<compile_context>
chip_gen: v6e
topology: v6e:2x2x1
jax: 0.10.0
libtpu: 0.0.40
codegen_flags: <defaults>
</compile_context>

<pallas_src>
import numpy as np

import jax
import jax.numpy as jnp
from jax import lax
from jax.experimental import pallas as pl
from jax.experimental.pallas import tpu as pltpu

EPS = 1e-5

# ------------------------- model configuration (small) -----------------------
GROWTH_RATE = 4
BLOCK_CONFIG = (2, 2, 2)
NUM_INIT_FEATURES = 8
BN_SIZE = 4
COMPRESSION = 0.5
NUM_CLASSES = 10
NUM_BRANCHES = 3
FACTOR = 8
INPUT_CHANNEL = 16                      # final feature channels (= 8 + 2*4)
DQ = INPUT_CHANNEL // FACTOR            # query/key dim = 2
CB = BN_SIZE * GROWTH_RATE              # bottleneck width = 16
TRANS_OUT = int((NUM_INIT_FEATURES + BLOCK_CONFIG[0] * GROWTH_RATE) * COMPRESSION)  # 8
HEAD_STEP = 2 * DQ + NUM_CLASSES        # per-branch fused head width (q|k|logits) = 14
HEAD_COLS = NUM_BRANCHES * HEAD_STEP + NUM_CLASSES                                  # 52
OUT_ROWS, OUT_COLS = 8, 128             # single lane-dense output block per image


# ------------------------------ BN row layout ---------------------------------
def _bn_layout():
    rows = {}
    r = 0
    for b, nl in enumerate(BLOCK_CONFIG):
        for l in range(nl):
            rows[('bn1', b, l)] = r; r += 1
            rows[('bn2', b, l)] = r; r += 1
        if b != len(BLOCK_CONFIG) - 1:
            rows[('trans', b)] = r; r += 1
    for i in range(NUM_BRANCHES):
        rows[('nf', i)] = r; r += 1
    return rows, r


# ------------------------------ in-kernel helpers -----------------------------
def _shift_rows(x, s):
    """result[i] = x[(i + s) % m]; wrapped rows are zeroed later by tap masks."""
    if s == 0:
        return x
    m = x.shape[0]
    s = s % m
    return jnp.concatenate([x[s:], x[:s]], axis=0)


def _make_tap_masks(m, width, height):
    """(m,1) float masks zeroing rows whose (h+dy, w+dx) tap leaves the image.

    Built ONCE per spatial resolution; handles all conv boundary conditions so
    no zero-padded scratch buffer is ever needed.
    """
    assert width & (width - 1) == 0 and height & (height - 1) == 0
    hw = width * height
    r = lax.broadcasted_iota(jnp.int32, (m, 1), 0)
    w_pos = r & (width - 1)
    r_img = r & (hw - 1)
    ml = w_pos > 0                       # valid when w-1 >= 0
    mr = w_pos < (width - 1)             # valid when w+1 <= W-1
    mt = r_img >= width                  # valid when h-1 >= 0
    mb = r_img < (hw - width)            # valid when h+1 <= H-1
    masks = {}
    for dy in (-1, 0, 1):
        for dx in (-1, 0, 1):
            conds = []
            if dy < 0:
                conds.append(mt)
            if dy > 0:
                conds.append(mb)
            if dx < 0:
                conds.append(ml)
            if dx > 0:
                conds.append(mr)
            if not conds:
                masks[(dy, dx)] = None
            else:
                c = conds[0]
                for extra in conds[1:]:
                    c = jnp.logical_and(c, extra)
                masks[(dy, dx)] = c.astype(jnp.float32)
    return masks


def _conv3x3(act, w, width, masks):
    """3x3 / stride 1 / pad 1 conv on a flattened (m, Cin) activation.

    The 9 shifted+masked taps are concatenated along lanes into one
    (m, 9*Cin) LHS and hit the MXU once against the (9*Cin, Cout) weight
    (rows ordered (ky, kx, cin)).
    """
    taps = []
    for dy in (-1, 0, 1):
        for dx in (-1, 0, 1):
            a = _shift_rows(act, dy * width + dx)
            msk = masks[(dy, dx)]
            if msk is not None:
                a = a * msk
            taps.append(a)
    lhs = jnp.concatenate(taps, axis=1)
    return jnp.dot(lhs, w, preferred_element_type=jnp.float32)


# ------------------------------ parameter init --------------------------------
def _kaiming_normal(key, shape, fan_in):
    return jax.random.normal(key, shape, jnp.float32) * jnp.sqrt(2.0 / fan_in)


def _linear_uniform(key, fan_in, fan_out):
    bound = 1.0 / jnp.sqrt(fan_in)
    return jax.random.uniform(key, (fan_in, fan_out), jnp.float32, -bound, bound)


def _bn_fold(c):
    gamma = jnp.ones((c,), jnp.float32)
    beta = jnp.zeros((c,), jnp.float32)
    mean = jnp.zeros((c,), jnp.float32)
    var = jnp.ones((c,), jnp.float32)
    scale = gamma / jnp.sqrt(var + EPS)
    shift = beta - mean * scale
    return scale.reshape(1, c), shift.reshape(1, c)


def _pool_matrix(h, w):
    """Constant (h/2*w/2, h*w) matrix implementing 2x2 avg pooling on flattened rows."""
    ho, wo = h // 2, w // 2
    p = np.zeros((ho * wo, h * w), np.float32)
    for i in range(ho):
        for j in range(wo):
            r = i * wo + j
            for dy in range(2):
                for dx in range(2):
                    p[r, (2 * i + dy) * w + (2 * j + dx)] = 0.25
    return jnp.asarray(p)


def make_params(key):
    keys = iter(jax.random.split(key, 64))
    p = {}
    p['conv0_w'] = _kaiming_normal(next(keys), (9 * 3, NUM_INIT_FEATURES), fan_in=9 * 3)
    num_features = NUM_INIT_FEATURES
    blocks, transitions = [], []
    last_block = None
    for bi, num_layers in enumerate(BLOCK_CONFIG):
        layers = []
        for li in range(num_layers):
            cin = num_features + li * GROWTH_RATE
            s1, sh1 = _bn_fold(cin)
            s2, sh2 = _bn_fold(CB)
            layers.append(dict(
                bn1_scale=s1, bn1_shift=sh1,
                w1=_kaiming_normal(next(keys), (cin, CB), fan_in=cin),
                bn2_scale=s2, bn2_shift=sh2,
                w2=_kaiming_normal(next(keys), (9 * CB, GROWTH_RATE), fan_in=9 * CB),
            ))
        num_features = num_features + num_layers * GROWTH_RATE
        if bi != len(BLOCK_CONFIG) - 1:
            blocks.append(layers)
            cout = int(num_features * COMPRESSION)
            ts, tsh = _bn_fold(num_features)
            transitions.append(dict(
                bn_scale=ts, bn_shift=tsh,
                w=_kaiming_normal(next(keys), (num_features, cout), fan_in=num_features)))
            num_features = cout
        else:
            last_block = layers   # shared by Branch0..Branch{nb-1} (same module object)
    p['block1'], p['block2'] = blocks
    p['trans1'], p['trans2'] = transitions
    p['block3'] = last_block

    assert num_features == INPUT_CHANNEL
    p['norm_final'] = []
    p['classifier'] = []
    for _ in range(NUM_BRANCHES):
        s, sh = _bn_fold(num_features)
        p['norm_final'].append(dict(scale=s, shift=sh))
    for _ in range(NUM_BRANCHES):
        p['classifier'].append(dict(
            w=_linear_uniform(next(keys), num_features, NUM_CLASSES),
            b=jnp.zeros((1, NUM_CLASSES), jnp.float32)))   # bias initialized to 0
    p['wq'] = _linear_uniform(next(keys), INPUT_CHANNEL, DQ)
    p['wk'] = _linear_uniform(next(keys), INPUT_CHANNEL, DQ)
    return p


# ------------------------------ parameter packing ------------------------------
def _pack_params(p):
    bn_rows, n_rows = _bn_layout()
    bn_scale = np.ones((n_rows, INPUT_CHANNEL), np.float32)
    bn_shift = np.zeros((n_rows, INPUT_CHANNEL), np.float32)

    def put_bn(r, s, sh):
        s = np.asarray(s).reshape(-1)
        sh = np.asarray(sh).reshape(-1)
        bn_scale[r, :s.size] = s
        bn_shift[r, :sh.size] = sh

    n_layers = sum(BLOCK_CONFIG)
    w1_slab = np.zeros((CB * n_layers, CB), np.float32)
    w2_slab = np.zeros((9 * CB, GROWTH_RATE * n_layers), np.float32)
    blocks = [p['block1'], p['block2'], p['block3']]
    lidx = 0
    for b, layers in enumerate(blocks):
        for l, lp in enumerate(layers):
            put_bn(bn_rows[('bn1', b, l)], lp['bn1_scale'], lp['bn1_shift'])
            put_bn(bn_rows[('bn2', b, l)], lp['bn2_scale'], lp['bn2_shift'])
            w1 = np.asarray(lp['w1'])
            w1_slab[CB * lidx:CB * lidx + w1.shape[0], :] = w1
            w2_slab[:, GROWTH_RATE * lidx:GROWTH_RATE * (lidx + 1)] = np.asarray(lp['w2'])
            lidx += 1

    trans_w = np.zeros((INPUT_CHANNEL, TRANS_OUT * (len(BLOCK_CONFIG) - 1)), np.float32)
    for t, tp in enumerate([p['trans1'], p['trans2']]):
        put_bn(bn_rows[('trans', t)], tp['bn_scale'], tp['bn_shift'])
        w = np.asarray(tp['w'])
        assert w.shape == (INPUT_CHANNEL, TRANS_OUT)
        trans_w[:, TRANS_OUT * t:TRANS_OUT * (t + 1)] = w

    for i in range(NUM_BRANCHES):
        put_bn(bn_rows[('nf', i)], p['norm_final'][i]['scale'], p['norm_final'][i]['shift'])

    # Fused head: per branch [wq | wk | classifier_i] block-diagonal, plus the
    # raw-pool final head (classifier_{nb-1}) in the trailing block.
    head_w = np.zeros((INPUT_CHANNEL * (NUM_BRANCHES + 1), HEAD_COLS), np.float32)
    head_b = np.zeros((1, HEAD_COLS), np.float32)
    wq = np.asarray(p['wq'])
    wk = np.asarray(p['wk'])
    for i in range(NUM_BRANCHES):
        r0, c0 = INPUT_CHANNEL * i, HEAD_STEP * i
        head_w[r0:r0 + INPUT_CHANNEL, c0:c0 + DQ] = wq
        head_w[r0:r0 + INPUT_CHANNEL, c0 + DQ:c0 + 2 * DQ] = wk
        head_w[r0:r0 + INPUT_CHANNEL, c0 + 2 * DQ:c0 + HEAD_STEP] = \
            np.asarray(p['classifier'][i]['w'])
        head_b[0, c0 + 2 * DQ:c0 + HEAD_STEP] = \
            np.asarray(p['classifier'][i]['b']).reshape(-1)
    head_w[INPUT_CHANNEL * NUM_BRANCHES:, NUM_BRANCHES * HEAD_STEP:] = \
        np.asarray(p['classifier'][NUM_BRANCHES - 1]['w'])
    head_b[0, NUM_BRANCHES * HEAD_STEP:] = \
        np.asarray(p['classifier'][NUM_BRANCHES - 1]['b']).reshape(-1)

    return dict(
        conv0_w=jnp.asarray(np.asarray(p['conv0_w'])),
        w1=jnp.asarray(w1_slab),
        w2=jnp.asarray(w2_slab),
        bn_scale=jnp.asarray(bn_scale),
        bn_shift=jnp.asarray(bn_shift),
        trans_w=jnp.asarray(trans_w),
        head_w=jnp.asarray(head_w),
        head_b=jnp.asarray(head_b),
    )


# ------------------------------ fused forward ----------------------------------
def make_forward(params, B, H, W):
    assert H % 4 == 0 and W % 4 == 0
    assert OUT_ROWS >= 2 * NUM_BRANCHES + 1
    M1, M2, M3 = H * W, (H * W) // 4, (H * W) // 16
    bn_rows, _ = _bn_layout()

    packed = _pack_params(params)
    packed['pool1'] = _pool_matrix(H, W)
    packed['pool2'] = _pool_matrix(H // 2, W // 2)
    order = ('conv0_w', 'w1', 'w2', 'bn_scale', 'bn_shift', 'trans_w',
             'head_w', 'head_b', 'pool1', 'pool2')
    flat = [packed[k] for k in order]

    def kernel(x_ref, conv0_ref, w1_ref, w2_ref, bns_ref, bnh_ref,
               transw_ref, headw_ref, headb_ref, pool1_ref, pool2_ref, out_ref):
        # Parameter slabs: loaded once, sliced as values at static offsets.
        w1_all = w1_ref[...]                    # (96, 16)
        w2_all = w2_ref[...]                    # (144, 24)
        bns = bns_ref[...]                      # (17, 16)
        bnh = bnh_ref[...]                      # (17, 16)
        transw = transw_ref[...]                # (16, 16)

        def bn(r, c):
            return bns[r:r + 1, :c], bnh[r:r + 1, :c]

        def dense_block(feat, b, width, masks):
            base = sum(BLOCK_CONFIG[:b])
            for l in range(BLOCK_CONFIG[b]):
                lidx = base + l
                cin = feat.shape[1]
                s1, h1 = bn(bn_rows[('bn1', b, l)], cin)
                y = jnp.maximum(feat * s1 + h1, 0.0)
                w1 = w1_all[CB * lidx:CB * lidx + cin, :]
                bott = jnp.dot(y, w1, preferred_element_type=jnp.float32)      # (m, 16)
                s2, h2 = bn(bn_rows[('bn2', b, l)], CB)
                a = jnp.maximum(bott * s2 + h2, 0.0)
                w2 = w2_all[:, GROWTH_RATE * lidx:GROWTH_RATE * (lidx + 1)]     # (144, 4)
                new = _conv3x3(a, w2, width, masks)
                feat = jnp.concatenate([feat, new], axis=1)
            return feat

        def transition(feat, t, pool):
            s, h = bn(bn_rows[('trans', t)], feat.shape[1])
            a = jnp.maximum(feat * s + h, 0.0)
            y = jnp.dot(a, transw[:, TRANS_OUT * t:TRANS_OUT * (t + 1)],
                        preferred_element_type=jnp.float32)
            return jnp.dot(pool, y, preferred_element_type=jnp.float32)

        # Boundary masks: one set per spatial resolution, reused by every conv.
        masks1 = _make_tap_masks(M1, W, H)
        masks2 = _make_tap_masks(M2, W // 2, H // 2)
        masks3 = _make_tap_masks(M3, W // 4, H // 4)

        x = x_ref[0]                                        # (M1, 3)
        feat = _conv3x3(x, conv0_ref[...], W, masks1)       # stem -> (M1, 8)
        feat = dense_block(feat, 0, W, masks1)              # (M1, 16)
        feat = transition(feat, 0, pool1_ref[...])          # (M2, 8)
        feat = dense_block(feat, 1, W // 2, masks2)         # (M2, 16)
        feat = transition(feat, 1, pool2_ref[...])          # (M3, 8)
        feat = dense_block(feat, 2, W // 4, masks3)         # shared block -> (M3, 16)

        # ---- heads: 3 branch heads + raw final head fused in ONE matmul ----
        inv_m = 1.0 / float(M3)
        pooled = []
        for i in range(NUM_BRANCHES):
            s, h = bn(bn_rows[('nf', i)], INPUT_CHANNEL)
            a = jnp.maximum(feat * s + h, 0.0)
            pooled.append(jnp.sum(a, axis=0, keepdims=True) * inv_m)           # (1, 16)
        pooled.append(jnp.sum(feat, axis=0, keepdims=True) * inv_m)            # raw pool
        lhs = jnp.concatenate(pooled, axis=1)                                  # (1, 64)

        ho = jnp.dot(lhs, headw_ref[...],
                     preferred_element_type=jnp.float32) + headb_ref[...]      # (1, 52)

        q = jnp.concatenate(
            [ho[:, HEAD_STEP * i:HEAD_STEP * i + DQ] for i in range(NUM_BRANCHES)], axis=0)
        k = jnp.concatenate(
            [ho[:, HEAD_STEP * i + DQ:HEAD_STEP * i + 2 * DQ] for i in range(NUM_BRANCHES)],
            axis=0)
        logits = jnp.concatenate(
            [ho[:, HEAD_STEP * i + 2 * DQ:HEAD_STEP * (i + 1)] for i in range(NUM_BRANCHES)],
            axis=0)                                                            # (nb, nc)
        temp = ho[:, NUM_BRANCHES * HEAD_STEP:NUM_BRANCHES * HEAD_STEP + NUM_CLASSES]

        # Attention mix: energy = Q K^T, exact softmax, x_m^T = attn @ logits.
        energy = lax.dot_general(q, k, (((1,), (1,)), ((), ())),
                                 preferred_element_type=jnp.float32)           # (nb, nb)
        energy = energy - jnp.max(energy, axis=-1, keepdims=True)
        e = jnp.exp(energy)
        attn = e / jnp.sum(e, axis=-1, keepdims=True)
        xm = jnp.dot(attn, logits, preferred_element_type=jnp.float32)         # (nb, nc)

        # Single lane-dense output block: rows 0..2 pro^T, 3..5 x_m^T, 6 temp_out.
        res = jnp.concatenate(
            [logits, xm, temp, jnp.zeros((1, NUM_CLASSES), jnp.float32)], axis=0)
        res = jnp.concatenate(
            [res, jnp.zeros((OUT_ROWS, OUT_COLS - NUM_CLASSES), jnp.float32)], axis=1)
        out_ref[0] = res

    in_specs = [pl.BlockSpec((1, M1, 3), lambda b: (b, 0, 0))]
    for a in flat:
        in_specs.append(pl.BlockSpec(a.shape, lambda b, _nd=a.ndim: (0,) * _nd))
    out_specs = pl.BlockSpec((1, OUT_ROWS, OUT_COLS), lambda b: (b, 0, 0))

    call = pl.pallas_call(
        kernel,
        out_shape=jax.ShapeDtypeStruct((B, OUT_ROWS, OUT_COLS), jnp.float32),
        grid=(B,),
        in_specs=in_specs,
        out_specs=out_specs,
        compiler_params=pltpu.CompilerParams(dimension_semantics=("parallel",)),
    )

    def forward(x_nchw):
        # PyTorch input is NCHW -> NHWC -> flatten spatial (row = h*W + w).
        x = jnp.transpose(x_nchw, (0, 2, 3, 1)).astype(jnp.float32).reshape(B, M1, 3)
        out = call(x, *flat)                                       # (B, 8, 128)
        pro = jnp.transpose(out[:, :NUM_BRANCHES, :NUM_CLASSES], (0, 2, 1))
        x_m = jnp.transpose(out[:, NUM_BRANCHES:2 * NUM_BRANCHES, :NUM_CLASSES], (0, 2, 1))
        temp_out = out[:, 2 * NUM_BRANCHES, :NUM_CLASSES]
        return pro, x_m, temp_out

    return forward


# ------------------------------------ main -------------------------------------
if __name__ == "__main__":
    key = jax.random.PRNGKey(0)
    pkey, xkey = jax.random.split(key)
    params = make_params(pkey)
    x = jax.random.normal(xkey, (2, 3, 16, 16), jnp.float32)   # NCHW like PyTorch

    fwd = jax.jit(make_forward(params, B=2, H=16, W=16))
    pro, x_m, temp_out = fwd(x)
    jax.block_until_ready((pro, x_m, temp_out))

    assert pro.shape == (2, NUM_CLASSES, NUM_BRANCHES)
    assert x_m.shape == (2, NUM_CLASSES, NUM_BRANCHES)
    assert temp_out.shape == (2, NUM_CLASSES)
    assert all(bool(jnp.all(jnp.isfinite(t))) for t in (pro, x_m, temp_out))
    print("KERNEL_OK")
</pallas_src>

<mosaic_0001>
module attributes {stable_mosaic.version = 11 : i64} {
  func.func @kernel(%arg0: i32, %arg1: memref<1x256x3xf32, #tpu.memory_space<vmem>>, %arg2: memref<27x8xf32, #tpu.memory_space<vmem>>, %arg3: memref<96x16xf32, #tpu.memory_space<vmem>>, %arg4: memref<144x24xf32, #tpu.memory_space<vmem>>, %arg5: memref<17x16xf32, #tpu.memory_space<vmem>>, %arg6: memref<17x16xf32, #tpu.memory_space<vmem>>, %arg7: memref<16x16xf32, #tpu.memory_space<vmem>>, %arg8: memref<64x52xf32, #tpu.memory_space<vmem>>, %arg9: memref<1x52xf32, #tpu.memory_space<vmem>>, %arg10: memref<64x256xf32, #tpu.memory_space<vmem>>, %arg11: memref<16x64xf32, #tpu.memory_space<vmem>>, %arg12: memref<1x8x128xf32, #tpu.memory_space<vmem>>) attributes {dimension_semantics = [#tpu.dimension_semantics<parallel>], iteration_bounds = array<i64: 2>, scalar_prefetch = 0 : i64, scratch_operands = 0 : i64, tpu.core_type = #tpu.core_type<tc>, window_params = [{transform_indices = @transform_0, window_bounds = array<i64: 1, 256, 3>}, {pipeline_mode = #tpu.pipeline_mode<synchronous>, transform_indices = @transform_1, window_bounds = array<i64: 27, 8>}, {pipeline_mode = #tpu.pipeline_mode<synchronous>, transform_indices = @transform_2, window_bounds = array<i64: 96, 16>}, {pipeline_mode = #tpu.pipeline_mode<synchronous>, transform_indices = @transform_3, window_bounds = array<i64: 144, 24>}, {pipeline_mode = #tpu.pipeline_mode<synchronous>, transform_indices = @transform_4, window_bounds = array<i64: 17, 16>}, {pipeline_mode = #tpu.pipeline_mode<synchronous>, transform_indices = @transform_5, window_bounds = array<i64: 17, 16>}, {pipeline_mode = #tpu.pipeline_mode<synchronous>, transform_indices = @transform_6, window_bounds = array<i64: 16, 16>}, {pipeline_mode = #tpu.pipeline_mode<synchronous>, transform_indices = @transform_7, window_bounds = array<i64: 64, 52>}, {pipeline_mode = #tpu.pipeline_mode<synchronous>, transform_indices = @transform_8, window_bounds = array<i64: 1, 52>}, {pipeline_mode = #tpu.pipeline_mode<synchronous>, transform_indices = @transform_9, window_bounds = array<i64: 64, 256>}, {pipeline_mode = #tpu.pipeline_mode<synchronous>, transform_indices = @transform_10, window_bounds = array<i64: 16, 64>}, {transform_indices = @transform_11, window_bounds = array<i64: 1, 8, 128>}]} {
    %c0 = arith.constant 0 : index
    %c0_0 = arith.constant 0 : index
    %0 = vector.load %arg3[%c0, %c0_0] : memref<96x16xf32, #tpu.memory_space<vmem>>, vector<96x16xf32>
    %c0_1 = arith.constant 0 : index
    %c0_2 = arith.constant 0 : index
    %1 = vector.load %arg4[%c0_1, %c0_2] : memref<144x24xf32, #tpu.memory_space<vmem>>, vector<144x24xf32>
    %c0_3 = arith.constant 0 : index
    %c0_4 = arith.constant 0 : index
    %2 = vector.load %arg5[%c0_3, %c0_4] : memref<17x16xf32, #tpu.memory_space<vmem>>, vector<17x16xf32>
    %c0_5 = arith.constant 0 : index
    %c0_6 = arith.constant 0 : index
    %3 = vector.load %arg6[%c0_5, %c0_6] : memref<17x16xf32, #tpu.memory_space<vmem>>, vector<17x16xf32>
    %c0_7 = arith.constant 0 : index
    %c0_8 = arith.constant 0 : index
    %4 = vector.load %arg7[%c0_7, %c0_8] : memref<16x16xf32, #tpu.memory_space<vmem>>, vector<16x16xf32>
    %5 = tpu.iota {dimensions = array<i32: 0>} : vector<256x1xi32>
    %c15_i32 = arith.constant 15 : i32
    %6 = vector.broadcast %c15_i32 : i32 to vector<256x1xi32>
    %7 = arith.andi %5, %6 : vector<256x1xi32>
    %c255_i32 = arith.constant 255 : i32
    %8 = vector.broadcast %c255_i32 : i32 to vector<256x1xi32>
    %9 = arith.andi %5, %8 : vector<256x1xi32>
    %c0_i32 = arith.constant 0 : i32
    %10 = vector.broadcast %c0_i32 : i32 to vector<256x1xi32>
    %11 = arith.cmpi sgt, %7, %10 : vector<256x1xi32>
    %c15_i32_9 = arith.constant 15 : i32
    %12 = vector.broadcast %c15_i32_9 : i32 to vector<256x1xi32>
    %13 = arith.cmpi slt, %7, %12 : vector<256x1xi32>
    %c16_i32 = arith.constant 16 : i32
    %14 = vector.broadcast %c16_i32 : i32 to vector<256x1xi32>
    %15 = arith.cmpi sge, %9, %14 : vector<256x1xi32>
    %c240_i32 = arith.constant 240 : i32
    %16 = vector.broadcast %c240_i32 : i32 to vector<256x1xi32>
    %17 = arith.cmpi slt, %9, %16 : vector<256x1xi32>
    %18 = arith.andi %15, %11 : vector<256x1xi1>
    %19 = arith.extui %18 : vector<256x1xi1> to vector<256x1xi32>
    %20 = arith.sitofp %19 : vector<256x1xi32> to vector<256x1xf32>
    %21 = arith.extui %15 : vector<256x1xi1> to vector<256x1xi32>
    %22 = arith.sitofp %21 : vector<256x1xi32> to vector<256x1xf32>
    %23 = arith.andi %15, %13 : vector<256x1xi1>
    %24 = arith.extui %23 : vector<256x1xi1> to vector<256x1xi32>
    %25 = arith.sitofp %24 : vector<256x1xi32> to vector<256x1xf32>
    %26 = arith.extui %11 : vector<256x1xi1> to vector<256x1xi32>
    %27 = arith.sitofp %26 : vector<256x1xi32> to vector<256x1xf32>
    %28 = arith.extui %13 : vector<256x1xi1> to vector<256x1xi32>
    %29 = arith.sitofp %28 : vector<256x1xi32> to vector<256x1xf32>
    %30 = arith.andi %17, %11 : vector<256x1xi1>
    %31 = arith.extui %30 : vector<256x1xi1> to vector<256x1xi32>
    %32 = arith.sitofp %31 : vector<256x1xi32> to vector<256x1xf32>
    %33 = arith.extui %17 : vector<256x1xi1> to vector<256x1xi32>
    %34 = arith.sitofp %33 : vector<256x1xi32> to vector<256x1xf32>
    %35 = arith.andi %17, %13 : vector<256x1xi1>
    %36 = arith.extui %35 : vector<256x1xi1> to vector<256x1xi32>
    %37 = arith.sitofp %36 : vector<256x1xi32> to vector<256x1xf32>
    %38 = tpu.iota {dimensions = array<i32: 0>} : vector<64x1xi32>
    %c7_i32 = arith.constant 7 : i32
    %39 = vector.broadcast %c7_i32 : i32 to vector<64x1xi32>
    %40 = arith.andi %38, %39 : vector<64x1xi32>
    %c63_i32 = arith.constant 63 : i32
    %41 = vector.broadcast %c63_i32 : i32 to vector<64x1xi32>
    %42 = arith.andi %38, %41 : vector<64x1xi32>
    %c0_i32_10 = arith.constant 0 : i32
    %43 = vector.broadcast %c0_i32_10 : i32 to vector<64x1xi32>
    %44 = arith.cmpi sgt, %40, %43 : vector<64x1xi32>
    %c7_i32_11 = arith.constant 7 : i32
    %45 = vector.broadcast %c7_i32_11 : i32 to vector<64x1xi32>
    %46 = arith.cmpi slt, %40, %45 : vector<64x1xi32>
    %c8_i32 = arith.constant 8 : i32
    %47 = vector.broadcast %c8_i32 : i32 to vector<64x1xi32>
    %48 = arith.cmpi sge, %42, %47 : vector<64x1xi32>
    %c56_i32 = arith.constant 56 : i32
    %49 = vector.broadcast %c56_i32 : i32 to vector<64x1xi32>
    %50 = arith.cmpi slt, %42, %49 : vector<64x1xi32>
    %51 = arith.andi %48, %44 : vector<64x1xi1>
    %52 = arith.extui %51 : vector<64x1xi1> to vector<64x1xi32>
    %53 = arith.sitofp %52 : vector<64x1xi32> to vector<64x1xf32>
    %54 = arith.extui %48 : vector<64x1xi1> to vector<64x1xi32>
    %55 = arith.sitofp %54 : vector<64x1xi32> to vector<64x1xf32>
    %56 = arith.andi %48, %46 : vector<64x1xi1>
    %57 = arith.extui %56 : vector<64x1xi1> to vector<64x1xi32>
    %58 = arith.sitofp %57 : vector<64x1xi32> to vector<64x1xf32>
    %59 = arith.extui %44 : vector<64x1xi1> to vector<64x1xi32>
    %60 = arith.sitofp %59 : vector<64x1xi32> to vector<64x1xf32>
    %61 = arith.extui %46 : vector<64x1xi1> to vector<64x1xi32>
    %62 = arith.sitofp %61 : vector<64x1xi32> to vector<64x1xf32>
    %63 = arith.andi %50, %44 : vector<64x1xi1>
    %64 = arith.extui %63 : vector<64x1xi1> to vector<64x1xi32>
    %65 = arith.sitofp %64 : vector<64x1xi32> to vector<64x1xf32>
    %66 = arith.extui %50 : vector<64x1xi1> to vector<64x1xi32>
    %67 = arith.sitofp %66 : vector<64x1xi32> to vector<64x1xf32>
    %68 = arith.andi %50, %46 : vector<64x1xi1>
    %69 = arith.extui %68 : vector<64x1xi1> to vector<64x1xi32>
    %70 = arith.sitofp %69 : vector<64x1xi32> to vector<64x1xf32>
    %71 = tpu.iota {dimensions = array<i32: 0>} : vector<16x1xi32>
    %c3_i32 = arith.constant 3 : i32
    %72 = vector.broadcast %c3_i32 : i32 to vector<16x1xi32>
    %73 = arith.andi %71, %72 : vector<16x1xi32>
    %c15_i32_12 = arith.constant 15 : i32
    %74 = vector.broadcast %c15_i32_12 : i32 to vector<16x1xi32>
    %75 = arith.andi %71, %74 : vector<16x1xi32>
    %c0_i32_13 = arith.constant 0 : i32
    %76 = vector.broadcast %c0_i32_13 : i32 to vector<16x1xi32>
    %77 = arith.cmpi sgt, %73, %76 : vector<16x1xi32>
    %c3_i32_14 = arith.constant 3 : i32
    %78 = vector.broadcast %c3_i32_14 : i32 to vector<16x1xi32>
    %79 = arith.cmpi slt, %73, %78 : vector<16x1xi32>
    %c4_i32 = arith.constant 4 : i32
    %80 = vector.broadcast %c4_i32 : i32 to vector<16x1xi32>
    %81 = arith.cmpi sge, %75, %80 : vector<16x1xi32>
    %c12_i32 = arith.constant 12 : i32
    %82 = vector.broadcast %c12_i32 : i32 to vector<16x1xi32>
    %83 = arith.cmpi slt, %75, %82 : vector<16x1xi32>
    %84 = arith.andi %81, %77 : vector<16x1xi1>
    %85 = arith.extui %84 : vector<16x1xi1> to vector<16x1xi32>
    %86 = arith.sitofp %85 : vector<16x1xi32> to vector<16x1xf32>
    %87 = arith.extui %81 : vector<16x1xi1> to vector<16x1xi32>
    %88 = arith.sitofp %87 : vector<16x1xi32> to vector<16x1xf32>
    %89 = arith.andi %81, %79 : vector<16x1xi1>
    %90 = arith.extui %89 : vector<16x1xi1> to vector<16x1xi32>
    %91 = arith.sitofp %90 : vector<16x1xi32> to vector<16x1xf32>
    %92 = arith.extui %77 : vector<16x1xi1> to vector<16x1xi32>
    %93 = arith.sitofp %92 : vector<16x1xi32> to vector<16x1xf32>
    %94 = arith.extui %79 : vector<16x1xi1> to vector<16x1xi32>
    %95 = arith.sitofp %94 : vector<16x1xi32> to vector<16x1xf32>
    %96 = arith.andi %83, %77 : vector<16x1xi1>
    %97 = arith.extui %96 : vector<16x1xi1> to vector<16x1xi32>
    %98 = arith.sitofp %97 : vector<16x1xi32> to vector<16x1xf32>
    %99 = arith.extui %83 : vector<16x1xi1> to vector<16x1xi32>
    %100 = arith.sitofp %99 : vector<16x1xi32> to vector<16x1xf32>
    %101 = arith.andi %83, %79 : vector<16x1xi1>
    %102 = arith.extui %101 : vector<16x1xi1> to vector<16x1xi32>
    %103 = arith.sitofp %102 : vector<16x1xi32> to vector<16x1xf32>
    %c0_15 = arith.constant 0 : index
    %c0_16 = arith.constant 0 : index
    %c0_17 = arith.constant 0 : index
    %104 = vector.load %arg1[%c0_15, %c0_16, %c0_17] : memref<1x256x3xf32, #tpu.memory_space<vmem>>, vector<1x256x3xf32>
    %105 = vector.shape_cast %104 : vector<1x256x3xf32> to vector<256x3xf32>
    %c0_18 = arith.constant 0 : index
    %c0_19 = arith.constant 0 : index
    %106 = vector.load %arg2[%c0_18, %c0_19] : memref<27x8xf32, #tpu.memory_space<vmem>>, vector<27x8xf32>
    %107 = vector.extract_strided_slice %105 {offsets = [239, 0], sizes = [17, 3], strides = [1, 1]} : vector<256x3xf32> to vector<17x3xf32>
    %108 = vector.extract_strided_slice %105 {offsets = [0, 0], sizes = [239, 3], strides = [1, 1]} : vector<256x3xf32> to vector<239x3xf32>
    %109 = tpu.concatenate %107, %108 in 0 : vector<17x3xf32>, vector<239x3xf32> -> vector<256x3xf32>
    %110 = vector.broadcast %20 : vector<256x1xf32> to vector<256x3xf32>
    %111 = arith.mulf %109, %110 : vector<256x3xf32>
    %112 = vector.extract_strided_slice %105 {offsets = [240, 0], sizes = [16, 3], strides = [1, 1]} : vector<256x3xf32> to vector<16x3xf32>
    %113 = vector.extract_strided_slice %105 {offsets = [0, 0], sizes = [240, 3], strides = [1, 1]} : vector<256x3xf32> to vector<240x3xf32>
    %114 = tpu.concatenate %112, %113 in 0 : vector<16x3xf32>, vector<240x3xf32> -> vector<256x3xf32>
    %115 = vector.broadcast %22 : vector<256x1xf32> to vector<256x3xf32>
    %116 = arith.mulf %114, %115 : vector<256x3xf32>
    %117 = vector.extract_strided_slice %105 {offsets = [241, 0], sizes = [15, 3], strides = [1, 1]} : vector<256x3xf32> to vector<15x3xf32>
    %118 = vector.extract_strided_slice %105 {offsets = [0, 0], sizes = [241, 3], strides = [1, 1]} : vector<256x3xf32> to vector<241x3xf32>
    %119 = tpu.concatenate %117, %118 in 0 : vector<15x3xf32>, vector<241x3xf32> -> vector<256x3xf32>
    %120 = vector.broadcast %25 : vector<256x1xf32> to vector<256x3xf32>
    %121 = arith.mulf %119, %120 : vector<256x3xf32>
    %122 = vector.extract_strided_slice %105 {offsets = [255, 0], sizes = [1, 3], strides = [1, 1]} : vector<256x3xf32> to vector<1x3xf32>
    %123 = vector.extract_strided_slice %105 {offsets = [0, 0], sizes = [255, 3], strides = [1, 1]} : vector<256x3xf32> to vector<255x3xf32>
    %124 = tpu.concatenate %122, %123 in 0 : vector<1x3xf32>, vector<255x3xf32> -> vector<256x3xf32>
    %125 = vector.broadcast %27 : vector<256x1xf32> to vector<256x3xf32>
    %126 = arith.mulf %124, %125 : vector<256x3xf32>
    %127 = vector.extract_strided_slice %105 {offsets = [1, 0], sizes = [255, 3], strides = [1, 1]} : vector<256x3xf32> to vector<255x3xf32>
    %128 = vector.extract_strided_slice %105 {offsets = [0, 0], sizes = [1, 3], strides = [1, 1]} : vector<256x3xf32> to vector<1x3xf32>
    %129 = tpu.concatenate %127, %128 in 0 : vector<255x3xf32>, vector<1x3xf32> -> vector<256x3xf32>
    %130 = vector.broadcast %29 : vector<256x1xf32> to vector<256x3xf32>
    %131 = arith.mulf %129, %130 : vector<256x3xf32>
    %132 = vector.extract_strided_slice %105 {offsets = [15, 0], sizes = [241, 3], strides = [1, 1]} : vector<256x3xf32> to vector<241x3xf32>
    %133 = vector.extract_strided_slice %105 {offsets = [0, 0], sizes = [15, 3], strides = [1, 1]} : vector<256x3xf32> to vector<15x3xf32>
    %134 = tpu.concatenate %132, %133 in 0 : vector<241x3xf32>, vector<15x3xf32> -> vector<256x3xf32>
    %135 = vector.broadcast %32 : vector<256x1xf32> to vector<256x3xf32>
    %136 = arith.mulf %134, %135 : vector<256x3xf32>
    %137 = vector.extract_strided_slice %105 {offsets = [16, 0], sizes = [240, 3], strides = [1, 1]} : vector<256x3xf32> to vector<240x3xf32>
    %138 = vector.extract_strided_slice %105 {offsets = [0, 0], sizes = [16, 3], strides = [1, 1]} : vector<256x3xf32> to vector<16x3xf32>
    %139 = tpu.concatenate %137, %138 in 0 : vector<240x3xf32>, vector<16x3xf32> -> vector<256x3xf32>
    %140 = vector.broadcast %34 : vector<256x1xf32> to vector<256x3xf32>
    %141 = arith.mulf %139, %140 : vector<256x3xf32>
    %142 = vector.extract_strided_slice %105 {offsets = [17, 0], sizes = [239, 3], strides = [1, 1]} : vector<256x3xf32> to vector<239x3xf32>
    %143 = vector.extract_strided_slice %105 {offsets = [0, 0], sizes = [17, 3], strides = [1, 1]} : vector<256x3xf32> to vector<17x3xf32>
    %144 = tpu.concatenate %142, %143 in 0 : vector<239x3xf32>, vector<17x3xf32> -> vector<256x3xf32>
    %145 = vector.broadcast %37 : vector<256x1xf32> to vector<256x3xf32>
    %146 = arith.mulf %144, %145 : vector<256x3xf32>
    %147 = tpu.concatenate %111, %116, %121, %126, %105, %131, %136, %141, %146 in 1 : vector<256x3xf32>, vector<256x3xf32>, vector<256x3xf32>, vector<256x3xf32>, vector<256x3xf32>, vector<256x3xf32>, vector<256x3xf32>, vector<256x3xf32>, vector<256x3xf32> -> vector<256x27xf32>
    %cst = arith.constant dense<0.000000e+00> : vector<256x8xf32>
    %148 = tpu.matmul %147, %106, %cst {dimension_numbers = #tpu.dot_dimension_numbers<[1], [0], [0], [1], [0, 0, 1, 1], [], []>} : vector<256x27xf32>, vector<27x8xf32>, vector<256x8xf32> -> vector<256x8xf32>
    %149 = vector.extract_strided_slice %2 {offsets = [0, 0], sizes = [1, 8], strides = [1, 1]} : vector<17x16xf32> to vector<1x8xf32>
    %150 = vector.extract_strided_slice %3 {offsets = [0, 0], sizes = [1, 8], strides = [1, 1]} : vector<17x16xf32> to vector<1x8xf32>
    %151 = vector.broadcast %149 : vector<1x8xf32> to vector<256x8xf32>
    %152 = arith.mulf %148, %151 : vector<256x8xf32>
    %153 = vector.broadcast %150 : vector<1x8xf32> to vector<256x8xf32>
    %154 = arith.addf %152, %153 : vector<256x8xf32>
    %cst_20 = arith.constant 0.000000e+00 : f32
    %155 = vector.broadcast %cst_20 : f32 to vector<256x8xf32>
    %156 = arith.maximumf %154, %155 : vector<256x8xf32>
    %157 = vector.extract_strided_slice %0 {offsets = [0, 0], sizes = [8, 16], strides = [1, 1]} : vector<96x16xf32> to vector<8x16xf32>
    %cst_21 = arith.constant dense<0.000000e+00> : vector<256x16xf32>
    %158 = tpu.matmul %156, %157, %cst_21 {dimension_numbers = #tpu.dot_dimension_numbers<[1], [0], [0], [1], [0, 0, 1, 1], [], []>} : vector<256x8xf32>, vector<8x16xf32>, vector<256x16xf32> -> vector<256x16xf32>
    %159 = vector.extract_strided_slice %2 {offsets = [1, 0], sizes = [1, 16], strides = [1, 1]} : vector<17x16xf32> to vector<1x16xf32>
    %160 = vector.extract_strided_slice %3 {offsets = [1, 0], sizes = [1, 16], strides = [1, 1]} : vector<17x16xf32> to vector<1x16xf32>
    %161 = vector.broadcast %159 : vector<1x16xf32> to vector<256x16xf32>
    %162 = arith.mulf %158, %161 : vector<256x16xf32>
    %163 = vector.broadcast %160 : vector<1x16xf32> to vector<256x16xf32>
    %164 = arith.addf %162, %163 : vector<256x16xf32>
    %cst_22 = arith.constant 0.000000e+00 : f32
    %165 = vector.broadcast %cst_22 : f32 to vector<256x16xf32>
    %166 = arith.maximumf %164, %165 : vector<256x16xf32>
    %167 = vector.extract_strided_slice %1 {offsets = [0, 0], sizes = [144, 4], strides = [1, 1]} : vector<144x24xf32> to vector<144x4xf32>
    %168 = vector.extract_strided_slice %166 {offsets = [239, 0], sizes = [17, 16], strides = [1, 1]} : vector<256x16xf32> to vector<17x16xf32>
    %169 = vector.extract_strided_slice %166 {offsets = [0, 0], sizes = [239, 16], strides = [1, 1]} : vector<256x16xf32> to vector<239x16xf32>
    %170 = tpu.concatenate %168, %169 in 0 : vector<17x16xf32>, vector<239x16xf32> -> vector<256x16xf32>
    %171 = vector.broadcast %20 : vector<256x1xf32> to vector<256x16xf32>
    %172 = arith.mulf %170, %171 : vector<256x16xf32>
    %173 = vector.extract_strided_slice %166 {offsets = [240, 0], sizes = [16, 16], strides = [1, 1]} : vector<256x16xf32> to vector<16x16xf32>
    %174 = vector.extract_strided_slice %166 {offsets = [0, 0], sizes = [240, 16], strides = [1, 1]} : vector<256x16xf32> to vector<240x16xf32>
    %175 = tpu.concatenate %173, %174 in 0 : vector<16x16xf32>, vector<240x16xf32> -> vector<256x16xf32>
    %176 = vector.broadcast %22 : vector<256x1xf32> to vector<256x16xf32>
    %177 = arith.mulf %175, %176 : vector<256x16xf32>
    %178 = vector.extract_strided_slice %166 {offsets = [241, 0], sizes = [15, 16], strides = [1, 1]} : vector<256x16xf32> to vector<15x16xf32>
    %179 = vector.extract_strided_slice %166 {offsets = [0, 0], sizes = [241, 16], strides = [1, 1]} : vector<256x16xf32> to vector<241x16xf32>
    %180 = tpu.concatenate %178, %179 in 0 : vector<15x16xf32>, vector<241x16xf32> -> vector<256x16xf32>
    %181 = vector.broadcast %25 : vector<256x1xf32> to vector<256x16xf32>
    %182 = arith.mulf %180, %181 : vector<256x16xf32>
    %183 = vector.extract_strided_slice %166 {offsets = [255, 0], sizes = [1, 16], strides = [1, 1]} : vector<256x16xf32> to vector<1x16xf32>
    %184 = vector.extract_strided_slice %166 {offsets = [0, 0], sizes = [255, 16], strides = [1, 1]} : vector<256x16xf32> to vector<255x16xf32>
    %185 = tpu.concatenate %183, %184 in 0 : vector<1x16xf32>, vector<255x16xf32> -> vector<256x16xf32>
    %186 = vector.broadcast %27 : vector<256x1xf32> to vector<256x16xf32>
    %187 = arith.mulf %185, %186 : vector<256x16xf32>
    %188 = vector.extract_strided_slice %166 {offsets = [1, 0], sizes = [255, 16], strides = [1, 1]} : vector<256x16xf32> to vector<255x16xf32>
    %189 = vector.extract_strided_slice %166 {offsets = [0, 0], sizes = [1, 16], strides = [1, 1]} : vector<256x16xf32> to vector<1x16xf32>
    %190 = tpu.concatenate %188, %189 in 0 : vector<255x16xf32>, vector<1x16xf32> -> vector<256x16xf32>
    %191 = vector.broadcast %29 : vector<256x1xf32> to vector<256x16xf32>
    %192 = arith.mulf %190, %191 : vector<256x16xf32>
    %193 = vector.extract_strided_slice %166 {offsets = [15, 0], sizes = [241, 16], strides = [1, 1]} : vector<256x16xf32> to vector<241x16xf32>
    %194 = vector.extract_strided_slice %166 {offsets = [0, 0], sizes = [15, 16], strides = [1, 1]} : vector<256x16xf32> to vector<15x16xf32>
    %195 = tpu.concatenate %193, %194 in 0 : vector<241x16xf32>, vector<15x16xf32> -> vector<256x16xf32>
    %196 = vector.broadcast %32 : vector<256x1xf32> to vector<256x16xf32>
    %197 = arith.mulf %195, %196 : vector<256x16xf32>
    %198 = vector.extract_strided_slice %166 {offsets = [16, 0], sizes = [240, 16], strides = [1, 1]} : vector<256x16xf32> to vector<240x16xf32>
    %199 = vector.extract_strided_slice %166 {offsets = [0, 0], sizes = [16, 16], strides = [1, 1]} : vector<256x16xf32> to vector<16x16xf32>
    %200 = tpu.concatenate %198, %199 in 0 : vector<240x16xf32>, vector<16x16xf32> -> vector<256x16xf32>
    %201 = vector.broadcast %34 : vector<256x1xf32> to vector<256x16xf32>
    %202 = arith.mulf %200, %201 : vector<256x16xf32>
    %203 = vector.extract_strided_slice %166 {offsets = [17, 0], sizes = [239, 16], strides = [1, 1]} : vector<256x16xf32> to vector<239x16xf32>
    %204 = vector.extract_strided_slice %166 {offsets = [0, 0], sizes = [17, 16], strides = [1, 1]} : vector<256x16xf32> to vector<17x16xf32>
    %205 = tpu.concatenate %203, %204 in 0 : vector<239x16xf32>, vector<17x16xf32> -> vector<256x16xf32>
    %206 = vector.broadcast %37 : vector<256x1xf32> to vector<256x16xf32>
    %207 = arith.mulf %205, %206 : vector<256x16xf32>
    %208 = tpu.concatenate %172, %177, %182, %187, %166, %192, %197, %202, %207 in 1 : vector<256x16xf32>, vector<256x16xf32>, vector<256x16xf32>, vector<256x16xf32>, vector<256x16xf32>, vector<256x16xf32>, vector<256x16xf32>, vector<256x16xf32>, vector<256x16xf32> -> vector<256x144xf32>
    %cst_23 = arith.constant dense<0.000000e+00> : vector<256x4xf32>
    %209 = tpu.matmul %208, %167, %cst_23 {dimension_numbers = #tpu.dot_dimension_numbers<[1], [0], [0], [1], [0, 0, 1, 1], [], []>} : vector<256x144xf32>, vector<144x4xf32>, vector<256x4xf32> -> vector<256x4xf32>
    %210 = tpu.concatenate %148, %209 in 1 : vector<256x8xf32>, vector<256x4xf32> -> vector<256x12xf32>
    %211 = vector.extract_strided_slice %2 {offsets = [2, 0], sizes = [1, 12], strides = [1, 1]} : vector<17x16xf32> to vector<1x12xf32>
    %212 = vector.extract_strided_slice %3 {offsets = [2, 0], sizes = [1, 12], strides = [1, 1]} : vector<17x16xf32> to vector<1x12xf32>
    %213 = vector.broadcast %211 : vector<1x12xf32> to vector<256x12xf32>
    %214 = arith.mulf %210, %213 : vector<256x12xf32>
    %215 = vector.broadcast %212 : vector<1x12xf32> to vector<256x12xf32>
    %216 = arith.addf %214, %215 : vector<256x12xf32>
    %cst_24 = arith.constant 0.000000e+00 : f32
    %217 = vector.broadcast %cst_24 : f32 to vector<256x12xf32>
    %218 = arith.maximumf %216, %217 : vector<256x12xf32>
    %219 = vector.extract_strided_slice %0 {offsets = [16, 0], sizes = [12, 16], strides = [1, 1]} : vector<96x16xf32> to vector<12x16xf32>
    %cst_25 = arith.constant dense<0.000000e+00> : vector<256x16xf32>
    %220 = tpu.matmul %218, %219, %cst_25 {dimension_numbers = #tpu.dot_dimension_numbers<[1], [0], [0], [1], [0, 0, 1, 1], [], []>} : vector<256x12xf32>, vector<12x16xf32>, vector<256x16xf32> -> vector<256x16xf32>
    %221 = vector.extract_strided_slice %2 {offsets = [3, 0], sizes = [1, 16], strides = [1, 1]} : vector<17x16xf32> to vector<1x16xf32>
    %222 = vector.extract_strided_slice %3 {offsets = [3, 0], sizes = [1, 16], strides = [1, 1]} : vector<17x16xf32> to vector<1x16xf32>
    %223 = vector.broadcast %221 : vector<1x16xf32> to vector<256x16xf32>
    %224 = arith.mulf %220, %223 : vector<256x16xf32>
    %225 = vector.broadcast %222 : vector<1x16xf32> to vector<256x16xf32>
    %226 = arith.addf %224, %225 : vector<256x16xf32>
    %cst_26 = arith.constant 0.000000e+00 : f32
    %227 = vector.broadcast %cst_26 : f32 to vector<256x16xf32>
    %228 = arith.maximumf %226, %227 : vector<256x16xf32>
    %229 = vector.extract_strided_slice %1 {offsets = [0, 4], sizes = [144, 4], strides = [1, 1]} : vector<144x24xf32> to vector<144x4xf32>
    %230 = vector.extract_strided_slice %228 {offsets = [239, 0], sizes = [17, 16], strides = [1, 1]} : vector<256x16xf32> to vector<17x16xf32>
    %231 = vector.extract_strided_slice %228 {offsets = [0, 0], sizes = [239, 16], strides = [1, 1]} : vector<256x16xf32> to vector<239x16xf32>
    %232 = tpu.concatenate %230, %231 in 0 : vector<17x16xf32>, vector<239x16xf32> -> vector<256x16xf32>
    %233 = vector.broadcast %20 : vector<256x1xf32> to vector<256x16xf32>
    %234 = arith.mulf %232, %233 : vector<256x16xf32>
    %235 = vector.extract_strided_slice %228 {offsets = [240, 0], sizes = [16, 16], strides = [1, 1]} : vector<256x16xf32> to vector<16x16xf32>
    %236 = vector.extract_strided_slice %228 {offsets = [0, 0], sizes = [240, 16], strides = [1, 1]} : vector<256x16xf32> to vector<240x16xf32>
    %237 = tpu.concatenate %235, %236 in 0 : vector<16x16xf32>, vector<240x16xf32> -> vector<256x16xf32>
    %238 = vector.broadcast %22 : vector<256x1xf32> to vector<256x16xf32>
    %239 = arith.mulf %237, %238 : vector<256x16xf32>
    %240 = vector.extract_strided_slice %228 {offsets = [241, 0], sizes = [15, 16], strides = [1, 1]} : vector<256x16xf32> to vector<15x16xf32>
    %241 = vector.extract_strided_slice %228 {offsets = [0, 0], sizes = [241, 16], strides = [1, 1]} : vector<256x16xf32> to vector<241x16xf32>
    %242 = tpu.concatenate %240, %241 in 0 : vector<15x16xf32>, vector<241x16xf32> -> vector<256x16xf32>
    %243 = vector.broadcast %25 : vector<256x1xf32> to vector<256x16xf32>
    %244 = arith.mulf %242, %243 : vector<256x16xf32>
    %245 = vector.extract_strided_slice %228 {offsets = [255, 0], sizes = [1, 16], strides = [1, 1]} : vector<256x16xf32> to vector<1x16xf32>
    %246 = vector.extract_strided_slice %228 {offsets = [0, 0], sizes = [255, 16], strides = [1, 1]} : vector<256x16xf32> to vector<255x16xf32>
    %247 = tpu.concatenate %245, %246 in 0 : vector<1x16xf32>, vector<255x16xf32> -> vector<256x16xf32>
    %248 = vector.broadcast %27 : vector<256x1xf32> to vector<256x16xf32>
    %249 = arith.mulf %247, %248 : vector<256x16xf32>
    %250 = vector.extract_strided_slice %228 {offsets = [1, 0], sizes = [255, 16], strides = [1, 1]} : vector<256x16xf32> to vector<255x16xf32>
    %251 = vector.extract_strided_slice %228 {offsets = [0, 0], sizes = [1, 16], strides = [1, 1]} : vector<256x16xf32> to vector<1x16xf32>
    %252 = tpu.concatenate %250, %251 in 0 : vector<255x16xf32>, vector<1x16xf32> -> vector<256x16xf32>
    %253 = vector.broadcast %29 : vector<256x1xf32> to vector<256x16xf32>
    %254 = arith.mulf %252, %253 : vector<256x16xf32>
    %255 = vector.extract_strided_slice %228 {offsets = [15, 0], sizes = [241, 16], strides = [1, 1]} : vector<256x16xf32> to vector<241x16xf32>
    %256 = vector.extract_strided_slice %228 {offsets = [0, 0], sizes = [15, 16], strides = [1, 1]} : vector<256x16xf32> to vector<15x16xf32>
    %257 = tpu.concatenate %255, %256 in 0 : vector<241x16xf32>, vector<15x16xf32> -> vector<256x16xf32>
    %258 = vector.broadcast %32 : vector<256x1xf32> to vector<256x16xf32>
    %259 = arith.mulf %257, %258 : vector<256x16xf32>
    %260 = vector.extract_strided_slice %228 {offsets = [16, 0], sizes = [240, 16], strides = [1, 1]} : vector<256x16xf32> to vector<240x16xf32>
    %261 = vector.extract_strided_slice %228 {offsets = [0, 0], sizes = [16, 16], strides = [1, 1]} : vector<256x16xf32> to vector<16x16xf32>
    %262 = tpu.concatenate %260, %261 in 0 : vector<240x16xf32>, vector<16x16xf32> -> vector<256x16xf32>
    %263 = vector.broadcast %34 : vector<256x1xf32> to vector<256x16xf32>
    %264 = arith.mulf %262, %263 : vector<256x16xf32>
    %265 = vector.extract_strided_slice %228 {offsets = [17, 0], sizes = [239, 16], strides = [1, 1]} : vector<256x16xf32> to vector<239x16xf32>
    %266 = vector.extract_strided_slice %228 {offsets = [0, 0], sizes = [17, 16], strides = [1, 1]} : vector<256x16xf32> to vector<17x16xf32>
    %267 = tpu.concatenate %265, %266 in 0 : vector<239x16xf32>, vector<17x16xf32> -> vector<256x16xf32>
    %268 = vector.broadcast %37 : vector<256x1xf32> to vector<256x16xf32>
    %269 = arith.mulf %267, %268 : vector<256x16xf32>
    %270 = tpu.concatenate %234, %239, %244, %249, %228, %254, %259, %264, %269 in 1 : vector<256x16xf32>, vector<256x16xf32>, vector<256x16xf32>, vector<256x16xf32>, vector<256x16xf32>, vector<256x16xf32>, vector<256x16xf32>, vector<256x16xf32>, vector<256x16xf32> -> vector<256x144xf32>
    %cst_27 = arith.constant dense<0.000000e+00> : vector<256x4xf32>
    %271 = tpu.matmul %270, %229, %cst_27 {dimension_numbers = #tpu.dot_dimension_numbers<[1], [0], [0], [1], [0, 0, 1, 1], [], []>} : vector<256x144xf32>, vector<144x4xf32>, vector<256x4xf32> -> vector<256x4xf32>
    %272 = tpu.concatenate %210, %271 in 1 : vector<256x12xf32>, vector<256x4xf32> -> vector<256x16xf32>
    %c0_28 = arith.constant 0 : index
    %c0_29 = arith.constant 0 : index
    %273 = vector.load %arg10[%c0_28, %c0_29] : memref<64x256xf32, #tpu.memory_space<vmem>>, vector<64x256xf32>
    %274 = vector.extract_strided_slice %2 {offsets = [4, 0], sizes = [1, 16], strides = [1, 1]} : vector<17x16xf32> to vector<1x16xf32>
    %275 = vector.extract_strided_slice %3 {offsets = [4, 0], sizes = [1, 16], strides = [1, 1]} : vector<17x16xf32> to vector<1x16xf32>
    %276 = vector.broadcast %274 : vector<1x16xf32> to vector<256x16xf32>
    %277 = arith.mulf %272, %276 : vector<256x16xf32>
    %278 = vector.broadcast %275 : vector<1x16xf32> to vector<256x16xf32>
    %279 = arith.addf %277, %278 : vector<256x16xf32>
    %cst_30 = arith.constant 0.000000e+00 : f32
    %280 = vector.broadcast %cst_30 : f32 to vector<256x16xf32>
    %281 = arith.maximumf %279, %280 : vector<256x16xf32>
    %282 = vector.extract_strided_slice %4 {offsets = [0, 0], sizes = [16, 8], strides = [1, 1]} : vector<16x16xf32> to vector<16x8xf32>
    %cst_31 = arith.constant dense<0.000000e+00> : vector<256x8xf32>
    %283 = tpu.matmul %281, %282, %cst_31 {dimension_numbers = #tpu.dot_dimension_numbers<[1], [0], [0], [1], [0, 0, 1, 1], [], []>} : vector<256x16xf32>, vector<16x8xf32>, vector<256x8xf32> -> vector<256x8xf32>
    %cst_32 = arith.constant dense<0.000000e+00> : vector<64x8xf32>
    %284 = tpu.matmul %273, %283, %cst_32 {dimension_numbers = #tpu.dot_dimension_numbers<[1], [0], [0], [1], [0, 0, 1, 1], [], []>} : vector<64x256xf32>, vector<256x8xf32>, vector<64x8xf32> -> vector<64x8xf32>
    %285 = vector.extract_strided_slice %2 {offsets = [5, 0], sizes = [1, 8], strides = [1, 1]} : vector<17x16xf32> to vector<1x8xf32>
    %286 = vector.extract_strided_slice %3 {offsets = [5, 0], sizes = [1, 8], strides = [1, 1]} : vector<17x16xf32> to vector<1x8xf32>
    %287 = vector.broadcast %285 : vector<1x8xf32> to vector<64x8xf32>
    %288 = arith.mulf %284, %287 : vector<64x8xf32>
    %289 = vector.broadcast %286 : vector<1x8xf32> to vector<64x8xf32>
    %290 = arith.addf %288, %289 : vector<64x8xf32>
    %cst_33 = arith.constant 0.000000e+00 : f32
    %291 = vector.broadcast %cst_33 : f32 to vector<64x8xf32>
    %292 = arith.maximumf %290, %291 : vector<64x8xf32>
    %293 = vector.extract_strided_slice %0 {offsets = [32, 0], sizes = [8, 16], strides = [1, 1]} : vector<96x16xf32> to vector<8x16xf32>
    %cst_34 = arith.constant dense<0.000000e+00> : vector<64x16xf32>
    %294 = tpu.matmul %292, %293, %cst_34 {dimension_numbers = #tpu.dot_dimension_numbers<[1], [0], [0], [1], [0, 0, 1, 1], [], []>} : vector<64x8xf32>, vector<8x16xf32>, vector<64x16xf32> -> vector<64x16xf32>
    %295 = vector.extract_strided_slice %2 {offsets = [6, 0], sizes = [1, 16], strides = [1, 1]} : vector<17x16xf32> to vector<1x16xf32>
    %296 = vector.extract_strided_slice %3 {offsets = [6, 0], sizes = [1, 16], strides = [1, 1]} : vector<17x16xf32> to vector<1x16xf32>
    %297 = vector.broadcast %295 : vector<1x16xf32> to vector<64x16xf32>
    %298 = arith.mulf %294, %297 : vector<64x16xf32>
    %299 = vector.broadcast %296 : vector<1x16xf32> to vector<64x16xf32>
    %300 = arith.addf %298, %299 : vector<64x16xf32>
    %cst_35 = arith.constant 0.000000e+00 : f32
    %301 = vector.broadcast %cst_35 : f32 to vector<64x16xf32>
    %302 = arith.maximumf %300, %301 : vector<64x16xf32>
    %303 = vector.extract_strided_slice %1 {offsets = [0, 8], sizes = [144, 4], strides = [1, 1]} : vector<144x24xf32> to vector<144x4xf32>
    %304 = vector.extract_strided_slice %302 {offsets = [55, 0], sizes = [9, 16], strides = [1, 1]} : vector<64x16xf32> to vector<9x16xf32>
    %305 = vector.extract_strided_slice %302 {offsets = [0, 0], sizes = [55, 16], strides = [1, 1]} : vector<64x16xf32> to vector<55x16xf32>
    %306 = tpu.concatenate %304, %305 in 0 : vector<9x16xf32>, vector<55x16xf32> -> vector<64x16xf32>
    %307 = vector.broadcast %53 : vector<64x1xf32> to vector<64x16xf32>
    %308 = arith.mulf %306, %307 : vector<64x16xf32>
    %309 = vector.extract_strided_slice %302 {offsets = [56, 0], sizes = [8, 16], strides = [1, 1]} : vector<64x16xf32> to vector<8x16xf32>
    %310 = vector.extract_strided_slice %302 {offsets = [0, 0], sizes = [56, 16], strides = [1, 1]} : vector<64x16xf32> to vector<56x16xf32>
    %311 = tpu.concatenate %309, %310 in 0 : vector<8x16xf32>, vector<56x16xf32> -> vector<64x16xf32>
    %312 = vector.broadcast %55 : vector<64x1xf32> to vector<64x16xf32>
    %313 = arith.mulf %311, %312 : vector<64x16xf32>
    %314 = vector.extract_strided_slice %302 {offsets = [57, 0], sizes = [7, 16], strides = [1, 1]} : vector<64x16xf32> to vector<7x16xf32>
    %315 = vector.extract_strided_slice %302 {offsets = [0, 0], sizes = [57, 16], strides = [1, 1]} : vector<64x16xf32> to vector<57x16xf32>
    %316 = tpu.concatenate %314, %315 in 0 : vector<7x16xf32>, vector<57x16xf32> -> vector<64x16xf32>
    %317 = vector.broadcast %58 : vector<64x1xf32> to vector<64x16xf32>
    %318 = arith.mulf %316, %317 : vector<64x16xf32>
    %319 = vector.extract_strided_slice %302 {offsets = [63, 0], sizes = [1, 16], strides = [1, 1]} : vector<64x16xf32> to vector<1x16xf32>
    %320 = vector.extract_strided_slice %302 {offsets = [0, 0], sizes = [63, 16], strides = [1, 1]} : vector<64x16xf32> to vector<63x16xf32>
    %321 = tpu.concatenate %319, %320 in 0 : vector<1x16xf32>, vector<63x16xf32> -> vector<64x16xf32>
    %322 = vector.broadcast %60 : vector<64x1xf32> to vector<64x16xf32>
    %323 = arith.mulf %321, %322 : vector<64x16xf32>
    %324 = vector.extract_strided_slice %302 {offsets = [1, 0], sizes = [63, 16], strides = [1, 1]} : vector<64x16xf32> to vector<63x16xf32>
    %325 = vector.extract_strided_slice %302 {offsets = [0, 0], sizes = [1, 16], strides = [1, 1]} : vector<64x16xf32> to vector<1x16xf32>
    %326 = tpu.concatenate %324, %325 in 0 : vector<63x16xf32>, vector<1x16xf32> -> vector<64x16xf32>
    %327 = vector.broadcast %62 : vector<64x1xf32> to vector<64x16xf32>
    %328 = arith.mulf %326, %327 : vector<64x16xf32>
    %329 = vector.extract_strided_slice %302 {offsets = [7, 0], sizes = [57, 16], strides = [1, 1]} : vector<64x16xf32> to vector<57x16xf32>
    %330 = vector.extract_strided_slice %302 {offsets = [0, 0], sizes = [7, 16], strides = [1, 1]} : vector<64x16xf32> to vector<7x16xf32>
    %331 = tpu.concatenate %329, %330 in 0 : vector<57x16xf32>, vector<7x16xf32> -> vector<64x16xf32>
    %332 = vector.broadcast %65 : vector<64x1xf32> to vector<64x16xf32>
    %333 = arith.mulf %331, %332 : vector<64x16xf32>
    %334 = vector.extract_strided_slice %302 {offsets = [8, 0], sizes = [56, 16], strides = [1, 1]} : vector<64x16xf32> to vector<56x16xf32>
    %335 = vector.extract_strided_slice %302 {offsets = [0, 0], sizes = [8, 16], strides = [1, 1]} : vector<64x16xf32> to vector<8x16xf32>
    %336 = tpu.concatenate %334, %335 in 0 : vector<56x16xf32>, vector<8x16xf32> -> vector<64x16xf32>
    %337 = vector.broadcast %67 : vector<64x1xf32> to vector<64x16xf32>
    %338 = arith.mulf %336, %337 : vector<64x16xf32>
    %339 = vector.extract_strided_slice %302 {offsets = [9, 0], sizes = [55, 16], strides = [1, 1]} : vector<64x16xf32> to vector<55x16xf32>
    %340 = vector.extract_strided_slice %302 {offsets = [0, 0], sizes = [9, 16], strides = [1, 1]} : vector<64x16xf32> to vector<9x16xf32>
    %341 = tpu.concatenate %339, %340 in 0 : vector<55x16xf32>, vector<9x16xf32> -> vector<64x16xf32>
    %342 = vector.broadcast %70 : vector<64x1xf32> to vector<64x16xf32>
    %343 = arith.mulf %341, %342 : vector<64x16xf32>
    %344 = tpu.concatenate %308, %313, %318, %323, %302, %328, %333, %338, %343 in 1 : vector<64x16xf32>, vector<64x16xf32>, vector<64x16xf32>, vector<64x16xf32>, vector<64x16xf32>, vector<64x16xf32>, vector<64x16xf32>, vector<64x16xf32>, vector<64x16xf32> -> vector<64x144xf32>
    %cst_36 = arith.constant dense<0.000000e+00> : vector<64x4xf32>
    %345 = tpu.matmul %344, %303, %cst_36 {dimension_numbers = #tpu.dot_dimension_numbers<[1], [0], [0], [1], [0, 0, 1, 1], [], []>} : vector<64x144xf32>, vector<144x4xf32>, vector<64x4xf32> -> vector<64x4xf32>
    %346 = tpu.concatenate %284, %345 in 1 : vector<64x8xf32>, vector<64x4xf32> -> vector<64x12xf32>
    %347 = vector.extract_strided_slice %2 {offsets = [7, 0], sizes = [1, 12], strides = [1, 1]} : vector<17x16xf32> to vector<1x12xf32>
    %348 = vector.extract_strided_slice %3 {offsets = [7, 0], sizes = [1, 12], strides = [1, 1]} : vector<17x16xf32> to vector<1x12xf32>
    %349 = vector.broadcast %347 : vector<1x12xf32> to vector<64x12xf32>
    %350 = arith.mulf %346, %349 : vector<64x12xf32>
    %351 = vector.broadcast %348 : vector<1x12xf32> to vector<64x12xf32>
    %352 = arith.addf %350, %351 : vector<64x12xf32>
    %cst_37 = arith.constant 0.000000e+00 : f32
    %353 = vector.broadcast %cst_37 : f32 to vector<64x12xf32>
    %354 = arith.maximumf %352, %353 : vector<64x12xf32>
    %355 = vector.extract_strided_slice %0 {offsets = [48, 0], sizes = [12, 16], strides = [1, 1]} : vector<96x16xf32> to vector<12x16xf32>
    %cst_38 = arith.constant dense<0.000000e+00> : vector<64x16xf32>
    %356 = tpu.matmul %354, %355, %cst_38 {dimension_numbers = #tpu.dot_dimension_numbers<[1], [0], [0], [1], [0, 0, 1, 1], [], []>} : vector<64x12xf32>, vector<12x16xf32>, vector<64x16xf32> -> vector<64x16xf32>
    %357 = vector.extract_strided_slice %2 {offsets = [8, 0], sizes = [1, 16], strides = [1, 1]} : vector<17x16xf32> to vector<1x16xf32>
    %358 = vector.extract_strided_slice %3 {offsets = [8, 0], sizes = [1, 16], strides = [1, 1]} : vector<17x16xf32> to vector<1x16xf32>
    %359 = vector.broadcast %357 : vector<1x16xf32> to vector<64x16xf32>
    %360 = arith.mulf %356, %359 : vector<64x16xf32>
    %361 = vector.broadcast %358 : vector<1x16xf32> to vector<64x16xf32>
    %362 = arith.addf %360, %361 : vector<64x16xf32>
    %cst_39 = arith.constant 0.000000e+00 : f32
    %363 = vector.broadcast %cst_39 : f32 to vector<64x16xf32>
    %364 = arith.maximumf %362, %363 : vector<64x16xf32>
    %365 = vector.extract_strided_slice %1 {offsets = [0, 12], sizes = [144, 4], strides = [1, 1]} : vector<144x24xf32> to vector<144x4xf32>
    %366 = vector.extract_strided_slice %364 {offsets = [55, 0], sizes = [9, 16], strides = [1, 1]} : vector<64x16xf32> to vector<9x16xf32>
    %367 = vector.extract_strided_slice %364 {offsets = [0, 0], sizes = [55, 16], strides = [1, 1]} : vector<64x16xf32> to vector<55x16xf32>
    %368 = tpu.concatenate %366, %367 in 0 : vector<9x16xf32>, vector<55x16xf32> -> vector<64x16xf32>
    %369 = vector.broadcast %53 : vector<64x1xf32> to vector<64x16xf32>
    %370 = arith.mulf %368, %369 : vector<64x16xf32>
    %371 = vector.extract_strided_slice %364 {offsets = [56, 0], sizes = [8, 16], strides = [1, 1]} : vector<64x16xf32> to vector<8x16xf32>
    %372 = vector.extract_strided_slice %364 {offsets = [0, 0], sizes = [56, 16], strides = [1, 1]} : vector<64x16xf32> to vector<56x16xf32>
    %373 = tpu.concatenate %371, %372 in 0 : vector<8x16xf32>, vector<56x16xf32> -> vector<64x16xf32>
    %374 = vector.broadcast %55 : vector<64x1xf32> to vector<64x16xf32>
    %375 = arith.mulf %373, %374 : vector<64x16xf32>
    %376 = vector.extract_strided_slice %364 {offsets = [57, 0], sizes = [7, 16], strides = [1, 1]} : vector<64x16xf32> to vector<7x16xf32>
    %377 = vector.extract_strided_slice %364 {offsets = [0, 0], sizes = [57, 16], strides = [1, 1]} : vector<64x16xf32> to vector<57x16xf32>
    %378 = tpu.concatenate %376, %377 in 0 : vector<7x16xf32>, vector<57x16xf32> -> vector<64x16xf32>
    %379 = vector.broadcast %58 : vector<64x1xf32> to vector<64x16xf32>
    %380 = arith.mulf %378, %379 : vector<64x16xf32>
    %381 = vector.extract_strided_slice %364 {offsets = [63, 0], sizes = [1, 16], strides = [1, 1]} : vector<64x16xf32> to vector<1x16xf32>
    %382 = vector.extract_strided_slice %364 {offsets = [0, 0], sizes = [63, 16], strides = [1, 1]} : vector<64x16xf32> to vector<63x16xf32>
    %383 = tpu.concatenate %381, %382 in 0 : vector<1x16xf32>, vector<63x16xf32> -> vector<64x16xf32>
    %384 = vector.broadcast %60 : vector<64x1xf32> to vector<64x16xf32>
    %385 = arith.mulf %383, %384 : vector<64x16xf32>
    %386 = vector.extract_strided_slice %364 {offsets = [1, 0], sizes = [63, 16], strides = [1, 1]} : vector<64x16xf32> to vector<63x16xf32>
    %387 = vector.extract_strided_slice %364 {offsets = [0, 0], sizes = [1, 16], strides = [1, 1]} : vector<64x16xf32> to vector<1x16xf32>
    %388 = tpu.concatenate %386, %387 in 0 : vector<63x16xf32>, vector<1x16xf32> -> vector<64x16xf32>
    %389 = vector.broadcast %62 : vector<64x1xf32> to vector<64x16xf32>
    %390 = arith.mulf %388, %389 : vector<64x16xf32>
    %391 = vector.extract_strided_slice %364 {offsets = [7, 0], sizes = [57, 16], strides = [1, 1]} : vector<64x16xf32> to vector<57x16xf32>
    %392 = vector.extract_strided_slice %364 {offsets = [0, 0], sizes = [7, 16], strides = [1, 1]} : vector<64x16xf32> to vector<7x16xf32>
    %393 = tpu.concatenate %391, %392 in 0 : vector<57x16xf32>, vector<7x16xf32> -> vector<64x16xf32>
    %394 = vector.broadcast %65 : vector<64x1xf32> to vector<64x16xf32>
    %395 = arith.mulf %393, %394 : vector<64x16xf32>
    %396 = vector.extract_strided_slice %364 {offsets = [8, 0], sizes = [56, 16], strides = [1, 1]} : vector<64x16xf32> to vector<56x16xf32>
    %397 = vector.extract_strided_slice %364 {offsets = [0, 0], sizes = [8, 16], strides = [1, 1]} : vector<64x16xf32> to vector<8x16xf32>
    %398 = tpu.concatenate %396, %397 in 0 : vector<56x16xf32>, vector<8x16xf32> -> vector<64x16xf32>
    %399 = vector.broadcast %67 : vector<64x1xf32> to vector<64x16xf32>
    %400 = arith.mulf %398, %399 : vector<64x16xf32>
    %401 = vector.extract_strided_slice %364 {offsets = [9, 0], sizes = [55, 16], strides = [1, 1]} : vector<64x16xf32> to vector<55x16xf32>
    %402 = vector.extract_strided_slice %364 {offsets = [0, 0], sizes = [9, 16], strides = [1, 1]} : vector<64x16xf32> to vector<9x16xf32>
    %403 = tpu.concatenate %401, %402 in 0 : vector<55x16xf32>, vector<9x16xf32> -> vector<64x16xf32>
    %404 = vector.broadcast %70 : vector<64x1xf32> to vector<64x16xf32>
    %405 = arith.mulf %403, %404 : vector<64x16xf32>
    %406 = tpu.concatenate %370, %375, %380, %385, %364, %390, %395, %400, %405 in 1 : vector<64x16xf32>, vector<64x16xf32>, vector<64x16xf32>, vector<64x16xf32>, vector<64x16xf32>, vector<64x16xf32>, vector<64x16xf32>, vector<64x16xf32>, vector<64x16xf32> -> vector<64x144xf32>
    %cst_40 = arith.constant dense<0.000000e+00> : vector<64x4xf32>
    %407 = tpu.matmul %406, %365, %cst_40 {dimension_numbers = #tpu.dot_dimension_numbers<[1], [0], [0], [1], [0, 0, 1, 1], [], []>} : vector<64x144xf32>, vector<144x4xf32>, vector<64x4xf32> -> vector<64x4xf32>
    %408 = tpu.concatenate %346, %407 in 1 : vector<64x12xf32>, vector<64x4xf32> -> vector<64x16xf32>
    %c0_41 = arith.constant 0 : index
    %c0_42 = arith.constant 0 : index
    %409 = vector.load %arg11[%c0_41, %c0_42] : memref<16x64xf32, #tpu.memory_space<vmem>>, vector<16x64xf32>
    %410 = vector.extract_strided_slice %2 {offsets = [9, 0], sizes = [1, 16], strides = [1, 1]} : vector<17x16xf32> to vector<1x16xf32>
    %411 = vector.extract_strided_slice %3 {offsets = [9, 0], sizes = [1, 16], strides = [1, 1]} : vector<17x16xf32> to vector<1x16xf32>
    %412 = vector.broadcast %410 : vector<1x16xf32> to vector<64x16xf32>
    %413 = arith.mulf %408, %412 : vector<64x16xf32>
    %414 = vector.broadcast %411 : vector<1x16xf32> to vector<64x16xf32>
    %415 = arith.addf %413, %414 : vector<64x16xf32>
    %cst_43 = arith.constant 0.000000e+00 : f32
    %416 = vector.broadcast %cst_43 : f32 to vector<64x16xf32>
    %417 = arith.maximumf %415, %416 : vector<64x16xf32>
    %418 = vector.extract_strided_slice %4 {offsets = [0, 8], sizes = [16, 8], strides = [1, 1]} : vector<16x16xf32> to vector<16x8xf32>
    %cst_44 = arith.constant dense<0.000000e+00> : vector<64x8xf32>
    %419 = tpu.matmul %417, %418, %cst_44 {dimension_numbers = #tpu.dot_dimension_numbers<[1], [0], [0], [1], [0, 0, 1, 1], [], []>} : vector<64x16xf32>, vector<16x8xf32>, vector<64x8xf32> -> vector<64x8xf32>
    %cst_45 = arith.constant dense<0.000000e+00> : vector<16x8xf32>
    %420 = tpu.matmul %409, %419, %cst_45 {dimension_numbers = #tpu.dot_dimension_numbers<[1], [0], [0], [1], [0, 0, 1, 1], [], []>} : vector<16x64xf32>, vector<64x8xf32>, vector<16x8xf32> -> vector<16x8xf32>
    %421 = vector.extract_strided_slice %2 {offsets = [10, 0], sizes = [1, 8], strides = [1, 1]} : vector<17x16xf32> to vector<1x8xf32>
    %422 = vector.extract_strided_slice %3 {offsets = [10, 0], sizes = [1, 8], strides = [1, 1]} : vector<17x16xf32> to vector<1x8xf32>
    %423 = vector.broadcast %421 : vector<1x8xf32> to vector<16x8xf32>
    %424 = arith.mulf %420, %423 : vector<16x8xf32>
    %425 = vector.broadcast %422 : vector<1x8xf32> to vector<16x8xf32>
    %426 = arith.addf %424, %425 : vector<16x8xf32>
    %cst_46 = arith.constant 0.000000e+00 : f32
    %427 = vector.broadcast %cst_46 : f32 to vector<16x8xf32>
    %428 = arith.maximumf %426, %427 : vector<16x8xf32>
    %429 = vector.extract_strided_slice %0 {offsets = [64, 0], sizes = [8, 16], strides = [1, 1]} : vector<96x16xf32> to vector<8x16xf32>
    %cst_47 = arith.constant dense<0.000000e+00> : vector<16x16xf32>
    %430 = tpu.matmul %428, %429, %cst_47 {dimension_numbers = #tpu.dot_dimension_numbers<[1], [0], [0], [1], [0, 0, 1, 1], [], []>} : vector<16x8xf32>, vector<8x16xf32>, vector<16x16xf32> -> vector<16x16xf32>
    %431 = vector.extract_strided_slice %2 {offsets = [11, 0], sizes = [1, 16], strides = [1, 1]} : vector<17x16xf32> to vector<1x16xf32>
    %432 = vector.extract_strided_slice %3 {offsets = [11, 0], sizes = [1, 16], strides = [1, 1]} : vector<17x16xf32> to vector<1x16xf32>
    %433 = vector.broadcast %431 : vector<1x16xf32> to vector<16x16xf32>
    %434 = arith.mulf %430, %433 : vector<16x16xf32>
    %435 = vector.broadcast %432 : vector<1x16xf32> to vector<16x16xf32>
    %436 = arith.addf %434, %435 : vector<16x16xf32>
    %cst_48 = arith.constant 0.000000e+00 : f32
    %437 = vector.broadcast %cst_48 : f32 to vector<16x16xf32>
    %438 = arith.maximumf %436, %437 : vector<16x16xf32>
    %439 = vector.extract_strided_slice %1 {offsets = [0, 16], sizes = [144, 4], strides = [1, 1]} : vector<144x24xf32> to vector<144x4xf32>
    %440 = vector.extract_strided_slice %438 {offsets = [11, 0], sizes = [5, 16], strides = [1, 1]} : vector<16x16xf32> to vector<5x16xf32>
    %441 = vector.extract_strided_slice %438 {offsets = [0, 0], sizes = [11, 16], strides = [1, 1]} : vector<16x16xf32> to vector<11x16xf32>
    %442 = tpu.concatenate %440, %441 in 0 : vector<5x16xf32>, vector<11x16xf32> -> vector<16x16xf32>
    %443 = vector.broadcast %86 : vector<16x1xf32> to vector<16x16xf32>
    %444 = arith.mulf %442, %443 : vector<16x16xf32>
    %445 = vector.extract_strided_slice %438 {offsets = [12, 0], sizes = [4, 16], strides = [1, 1]} : vector<16x16xf32> to vector<4x16xf32>
    %446 = vector.extract_strided_slice %438 {offsets = [0, 0], sizes = [12, 16], strides = [1, 1]} : vector<16x16xf32> to vector<12x16xf32>
    %447 = tpu.concatenate %445, %446 in 0 : vector<4x16xf32>, vector<12x16xf32> -> vector<16x16xf32>
    %448 = vector.broadcast %88 : vector<16x1xf32> to vector<16x16xf32>
    %449 = arith.mulf %447, %448 : vector<16x16xf32>
    %450 = vector.extract_strided_slice %438 {offsets = [13, 0], sizes = [3, 16], strides = [1, 1]} : vector<16x16xf32> to vector<3x16xf32>
    %451 = vector.extract_strided_slice %438 {offsets = [0, 0], sizes = [13, 16], strides = [1, 1]} : vector<16x16xf32> to vector<13x16xf32>
    %452 = tpu.concatenate %450, %451 in 0 : vector<3x16xf32>, vector<13x16xf32> -> vector<16x16xf32>
    %453 = vector.broadcast %91 : vector<16x1xf32> to vector<16x16xf32>
    %454 = arith.mulf %452, %453 : vector<16x16xf32>
    %455 = vector.extract_strided_slice %438 {offsets = [15, 0], sizes = [1, 16], strides = [1, 1]} : vector<16x16xf32> to vector<1x16xf32>
    %456 = vector.extract_strided_slice %438 {offsets = [0, 0], sizes = [15, 16], strides = [1, 1]} : vector<16x16xf32> to vector<15x16xf32>
    %457 = tpu.concatenate %455, %456 in 0 : vector<1x16xf32>, vector<15x16xf32> -> vector<16x16xf32>
    %458 = vector.broadcast %93 : vector<16x1xf32> to vector<16x16xf32>
    %459 = arith.mulf %457, %458 : vector<16x16xf32>
    %460 = vector.extract_strided_slice %438 {offsets = [1, 0], sizes = [15, 16], strides = [1, 1]} : vector<16x16xf32> to vector<15x16xf32>
    %461 = vector.extract_strided_slice %438 {offsets = [0, 0], sizes = [1, 16], strides = [1, 1]} : vector<16x16xf32> to vector<1x16xf32>
    %462 = tpu.concatenate %460, %461 in 0 : vector<15x16xf32>, vector<1x16xf32> -> vector<16x16xf32>
    %463 = vector.broadcast %95 : vector<16x1xf32> to vector<16x16xf32>
    %464 = arith.mulf %462, %463 : vector<16x16xf32>
    %465 = vector.extract_strided_slice %438 {offsets = [3, 0], sizes = [13, 16], strides = [1, 1]} : vector<16x16xf32> to vector<13x16xf32>
    %466 = vector.extract_strided_slice %438 {offsets = [0, 0], sizes = [3, 16], strides = [1, 1]} : vector<16x16xf32> to vector<3x16xf32>
    %467 = tpu.concatenate %465, %466 in 0 : vector<13x16xf32>, vector<3x16xf32> -> vector<16x16xf32>
    %468 = vector.broadcast %98 : vector<16x1xf32> to vector<16x16xf32>
    %469 = arith.mulf %467, %468 : vector<16x16xf32>
    %470 = vector.extract_strided_slice %438 {offsets = [4, 0], sizes = [12, 16], strides = [1, 1]} : vector<16x16xf32> to vector<12x16xf32>
    %471 = vector.extract_strided_slice %438 {offsets = [0, 0], sizes = [4, 16], strides = [1, 1]} : vector<16x16xf32> to vector<4x16xf32>
    %472 = tpu.concatenate %470, %471 in 0 : vector<12x16xf32>, vector<4x16xf32> -> vector<16x16xf32>
    %473 = vector.broadcast %100 : vector<16x1xf32> to vector<16x16xf32>
    %474 = arith.mulf %472, %473 : vector<16x16xf32>
    %475 = vector.extract_strided_slice %438 {offsets = [5, 0], sizes = [11, 16], strides = [1, 1]} : vector<16x16xf32> to vector<11x16xf32>
    %476 = vector.extract_strided_slice %438 {offsets = [0, 0], sizes = [5, 16], strides = [1, 1]} : vector<16x16xf32> to vector<5x16xf32>
    %477 = tpu.concatenate %475, %476 in 0 : vector<11x16xf32>, vector<5x16xf32> -> vector<16x16xf32>
    %478 = vector.broadcast %103 : vector<16x1xf32> to vector<16x16xf32>
    %479 = arith.mulf %477, %478 : vector<16x16xf32>
    %480 = tpu.concatenate %444, %449, %454, %459, %438, %464, %469, %474, %479 in 1 : vector<16x16xf32>, vector<16x16xf32>, vector<16x16xf32>, vector<16x16xf32>, vector<16x16xf32>, vector<16x16xf32>, vector<16x16xf32>, vector<16x16xf32>, vector<16x16xf32> -> vector<16x144xf32>
    %cst_49 = arith.constant dense<0.000000e+00> : vector<16x4xf32>
    %481 = tpu.matmul %480, %439, %cst_49 {dimension_numbers = #tpu.dot_dimension_numbers<[1], [0], [0], [1], [0, 0, 1, 1], [], []>} : vector<16x144xf32>, vector<144x4xf32>, vector<16x4xf32> -> vector<16x4xf32>
    %482 = tpu.concatenate %420, %481 in 1 : vector<16x8xf32>, vector<16x4xf32> -> vector<16x12xf32>
    %483 = vector.extract_strided_slice %2 {offsets = [12, 0], sizes = [1, 12], strides = [1, 1]} : vector<17x16xf32> to vector<1x12xf32>
    %484 = vector.extract_strided_slice %3 {offsets = [12, 0], sizes = [1, 12], strides = [1, 1]} : vector<17x16xf32> to vector<1x12xf32>
    %485 = vector.broadcast %483 : vector<1x12xf32> to vector<16x12xf32>
    %486 = arith.mulf %482, %485 : vector<16x12xf32>
    %487 = vector.broadcast %484 : vector<1x12xf32> to vector<16x12xf32>
    %488 = arith.addf %486, %487 : vector<16x12xf32>
    %cst_50 = arith.constant 0.000000e+00 : f32
    %489 = vector.broadcast %cst_50 : f32 to vector<16x12xf32>
    %490 = arith.maximumf %488, %489 : vector<16x12xf32>
    %491 = vector.extract_strided_slice %0 {offsets = [80, 0], sizes = [12, 16], strides = [1, 1]} : vector<96x16xf32> to vector<12x16xf32>
    %cst_51 = arith.constant dense<0.000000e+00> : vector<16x16xf32>
    %492 = tpu.matmul %490, %491, %cst_51 {dimension_numbers = #tpu.dot_dimension_numbers<[1], [0], [0], [1], [0, 0, 1, 1], [], []>} : vector<16x12xf32>, vector<12x16xf32>, vector<16x16xf32> -> vector<16x16xf32>
    %493 = vector.extract_strided_slice %2 {offsets = [13, 0], sizes = [1, 16], strides = [1, 1]} : vector<17x16xf32> to vector<1x16xf32>
    %494 = vector.extract_strided_slice %3 {offsets = [13, 0], sizes = [1, 16], strides = [1, 1]} : vector<17x16xf32> to vector<1x16xf32>
    %495 = vector.broadcast %493 : vector<1x16xf32> to vector<16x16xf32>
    %496 = arith.mulf %492, %495 : vector<16x16xf32>
    %497 = vector.broadcast %494 : vector<1x16xf32> to vector<16x16xf32>
    %498 = arith.addf %496, %497 : vector<16x16xf32>
    %cst_52 = arith.constant 0.000000e+00 : f32
    %499 = vector.broadcast %cst_52 : f32 to vector<16x16xf32>
    %500 = arith.maximumf %498, %499 : vector<16x16xf32>
    %501 = vector.extract_strided_slice %1 {offsets = [0, 20], sizes = [144, 4], strides = [1, 1]} : vector<144x24xf32> to vector<144x4xf32>
    %502 = vector.extract_strided_slice %500 {offsets = [11, 0], sizes = [5, 16], strides = [1, 1]} : vector<16x16xf32> to vector<5x16xf32>
    %503 = vector.extract_strided_slice %500 {offsets = [0, 0], sizes = [11, 16], strides = [1, 1]} : vector<16x16xf32> to vector<11x16xf32>
    %504 = tpu.concatenate %502, %503 in 0 : vector<5x16xf32>, vector<11x16xf32> -> vector<16x16xf32>
    %505 = vector.broadcast %86 : vector<16x1xf32> to vector<16x16xf32>
    %506 = arith.mulf %504, %505 : vector<16x16xf32>
    %507 = vector.extract_strided_slice %500 {offsets = [12, 0], sizes = [4, 16], strides = [1, 1]} : vector<16x16xf32> to vector<4x16xf32>
    %508 = vector.extract_strided_slice %500 {offsets = [0, 0], sizes = [12, 16], strides = [1, 1]} : vector<16x16xf32> to vector<12x16xf32>
    %509 = tpu.concatenate %507, %508 in 0 : vector<4x16xf32>, vector<12x16xf32> -> vector<16x16xf32>
    %510 = vector.broadcast %88 : vector<16x1xf32> to vector<16x16xf32>
    %511 = arith.mulf %509, %510 : vector<16x16xf32>
    %512 = vector.extract_strided_slice %500 {offsets = [13, 0], sizes = [3, 16], strides = [1, 1]} : vector<16x16xf32> to vector<3x16xf32>
    %513 = vector.extract_strided_slice %500 {offsets = [0, 0], sizes = [13, 16], strides = [1, 1]} : vector<16x16xf32> to vector<13x16xf32>
    %514 = tpu.concatenate %512, %513 in 0 : vector<3x16xf32>, vector<13x16xf32> -> vector<16x16xf32>
    %515 = vector.broadcast %91 : vector<16x1xf32> to vector<16x16xf32>
    %516 = arith.mulf %514, %515 : vector<16x16xf32>
    %517 = vector.extract_strided_slice %500 {offsets = [15, 0], sizes = [1, 16], strides = [1, 1]} : vector<16x16xf32> to vector<1x16xf32>
    %518 = vector.extract_strided_slice %500 {offsets = [0, 0], sizes = [15, 16], strides = [1, 1]} : vector<16x16xf32> to vector<15x16xf32>
    %519 = tpu.concatenate %517, %518 in 0 : vector<1x16xf32>, vector<15x16xf32> -> vector<16x16xf32>
    %520 = vector.broadcast %93 : vector<16x1xf32> to vector<16x16xf32>
    %521 = arith.mulf %519, %520 : vector<16x16xf32>
    %522 = vector.extract_strided_slice %500 {offsets = [1, 0], sizes = [15, 16], strides = [1, 1]} : vector<16x16xf32> to vector<15x16xf32>
    %523 = vector.extract_strided_slice %500 {offsets = [0, 0], sizes = [1, 16], strides = [1, 1]} : vector<16x16xf32> to vector<1x16xf32>
    %524 = tpu.concatenate %522, %523 in 0 : vector<15x16xf32>, vector<1x16xf32> -> vector<16x16xf32>
    %525 = vector.broadcast %95 : vector<16x1xf32> to vector<16x16xf32>
    %526 = arith.mulf %524, %525 : vector<16x16xf32>
    %527 = vector.extract_strided_slice %500 {offsets = [3, 0], sizes = [13, 16], strides = [1, 1]} : vector<16x16xf32> to vector<13x16xf32>
    %528 = vector.extract_strided_slice %500 {offsets = [0, 0], sizes = [3, 16], strides = [1, 1]} : vector<16x16xf32> to vector<3x16xf32>
    %529 = tpu.concatenate %527, %528 in 0 : vector<13x16xf32>, vector<3x16xf32> -> vector<16x16xf32>
    %530 = vector.broadcast %98 : vector<16x1xf32> to vector<16x16xf32>
    %531 = arith.mulf %529, %530 : vector<16x16xf32>
    %532 = vector.extract_strided_slice %500 {offsets = [4, 0], sizes = [12, 16], strides = [1, 1]} : vector<16x16xf32> to vector<12x16xf32>
    %533 = vector.extract_strided_slice %500 {offsets = [0, 0], sizes = [4, 16], strides = [1, 1]} : vector<16x16xf32> to vector<4x16xf32>
    %534 = tpu.concatenate %532, %533 in 0 : vector<12x16xf32>, vector<4x16xf32> -> vector<16x16xf32>
    %535 = vector.broadcast %100 : vector<16x1xf32> to vector<16x16xf32>
    %536 = arith.mulf %534, %535 : vector<16x16xf32>
    %537 = vector.extract_strided_slice %500 {offsets = [5, 0], sizes = [11, 16], strides = [1, 1]} : vector<16x16xf32> to vector<11x16xf32>
    %538 = vector.extract_strided_slice %500 {offsets = [0, 0], sizes = [5, 16], strides = [1, 1]} : vector<16x16xf32> to vector<5x16xf32>
    %539 = tpu.concatenate %537, %538 in 0 : vector<11x16xf32>, vector<5x16xf32> -> vector<16x16xf32>
    %540 = vector.broadcast %103 : vector<16x1xf32> to vector<16x16xf32>
    %541 = arith.mulf %539, %540 : vector<16x16xf32>
    %542 = tpu.concatenate %506, %511, %516, %521, %500, %526, %531, %536, %541 in 1 : vector<16x16xf32>, vector<16x16xf32>, vector<16x16xf32>, vector<16x16xf32>, vector<16x16xf32>, vector<16x16xf32>, vector<16x16xf32>, vector<16x16xf32>, vector<16x16xf32> -> vector<16x144xf32>
    %cst_53 = arith.constant dense<0.000000e+00> : vector<16x4xf32>
    %543 = tpu.matmul %542, %501, %cst_53 {dimension_numbers = #tpu.dot_dimension_numbers<[1], [0], [0], [1], [0, 0, 1, 1], [], []>} : vector<16x144xf32>, vector<144x4xf32>, vector<16x4xf32> -> vector<16x4xf32>
    %544 = tpu.concatenate %482, %543 in 1 : vector<16x12xf32>, vector<16x4xf32> -> vector<16x16xf32>
    %545 = vector.extract_strided_slice %2 {offsets = [14, 0], sizes = [1, 16], strides = [1, 1]} : vector<17x16xf32> to vector<1x16xf32>
    %546 = vector.extract_strided_slice %3 {offsets = [14, 0], sizes = [1, 16], strides = [1, 1]} : vector<17x16xf32> to vector<1x16xf32>
    %547 = vector.broadcast %545 : vector<1x16xf32> to vector<16x16xf32>
    %548 = arith.mulf %544, %547 : vector<16x16xf32>
    %549 = vector.broadcast %546 : vector<1x16xf32> to vector<16x16xf32>
    %550 = arith.addf %548, %549 : vector<16x16xf32>
    %cst_54 = arith.constant 0.000000e+00 : f32
    %551 = vector.broadcast %cst_54 : f32 to vector<16x16xf32>
    %552 = arith.maximumf %550, %551 : vector<16x16xf32>
    %cst_55 = arith.constant dense<0.000000e+00> : vector<16xf32>
    %553 = vector.multi_reduction <add>, %552, %cst_55 [0] : vector<16x16xf32> to vector<16xf32>
    %554 = vector.shape_cast %553 : vector<16xf32> to vector<1x16xf32>
    %cst_56 = arith.constant 6.250000e-02 : f32
    %555 = vector.broadcast %cst_56 : f32 to vector<1x16xf32>
    %556 = arith.mulf %554, %555 : vector<1x16xf32>
    %557 = vector.extract_strided_slice %2 {offsets = [15, 0], sizes = [1, 16], strides = [1, 1]} : vector<17x16xf32> to vector<1x16xf32>
    %558 = vector.extract_strided_slice %3 {offsets = [15, 0], sizes = [1, 16], strides = [1, 1]} : vector<17x16xf32> to vector<1x16xf32>
    %559 = vector.broadcast %557 : vector<1x16xf32> to vector<16x16xf32>
    %560 = arith.mulf %544, %559 : vector<16x16xf32>
    %561 = vector.broadcast %558 : vector<1x16xf32> to vector<16x16xf32>
    %562 = arith.addf %560, %561 : vector<16x16xf32>
    %cst_57 = arith.constant 0.000000e+00 : f32
    %563 = vector.broadcast %cst_57 : f32 to vector<16x16xf32>
    %564 = arith.maximumf %562, %563 : vector<16x16xf32>
    %cst_58 = arith.constant dense<0.000000e+00> : vector<16xf32>
    %565 = vector.multi_reduction <add>, %564, %cst_58 [0] : vector<16x16xf32> to vector<16xf32>
    %566 = vector.shape_cast %565 : vector<16xf32> to vector<1x16xf32>
    %cst_59 = arith.constant 6.250000e-02 : f32
    %567 = vector.broadcast %cst_59 : f32 to vector<1x16xf32>
    %568 = arith.mulf %566, %567 : vector<1x16xf32>
    %569 = vector.extract_strided_slice %2 {offsets = [16, 0], sizes = [1, 16], strides = [1, 1]} : vector<17x16xf32> to vector<1x16xf32>
    %570 = vector.extract_strided_slice %3 {offsets = [16, 0], sizes = [1, 16], strides = [1, 1]} : vector<17x16xf32> to vector<1x16xf32>
    %571 = vector.broadcast %569 : vector<1x16xf32> to vector<16x16xf32>
    %572 = arith.mulf %544, %571 : vector<16x16xf32>
    %573 = vector.broadcast %570 : vector<1x16xf32> to vector<16x16xf32>
    %574 = arith.addf %572, %573 : vector<16x16xf32>
    %cst_60 = arith.constant 0.000000e+00 : f32
    %575 = vector.broadcast %cst_60 : f32 to vector<16x16xf32>
    %576 = arith.maximumf %574, %575 : vector<16x16xf32>
    %cst_61 = arith.constant dense<0.000000e+00> : vector<16xf32>
    %577 = vector.multi_reduction <add>, %576, %cst_61 [0] : vector<16x16xf32> to vector<16xf32>
    %578 = vector.shape_cast %577 : vector<16xf32> to vector<1x16xf32>
    %cst_62 = arith.constant 6.250000e-02 : f32
    %579 = vector.broadcast %cst_62 : f32 to vector<1x16xf32>
    %580 = arith.mulf %578, %579 : vector<1x16xf32>
    %cst_63 = arith.constant dense<0.000000e+00> : vector<16xf32>
    %581 = vector.multi_reduction <add>, %544, %cst_63 [0] : vector<16x16xf32> to vector<16xf32>
    %582 = vector.shape_cast %581 : vector<16xf32> to vector<1x16xf32>
    %cst_64 = arith.constant 6.250000e-02 : f32
    %583 = vector.broadcast %cst_64 : f32 to vector<1x16xf32>
    %584 = arith.mulf %582, %583 : vector<1x16xf32>
    %585 = tpu.concatenate %556, %568, %580, %584 in 1 : vector<1x16xf32>, vector<1x16xf32>, vector<1x16xf32>, vector<1x16xf32> -> vector<1x64xf32>
    %c0_65 = arith.constant 0 : index
    %c0_66 = arith.constant 0 : index
    %586 = vector.load %arg8[%c0_65, %c0_66] : memref<64x52xf32, #tpu.memory_space<vmem>>, vector<64x52xf32>
    %cst_67 = arith.constant dense<0.000000e+00> : vector<1x52xf32>
    %587 = tpu.matmul %585, %586, %cst_67 {dimension_numbers = #tpu.dot_dimension_numbers<[1], [0], [0], [1], [0, 0, 1, 1], [], []>} : vector<1x64xf32>, vector<64x52xf32>, vector<1x52xf32> -> vector<1x52xf32>
    %c0_68 = arith.constant 0 : index
    %c0_69 = arith.constant 0 : index
    %588 = vector.load %arg9[%c0_68, %c0_69] : memref<1x52xf32, #tpu.memory_space<vmem>>, vector<1x52xf32>
    %589 = arith.addf %587, %588 : vector<1x52xf32>
    %590 = vector.extract_strided_slice %589 {offsets = [0, 0], sizes = [1, 2], strides = [1, 1]} : vector<1x52xf32> to vector<1x2xf32>
    %591 = vector.extract_strided_slice %589 {offsets = [0, 14], sizes = [1, 2], strides = [1, 1]} : vector<1x52xf32> to vector<1x2xf32>
    %592 = vector.extract_strided_slice %589 {offsets = [0, 28], sizes = [1, 2], strides = [1, 1]} : vector<1x52xf32> to vector<1x2xf32>
    %593 = tpu.concatenate %590, %591, %592 in 0 : vector<1x2xf32>, vector<1x2xf32>, vector<1x2xf32> -> vector<3x2xf32>
    %594 = vector.extract_strided_slice %589 {offsets = [0, 2], sizes = [1, 2], strides = [1, 1]} : vector<1x52xf32> to vector<1x2xf32>
    %595 = vector.extract_strided_slice %589 {offsets = [0, 16], sizes = [1, 2], strides = [1, 1]} : vector<1x52xf32> to vector<1x2xf32>
    %596 = vector.extract_strided_slice %589 {offsets = [0, 30], sizes = [1, 2], strides = [1, 1]} : vector<1x52xf32> to vector<1x2xf32>
    %597 = tpu.concatenate %594, %595, %596 in 0 : vector<1x2xf32>, vector<1x2xf32>, vector<1x2xf32> -> vector<3x2xf32>
    %598 = vector.extract_strided_slice %589 {offsets = [0, 4], sizes = [1, 10], strides = [1, 1]} : vector<1x52xf32> to vector<1x10xf32>
    %599 = vector.extract_strided_slice %589 {offsets = [0, 18], sizes = [1, 10], strides = [1, 1]} : vector<1x52xf32> to vector<1x10xf32>
    %600 = vector.extract_strided_slice %589 {offsets = [0, 32], sizes = [1, 10], strides = [1, 1]} : vector<1x52xf32> to vector<1x10xf32>
    %601 = tpu.concatenate %598, %599, %600 in 0 : vector<1x10xf32>, vector<1x10xf32>, vector<1x10xf32> -> vector<3x10xf32>
    %602 = vector.extract_strided_slice %589 {offsets = [0, 42], sizes = [1, 10], strides = [1, 1]} : vector<1x52xf32> to vector<1x10xf32>
    %cst_70 = arith.constant dense<0.000000e+00> : vector<3x3xf32>
    %603 = tpu.matmul %593, %597, %cst_70 {dimension_numbers = #tpu.dot_dimension_numbers<[1], [1], [0], [0], [0, 0, 1, 0], [], []>} : vector<3x2xf32>, vector<3x2xf32>, vector<3x3xf32> -> vector<3x3xf32>
    %cst_71 = arith.constant dense<0xFF800000> : vector<3xf32>
    %604 = vector.multi_reduction <maximumf>, %603, %cst_71 [1] : vector<3x3xf32> to vector<3xf32>
    %605 = vector.shape_cast %604 : vector<3xf32> to vector<3x1xf32>
    %606 = vector.broadcast %605 : vector<3x1xf32> to vector<3x3xf32>
    %607 = arith.subf %603, %606 : vector<3x3xf32>
    %608 = math.exp %607 : vector<3x3xf32>
    %cst_72 = arith.constant dense<0.000000e+00> : vector<3xf32>
    %609 = vector.multi_reduction <add>, %608, %cst_72 [1] : vector<3x3xf32> to vector<3xf32>
    %610 = vector.shape_cast %609 : vector<3xf32> to vector<3x1xf32>
    %611 = vector.broadcast %610 : vector<3x1xf32> to vector<3x3xf32>
    %612 = arith.divf %608, %611 : vector<3x3xf32>
    %cst_73 = arith.constant dense<0.000000e+00> : vector<3x10xf32>
    %613 = tpu.matmul %612, %601, %cst_73 {dimension_numbers = #tpu.dot_dimension_numbers<[1], [0], [0], [1], [0, 0, 1, 1], [], []>} : vector<3x3xf32>, vector<3x10xf32>, vector<3x10xf32> -> vector<3x10xf32>
    %cst_74 = arith.constant 0.000000e+00 : f32
    %614 = vector.broadcast %cst_74 : f32 to vector<1x10xf32>
    %615 = tpu.concatenate %601, %613, %602, %614 in 0 : vector<3x10xf32>, vector<3x10xf32>, vector<1x10xf32>, vector<1x10xf32> -> vector<8x10xf32>
    %cst_75 = arith.constant 0.000000e+00 : f32
    %616 = vector.broadcast %cst_75 : f32 to vector<8x118xf32>
    %617 = tpu.concatenate %615, %616 in 1 : vector<8x10xf32>, vector<8x118xf32> -> vector<8x128xf32>
    %c0_76 = arith.constant 0 : index
    %c0_77 = arith.constant 0 : index
    %c0_78 = arith.constant 0 : index
    %618 = vector.load %arg12[%c0_76, %c0_77, %c0_78] : memref<1x8x128xf32, #tpu.memory_space<vmem>>, vector<1x8x128xf32>
    %619 = vector.shape_cast %618 : vector<1x8x128xf32> to vector<8x128xf32>
    %620 = vector.shape_cast %617 : vector<8x128xf32> to vector<1x8x128xf32>
    tpu.vector_store %arg12[%c0_76, %c0_77, %c0_78], %620 {strides = array<i32>} : memref<1x8x128xf32, #tpu.memory_space<vmem>>, vector<1x8x128xf32>,
    return
  }
  func.func @transform_0(%arg0: i32) -> (i32, i32, i32) {
    %c0_i32 = arith.constant 0 : i32
    %c0_i32_0 = arith.constant 0 : i32
    %c0_i32_1 = arith.constant 0 : i32
    return %arg0, %c0_i32, %c0_i32_0 : i32, i32, i32
  }
  func.func @transform_1(%arg0: i32) -> (i32, i32) {
    %c0_i32 = arith.constant 0 : i32
    %c0_i32_0 = arith.constant 0 : i32
    %c0_i32_1 = arith.constant 0 : i32
    return %c0_i32, %c0_i32_0 : i32, i32
  }
  func.func @transform_2(%arg0: i32) -> (i32, i32) {
    %c0_i32 = arith.constant 0 : i32
    %c0_i32_0 = arith.constant 0 : i32
    %c0_i32_1 = arith.constant 0 : i32
    return %c0_i32, %c0_i32_0 : i32, i32
  }
  func.func @transform_3(%arg0: i32) -> (i32, i32) {
    %c0_i32 = arith.constant 0 : i32
    %c0_i32_0 = arith.constant 0 : i32
    %c0_i32_1 = arith.constant 0 : i32
    return %c0_i32, %c0_i32_0 : i32, i32
  }
  func.func @transform_4(%arg0: i32) -> (i32, i32) {
    %c0_i32 = arith.constant 0 : i32
    %c0_i32_0 = arith.constant 0 : i32
    %c0_i32_1 = arith.constant 0 : i32
    return %c0_i32, %c0_i32_0 : i32, i32
  }
  func.func @transform_5(%arg0: i32) -> (i32, i32) {
    %c0_i32 = arith.constant 0 : i32
    %c0_i32_0 = arith.constant 0 : i32
    %c0_i32_1 = arith.constant 0 : i32
    return %c0_i32, %c0_i32_0 : i32, i32
  }
  func.func @transform_6(%arg0: i32) -> (i32, i32) {
    %c0_i32 = arith.constant 0 : i32
    %c0_i32_0 = arith.constant 0 : i32
    %c0_i32_1 = arith.constant 0 : i32
    return %c0_i32, %c0_i32_0 : i32, i32
  }
  func.func @transform_7(%arg0: i32) -> (i32, i32) {
    %c0_i32 = arith.constant 0 : i32
    %c0_i32_0 = arith.constant 0 : i32
    %c0_i32_1 = arith.constant 0 : i32
    return %c0_i32, %c0_i32_0 : i32, i32
  }
  func.func @transform_8(%arg0: i32) -> (i32, i32) {
    %c0_i32 = arith.constant 0 : i32
    %c0_i32_0 = arith.constant 0 : i32
    %c0_i32_1 = arith.constant 0 : i32
    return %c0_i32, %c0_i32_0 : i32, i32
  }
  func.func @transform_9(%arg0: i32) -> (i32, i32) {
    %c0_i32 = arith.constant 0 : i32
    %c0_i32_0 = arith.constant 0 : i32
    %c0_i32_1 = arith.constant 0 : i32
    return %c0_i32, %c0_i32_0 : i32, i32
  }
  func.func @transform_10(%arg0: i32) -> (i32, i32) {
    %c0_i32 = arith.constant 0 : i32
    %c0_i32_0 = arith.constant 0 : i32
    %c0_i32_1 = arith.constant 0 : i32
    return %c0_i32, %c0_i32_0 : i32, i32
  }
  func.func @transform_11(%arg0: i32) -> (i32, i32, i32) {
    %c0_i32 = arith.constant 0 : i32
    %c0_i32_0 = arith.constant 0 : i32
    %c0_i32_1 = arith.constant 0 : i32
    return %arg0, %c0_i32, %c0_i32_0 : i32, i32, i32
  }
}

</mosaic_0001>

<llo_original>
// kernel: forward.1
$region0: #{forward.1}
  #allocation0 [shape = 'u32[]', space=smem, size = 0x4, offset = 0x4, fixed_abs, tag = 'smem constant byte address 0x4 - core index']
  #allocation1 [shape = 'u32[144,128]{1,0:T(1,128)}', space=vmem, size = 0x12000, scoped, tag = 'internal scratch']
  %s0 = inlined_call_operand.vmem [shape: f32[2,256,3], index: 0, kind: input, shape index: {}]
  %s1 = inlined_call_operand.vmem [shape: f32[27,8], index: 1, kind: input, shape index: {}]
  %s2 = inlined_call_operand.vmem [shape: f32[96,16], index: 2, kind: input, shape index: {}]
  %s3 = inlined_call_operand.vmem [shape: f32[144,24], index: 3, kind: input, shape index: {}]
  %s4 = inlined_call_operand.vmem [shape: f32[17,16], index: 4, kind: input, shape index: {}]
  %s5 = inlined_call_operand.vmem [shape: f32[17,16], index: 5, kind: input, shape index: {}]
  %s6 = inlined_call_operand.vmem [shape: f32[16,16], index: 6, kind: input, shape index: {}]
  %s7 = inlined_call_operand.vmem [shape: f32[64,52], index: 7, kind: input, shape index: {}]
  %s8 = inlined_call_operand.vmem [shape: f32[1,52], index: 8, kind: input, shape index: {}]
  %s9 = inlined_call_operand.vmem [shape: f32[64,256], index: 9, kind: input, shape index: {}]
  %s10 = inlined_call_operand.vmem [shape: f32[16,64], index: 10, kind: input, shape index: {}]
  %s11 = inlined_call_operand.vmem [shape: f32[2,8,128], index: 11, kind: output, shape index: {}]
  %s12 = sld [smem:[#allocation0]]
  $region77: #{forward.1} parent=0
    _
  %s14 = ssub.s32 1, %s12
  %s15 = scalar_select 0, %s14, %s12
  loop: start=0, step=1, limit=4
  $region2: #{forward.1} parent=0 // loop_pre_header
    _
  $region3: #{forward.1} parent=0 // loop_header
    %s17 = sphi 0, %s21
    %p18 = scmp.ge.s32.totalorder %s17, 4
    %s27 = sphi 0, %s29
    %s30 = sphi 0, %s27
    %s31 = sphi 0, %s30
    %s47 = sphi 0, %s31
    %s51 = sphi 0, %s51
    %s53 = sphi 0, %s51
    %s54 = sphi 0, %s53
    %s68 = sphi 0, %s54
    %s72 = sphi 0, %s72
    %s74 = sphi 0, %s72
    %s75 = sphi 0, %s74
    %s89 = sphi 0, %s75
    %s93 = sphi 0, %s93
    %s95 = sphi 0, %s93
    %s96 = sphi 0, %s95
    %s110 = sphi 0, %s96
    %s114 = sphi 0, %s114
    %s116 = sphi 0, %s114
    %s117 = sphi 0, %s116
    %s131 = sphi 0, %s117
    %s135 = sphi 0, %s135
    %s137 = sphi 0, %s135
    %s138 = sphi 0, %s137
    %s152 = sphi 0, %s138
    %s156 = sphi 0, %s156
    %s158 = sphi 0, %s156
    %s159 = sphi 0, %s158
    %s173 = sphi 0, %s159
    %s177 = sphi 0, %s177
    %s179 = sphi 0, %s177
    %s180 = sphi 0, %s179
    %s194 = sphi 0, %s180
    %s198 = sphi 0, %s198
    %s200 = sphi 0, %s198
    %s201 = sphi 0, %s200
    %s215 = sphi 0, %s201
    %s219 = sphi 0, %s219
    %s221 = sphi 0, %s219
    %s222 = sphi 0, %s221
    %s236 = sphi 0, %s222
    %s240 = sphi 0, %s240
    %s242 = sphi 0, %s240
    %s243 = sphi 0, %s242
    %s257 = sphi 0, %s243
    %s263 = sphi 0, %s265
    %s266 = sphi 0, %s263
    %s267 = sphi 0, %s266
    %s283 = sphi 0, %s267
  $region4: #{forward.1} parent=0 // loop_header_branch
    %20 = sbr.rel (%p18) target = $region8
  $region5: #{forward.1} parent=0 // loop_body
    %s22 = ssub.s32 %s17, 1
    %s23 = ssub.s32 %s17, 2
    %s24 = sadd.s32 %s17, 1
    %s25 = ssub.s32 %s17, %s24
    %p26 = scmp.eq.s32.totalorder %s25, 0
    %s28 = sadd.s32 %s27, 1
    %s29 = scalar_select %p26, %s27, %s28
    %p32 = pneg %p26
    %p33 = scmp.eq.s32.totalorder %s17, 1
    %p34 = por %p32, %p33
    %p35 = scmp.ne.s32.totalorder %s27, %s30
    %p36 = scmp.eq.s32.totalorder %s17, 0
    %p37 = por %p35, %p36
    %p38 = scmp.ne.s32.totalorder %s27, %s30
    %p39 = scmp.eq.s32.totalorder %s22, 1
    %p40 = por %p38, %p39
    %p41 = scmp.ne.s32.totalorder %s30, %s31
    %p42 = scmp.eq.s32.totalorder %s22, 0
    %p43 = por %p41, %p42
    %p44 = scmp.ne.s32.totalorder %s30, %s31
    %p45 = scmp.eq.s32.totalorder %s23, 1
    %p46 = por %p44, %p45
    %p48 = scmp.ne.s32.totalorder %s31, %s47
    %p49 = scmp.eq.s32.totalorder %s23, 0
    %p50 = por %p48, %p49
    %s52 = sadd.s32 %s51, 1
    %p55 = scmp.eq.s32.totalorder %s17, 1
    %p56 = scmp.ne.s32.totalorder %s51, %s53
    %p57 = scmp.eq.s32.totalorder %s17, 0
    %p58 = por %p56, %p57
    %p59 = scmp.ne.s32.totalorder %s51, %s53
    %p60 = scmp.eq.s32.totalorder %s22, 1
    %p61 = por %p59, %p60
    %p62 = scmp.ne.s32.totalorder %s53, %s54
    %p63 = scmp.eq.s32.totalorder %s22, 0
    %p64 = por %p62, %p63
    %p65 = scmp.ne.s32.totalorder %s53, %s54
    %p66 = scmp.eq.s32.totalorder %s23, 1
    %p67 = por %p65, %p66
    %p69 = scmp.ne.s32.totalorder %s54, %s68
    %p70 = scmp.eq.s32.totalorder %s23, 0
    %p71 = por %p69, %p70
    %s73 = sadd.s32 %s72, 1
    %p76 = scmp.eq.s32.totalorder %s17, 1
    %p77 = scmp.ne.s32.totalorder %s72, %s74
    %p78 = scmp.eq.s32.totalorder %s17, 0
    %p79 = por %p77, %p78
    %p80 = scmp.ne.s32.totalorder %s72, %s74
    %p81 = scmp.eq.s32.totalorder %s22, 1
    %p82 = por %p80, %p81
    %p83 = scmp.ne.s32.totalorder %s74, %s75
    %p84 = scmp.eq.s32.totalorder %s22, 0
    %p85 = por %p83, %p84
    %p86 = scmp.ne.s32.totalorder %s74, %s75
    %p87 = scmp.eq.s32.totalorder %s23, 1
    %p88 = por %p86, %p87
    %p90 = scmp.ne.s32.totalorder %s75, %s89
    %p91 = scmp.eq.s32.totalorder %s23, 0
    %p92 = por %p90, %p91
    %s94 = sadd.s32 %s93, 1
    %p97 = scmp.eq.s32.totalorder %s17, 1
    %p98 = scmp.ne.s32.totalorder %s93, %s95
    %p99 = scmp.eq.s32.totalorder %s17, 0
    %p100 = por %p98, %p99
    %p101 = scmp.ne.s32.totalorder %s93, %s95
    %p102 = scmp.eq.s32.totalorder %s22, 1
    %p103 = por %p101, %p102
    %p104 = scmp.ne.s32.totalorder %s95, %s96
    %p105 = scmp.eq.s32.totalorder %s22, 0
    %p106 = por %p104, %p105
    %p107 = scmp.ne.s32.totalorder %s95, %s96
    %p108 = scmp.eq.s32.totalorder %s23, 1
    %p109 = por %p107, %p108
    %p111 = scmp.ne.s32.totalorder %s96, %s110
    %p112 = scmp.eq.s32.totalorder %s23, 0
    %p113 = por %p111, %p112
    %s115 = sadd.s32 %s114, 1
    %p118 = scmp.eq.s32.totalorder %s17, 1
    %p119 = scmp.ne.s32.totalorder %s114, %s116
    %p120 = scmp.eq.s32.totalorder %s17, 0
    %p121 = por %p119, %p120
    %p122 = scmp.ne.s32.totalorder %s114, %s116
    %p123 = scmp.eq.s32.totalorder %s22, 1
    %p124 = por %p122, %p123
    %p125 = scmp.ne.s32.totalorder %s116, %s117
    %p126 = scmp.eq.s32.totalorder %s22, 0
    %p127 = por %p125, %p126
    %p128 = scmp.ne.s32.totalorder %s116, %s117
    %p129 = scmp.eq.s32.totalorder %s23, 1
    %p130 = por %p128, %p129
    %p132 = scmp.ne.s32.totalorder %s117, %s131
    %p133 = scmp.eq.s32.totalorder %s23, 0
    %p134 = por %p132, %p133
    %s136 = sadd.s32 %s135, 1
    %p139 = scmp.eq.s32.totalorder %s17, 1
    %p140 = scmp.ne.s32.totalorder %s135, %s137
    %p141 = scmp.eq.s32.totalorder %s17, 0
    %p142 = por %p140, %p141
    %p143 = scmp.ne.s32.totalorder %s135, %s137
    %p144 = scmp.eq.s32.totalorder %s22, 1
    %p145 = por %p143, %p144
    %p146 = scmp.ne.s32.totalorder %s137, %s138
    %p147 = scmp.eq.s32.totalorder %s22, 0
    %p148 = por %p146, %p147
    %p149 = scmp.ne.s32.totalorder %s137, %s138
    %p150 = scmp.eq.s32.totalorder %s23, 1
    %p151 = por %p149, %p150
    %p153 = scmp.ne.s32.totalorder %s138, %s152
    %p154 = scmp.eq.s32.totalorder %s23, 0
    %p155 = por %p153, %p154
    %s157 = sadd.s32 %s156, 1
    %p160 = scmp.eq.s32.totalorder %s17, 1
    %p161 = scmp.ne.s32.totalorder %s156, %s158
    %p162 = scmp.eq.s32.totalorder %s17, 0
    %p163 = por %p161, %p162
    %p164 = scmp.ne.s32.totalorder %s156, %s158
    %p165 = scmp.eq.s32.totalorder %s22, 1
    %p166 = por %p164, %p165
    %p167 = scmp.ne.s32.totalorder %s158, %s159
    %p168 = scmp.eq.s32.totalorder %s22, 0
    %p169 = por %p167, %p168
    %p170 = scmp.ne.s32.totalorder %s158, %s159
    %p171 = scmp.eq.s32.totalorder %s23, 1
    %p172 = por %p170, %p171
    %p174 = scmp.ne.s32.totalorder %s159, %s173
    %p175 = scmp.eq.s32.totalorder %s23, 0
    %p176 = por %p174, %p175
    %s178 = sadd.s32 %s177, 1
    %p181 = scmp.eq.s32.totalorder %s17, 1
    %p182 = scmp.ne.s32.totalorder %s177, %s179
    %p183 = scmp.eq.s32.totalorder %s17, 0
    %p184 = por %p182, %p183
    %p185 = scmp.ne.s32.totalorder %s177, %s179
    %p186 = scmp.eq.s32.totalorder %s22, 1
    %p187 = por %p185, %p186
    %p188 = scmp.ne.s32.totalorder %s179, %s180
    %p189 = scmp.eq.s32.totalorder %s22, 0
    %p190 = por %p188, %p189
    %p191 = scmp.ne.s32.totalorder %s179, %s180
    %p192 = scmp.eq.s32.totalorder %s23, 1
    %p193 = por %p191, %p192
    %p195 = scmp.ne.s32.totalorder %s180, %s194
    %p196 = scmp.eq.s32.totalorder %s23, 0
    %p197 = por %p195, %p196
    %s199 = sadd.s32 %s198, 1
    %p202 = scmp.eq.s32.totalorder %s17, 1
    %p203 = scmp.ne.s32.totalorder %s198, %s200
    %p204 = scmp.eq.s32.totalorder %s17, 0
    %p205 = por %p203, %p204
    %p206 = scmp.ne.s32.totalorder %s198, %s200
    %p207 = scmp.eq.s32.totalorder %s22, 1
    %p208 = por %p206, %p207
    %p209 = scmp.ne.s32.totalorder %s200, %s201
    %p210 = scmp.eq.s32.totalorder %s22, 0
    %p211 = por %p209, %p210
    %p212 = scmp.ne.s32.totalorder %s200, %s201
    %p213 = scmp.eq.s32.totalorder %s23, 1
    %p214 = por %p212, %p213
    %p216 = scmp.ne.s32.totalorder %s201, %s215
    %p217 = scmp.eq.s32.totalorder %s23, 0
    %p218 = por %p216, %p217
    %s220 = sadd.s32 %s219, 1
    %p223 = scmp.eq.s32.totalorder %s17, 1
    %p224 = scmp.ne.s32.totalorder %s219, %s221
    %p225 = scmp.eq.s32.totalorder %s17, 0
    %p226 = por %p224, %p225
    %p227 = scmp.ne.s32.totalorder %s219, %s221
    %p228 = scmp.eq.s32.totalorder %s22, 1
    %p229 = por %p227, %p228
    %p230 = scmp.ne.s32.totalorder %s221, %s222
    %p231 = scmp.eq.s32.totalorder %s22, 0
    %p232 = por %p230, %p231
    %p233 = scmp.ne.s32.totalorder %s221, %s222
    %p234 = scmp.eq.s32.totalorder %s23, 1
    %p235 = por %p233, %p234
    %p237 = scmp.ne.s32.totalorder %s222, %s236
    %p238 = scmp.eq.s32.totalorder %s23, 0
    %p239 = por %p237, %p238
    %s241 = sadd.s32 %s240, 1
    %p244 = scmp.eq.s32.totalorder %s17, 1
    %p245 = scmp.ne.s32.totalorder %s240, %s242
    %p246 = scmp.eq.s32.totalorder %s17, 0
    %p247 = por %p245, %p246
    %p248 = scmp.ne.s32.totalorder %s240, %s242
    %p249 = scmp.eq.s32.totalorder %s22, 1
    %p250 = por %p248, %p249
    %p251 = scmp.ne.s32.totalorder %s242, %s243
    %p252 = scmp.eq.s32.totalorder %s22, 0
    %p253 = por %p251, %p252
    %p254 = scmp.ne.s32.totalorder %s242, %s243
    %p255 = scmp.eq.s32.totalorder %s23, 1
    %p256 = por %p254, %p255
    %p258 = scmp.ne.s32.totalorder %s243, %s257
    %p259 = scmp.eq.s32.totalorder %s23, 0
    %p260 = por %p258, %p259
    %s261 = ssub.s32 %s17, %s24
    %p262 = scmp.eq.s32.totalorder %s261, 0
    %s264 = sadd.s32 %s263, 1
    %s265 = scalar_select %p262, %s263, %s264
    %p268 = pneg %p262
    %p269 = scmp.eq.s32.totalorder %s17, 1
    %p270 = por %p268, %p269
    %p271 = scmp.ne.s32.totalorder %s263, %s266
    %p272 = scmp.eq.s32.totalorder %s17, 0
    %p273 = por %p271, %p272
    %p274 = scmp.ne.s32.totalorder %s263, %s266
    %p275 = scmp.eq.s32.totalorder %s22, 1
    %p276 = por %p274, %p275
    %p277 = scmp.ne.s32.totalorder %s266, %s267
    %p278 = scmp.eq.s32.totalorder %s22, 0
    %p279 = por %p277, %p278
    %p280 = scmp.ne.s32.totalorder %s266, %s267
    %p281 = scmp.eq.s32.totalorder %s23, 1
    %p282 = por %p280, %p281
    %p284 = scmp.ne.s32.totalorder %s267, %s283
    %p285 = scmp.eq.s32.totalorder %s23, 0
    %p286 = por %p284, %p285
    %p287 = scmp.le.s32.totalorder 1, %s17
    %p288 = scmp.lt.s32.totalorder %s17, 3
    %p289 = pnand %p287, %p288
    %p290 = pneg %p289
    // Predicated region
    $region9: #{forward.1} parent=5 // pred_check
      _
    $region10: #{forward.1} parent=5 // pred_check_branch
      %292 = sbr.rel (%p289) target = $region12
    $region11: #{forward.1} parent=5 // pred_region
      %s293 = ssub.s32 %s17, 1
      // Predicated region
      $region13: #{forward.1} parent=11 // pred_check
        %p294 = pneg %p64
      $region14: #{forward.1} parent=11 // pred_check_branch
        %296 = sbr.rel (%p294) target = $region16
      $region15: #{forward.1} parent=11 // pred_region
        _
      $region16: #{forward.1} parent=11 // pred_fallthru
        _
      // Predicated region
      $region17: #{forward.1} parent=11 // pred_check
        %p297 = pneg %p85
      $region18: #{forward.1} parent=11 // pred_check_branch
        %299 = sbr.rel (%p297) target = $region20
      $region19: #{forward.1} parent=11 // pred_region
        _
      $region20: #{forward.1} parent=11 // pred_fallthru
        _
      // Predicated region
      $region21: #{forward.1} parent=11 // pred_check
        %p300 = pneg %p106
      $region22: #{forward.1} parent=11 // pred_check_branch
        %302 = sbr.rel (%p300) target = $region24
      $region23: #{forward.1} parent=11 // pred_region
        _
      $region24: #{forward.1} parent=11 // pred_fallthru
        _
      // Predicated region
      $region25: #{forward.1} parent=11 // pred_check
        %p303 = pneg %p127
      $region26: #{forward.1} parent=11 // pred_check_branch
        %305 = sbr.rel (%p303) target = $region28
      $region27: #{forward.1} parent=11 // pred_region
        _
      $region28: #{forward.1} parent=11 // pred_fallthru
        _
      // Predicated region
      $region29: #{forward.1} parent=11 // pred_check
        %p306 = pneg %p148
      $region30: #{forward.1} parent=11 // pred_check_branch
        %308 = sbr.rel (%p306) target = $region32
      $region31: #{forward.1} parent=11 // pred_region
        _
      $region32: #{forward.1} parent=11 // pred_fallthru
        _
      // Predicated region
      $region33: #{forward.1} parent=11 // pred_check
        %p309 = pneg %p169
      $region34: #{forward.1} parent=11 // pred_check_branch
        %311 = sbr.rel (%p309) target = $region36
      $region35: #{forward.1} parent=11 // pred_region
        _
      $region36: #{forward.1} parent=11 // pred_fallthru
        _
      // Predicated region
      $region37: #{forward.1} parent=11 // pred_check
        %p312 = pneg %p190
      $region38: #{forward.1} parent=11 // pred_check_branch
        %314 = sbr.rel (%p312) target = $region40
      $region39: #{forward.1} parent=11 // pred_region
        _
      $region40: #{forward.1} parent=11 // pred_fallthru
        _
      // Predicated region
      $region41: #{forward.1} parent=11 // pred_check
        %p315 = pneg %p211
      $region42: #{forward.1} parent=11 // pred_check_branch
        %317 = sbr.rel (%p315) target = $region44
      $region43: #{forward.1} parent=11 // pred_region
        _
      $region44: #{forward.1} parent=11 // pred_fallthru
        _
      // Predicated region
      $region45: #{forward.1} parent=11 // pred_check
        %p318 = pneg %p232
      $region46: #{forward.1} parent=11 // pred_check_branch
        %320 = sbr.rel (%p318) target = $region48
      $region47: #{forward.1} parent=11 // pred_region
        _
      $region48: #{forward.1} parent=11 // pred_fallthru
        _
      // Predicated region
      $region49: #{forward.1} parent=11 // pred_check
        %p321 = pneg %p253
      $region50: #{forward.1} parent=11 // pred_check_branch
        %323 = sbr.rel (%p321) target = $region52
      $region51: #{forward.1} parent=11 // pred_region
        _
      $region52: #{forward.1} parent=11 // pred_fallthru
        _
    $region12: #{forward.1} parent=5 // pred_fallthru
      _
    %p324 = scmp.lt.s32.totalorder %s17, 2
    // Predicated region
    $region53: #{forward.1} parent=5 // pred_check
      %p325 = pneg %p324
    $region54: #{forward.1} parent=5 // pred_check_branch
      %327 = sbr.rel (%p325) target = $region56
    $region55: #{forward.1} parent=5 // pred_region
      // Predicated region
      $region57: #{forward.1} parent=55 // pred_check
        %p328 = pneg %p37
      $region58: #{forward.1} parent=55 // pred_check_branch
        %330 = sbr.rel (%p328) target = $region60
      $region59: #{forward.1} parent=55 // pred_region
        %p331 = scmp.lt.s32.totalorder %s17, 1
        %s332 = scalar_select %p331, %s17, 1
        %s333 = smul.addr %s332, 32
        %s334 = smul.addr %s333, 8
        %s335 = scalar_lea.vmem %s0, %s334
      $region60: #{forward.1} parent=55 // pred_fallthru
        _
    $region56: #{forward.1} parent=5 // pred_fallthru
      _
    %p336 = scmp.le.s32.totalorder 1, %s17
    %p337 = scmp.lt.s32.totalorder %s17, 3
    %p338 = pnand %p336, %p337
    %p339 = pneg %p338
    // Predicated region
    $region61: #{forward.1} parent=5 // pred_check
      _
    $region62: #{forward.1} parent=5 // pred_check_branch
      %341 = sbr.rel (%p338) target = $region64
    $region63: #{forward.1} parent=5 // pred_region
      %s342 = ssub.s32 %s17, 1
      %p343 = scmp.lt.s32.totalorder %s22, 1
      %s344 = scalar_select %p343, %s22, 1
      %s345 = smul.addr %s344, 32
      %s346 = smul.addr %s345, 8
      %s347 = scalar_lea.vmem %s0, %s346
      %p348 = pneg %p43
      %p349 = pneg %p40
      %p350 = pneg %p64
      %p351 = pneg %p61
      %p352 = pneg %p85
      %p353 = pneg %p82
      %p354 = pneg %p106
      %p355 = pneg %p103
      %p356 = pneg %p127
      %p357 = pneg %p124
      %p358 = pneg %p148
      %p359 = pneg %p145
      %p360 = pneg %p169
      %p361 = pneg %p166
      %p362 = pneg %p190
      %p363 = pneg %p187
      %p364 = pneg %p211
      %p365 = pneg %p208
      %p366 = pneg %p232
      %p367 = pneg %p229
      %p368 = pneg %p253
      %p369 = pneg %p250
      %p370 = pneg %p279
      %p371 = pneg %p276
      %p372 = scmp.lt.s32.totalorder %s22, 1
      %s373 = scalar_select %p372, %s22, 1
      %s374 = smul.addr %s373, 8
      %s375 = scalar_lea.vmem %s11, %s374
      %p376 = scmp.lt.s32.totalorder %s22, 1
      %s377 = scalar_select %p376, %s22, 1
      %s378 = smul.addr %s377, 32
      %s379 = smul.addr %s378, 8
      %s380 = scalar_lea.vmem %s0, %s379
      %p381 = scmp.lt.s32.totalorder %s22, 1
      %s382 = scalar_select %p381, %s22, 1
      %s383 = smul.addr %s382, 8
      %s384 = scalar_lea.vmem %s11, %s383
      %v385 = vld [vmem:[%s2] sm:$0xff]
      %v386 = vld [vmem:[%s2 + $0x10] sm:$0xff]
      %v387 = vld [vmem:[%s2 + $0x18] sm:$0xff]
      %v388 = vld [vmem:[%s2 + $0x20] sm:$0xff]
      %v389 = vld [vmem:[%s2 + $0x30] sm:$0xff]
      %v390 = vld [vmem:[%s2 + $0x38] sm:$0xff]
      %v391 = vld [vmem:[%s2 + $0x40] sm:$0xff]
      %v392 = vld [vmem:[%s2 + $0x50] sm:$0xff]
      %v393 = vld [vmem:[%s2 + $0x58] sm:$0xff]
      %v394 = vld [vmem:[%s3] sm:$0xff]
      %v395 = vld [vmem:[%s3 + $0x8] sm:$0xff]
      %v396 = vld [vmem:[%s3 + $0x10] sm:$0xff]
      %v397 = vld [vmem:[%s3 + $0x18] sm:$0xff]
      %v398 = vld [vmem:[%s3 + $0x20] sm:$0xff]
      %v399 = vld [vmem:[%s3 + $0x28] sm:$0xff]
      %v400 = vld [vmem:[%s3 + $0x30] sm:$0xff]
      %v401 = vld [vmem:[%s3 + $0x38] sm:$0xff]
      %v402 = vld [vmem:[%s3 + $0x40] sm:$0xff]
      %v403 = vld [vmem:[%s3 + $0x48] sm:$0xff]
      %v404 = vld [vmem:[%s3 + $0x50] sm:$0xff]
      %v405 = vld [vmem:[%s3 + $0x58] sm:$0xff]
      %v406 = vld [vmem:[%s3 + $0x60] sm:$0xff]
      %v407 = vld [vmem:[%s3 + $0x68] sm:$0xff]
      %v408 = vld [vmem:[%s3 + $0x70] sm:$0xff]
      %v409 = vld [vmem:[%s3 + $0x78] sm:$0xff]
      %v410 = vld [vmem:[%s3 + $0x80] sm:$0xff]
      %v411 = vld [vmem:[%s3 + $0x88] sm:$0xff]
      %v412 = vld [vmem:[%s4] sm:$0xff]
      %v413 = vld [vmem:[%s4 + $0x8] sm:$0xff]
      %v414 = vld [vmem:[%s4 + $0x10] sm:$0x1]
      %v415 = vld [vmem:[%s5] sm:$0xff]
      %v416 = vld [vmem:[%s5 + $0x8] sm:$0xff]
      %v417 = vld [vmem:[%s5 + $0x10] sm:$0x1]
      %v418 = vld [vmem:[%s6] sm:$0xff]
      %v419 = vld [vmem:[%s6 + $0x8] sm:$0xff]
      %v420 = vlaneseq
      %v421 = vshrl.u32 %v420, 7
      %v422 = vadd.s32 %v421, 8
      %v423 = vadd.s32 %v421, 16
      %v424 = vadd.s32 %v421, 24
      %v425 = vadd.s32 %v421, 32
      %v426 = vadd.s32 %v421, 40
      %v427 = vadd.s32 %v421, 48
      %v428 = vadd.s32 %v421, 56
      %v429 = vadd.s32 %v421, 64
      %v430 = vadd.s32 %v421, 72
      %v431 = vadd.s32 %v421, 80
      %v432 = vadd.s32 %v421, 88
      %v433 = vadd.s32 %v421, 96
      %v434 = vadd.s32 %v421, 104
      %v435 = vadd.s32 %v421, 112
      %v436 = vadd.s32 %v421, 120
      %v437 = vadd.s32 %v421, 128
      %v438 = vadd.s32 %v421, 136
      %v439 = vadd.s32 %v421, 144
      %v440 = vadd.s32 %v421, 152
      %v441 = vadd.s32 %v421, 160
      %v442 = vadd.s32 %v421, 168
      %v443 = vadd.s32 %v421, 176
      %v444 = vadd.s32 %v421, 184
      %v445 = vadd.s32 %v421, 192
      %v446 = vadd.s32 %v421, 200
      %v447 = vadd.s32 %v421, 208
      %v448 = vadd.s32 %v421, 216
      %v449 = vadd.s32 %v421, 224
      %v450 = vadd.s32 %v421, 232
      %v451 = vadd.s32 %v421, 240
      %v452 = vadd.s32 %v421, 248
      %v453 = vand.u32 %v421, 15
      %v454 = vand.u32 %v422, 15
      %v455 = vand.u32 %v423, 15
      %v456 = vand.u32 %v424, 15
      %v457 = vand.u32 %v425, 15
      %v458 = vand.u32 %v426, 15
      %v459 = vand.u32 %v427, 15
      %v460 = vand.u32 %v428, 15
      %v461 = vand.u32 %v429, 15
      %v462 = vand.u32 %v430, 15
      %v463 = vand.u32 %v431, 15
      %v464 = vand.u32 %v432, 15
      %v465 = vand.u32 %v433, 15
      %v466 = vand.u32 %v434, 15
      %v467 = vand.u32 %v435, 15
      %v468 = vand.u32 %v436, 15
      %v469 = vand.u32 %v437, 15
      %v470 = vand.u32 %v438, 15
      %v471 = vand.u32 %v439, 15
      %v472 = vand.u32 %v440, 15
      %v473 = vand.u32 %v441, 15
      %v474 = vand.u32 %v442, 15
      %v475 = vand.u32 %v443, 15
      %v476 = vand.u32 %v444, 15
      %v477 = vand.u32 %v445, 15
      %v478 = vand.u32 %v446, 15
      %v479 = vand.u32 %v447, 15
      %v480 = vand.u32 %v448, 15
      %v481 = vand.u32 %v449, 15
      %v482 = vand.u32 %v450, 15
      %v483 = vand.u32 %v451, 15
      %v484 = vand.u32 %v452, 15
      %v485 = vand.u32 %v421, 255
      %v486 = vand.u32 %v422, 255
      %v487 = vand.u32 %v423, 255
      %v488 = vand.u32 %v424, 255
      %v489 = vand.u32 %v425, 255
      %v490 = vand.u32 %v426, 255
      %v491 = vand.u32 %v427, 255
      %v492 = vand.u32 %v428, 255
      %v493 = vand.u32 %v429, 255
      %v494 = vand.u32 %v430, 255
      %v495 = vand.u32 %v431, 255
      %v496 = vand.u32 %v432, 255
      %v497 = vand.u32 %v433, 255
      %v498 = vand.u32 %v434, 255
      %v499 = vand.u32 %v435, 255
      %v500 = vand.u32 %v436, 255
      %v501 = vand.u32 %v437, 255
      %v502 = vand.u32 %v438, 255
      %v503 = vand.u32 %v439, 255
      %v504 = vand.u32 %v440, 255
      %v505 = vand.u32 %v441, 255
      %v506 = vand.u32 %v442, 255
      %v507 = vand.u32 %v443, 255
      %v508 = vand.u32 %v444, 255
      %v509 = vand.u32 %v445, 255
      %v510 = vand.u32 %v446, 255
      %v511 = vand.u32 %v447, 255
      %v512 = vand.u32 %v448, 255
      %v513 = vand.u32 %v449, 255
      %v514 = vand.u32 %v450, 255
      %v515 = vand.u32 %v451, 255
      %v516 = vand.u32 %v452, 255
      %vm517 = vcmp.gt.s32.totalorder %v453, 0
      %vm518 = vcmp.gt.s32.totalorder %v454, 0
      %vm519 = vcmp.gt.s32.totalorder %v455, 0
      %vm520 = vcmp.gt.s32.totalorder %v456, 0
      %vm521 = vcmp.gt.s32.totalorder %v457, 0
      %vm522 = vcmp.gt.s32.totalorder %v458, 0
      %vm523 = vcmp.gt.s32.totalorder %v459, 0
      %vm524 = vcmp.gt.s32.totalorder %v460, 0
      %vm525 = vcmp.gt.s32.totalorder %v461, 0
      %vm526 = vcmp.gt.s32.totalorder %v462, 0
      %vm527 = vcmp.gt.s32.totalorder %v463, 0
      %vm528 = vcmp.gt.s32.totalorder %v464, 0
      %vm529 = vcmp.gt.s32.totalorder %v465, 0
      %vm530 = vcmp.gt.s32.totalorder %v466, 0
      %vm531 = vcmp.gt.s32.totalorder %v467, 0
      %vm532 = vcmp.gt.s32.totalorder %v468, 0
      %vm533 = vcmp.gt.s32.totalorder %v469, 0
      %vm534 = vcmp.gt.s32.totalorder %v470, 0
      %vm535 = vcmp.gt.s32.totalorder %v471, 0
      %vm536 = vcmp.gt.s32.totalorder %v472, 0
      %vm537 = vcmp.gt.s32.totalorder %v473, 0
      %vm538 = vcmp.gt.s32.totalorder %v474, 0
      %vm539 = vcmp.gt.s32.totalorder %v475, 0
      %vm540 = vcmp.gt.s32.totalorder %v476, 0
      %vm541 = vcmp.gt.s32.totalorder %v477, 0
      %vm542 = vcmp.gt.s32.totalorder %v478, 0
      %vm543 = vcmp.gt.s32.totalorder %v479, 0
      %vm544 = vcmp.gt.s32.totalorder %v480, 0
      %vm545 = vcmp.gt.s32.totalorder %v481, 0
      %vm546 = vcmp.gt.s32.totalorder %v482, 0
      %vm547 = vcmp.gt.s32.totalorder %v483, 0
      %vm548 = vcmp.gt.s32.totalorder %v484, 0
      %vm549 = vcmp.lt.s32.totalorder %v453, 15
      %vm550 = vcmp.lt.s32.totalorder %v454, 15
      %vm551 = vcmp.lt.s32.totalorder %v455, 15
      %vm552 = vcmp.lt.s32.totalorder %v456, 15
      %vm553 = vcmp.lt.s32.totalorder %v457, 15
      %vm554 = vcmp.lt.s32.totalorder %v458, 15
      %vm555 = vcmp.lt.s32.totalorder %v459, 15
      %vm556 = vcmp.lt.s32.totalorder %v460, 15
      %vm557 = vcmp.lt.s32.totalorder %v461, 15
      %vm558 = vcmp.lt.s32.totalorder %v462, 15
      %vm559 = vcmp.lt.s32.totalorder %v463, 15
      %vm560 = vcmp.lt.s32.totalorder %v464, 15
      %vm561 = vcmp.lt.s32.totalorder %v465, 15
      %vm562 = vcmp.lt.s32.totalorder %v466, 15
      %vm563 = vcmp.lt.s32.totalorder %v467, 15
      %vm564 = vcmp.lt.s32.totalorder %v468, 15
      %vm565 = vcmp.lt.s32.totalorder %v469, 15
      %vm566 = vcmp.lt.s32.totalorder %v470, 15
      %vm567 = vcmp.lt.s32.totalorder %v471, 15
      %vm568 = vcmp.lt.s32.totalorder %v472, 15
      %vm569 = vcmp.lt.s32.totalorder %v473, 15
      %vm570 = vcmp.lt.s32.totalorder %v474, 15
      %vm571 = vcmp.lt.s32.totalorder %v475, 15
      %vm572 = vcmp.lt.s32.totalorder %v476, 15
      %vm573 = vcmp.lt.s32.totalorder %v477, 15
      %vm574 = vcmp.lt.s32.totalorder %v478, 15
      %vm575 = vcmp.lt.s32.totalorder %v479, 15
      %vm576 = vcmp.lt.s32.totalorder %v480, 15
      %vm577 = vcmp.lt.s32.totalorder %v481, 15
      %vm578 = vcmp.lt.s32.totalorder %v482, 15
      %vm579 = vcmp.lt.s32.totalorder %v483, 15
      %vm580 = vcmp.lt.s32.totalorder %v484, 15
      %vm581 = vcmp.ge.s32.totalorder %v485, 16
      %vm582 = vcmp.ge.s32.totalorder %v486, 16
      %vm583 = vcmp.ge.s32.totalorder %v487, 16
      %vm584 = vcmp.ge.s32.totalorder %v488, 16
      %vm585 = vcmp.ge.s32.totalorder %v489, 16
      %vm586 = vcmp.ge.s32.totalorder %v490, 16
      %vm587 = vcmp.ge.s32.totalorder %v491, 16
      %vm588 = vcmp.ge.s32.totalorder %v492, 16
      %vm589 = vcmp.ge.s32.totalorder %v493, 16
      %vm590 = vcmp.ge.s32.totalorder %v494, 16
      %vm591 = vcmp.ge.s32.totalorder %v495, 16
      %vm592 = vcmp.ge.s32.totalorder %v496, 16
      %vm593 = vcmp.ge.s32.totalorder %v497, 16
      %vm594 = vcmp.ge.s32.totalorder %v498, 16
      %vm595 = vcmp.ge.s32.totalorder %v499, 16
      %vm596 = vcmp.ge.s32.totalorder %v500, 16
      %vm597 = vcmp.ge.s32.totalorder %v501, 16
      %vm598 = vcmp.ge.s32.totalorder %v502, 16
      %vm599 = vcmp.ge.s32.totalorder %v503, 16
      %vm600 = vcmp.ge.s32.totalorder %v504, 16
      %vm601 = vcmp.ge.s32.totalorder %v505, 16
      %vm602 = vcmp.ge.s32.totalorder %v506, 16
      %vm603 = vcmp.ge.s32.totalorder %v507, 16
      %vm604 = vcmp.ge.s32.totalorder %v508, 16
      %vm605 = vcmp.ge.s32.totalorder %v509, 16
      %vm606 = vcmp.ge.s32.totalorder %v510, 16
      %vm607 = vcmp.ge.s32.totalorder %v511, 16
      %vm608 = vcmp.ge.s32.totalorder %v512, 16
      %vm609 = vcmp.ge.s32.totalorder %v513, 16
      %vm610 = vcmp.ge.s32.totalorder %v514, 16
      %vm611 = vcmp.ge.s32.totalorder %v515, 16
      %vm612 = vcmp.ge.s32.totalorder %v516, 16
      %vm613 = vcmp.lt.s32.totalorder %v485, 240
      %vm614 = vcmp.lt.s32.totalorder %v486, 240
      %vm615 = vcmp.lt.s32.totalorder %v487, 240
      %vm616 = vcmp.lt.s32.totalorder %v488, 240
      %vm617 = vcmp.lt.s32.totalorder %v489, 240
      %vm618 = vcmp.lt.s32.totalorder %v490, 240
      %vm619 = vcmp.lt.s32.totalorder %v491, 240
      %vm620 = vcmp.lt.s32.totalorder %v492, 240
      %vm621 = vcmp.lt.s32.totalorder %v493, 240
      %vm622 = vcmp.lt.s32.totalorder %v494, 240
      %vm623 = vcmp.lt.s32.totalorder %v495, 240
      %vm624 = vcmp.lt.s32.totalorder %v496, 240
      %vm625 = vcmp.lt.s32.totalorder %v497, 240
      %vm626 = vcmp.lt.s32.totalorder %v498, 240
      %vm627 = vcmp.lt.s32.totalorder %v499, 240
      %vm628 = vcmp.lt.s32.totalorder %v500, 240
      %vm629 = vcmp.lt.s32.totalorder %v501, 240
      %vm630 = vcmp.lt.s32.totalorder %v502, 240
      %vm631 = vcmp.lt.s32.totalorder %v503, 240
      %vm632 = vcmp.lt.s32.totalorder %v504, 240
      %vm633 = vcmp.lt.s32.totalorder %v505, 240
      %vm634 = vcmp.lt.s32.totalorder %v506, 240
      %vm635 = vcmp.lt.s32.totalorder %v507, 240
      %vm636 = vcmp.lt.s32.totalorder %v508, 240
      %vm637 = vcmp.lt.s32.totalorder %v509, 240
      %vm638 = vcmp.lt.s32.totalorder %v510, 240
      %vm639 = vcmp.lt.s32.totalorder %v511, 240
      %vm640 = vcmp.lt.s32.totalorder %v512, 240
      %vm641 = vcmp.lt.s32.totalorder %v513, 240
      %vm642 = vcmp.lt.s32.totalorder %v514, 240
      %vm643 = vcmp.lt.s32.totalorder %v515, 240
      %vm644 = vcmp.lt.s32.totalorder %v516, 240
      %vm645 = vmand %vm581, %vm517
      %vm646 = vmand %vm582, %vm518
      %vm647 = vmand %vm583, %vm519
      %vm648 = vmand %vm584, %vm520
      %vm649 = vmand %vm585, %vm521
      %vm650 = vmand %vm586, %vm522
      %vm651 = vmand %vm587, %vm523
      %vm652 = vmand %vm588, %vm524
      %vm653 = vmand %vm589, %vm525
      %vm654 = vmand %vm590, %vm526
      %vm655 = vmand %vm591, %vm527
      %vm656 = vmand %vm592, %vm528
      %vm657 = vmand %vm593, %vm529
      %vm658 = vmand %vm594, %vm530
      %vm659 = vmand %vm595, %vm531
      %vm660 = vmand %vm596, %vm532
      %vm661 = vmand %vm597, %vm533
      %vm662 = vmand %vm598, %vm534
      %vm663 = vmand %vm599, %vm535
      %vm664 = vmand %vm600, %vm536
      %vm665 = vmand %vm601, %vm537
      %vm666 = vmand %vm602, %vm538
      %vm667 = vmand %vm603, %vm539
      %vm668 = vmand %vm604, %vm540
      %vm669 = vmand %vm605, %vm541
      %vm670 = vmand %vm606, %vm542
      %vm671 = vmand %vm607, %vm543
      %vm672 = vmand %vm608, %vm544
      %vm673 = vmand %vm609, %vm545
      %vm674 = vmand %vm610, %vm546
      %vm675 = vmand %vm611, %vm547
      %vm676 = vmand %vm612, %vm548
      %v677 = vsel %vm645, 1, 0
      %v678 = vsel %vm646, 1, 0
      %v679 = vsel %vm647, 1, 0
      %v680 = vsel %vm648, 1, 0
      %v681 = vsel %vm649, 1, 0
      %v682 = vsel %vm650, 1, 0
      %v683 = vsel %vm651, 1, 0
      %v684 = vsel %vm652, 1, 0
      %v685 = vsel %vm653, 1, 0
      %v686 = vsel %vm654, 1, 0
      %v687 = vsel %vm655, 1, 0
      %v688 = vsel %vm656, 1, 0
      %v689 = vsel %vm657, 1, 0
      %v690 = vsel %vm658, 1, 0
      %v691 = vsel %vm659, 1, 0
      %v692 = vsel %vm660, 1, 0
      %v693 = vsel %vm661, 1, 0
      %v694 = vsel %vm662, 1, 0
      %v695 = vsel %vm663, 1, 0
      %v696 = vsel %vm664, 1, 0
      %v697 = vsel %vm665, 1, 0
      %v698 = vsel %vm666, 1, 0
      %v699 = vsel %vm667, 1, 0
      %v700 = vsel %vm668, 1, 0
      %v701 = vsel %vm669, 1, 0
      %v702 = vsel %vm670, 1, 0
      %v703 = vsel %vm671, 1, 0
      %v704 = vsel %vm672, 1, 0
      %v705 = vsel %vm673, 1, 0
      %v706 = vsel %vm674, 1, 0
      %v707 = vsel %vm675, 1, 0
      %v708 = vsel %vm676, 1, 0
      %v709 = vcvt.s32.f32 %v677
      %v710 = vcvt.s32.f32 %v678
      %v711 = vcvt.s32.f32 %v679
      %v712 = vcvt.s32.f32 %v680
      %v713 = vcvt.s32.f32 %v681
      %v714 = vcvt.s32.f32 %v682
      %v715 = vcvt.s32.f32 %v683
      %v716 = vcvt.s32.f32 %v684
      %v717 = vcvt.s32.f32 %v685
      %v718 = vcvt.s32.f32 %v686
      %v719 = vcvt.s32.f32 %v687
      %v720 = vcvt.s32.f32 %v688
      %v721 = vcvt.s32.f32 %v689
      %v722 = vcvt.s32.f32 %v690
      %v723 = vcvt.s32.f32 %v691
      %v724 = vcvt.s32.f32 %v692
      %v725 = vcvt.s32.f32 %v693
      %v726 = vcvt.s32.f32 %v694
      %v727 = vcvt.s32.f32 %v695
      %v728 = vcvt.s32.f32 %v696
      %v729 = vcvt.s32.f32 %v697
      %v730 = vcvt.s32.f32 %v698
      %v731 = vcvt.s32.f32 %v699
      %v732 = vcvt.s32.f32 %v700
      %v733 = vcvt.s32.f32 %v701
      %v734 = vcvt.s32.f32 %v702
      %v735 = vcvt.s32.f32 %v703
      %v736 = vcvt.s32.f32 %v704
      %v737 = vcvt.s32.f32 %v705
      %v738 = vcvt.s32.f32 %v706
      %v739 = vcvt.s32.f32 %v707
      %v740 = vcvt.s32.f32 %v708
      %v741 = vsel %vm581, 1, 0
      %v742 = vsel %vm582, 1, 0
      %v743 = vsel %vm583, 1, 0
      %v744 = vsel %vm584, 1, 0
      %v745 = vsel %vm585, 1, 0
      %v746 = vsel %vm586, 1, 0
      %v747 = vsel %vm587, 1, 0
      %v748 = vsel %vm588, 1, 0
      %v749 = vsel %vm589, 1, 0
      %v750 = vsel %vm590, 1, 0
      %v751 = vsel %vm591, 1, 0
      %v752 = vsel %vm592, 1, 0
      %v753 = vsel %vm593, 1, 0
      %v754 = vsel %vm594, 1, 0
      %v755 = vsel %vm595, 1, 0
      %v756 = vsel %vm596, 1, 0
      %v757 = vsel %vm597, 1, 0
      %v758 = vsel %vm598, 1, 0
      %v759 = vsel %vm599, 1, 0
      %v760 = vsel %vm600, 1, 0
      %v761 = vsel %vm601, 1, 0
      %v762 = vsel %vm602, 1, 0
      %v763 = vsel %vm603, 1, 0
      %v764 = vsel %vm604, 1, 0
      %v765 = vsel %vm605, 1, 0
      %v766 = vsel %vm606, 1, 0
      %v767 = vsel %vm607, 1, 0
      %v768 = vsel %vm608, 1, 0
      %v769 = vsel %vm609, 1, 0
      %v770 = vsel %vm610, 1, 0
      %v771 = vsel %vm611, 1, 0
      %v772 = vsel %vm612, 1, 0
      %v773 = vcvt.s32.f32 %v741
      %v774 = vcvt.s32.f32 %v742
      %v775 = vcvt.s32.f32 %v743
      %v776 = vcvt.s32.f32 %v744
      %v777 = vcvt.s32.f32 %v745
      %v778 = vcvt.s32.f32 %v746
      %v779 = vcvt.s32.f32 %v747
      %v780 = vcvt.s32.f32 %v748
      %v781 = vcvt.s32.f32 %v749
      %v782 = vcvt.s32.f32 %v750
      %v783 = vcvt.s32.f32 %v751
      %v784 = vcvt.s32.f32 %v752
      %v785 = vcvt.s32.f32 %v753
      %v786 = vcvt.s32.f32 %v754
      %v787 = vcvt.s32.f32 %v755
      %v788 = vcvt.s32.f32 %v756
      %v789 = vcvt.s32.f32 %v757
      %v790 = vcvt.s32.f32 %v758
      %v791 = vcvt.s32.f32 %v759
      %v792 = vcvt.s32.f32 %v760
      %v793 = vcvt.s32.f32 %v761
      %v794 = vcvt.s32.f32 %v762
      %v795 = vcvt.s32.f32 %v763
      %v796 = vcvt.s32.f32 %v764
      %v797 = vcvt.s32.f32 %v765
      %v798 = vcvt.s32.f32 %v766
      %v799 = vcvt.s32.f32 %v767
      %v800 = vcvt.s32.f32 %v768
      %v801 = vcvt.s32.f32 %v769
      %v802 = vcvt.s32.f32 %v770
      %v803 = vcvt.s32.f32 %v771
      %v804 = vcvt.s32.f32 %v772
      %vm805 = vmand %vm581, %vm549
      %vm806 = vmand %vm582, %vm550
      %vm807 = vmand %vm583, %vm551
      %vm808 = vmand %vm584, %vm552
      %vm809 = vmand %vm585, %vm553
      %vm810 = vmand %vm586, %vm554
      %vm811 = vmand %vm587, %vm555
      %vm812 = vmand %vm588, %vm556
      %vm813 = vmand %vm589, %vm557
      %vm814 = vmand %vm590, %vm558
      %vm815 = vmand %vm591, %vm559
      %vm816 = vmand %vm592, %vm560
      %vm817 = vmand %vm593, %vm561
      %vm818 = vmand %vm594, %vm562
      %vm819 = vmand %vm595, %vm563
      %vm820 = vmand %vm596, %vm564
      %vm821 = vmand %vm597, %vm565
      %vm822 = vmand %vm598, %vm566
      %vm823 = vmand %vm599, %vm567
      %vm824 = vmand %vm600, %vm568
      %vm825 = vmand %vm601, %vm569
      %vm826 = vmand %vm602, %vm570
      %vm827 = vmand %vm603, %vm571
      %vm828 = vmand %vm604, %vm572
      %vm829 = vmand %vm605, %vm573
      %vm830 = vmand %vm606, %vm574
      %vm831 = vmand %vm607, %vm575
      %vm832 = vmand %vm608, %vm576
      %vm833 = vmand %vm609, %vm577
      %vm834 = vmand %vm610, %vm578
      %vm835 = vmand %vm611, %vm579
      %vm836 = vmand %vm612, %vm580
      %v837 = vsel %vm805, 1, 0
      %v838 = vsel %vm806, 1, 0
      %v839 = vsel %vm807, 1, 0
      %v840 = vsel %vm808, 1, 0
      %v841 = vsel %vm809, 1, 0
      %v842 = vsel %vm810, 1, 0
      %v843 = vsel %vm811, 1, 0
      %v844 = vsel %vm812, 1, 0
      %v845 = vsel %vm813, 1, 0
      %v846 = vsel %vm814, 1, 0
      %v847 = vsel %vm815, 1, 0
      %v848 = vsel %vm816, 1, 0
      %v849 = vsel %vm817, 1, 0
      %v850 = vsel %vm818, 1, 0
      %v851 = vsel %vm819, 1, 0
      %v852 = vsel %vm820, 1, 0
      %v853 = vsel %vm821, 1, 0
      %v854 = vsel %vm822, 1, 0
      %v855 = vsel %vm823, 1, 0
      %v856 = vsel %vm824, 1, 0
      %v857 = vsel %vm825, 1, 0
      %v858 = vsel %vm826, 1, 0
      %v859 = vsel %vm827, 1, 0
      %v860 = vsel %vm828, 1, 0
      %v861 = vsel %vm829, 1, 0
      %v862 = vsel %vm830, 1, 0
      %v863 = vsel %vm831, 1, 0
      %v864 = vsel %vm832, 1, 0
      %v865 = vsel %vm833, 1, 0
      %v866 = vsel %vm834, 1, 0
      %v867 = vsel %vm835, 1, 0
      %v868 = vsel %vm836, 1, 0
      %v869 = vcvt.s32.f32 %v837
      %v870 = vcvt.s32.f32 %v838
      %v871 = vcvt.s32.f32 %v839
      %v872 = vcvt.s32.f32 %v840
      %v873 = vcvt.s32.f32 %v841
      %v874 = vcvt.s32.f32 %v842
      %v875 = vcvt.s32.f32 %v843
      %v876 = vcvt.s32.f32 %v844
      %v877 = vcvt.s32.f32 %v845
      %v878 = vcvt.s32.f32 %v846
      %v879 = vcvt.s32.f32 %v847
      %v880 = vcvt.s32.f32 %v848
      %v881 = vcvt.s32.f32 %v849
      %v882 = vcvt.s32.f32 %v850
      %v883 = vcvt.s32.f32 %v851
      %v884 = vcvt.s32.f32 %v852
      %v885 = vcvt.s32.f32 %v853
      %v886 = vcvt.s32.f32 %v854
      %v887 = vcvt.s32.f32 %v855
      %v888 = vcvt.s32.f32 %v856
      %v889 = vcvt.s32.f32 %v857
      %v890 = vcvt.s32.f32 %v858
      %v891 = vcvt.s32.f32 %v859
      %v892 = vcvt.s32.f32 %v860
      %v893 = vcvt.s32.f32 %v861
      %v894 = vcvt.s32.f32 %v862
      %v895 = vcvt.s32.f32 %v863
      %v896 = vcvt.s32.f32 %v864
      %v897 = vcvt.s32.f32 %v865
      %v898 = vcvt.s32.f32 %v866
      %v899 = vcvt.s32.f32 %v867
      %v900 = vcvt.s32.f32 %v868
      %v901 = vsel %vm517, 1, 0
      %v902 = vsel %vm518, 1, 0
      %v903 = vsel %vm519, 1, 0
      %v904 = vsel %vm520, 1, 0
      %v905 = vsel %vm521, 1, 0
      %v906 = vsel %vm522, 1, 0
      %v907 = vsel %vm523, 1, 0
      %v908 = vsel %vm524, 1, 0
      %v909 = vsel %vm525, 1, 0
      %v910 = vsel %vm526, 1, 0
      %v911 = vsel %vm527, 1, 0
      %v912 = vsel %vm528, 1, 0
      %v913 = vsel %vm529, 1, 0
      %v914 = vsel %vm530, 1, 0
      %v915 = vsel %vm531, 1, 0
      %v916 = vsel %vm532, 1, 0
      %v917 = vsel %vm533, 1, 0
      %v918 = vsel %vm534, 1, 0
      %v919 = vsel %vm535, 1, 0
      %v920 = vsel %vm536, 1, 0
      %v921 = vsel %vm537, 1, 0
      %v922 = vsel %vm538, 1, 0
      %v923 = vsel %vm539, 1, 0
      %v924 = vsel %vm540, 1, 0
      %v925 = vsel %vm541, 1, 0
      %v926 = vsel %vm542, 1, 0
      %v927 = vsel %vm543, 1, 0
      %v928 = vsel %vm544, 1, 0
      %v929 = vsel %vm545, 1, 0
      %v930 = vsel %vm546, 1, 0
      %v931 = vsel %vm547, 1, 0
      %v932 = vsel %vm548, 1, 0
      %v933 = vcvt.s32.f32 %v901
      %v934 = vcvt.s32.f32 %v902
      %v935 = vcvt.s32.f32 %v903
      %v936 = vcvt.s32.f32 %v904
      %v937 = vcvt.s32.f32 %v905
      %v938 = vcvt.s32.f32 %v906
      %v939 = vcvt.s32.f32 %v907
      %v940 = vcvt.s32.f32 %v908
      %v941 = vcvt.s32.f32 %v909
      %v942 = vcvt.s32.f32 %v910
      %v943 = vcvt.s32.f32 %v911
      %v944 = vcvt.s32.f32 %v912
      %v945 = vcvt.s32.f32 %v913
      %v946 = vcvt.s32.f32 %v914
      %v947 = vcvt.s32.f32 %v915
      %v948 = vcvt.s32.f32 %v916
      %v949 = vcvt.s32.f32 %v917
      %v950 = vcvt.s32.f32 %v918
      %v951 = vcvt.s32.f32 %v919
      %v952 = vcvt.s32.f32 %v920
      %v953 = vcvt.s32.f32 %v921
      %v954 = vcvt.s32.f32 %v922
      %v955 = vcvt.s32.f32 %v923
      %v956 = vcvt.s32.f32 %v924
      %v957 = vcvt.s32.f32 %v925
      %v958 = vcvt.s32.f32 %v926
      %v959 = vcvt.s32.f32 %v927
      %v960 = vcvt.s32.f32 %v928
      %v961 = vcvt.s32.f32 %v929
      %v962 = vcvt.s32.f32 %v930
      %v963 = vcvt.s32.f32 %v931
      %v964 = vcvt.s32.f32 %v932
      %v965 = vsel %vm549, 1, 0
      %v966 = vsel %vm550, 1, 0
      %v967 = vsel %vm551, 1, 0
      %v968 = vsel %vm552, 1, 0
      %v969 = vsel %vm553, 1, 0
      %v970 = vsel %vm554, 1, 0
      %v971 = vsel %vm555, 1, 0
      %v972 = vsel %vm556, 1, 0
      %v973 = vsel %vm557, 1, 0
      %v974 = vsel %vm558, 1, 0
      %v975 = vsel %vm559, 1, 0
      %v976 = vsel %vm560, 1, 0
      %v977 = vsel %vm561, 1, 0
      %v978 = vsel %vm562, 1, 0
      %v979 = vsel %vm563, 1, 0
      %v980 = vsel %vm564, 1, 0
      %v981 = vsel %vm565, 1, 0
      %v982 = vsel %vm566, 1, 0
      %v983 = vsel %vm567, 1, 0
      %v984 = vsel %vm568, 1, 0
      %v985 = vsel %vm569, 1, 0
      %v986 = vsel %vm570, 1, 0
      %v987 = vsel %vm571, 1, 0
      %v988 = vsel %vm572, 1, 0
      %v989 = vsel %vm573, 1, 0
      %v990 = vsel %vm574, 1, 0
      %v991 = vsel %vm575, 1, 0
      %v992 = vsel %vm576, 1, 0
      %v993 = vsel %vm577, 1, 0
      %v994 = vsel %vm578, 1, 0
      %v995 = vsel %vm579, 1, 0
      %v996 = vsel %vm580, 1, 0
      %v997 = vcvt.s32.f32 %v965
      %v998 = vcvt.s32.f32 %v966
      %v999 = vcvt.s32.f32 %v967
      %v1000 = vcvt.s32.f32 %v968
      %v1001 = vcvt.s32.f32 %v969
      %v1002 = vcvt.s32.f32 %v970
      %v1003 = vcvt.s32.f32 %v971
      %v1004 = vcvt.s32.f32 %v972
      %v1005 = vcvt.s32.f32 %v973
      %v1006 = vcvt.s32.f32 %v974
      %v1007 = vcvt.s32.f32 %v975
      %v1008 = vcvt.s32.f32 %v976
      %v1009 = vcvt.s32.f32 %v977
      %v1010 = vcvt.s32.f32 %v978
      %v1011 = vcvt.s32.f32 %v979
      %v1012 = vcvt.s32.f32 %v980
      %v1013 = vcvt.s32.f32 %v981
      %v1014 = vcvt.s32.f32 %v982
      %v1015 = vcvt.s32.f32 %v983
      %v1016 = vcvt.s32.f32 %v984
      %v1017 = vcvt.s32.f32 %v985
      %v1018 = vcvt.s32.f32 %v986
      %v1019 = vcvt.s32.f32 %v987
      %v1020 = vcvt.s32.f32 %v988
      %v1021 = vcvt.s32.f32 %v989
      %v1022 = vcvt.s32.f32 %v990
      %v1023 = vcvt.s32.f32 %v991
      %v1024 = vcvt.s32.f32 %v992
      %v1025 = vcvt.s32.f32 %v993
      %v1026 = vcvt.s32.f32 %v994
      %v1027 = vcvt.s32.f32 %v995
      %v1028 = vcvt.s32.f32 %v996
      %vm1029 = vmand %vm613, %vm517
      %vm1030 = vmand %vm614, %vm518
      %vm1031 = vmand %vm615, %vm519
      %vm1032 = vmand %vm616, %vm520
      %vm1033 = vmand %vm617, %vm521
      %vm1034 = vmand %vm618, %vm522
      %vm1035 = vmand %vm619, %vm523
      %vm1036 = vmand %vm620, %vm524
      %vm1037 = vmand %vm621, %vm525
      %vm1038 = vmand %vm622, %vm526
      %vm1039 = vmand %vm623, %vm527
      %vm1040 = vmand %vm624, %vm528
      %vm1041 = vmand %vm625, %vm529
      %vm1042 = vmand %vm626, %vm530
      %vm1043 = vmand %vm627, %vm531
      %vm1044 = vmand %vm628, %vm532
      %vm1045 = vmand %vm629, %vm533
      %vm1046 = vmand %vm630, %vm534
      %vm1047 = vmand %vm631, %vm535
      %vm1048 = vmand %vm632, %vm536
      %vm1049 = vmand %vm633, %vm537
      %vm1050 = vmand %vm634, %vm538
      %vm1051 = vmand %vm635, %vm539
      %vm1052 = vmand %vm636, %vm540
      %vm1053 = vmand %vm637, %vm541
      %vm1054 = vmand %vm638, %vm542
      %vm1055 = vmand %vm639, %vm543
      %vm1056 = vmand %vm640, %vm544
      %vm1057 = vmand %vm641, %vm545
      %vm1058 = vmand %vm642, %vm546
      %vm1059 = vmand %vm643, %vm547
      %vm1060 = vmand %vm644, %vm548
      %v1061 = vsel %vm1029, 1, 0
      %v1062 = vsel %vm1030, 1, 0
      %v1063 = vsel %vm1031, 1, 0
      %v1064 = vsel %vm1032, 1, 0
      %v1065 = vsel %vm1033, 1, 0
      %v1066 = vsel %vm1034, 1, 0
      %v1067 = vsel %vm1035, 1, 0
      %v1068 = vsel %vm1036, 1, 0
      %v1069 = vsel %vm1037, 1, 0
      %v1070 = vsel %vm1038, 1, 0
      %v1071 = vsel %vm1039, 1, 0
      %v1072 = vsel %vm1040, 1, 0
      %v1073 = vsel %vm1041, 1, 0
      %v1074 = vsel %vm1042, 1, 0
      %v1075 = vsel %vm1043, 1, 0
      %v1076 = vsel %vm1044, 1, 0
      %v1077 = vsel %vm1045, 1, 0
      %v1078 = vsel %vm1046, 1, 0
      %v1079 = vsel %vm1047, 1, 0
      %v1080 = vsel %vm1048, 1, 0
      %v1081 = vsel %vm1049, 1, 0
      %v1082 = vsel %vm1050, 1, 0
      %v1083 = vsel %vm1051, 1, 0
      %v1084 = vsel %vm1052, 1, 0
      %v1085 = vsel %vm1053, 1, 0
      %v1086 = vsel %vm1054, 1, 0
      %v1087 = vsel %vm1055, 1, 0
      %v1088 = vsel %vm1056, 1, 0
      %v1089 = vsel %vm1057, 1, 0
      %v1090 = vsel %vm1058, 1, 0
      %v1091 = vsel %vm1059, 1, 0
      %v1092 = vsel %vm1060, 1, 0
      %v1093 = vcvt.s32.f32 %v1061
      %v1094 = vcvt.s32.f32 %v1062
      %v1095 = vcvt.s32.f32 %v1063
      %v1096 = vcvt.s32.f32 %v1064
      %v1097 = vcvt.s32.f32 %v1065
      %v1098 = vcvt.s32.f32 %v1066
      %v1099 = vcvt.s32.f32 %v1067
      %v1100 = vcvt.s32.f32 %v1068
      %v1101 = vcvt.s32.f32 %v1069
      %v1102 = vcvt.s32.f32 %v1070
      %v1103 = vcvt.s32.f32 %v1071
      %v1104 = vcvt.s32.f32 %v1072
      %v1105 = vcvt.s32.f32 %v1073
      %v1106 = vcvt.s32.f32 %v1074
      %v1107 = vcvt.s32.f32 %v1075
      %v1108 = vcvt.s32.f32 %v1076
      %v1109 = vcvt.s32.f32 %v1077
      %v1110 = vcvt.s32.f32 %v1078
      %v1111 = vcvt.s32.f32 %v1079
      %v1112 = vcvt.s32.f32 %v1080
      %v1113 = vcvt.s32.f32 %v1081
      %v1114 = vcvt.s32.f32 %v1082
      %v1115 = vcvt.s32.f32 %v1083
      %v1116 = vcvt.s32.f32 %v1084
      %v1117 = vcvt.s32.f32 %v1085
      %v1118 = vcvt.s32.f32 %v1086
      %v1119 = vcvt.s32.f32 %v1087
      %v1120 = vcvt.s32.f32 %v1088
      %v1121 = vcvt.s32.f32 %v1089
      %v1122 = vcvt.s32.f32 %v1090
      %v1123 = vcvt.s32.f32 %v1091
      %v1124 = vcvt.s32.f32 %v1092
      %v1125 = vsel %vm613, 1, 0
      %v1126 = vsel %vm614, 1, 0
      %v1127 = vsel %vm615, 1, 0
      %v1128 = vsel %vm616, 1, 0
      %v1129 = vsel %vm617, 1, 0
      %v1130 = vsel %vm618, 1, 0
      %v1131 = vsel %vm619, 1, 0
      %v1132 = vsel %vm620, 1, 0
      %v1133 = vsel %vm621, 1, 0
      %v1134 = vsel %vm622, 1, 0
      %v1135 = vsel %vm623, 1, 0
      %v1136 = vsel %vm624, 1, 0
      %v1137 = vsel %vm625, 1, 0
      %v1138 = vsel %vm626, 1, 0
      %v1139 = vsel %vm627, 1, 0
      %v1140 = vsel %vm628, 1, 0
      %v1141 = vsel %vm629, 1, 0
      %v1142 = vsel %vm630, 1, 0
      %v1143 = vsel %vm631, 1, 0
      %v1144 = vsel %vm632, 1, 0
      %v1145 = vsel %vm633, 1, 0
      %v1146 = vsel %vm634, 1, 0
      %v1147 = vsel %vm635, 1, 0
      %v1148 = vsel %vm636, 1, 0
      %v1149 = vsel %vm637, 1, 0
      %v1150 = vsel %vm638, 1, 0
      %v1151 = vsel %vm639, 1, 0
      %v1152 = vsel %vm640, 1, 0
      %v1153 = vsel %vm641, 1, 0
      %v1154 = vsel %vm642, 1, 0
      %v1155 = vsel %vm643, 1, 0
      %v1156 = vsel %vm644, 1, 0
      %v1157 = vcvt.s32.f32 %v1125
      %v1158 = vcvt.s32.f32 %v1126
      %v1159 = vcvt.s32.f32 %v1127
      %v1160 = vcvt.s32.f32 %v1128
      %v1161 = vcvt.s32.f32 %v1129
      %v1162 = vcvt.s32.f32 %v1130
      %v1163 = vcvt.s32.f32 %v1131
      %v1164 = vcvt.s32.f32 %v1132
      %v1165 = vcvt.s32.f32 %v1133
      %v1166 = vcvt.s32.f32 %v1134
      %v1167 = vcvt.s32.f32 %v1135
      %v1168 = vcvt.s32.f32 %v1136
      %v1169 = vcvt.s32.f32 %v1137
      %v1170 = vcvt.s32.f32 %v1138
      %v1171 = vcvt.s32.f32 %v1139
      %v1172 = vcvt.s32.f32 %v1140
      %v1173 = vcvt.s32.f32 %v1141
      %v1174 = vcvt.s32.f32 %v1142
      %v1175 = vcvt.s32.f32 %v1143
      %v1176 = vcvt.s32.f32 %v1144
      %v1177 = vcvt.s32.f32 %v1145
      %v1178 = vcvt.s32.f32 %v1146
      %v1179 = vcvt.s32.f32 %v1147
      %v1180 = vcvt.s32.f32 %v1148
      %v1181 = vcvt.s32.f32 %v1149
      %v1182 = vcvt.s32.f32 %v1150
      %v1183 = vcvt.s32.f32 %v1151
      %v1184 = vcvt.s32.f32 %v1152
      %v1185 = vcvt.s32.f32 %v1153
      %v1186 = vcvt.s32.f32 %v1154
      %v1187 = vcvt.s32.f32 %v1155
      %v1188 = vcvt.s32.f32 %v1156
      %vm1189 = vmand %vm613, %vm549
      %vm1190 = vmand %vm614, %vm550
      %vm1191 = vmand %vm615, %vm551
      %vm1192 = vmand %vm616, %vm552
      %vm1193 = vmand %vm617, %vm553
      %vm1194 = vmand %vm618, %vm554
      %vm1195 = vmand %vm619, %vm555
      %vm1196 = vmand %vm620, %vm556
      %vm1197 = vmand %vm621, %vm557
      %vm1198 = vmand %vm622, %vm558
      %vm1199 = vmand %vm623, %vm559
      %vm1200 = vmand %vm624, %vm560
      %vm1201 = vmand %vm625, %vm561
      %vm1202 = vmand %vm626, %vm562
      %vm1203 = vmand %vm627, %vm563
      %vm1204 = vmand %vm628, %vm564
      %vm1205 = vmand %vm629, %vm565
      %vm1206 = vmand %vm630, %vm566
      %vm1207 = vmand %vm631, %vm567
      %vm1208 = vmand %vm632, %vm568
      %vm1209 = vmand %vm633, %vm569
      %vm1210 = vmand %vm634, %vm570
      %vm1211 = vmand %vm635, %vm571
      %vm1212 = vmand %vm636, %vm572
      %vm1213 = vmand %vm637, %vm573
      %vm1214 = vmand %vm638, %vm574
      %vm1215 = vmand %vm639, %vm575
      %vm1216 = vmand %vm640, %vm576
      %vm1217 = vmand %vm641, %vm577
      %vm1218 = vmand %vm642, %vm578
      %vm1219 = vmand %vm643, %vm579
      %vm1220 = vmand %vm644, %vm580
      %v1221 = vsel %vm1189, 1, 0
      %v1222 = vsel %vm1190, 1, 0
      %v1223 = vsel %vm1191, 1, 0
      %v1224 = vsel %vm1192, 1, 0
      %v1225 = vsel %vm1193, 1, 0
      %v1226 = vsel %vm1194, 1, 0
      %v1227 = vsel %vm1195, 1, 0
      %v1228 = vsel %vm1196, 1, 0
      %v1229 = vsel %vm1197, 1, 0
      %v1230 = vsel %vm1198, 1, 0
      %v1231 = vsel %vm1199, 1, 0
      %v1232 = vsel %vm1200, 1, 0
      %v1233 = vsel %vm1201, 1, 0
      %v1234 = vsel %vm1202, 1, 0
      %v1235 = vsel %vm1203, 1, 0
      %v1236 = vsel %vm1204, 1, 0
      %v1237 = vsel %vm1205, 1, 0
      %v1238 = vsel %vm1206, 1, 0
      %v1239 = vsel %vm1207, 1, 0
      %v1240 = vsel %vm1208, 1, 0
      %v1241 = vsel %vm1209, 1, 0
      %v1242 = vsel %vm1210, 1, 0
      %v1243 = vsel %vm1211, 1, 0
      %v1244 = vsel %vm1212, 1, 0
      %v1245 = vsel %vm1213, 1, 0
      %v1246 = vsel %vm1214, 1, 0
      %v1247 = vsel %vm1215, 1, 0
      %v1248 = vsel %vm1216, 1, 0
      %v1249 = vsel %vm1217, 1, 0
      %v1250 = vsel %vm1218, 1, 0
      %v1251 = vsel %vm1219, 1, 0
      %v1252 = vsel %vm1220, 1, 0
      %v1253 = vcvt.s32.f32 %v1221
      %v1254 = vcvt.s32.f32 %v1222
      %v1255 = vcvt.s32.f32 %v1223
      %v1256 = vcvt.s32.f32 %v1224
      %v1257 = vcvt.s32.f32 %v1225
      %v1258 = vcvt.s32.f32 %v1226
      %v1259 = vcvt.s32.f32 %v1227
      %v1260 = vcvt.s32.f32 %v1228
      %v1261 = vcvt.s32.f32 %v1229
      %v1262 = vcvt.s32.f32 %v1230
      %v1263 = vcvt.s32.f32 %v1231
      %v1264 = vcvt.s32.f32 %v1232
      %v1265 = vcvt.s32.f32 %v1233
      %v1266 = vcvt.s32.f32 %v1234
      %v1267 = vcvt.s32.f32 %v1235
      %v1268 = vcvt.s32.f32 %v1236
      %v1269 = vcvt.s32.f32 %v1237
      %v1270 = vcvt.s32.f32 %v1238
      %v1271 = vcvt.s32.f32 %v1239
      %v1272 = vcvt.s32.f32 %v1240
      %v1273 = vcvt.s32.f32 %v1241
      %v1274 = vcvt.s32.f32 %v1242
      %v1275 = vcvt.s32.f32 %v1243
      %v1276 = vcvt.s32.f32 %v1244
      %v1277 = vcvt.s32.f32 %v1245
      %v1278 = vcvt.s32.f32 %v1246
      %v1279 = vcvt.s32.f32 %v1247
      %v1280 = vcvt.s32.f32 %v1248
      %v1281 = vcvt.s32.f32 %v1249
      %v1282 = vcvt.s32.f32 %v1250
      %v1283 = vcvt.s32.f32 %v1251
      %v1284 = vcvt.s32.f32 %v1252
      %v1285 = vand.u32 %v421, 7
      %v1286 = vand.u32 %v422, 7
      %v1287 = vand.u32 %v423, 7
      %v1288 = vand.u32 %v424, 7
      %v1289 = vand.u32 %v425, 7
      %v1290 = vand.u32 %v426, 7
      %v1291 = vand.u32 %v427, 7
      %v1292 = vand.u32 %v428, 7
      %v1293 = vand.u32 %v421, 63
      %v1294 = vand.u32 %v422, 63
      %v1295 = vand.u32 %v423, 63
      %v1296 = vand.u32 %v424, 63
      %v1297 = vand.u32 %v425, 63
      %v1298 = vand.u32 %v426, 63
      %v1299 = vand.u32 %v427, 63
      %v1300 = vand.u32 %v428, 63
      %vm1301 = vcmp.gt.s32.totalorder %v1285, 0
      %vm1302 = vcmp.gt.s32.totalorder %v1286, 0
      %vm1303 = vcmp.gt.s32.totalorder %v1287, 0
      %vm1304 = vcmp.gt.s32.totalorder %v1288, 0
      %vm1305 = vcmp.gt.s32.totalorder %v1289, 0
      %vm1306 = vcmp.gt.s32.totalorder %v1290, 0
      %vm1307 = vcmp.gt.s32.totalorder %v1291, 0
      %vm1308 = vcmp.gt.s32.totalorder %v1292, 0
      %vm1309 = vcmp.lt.s32.totalorder %v1285, 7
      %vm1310 = vcmp.lt.s32.totalorder %v1286, 7
      %vm1311 = vcmp.lt.s32.totalorder %v1287, 7
      %vm1312 = vcmp.lt.s32.totalorder %v1288, 7
      %vm1313 = vcmp.lt.s32.totalorder %v1289, 7
      %vm1314 = vcmp.lt.s32.totalorder %v1290, 7
      %vm1315 = vcmp.lt.s32.totalorder %v1291, 7
      %vm1316 = vcmp.lt.s32.totalorder %v1292, 7
      %vm1317 = vcmp.ge.s32.totalorder %v1293, 8
      %vm1318 = vcmp.ge.s32.totalorder %v1294, 8
      %vm1319 = vcmp.ge.s32.totalorder %v1295, 8
      %vm1320 = vcmp.ge.s32.totalorder %v1296, 8
      %vm1321 = vcmp.ge.s32.totalorder %v1297, 8
      %vm1322 = vcmp.ge.s32.totalorder %v1298, 8
      %vm1323 = vcmp.ge.s32.totalorder %v1299, 8
      %vm1324 = vcmp.ge.s32.totalorder %v1300, 8
      %vm1325 = vcmp.lt.s32.totalorder %v1293, 56
      %vm1326 = vcmp.lt.s32.totalorder %v1294, 56
      %vm1327 = vcmp.lt.s32.totalorder %v1295, 56
      %vm1328 = vcmp.lt.s32.totalorder %v1296, 56
      %vm1329 = vcmp.lt.s32.totalorder %v1297, 56
      %vm1330 = vcmp.lt.s32.totalorder %v1298, 56
      %vm1331 = vcmp.lt.s32.totalorder %v1299, 56
      %vm1332 = vcmp.lt.s32.totalorder %v1300, 56
      %vm1333 = vmand %vm1317, %vm1301
      %vm1334 = vmand %vm1318, %vm1302
      %vm1335 = vmand %vm1319, %vm1303
      %vm1336 = vmand %vm1320, %vm1304
      %vm1337 = vmand %vm1321, %vm1305
      %vm1338 = vmand %vm1322, %vm1306
      %vm1339 = vmand %vm1323, %vm1307
      %vm1340 = vmand %vm1324, %vm1308
      %v1341 = vsel %vm1333, 1, 0
      %v1342 = vsel %vm1334, 1, 0
      %v1343 = vsel %vm1335, 1, 0
      %v1344 = vsel %vm1336, 1, 0
      %v1345 = vsel %vm1337, 1, 0
      %v1346 = vsel %vm1338, 1, 0
      %v1347 = vsel %vm1339, 1, 0
      %v1348 = vsel %vm1340, 1, 0
      %v1349 = vcvt.s32.f32 %v1341
      %v1350 = vcvt.s32.f32 %v1342
      %v1351 = vcvt.s32.f32 %v1343
      %v1352 = vcvt.s32.f32 %v1344
      %v1353 = vcvt.s32.f32 %v1345
      %v1354 = vcvt.s32.f32 %v1346
      %v1355 = vcvt.s32.f32 %v1347
      %v1356 = vcvt.s32.f32 %v1348
      %v1357 = vsel %vm1317, 1, 0
      %v1358 = vsel %vm1318, 1, 0
      %v1359 = vsel %vm1319, 1, 0
      %v1360 = vsel %vm1320, 1, 0
      %v1361 = vsel %vm1321, 1, 0
      %v1362 = vsel %vm1322, 1, 0
      %v1363 = vsel %vm1323, 1, 0
      %v1364 = vsel %vm1324, 1, 0
      %v1365 = vcvt.s32.f32 %v1357
      %v1366 = vcvt.s32.f32 %v1358
      %v1367 = vcvt.s32.f32 %v1359
      %v1368 = vcvt.s32.f32 %v1360
      %v1369 = vcvt.s32.f32 %v1361
      %v1370 = vcvt.s32.f32 %v1362
      %v1371 = vcvt.s32.f32 %v1363
      %v1372 = vcvt.s32.f32 %v1364
      %vm1373 = vmand %vm1317, %vm1309
      %vm1374 = vmand %vm1318, %vm1310
      %vm1375 = vmand %vm1319, %vm1311
      %vm1376 = vmand %vm1320, %vm1312
      %vm1377 = vmand %vm1321, %vm1313
      %vm1378 = vmand %vm1322, %vm1314
      %vm1379 = vmand %vm1323, %vm1315
      %vm1380 = vmand %vm1324, %vm1316
      %v1381 = vsel %vm1373, 1, 0
      %v1382 = vsel %vm1374, 1, 0
      %v1383 = vsel %vm1375, 1, 0
      %v1384 = vsel %vm1376, 1, 0
      %v1385 = vsel %vm1377, 1, 0
      %v1386 = vsel %vm1378, 1, 0
      %v1387 = vsel %vm1379, 1, 0
      %v1388 = vsel %vm1380, 1, 0
      %v1389 = vcvt.s32.f32 %v1381
      %v1390 = vcvt.s32.f32 %v1382
      %v1391 = vcvt.s32.f32 %v1383
      %v1392 = vcvt.s32.f32 %v1384
      %v1393 = vcvt.s32.f32 %v1385
      %v1394 = vcvt.s32.f32 %v1386
      %v1395 = vcvt.s32.f32 %v1387
      %v1396 = vcvt.s32.f32 %v1388
      %v1397 = vsel %vm1301, 1, 0
      %v1398 = vsel %vm1302, 1, 0
      %v1399 = vsel %vm1303, 1, 0
      %v1400 = vsel %vm1304, 1, 0
      %v1401 = vsel %vm1305, 1, 0
      %v1402 = vsel %vm1306, 1, 0
      %v1403 = vsel %vm1307, 1, 0
      %v1404 = vsel %vm1308, 1, 0
      %v1405 = vcvt.s32.f32 %v1397
      %v1406 = vcvt.s32.f32 %v1398
      %v1407 = vcvt.s32.f32 %v1399
      %v1408 = vcvt.s32.f32 %v1400
      %v1409 = vcvt.s32.f32 %v1401
      %v1410 = vcvt.s32.f32 %v1402
      %v1411 = vcvt.s32.f32 %v1403
      %v1412 = vcvt.s32.f32 %v1404
      %v1413 = vsel %vm1309, 1, 0
      %v1414 = vsel %vm1310, 1, 0
      %v1415 = vsel %vm1311, 1, 0
      %v1416 = vsel %vm1312, 1, 0
      %v1417 = vsel %vm1313, 1, 0
      %v1418 = vsel %vm1314, 1, 0
      %v1419 = vsel %vm1315, 1, 0
      %v1420 = vsel %vm1316, 1, 0
      %v1421 = vcvt.s32.f32 %v1413
      %v1422 = vcvt.s32.f32 %v1414
      %v1423 = vcvt.s32.f32 %v1415
      %v1424 = vcvt.s32.f32 %v1416
      %v1425 = vcvt.s32.f32 %v1417
      %v1426 = vcvt.s32.f32 %v1418
      %v1427 = vcvt.s32.f32 %v1419
      %v1428 = vcvt.s32.f32 %v1420
      %vm1429 = vmand %vm1325, %vm1301
      %vm1430 = vmand %vm1326, %vm1302
      %vm1431 = vmand %vm1327, %vm1303
      %vm1432 = vmand %vm1328, %vm1304
      %vm1433 = vmand %vm1329, %vm1305
      %vm1434 = vmand %vm1330, %vm1306
      %vm1435 = vmand %vm1331, %vm1307
      %vm1436 = vmand %vm1332, %vm1308
      %v1437 = vsel %vm1429, 1, 0
      %v1438 = vsel %vm1430, 1, 0
      %v1439 = vsel %vm1431, 1, 0
      %v1440 = vsel %vm1432, 1, 0
      %v1441 = vsel %vm1433, 1, 0
      %v1442 = vsel %vm1434, 1, 0
      %v1443 = vsel %vm1435, 1, 0
      %v1444 = vsel %vm1436, 1, 0
      %v1445 = vcvt.s32.f32 %v1437
      %v1446 = vcvt.s32.f32 %v1438
      %v1447 = vcvt.s32.f32 %v1439
      %v1448 = vcvt.s32.f32 %v1440
      %v1449 = vcvt.s32.f32 %v1441
      %v1450 = vcvt.s32.f32 %v1442
      %v1451 = vcvt.s32.f32 %v1443
      %v1452 = vcvt.s32.f32 %v1444
      %v1453 = vsel %vm1325, 1, 0
      %v1454 = vsel %vm1326, 1, 0
      %v1455 = vsel %vm1327, 1, 0
      %v1456 = vsel %vm1328, 1, 0
      %v1457 = vsel %vm1329, 1, 0
      %v1458 = vsel %vm1330, 1, 0
      %v1459 = vsel %vm1331, 1, 0
      %v1460 = vsel %vm1332, 1, 0
      %v1461 = vcvt.s32.f32 %v1453
      %v1462 = vcvt.s32.f32 %v1454
      %v1463 = vcvt.s32.f32 %v1455
      %v1464 = vcvt.s32.f32 %v1456
      %v1465 = vcvt.s32.f32 %v1457
      %v1466 = vcvt.s32.f32 %v1458
      %v1467 = vcvt.s32.f32 %v1459
      %v1468 = vcvt.s32.f32 %v1460
      %vm1469 = vmand %vm1325, %vm1309
      %vm1470 = vmand %vm1326, %vm1310
      %vm1471 = vmand %vm1327, %vm1311
      %vm1472 = vmand %vm1328, %vm1312
      %vm1473 = vmand %vm1329, %vm1313
      %vm1474 = vmand %vm1330, %vm1314
      %vm1475 = vmand %vm1331, %vm1315
      %vm1476 = vmand %vm1332, %vm1316
      %v1477 = vsel %vm1469, 1, 0
      %v1478 = vsel %vm1470, 1, 0
      %v1479 = vsel %vm1471, 1, 0
      %v1480 = vsel %vm1472, 1, 0
      %v1481 = vsel %vm1473, 1, 0
      %v1482 = vsel %vm1474, 1, 0
      %v1483 = vsel %vm1475, 1, 0
      %v1484 = vsel %vm1476, 1, 0
      %v1485 = vcvt.s32.f32 %v1477
      %v1486 = vcvt.s32.f32 %v1478
      %v1487 = vcvt.s32.f32 %v1479
      %v1488 = vcvt.s32.f32 %v1480
      %v1489 = vcvt.s32.f32 %v1481
      %v1490 = vcvt.s32.f32 %v1482
      %v1491 = vcvt.s32.f32 %v1483
      %v1492 = vcvt.s32.f32 %v1484
      %v1493 = vand.u32 %v421, 3
      %v1494 = vand.u32 %v422, 3
      %vm1495 = vcmp.gt.s32.totalorder %v1493, 0
      %vm1496 = vcmp.gt.s32.totalorder %v1494, 0
      %vm1497 = vcmp.lt.s32.totalorder %v1493, 3
      %vm1498 = vcmp.lt.s32.totalorder %v1494, 3
      %vm1499 = vcmp.ge.s32.totalorder %v453, 4
      %vm1500 = vcmp.ge.s32.totalorder %v454, 4
      %vm1501 = vcmp.lt.s32.totalorder %v453, 12
      %vm1502 = vcmp.lt.s32.totalorder %v454, 12
      %vm1503 = vmand %vm1499, %vm1495
      %vm1504 = vmand %vm1500, %vm1496
      %v1505 = vsel %vm1503, 1, 0
      %v1506 = vsel %vm1504, 1, 0
      %v1507 = vcvt.s32.f32 %v1505
      %v1508 = vcvt.s32.f32 %v1506
      %v1509 = vsel %vm1499, 1, 0
      %v1510 = vsel %vm1500, 1, 0
      %v1511 = vcvt.s32.f32 %v1509
      %v1512 = vcvt.s32.f32 %v1510
      %vm1513 = vmand %vm1499, %vm1497
      %vm1514 = vmand %vm1500, %vm1498
      %v1515 = vsel %vm1513, 1, 0
      %v1516 = vsel %vm1514, 1, 0
      %v1517 = vcvt.s32.f32 %v1515
      %v1518 = vcvt.s32.f32 %v1516
      %v1519 = vsel %vm1495, 1, 0
      %v1520 = vsel %vm1496, 1, 0
      %v1521 = vcvt.s32.f32 %v1519
      %v1522 = vcvt.s32.f32 %v1520
      %v1523 = vsel %vm1497, 1, 0
      %v1524 = vsel %vm1498, 1, 0
      %v1525 = vcvt.s32.f32 %v1523
      %v1526 = vcvt.s32.f32 %v1524
      %vm1527 = vmand %vm1501, %vm1495
      %vm1528 = vmand %vm1502, %vm1496
      %v1529 = vsel %vm1527, 1, 0
      %v1530 = vsel %vm1528, 1, 0
      %v1531 = vcvt.s32.f32 %v1529
      %v1532 = vcvt.s32.f32 %v1530
      %v1533 = vsel %vm1501, 1, 0
      %v1534 = vsel %vm1502, 1, 0
      %v1535 = vcvt.s32.f32 %v1533
      %v1536 = vcvt.s32.f32 %v1534
      %vm1537 = vmand %vm1501, %vm1497
      %vm1538 = vmand %vm1502, %vm1498
      %v1539 = vsel %vm1537, 1, 0
      %v1540 = vsel %vm1538, 1, 0
      %v1541 = vcvt.s32.f32 %v1539
      %v1542 = vcvt.s32.f32 %v1540
      %v1543 = vld [vmem:[%s380] sm:$0xff]
      %v1544 = vld [vmem:[%s380 + $0x8] sm:$0xff]
      %v1545 = vld [vmem:[%s380 + $0x10] sm:$0xff]
      %v1546 = vld [vmem:[%s380 + $0x18] sm:$0xff]
      %v1547 = vld [vmem:[%s380 + $0x20] sm:$0xff]
      %v1548 = vld [vmem:[%s380 + $0x28] sm:$0xff]
      %v1549 = vld [vmem:[%s380 + $0x30] sm:$0xff]
      %v1550 = vld [vmem:[%s380 + $0x38] sm:$0xff]
      %v1551 = vld [vmem:[%s380 + $0x40] sm:$0xff]
      %v1552 = vld [vmem:[%s380 + $0x48] sm:$0xff]
      %v1553 = vld [vmem:[%s380 + $0x50] sm:$0xff]
      %v1554 = vld [vmem:[%s380 + $0x58] sm:$0xff]
      %v1555 = vld [vmem:[%s380 + $0x60] sm:$0xff]
      %v1556 = vld [vmem:[%s380 + $0x68] sm:$0xff]
      %v1557 = vld [vmem:[%s380 + $0x70] sm:$0xff]
      %v1558 = vld [vmem:[%s380 + $0x78] sm:$0xff]
      %v1559 = vld [vmem:[%s380 + $0x80] sm:$0xff]
      %v1560 = vld [vmem:[%s380 + $0x88] sm:$0xff]
      %v1561 = vld [vmem:[%s380 + $0x90] sm:$0xff]
      %v1562 = vld [vmem:[%s380 + $0x98] sm:$0xff]
      %v1563 = vld [vmem:[%s380 + $0xa0] sm:$0xff]
      %v1564 = vld [vmem:[%s380 + $0xa8] sm:$0xff]
      %v1565 = vld [vmem:[%s380 + $0xb0] sm:$0xff]
      %v1566 = vld [vmem:[%s380 + $0xb8] sm:$0xff]
      %v1567 = vld [vmem:[%s380 + $0xc0] sm:$0xff]
      %v1568 = vld [vmem:[%s380 + $0xc8] sm:$0xff]
      %v1569 = vld [vmem:[%s380 + $0xd0] sm:$0xff]
      %v1570 = vld [vmem:[%s380 + $0xd8] sm:$0xff]
      %v1571 = vld [vmem:[%s380 + $0xe0] sm:$0xff]
      %v1572 = vld [vmem:[%s380 + $0xe8] sm:$0xff]
      %v1573 = vld [vmem:[%s380 + $0xf0] sm:$0xff]
      %v1574 = vld [vmem:[%s380 + $0xf8] sm:$0xff]
      %v1575 = vld [vmem:[%s1] sm:$0xff]
      %v1576 = vld [vmem:[%s1 + $0x8] sm:$0xff]
      %v1577 = vld [vmem:[%s1 + $0x10] sm:$0xff]
      %v1578 = vld [vmem:[%s1 + $0x18] sm:$0x7]
      %vm1582 = vcmask 1040384
      %v1583 = vrot.slane %v1572, 7
      %v1584 = vrot.slane %v1573, 7
      %v1585 = vsel %vm1582, %v1583, %v1584
      %v1586 = vrot.slane %v1574, 7
      %v1587 = vsel %vm1582, %v1584, %v1586
      %v1620 = vrot.slane %v1543, 7
      %v1621 = vrot.slane %v1544, 7
      %v1622 = vsel %vm1582, %v1620, %v1621
      %v1623 = vrot.slane %v1545, 7
      %v1624 = vsel %vm1582, %v1621, %v1623
      %v1625 = vrot.slane %v1546, 7
      %v1626 = vsel %vm1582, %v1623, %v1625
      %v1627 = vrot.slane %v1547, 7
      %v1628 = vsel %vm1582, %v1625, %v1627
      %v1629 = vrot.slane %v1548, 7
      %v1630 = vsel %vm1582, %v1627, %v1629
      %v1631 = vrot.slane %v1549, 7
      %v1632 = vsel %vm1582, %v1629, %v1631
      %v1633 = vrot.slane %v1550, 7
      %v1634 = vsel %vm1582, %v1631, %v1633
      %v1635 = vrot.slane %v1551, 7
      %v1636 = vsel %vm1582, %v1633, %v1635
      %v1637 = vrot.slane %v1552, 7
      %v1638 = vsel %vm1582, %v1635, %v1637
      %v1639 = vrot.slane %v1553, 7
      %v1640 = vsel %vm1582, %v1637, %v1639
      %v1641 = vrot.slane %v1554, 7
      %v1642 = vsel %vm1582, %v1639, %v1641
      %v1643 = vrot.slane %v1555, 7
      %v1644 = vsel %vm1582, %v1641, %v1643
      %v1645 = vrot.slane %v1556, 7
      %v1646 = vsel %vm1582, %v1643, %v1645
      %v1647 = vrot.slane %v1557, 7
      %v1648 = vsel %vm1582, %v1645, %v1647
      %v1649 = vrot.slane %v1558, 7
      %v1650 = vsel %vm1582, %v1647, %v1649
      %v1651 = vrot.slane %v1559, 7
      %v1652 = vsel %vm1582, %v1649, %v1651
      %v1653 = vrot.slane %v1560, 7
      %v1654 = vsel %vm1582, %v1651, %v1653
      %v1655 = vrot.slane %v1561, 7
      %v1656 = vsel %vm1582, %v1653, %v1655
      %v1657 = vrot.slane %v1562, 7
      %v1658 = vsel %vm1582, %v1655, %v1657
      %v1659 = vrot.slane %v1563, 7
      %v1660 = vsel %vm1582, %v1657, %v1659
      %v1661 = vrot.slane %v1564, 7
      %v1662 = vsel %vm1582, %v1659, %v1661
      %v1663 = vrot.slane %v1565, 7
      %v1664 = vsel %vm1582, %v1661, %v1663
      %v1665 = vrot.slane %v1566, 7
      %v1666 = vsel %vm1582, %v1663, %v1665
      %v1667 = vrot.slane %v1567, 7
      %v1668 = vsel %vm1582, %v1665, %v1667
      %v1669 = vrot.slane %v1568, 7
      %v1670 = vsel %vm1582, %v1667, %v1669
      %v1671 = vrot.slane %v1569, 7
      %v1672 = vsel %vm1582, %v1669, %v1671
      %v1673 = vrot.slane %v1570, 7
      %v1674 = vsel %vm1582, %v1671, %v1673
      %v1675 = vrot.slane %v1571, 7
      %v1676 = vsel %vm1582, %v1673, %v1675
      %v1677 = vsel %vm1582, %v1675, %v1583
      %v1708 = vsel %vm1582, %v1586, %v1620
      %v1709 = vmul.f32 %v1585, %v709
      %v1710 = vmul.f32 %v1587, %v710
      %v1711 = vmul.f32 %v1708, %v711
      %v1712 = vmul.f32 %v1622, %v712
      %v1713 = vmul.f32 %v1624, %v713
      %v1714 = vmul.f32 %v1626, %v714
      %v1715 = vmul.f32 %v1628, %v715
      %v1716 = vmul.f32 %v1630, %v716
      %v1717 = vmul.f32 %v1632, %v717
      %v1718 = vmul.f32 %v1634, %v718
      %v1719 = vmul.f32 %v1636, %v719
      %v1720 = vmul.f32 %v1638, %v720
      %v1721 = vmul.f32 %v1640, %v721
      %v1722 = vmul.f32 %v1642, %v722
      %v1723 = vmul.f32 %v1644, %v723
      %v1724 = vmul.f32 %v1646, %v724
      %v1725 = vmul.f32 %v1648, %v725
      %v1726 = vmul.f32 %v1650, %v726
      %v1727 = vmul.f32 %v1652, %v727
      %v1728 = vmul.f32 %v1654, %v728
      %v1729 = vmul.f32 %v1656, %v729
      %v1730 = vmul.f32 %v1658, %v730
      %v1731 = vmul.f32 %v1660, %v731
      %v1732 = vmul.f32 %v1662, %v732
      %v1733 = vmul.f32 %v1664, %v733
      %v1734 = vmul.f32 %v1666, %v734
      %v1735 = vmul.f32 %v1668, %v735
      %v1736 = vmul.f32 %v1670, %v736
      %v1737 = vmul.f32 %v1672, %v737
      %v1738 = vmul.f32 %v1674, %v738
      %v1739 = vmul.f32 %v1676, %v739
      %v1740 = vmul.f32 %v1677, %v740
      %v1741 = vmul.f32 %v1573, %v773
      %v1742 = vmul.f32 %v1574, %v774
      %v1743 = vmul.f32 %v1543, %v775
      %v1744 = vmul.f32 %v1544, %v776
      %v1745 = vmul.f32 %v1545, %v777
      %v1746 = vmul.f32 %v1546, %v778
      %v1747 = vmul.f32 %v1547, %v779
      %v1748 = vmul.f32 %v1548, %v780
      %v1749 = vmul.f32 %v1549, %v781
      %v1750 = vmul.f32 %v1550, %v782
      %v1751 = vmul.f32 %v1551, %v783
      %v1752 = vmul.f32 %v1552, %v784
      %v1753 = vmul.f32 %v1553, %v785
      %v1754 = vmul.f32 %v1554, %v786
      %v1755 = vmul.f32 %v1555, %v787
      %v1756 = vmul.f32 %v1556, %v788
      %v1757 = vmul.f32 %v1557, %v789
      %v1758 = vmul.f32 %v1558, %v790
      %v1759 = vmul.f32 %v1559, %v791
      %v1760 = vmul.f32 %v1560, %v792
      %v1761 = vmul.f32 %v1561, %v793
      %v1762 = vmul.f32 %v1562, %v794
      %v1763 = vmul.f32 %v1563, %v795
      %v1764 = vmul.f32 %v1564, %v796
      %v1765 = vmul.f32 %v1565, %v797
      %v1766 = vmul.f32 %v1566, %v798
      %v1767 = vmul.f32 %v1567, %v799
      %v1768 = vmul.f32 %v1568, %v800
      %v1769 = vmul.f32 %v1569, %v801
      %v1770 = vmul.f32 %v1570, %v802
      %v1771 = vmul.f32 %v1571, %v803
      %v1772 = vmul.f32 %v1572, %v804
      %vm1773 = vcmask 1046528
      %v1774 = vrot.slane %v1573, 1
      %v1775 = vrot.slane %v1574, 1
      %v1776 = vsel %vm1773, %v1774, %v1775
      %v1779 = vrot.slane %v1543, 1
      %v1780 = vrot.slane %v1544, 1
      %v1781 = vsel %vm1773, %v1779, %v1780
      %v1782 = vrot.slane %v1545, 1
      %v1783 = vsel %vm1773, %v1780, %v1782
      %v1784 = vrot.slane %v1546, 1
      %v1785 = vsel %vm1773, %v1782, %v1784
      %v1786 = vrot.slane %v1547, 1
      %v1787 = vsel %vm1773, %v1784, %v1786
      %v1788 = vrot.slane %v1548, 1
      %v1789 = vsel %vm1773, %v1786, %v1788
      %v1790 = vrot.slane %v1549, 1
      %v1791 = vsel %vm1773, %v1788, %v1790
      %v1792 = vrot.slane %v1550, 1
      %v1793 = vsel %vm1773, %v1790, %v1792
      %v1794 = vrot.slane %v1551, 1
      %v1795 = vsel %vm1773, %v1792, %v1794
      %v1796 = vrot.slane %v1552, 1
      %v1797 = vsel %vm1773, %v1794, %v1796
      %v1798 = vrot.slane %v1553, 1
      %v1799 = vsel %vm1773, %v1796, %v1798
      %v1800 = vrot.slane %v1554, 1
      %v1801 = vsel %vm1773, %v1798, %v1800
      %v1802 = vrot.slane %v1555, 1
      %v1803 = vsel %vm1773, %v1800, %v1802
      %v1804 = vrot.slane %v1556, 1
      %v1805 = vsel %vm1773, %v1802, %v1804
      %v1806 = vrot.slane %v1557, 1
      %v1807 = vsel %vm1773, %v1804, %v1806
      %v1808 = vrot.slane %v1558, 1
      %v1809 = vsel %vm1773, %v1806, %v1808
      %v1810 = vrot.slane %v1559, 1
      %v1811 = vsel %vm1773, %v1808, %v1810
      %v1812 = vrot.slane %v1560, 1
      %v1813 = vsel %vm1773, %v1810, %v1812
      %v1814 = vrot.slane %v1561, 1
      %v1815 = vsel %vm1773, %v1812, %v1814
      %v1816 = vrot.slane %v1562, 1
      %v1817 = vsel %vm1773, %v1814, %v1816
      %v1818 = vrot.slane %v1563, 1
      %v1819 = vsel %vm1773, %v1816, %v1818
      %v1820 = vrot.slane %v1564, 1
      %v1821 = vsel %vm1773, %v1818, %v1820
      %v1822 = vrot.slane %v1565, 1
      %v1823 = vsel %vm1773, %v1820, %v1822
      %v1824 = vrot.slane %v1566, 1
      %v1825 = vsel %vm1773, %v1822, %v1824
      %v1826 = vrot.slane %v1567, 1
      %v1827 = vsel %vm1773, %v1824, %v1826
      %v1828 = vrot.slane %v1568, 1
      %v1829 = vsel %vm1773, %v1826, %v1828
      %v1830 = vrot.slane %v1569, 1
      %v1831 = vsel %vm1773, %v1828, %v1830
      %v1832 = vrot.slane %v1570, 1
      %v1833 = vsel %vm1773, %v1830, %v1832
      %v1834 = vrot.slane %v1571, 1
      %v1835 = vsel %vm1773, %v1832, %v1834
      %v1836 = vrot.slane %v1572, 1
      %v1837 = vsel %vm1773, %v1834, %v1836
      %v1838 = vsel %vm1773, %v1836, %v1774
      %v1870 = vsel %vm1773, %v1775, %v1779
      %v1871 = vmul.f32 %v1776, %v869
      %v1872 = vmul.f32 %v1870, %v870
      %v1873 = vmul.f32 %v1781, %v871
      %v1874 = vmul.f32 %v1783, %v872
      %v1875 = vmul.f32 %v1785, %v873
      %v1876 = vmul.f32 %v1787, %v874
      %v1877 = vmul.f32 %v1789, %v875
      %v1878 = vmul.f32 %v1791, %v876
      %v1879 = vmul.f32 %v1793, %v877
      %v1880 = vmul.f32 %v1795, %v878
      %v1881 = vmul.f32 %v1797, %v879
      %v1882 = vmul.f32 %v1799, %v880
      %v1883 = vmul.f32 %v1801, %v881
      %v1884 = vmul.f32 %v1803, %v882
      %v1885 = vmul.f32 %v1805, %v883
      %v1886 = vmul.f32 %v1807, %v884
      %v1887 = vmul.f32 %v1809, %v885
      %v1888 = vmul.f32 %v1811, %v886
      %v1889 = vmul.f32 %v1813, %v887
      %v1890 = vmul.f32 %v1815, %v888
      %v1891 = vmul.f32 %v1817, %v889
      %v1892 = vmul.f32 %v1819, %v890
      %v1893 = vmul.f32 %v1821, %v891
      %v1894 = vmul.f32 %v1823, %v892
      %v1895 = vmul.f32 %v1825, %v893
      %v1896 = vmul.f32 %v1827, %v894
      %v1897 = vmul.f32 %v1829, %v895
      %v1898 = vmul.f32 %v1831, %v896
      %v1899 = vmul.f32 %v1833, %v897
      %v1900 = vmul.f32 %v1835, %v898
      %v1901 = vmul.f32 %v1837, %v899
      %v1902 = vmul.f32 %v1838, %v900
      %v1903 = vmul.f32 %v1708, %v933
      %v1904 = vmul.f32 %v1622, %v934
      %v1905 = vmul.f32 %v1624, %v935
      %v1906 = vmul.f32 %v1626, %v936
      %v1907 = vmul.f32 %v1628, %v937
      %v1908 = vmul.f32 %v1630, %v938
      %v1909 = vmul.f32 %v1632, %v939
      %v1910 = vmul.f32 %v1634, %v940
      %v1911 = vmul.f32 %v1636, %v941
      %v1912 = vmul.f32 %v1638, %v942
      %v1913 = vmul.f32 %v1640, %v943
      %v1914 = vmul.f32 %v1642, %v944
      %v1915 = vmul.f32 %v1644, %v945
      %v1916 = vmul.f32 %v1646, %v946
      %v1917 = vmul.f32 %v1648, %v947
      %v1918 = vmul.f32 %v1650, %v948
      %v1919 = vmul.f32 %v1652, %v949
      %v1920 = vmul.f32 %v1654, %v950
      %v1921 = vmul.f32 %v1656, %v951
      %v1922 = vmul.f32 %v1658, %v952
      %v1923 = vmul.f32 %v1660, %v953
      %v1924 = vmul.f32 %v1662, %v954
      %v1925 = vmul.f32 %v1664, %v955
      %v1926 = vmul.f32 %v1666, %v956
      %v1927 = vmul.f32 %v1668, %v957
      %v1928 = vmul.f32 %v1670, %v958
      %v1929 = vmul.f32 %v1672, %v959
      %v1930 = vmul.f32 %v1674, %v960
      %v1931 = vmul.f32 %v1676, %v961
      %v1932 = vmul.f32 %v1677, %v962
      %v1933 = vmul.f32 %v1585, %v963
      %v1934 = vmul.f32 %v1587, %v964
      %v1935 = vmul.f32 %v1781, %v997
      %v1936 = vmul.f32 %v1783, %v998
      %v1937 = vmul.f32 %v1785, %v999
      %v1938 = vmul.f32 %v1787, %v1000
      %v1939 = vmul.f32 %v1789, %v1001
      %v1940 = vmul.f32 %v1791, %v1002
      %v1941 = vmul.f32 %v1793, %v1003
      %v1942 = vmul.f32 %v1795, %v1004
      %v1943 = vmul.f32 %v1797, %v1005
      %v1944 = vmul.f32 %v1799, %v1006
      %v1945 = vmul.f32 %v1801, %v1007
      %v1946 = vmul.f32 %v1803, %v1008
      %v1947 = vmul.f32 %v1805, %v1009
      %v1948 = vmul.f32 %v1807, %v1010
      %v1949 = vmul.f32 %v1809, %v1011
      %v1950 = vmul.f32 %v1811, %v1012
      %v1951 = vmul.f32 %v1813, %v1013
      %v1952 = vmul.f32 %v1815, %v1014
      %v1953 = vmul.f32 %v1817, %v1015
      %v1954 = vmul.f32 %v1819, %v1016
      %v1955 = vmul.f32 %v1821, %v1017
      %v1956 = vmul.f32 %v1823, %v1018
      %v1957 = vmul.f32 %v1825, %v1019
      %v1958 = vmul.f32 %v1827, %v1020
      %v1959 = vmul.f32 %v1829, %v1021
      %v1960 = vmul.f32 %v1831, %v1022
      %v1961 = vmul.f32 %v1833, %v1023
      %v1962 = vmul.f32 %v1835, %v1024
      %v1963 = vmul.f32 %v1837, %v1025
      %v1964 = vmul.f32 %v1838, %v1026
      %v1965 = vmul.f32 %v1776, %v1027
      %v1966 = vmul.f32 %v1870, %v1028
      %v1967 = vmul.f32 %v1624, %v1093
      %v1968 = vmul.f32 %v1626, %v1094
      %v1969 = vmul.f32 %v1628, %v1095
      %v1970 = vmul.f32 %v1630, %v1096
      %v1971 = vmul.f32 %v1632, %v1097
      %v1972 = vmul.f32 %v1634, %v1098
      %v1973 = vmul.f32 %v1636, %v1099
      %v1974 = vmul.f32 %v1638, %v1100
      %v1975 = vmul.f32 %v1640, %v1101
      %v1976 = vmul.f32 %v1642, %v1102
      %v1977 = vmul.f32 %v1644, %v1103
      %v1978 = vmul.f32 %v1646, %v1104
      %v1979 = vmul.f32 %v1648, %v1105
      %v1980 = vmul.f32 %v1650, %v1106
      %v1981 = vmul.f32 %v1652, %v1107
      %v1982 = vmul.f32 %v1654, %v1108
      %v1983 = vmul.f32 %v1656, %v1109
      %v1984 = vmul.f32 %v1658, %v1110
      %v1985 = vmul.f32 %v1660, %v1111
      %v1986 = vmul.f32 %v1662, %v1112
      %v1987 = vmul.f32 %v1664, %v1113
      %v1988 = vmul.f32 %v1666, %v1114
      %v1989 = vmul.f32 %v1668, %v1115
      %v1990 = vmul.f32 %v1670, %v1116
      %v1991 = vmul.f32 %v1672, %v1117
      %v1992 = vmul.f32 %v1674, %v1118
      %v1993 = vmul.f32 %v1676, %v1119
      %v1994 = vmul.f32 %v1677, %v1120
      %v1995 = vmul.f32 %v1585, %v1121
      %v1996 = vmul.f32 %v1587, %v1122
      %v1997 = vmul.f32 %v1708, %v1123
      %v1998 = vmul.f32 %v1622, %v1124
      %v1999 = vmul.f32 %v1545, %v1157
      %v2000 = vmul.f32 %v1546, %v1158
      %v2001 = vmul.f32 %v1547, %v1159
      %v2002 = vmul.f32 %v1548, %v1160
      %v2003 = vmul.f32 %v1549, %v1161
      %v2004 = vmul.f32 %v1550, %v1162
      %v2005 = vmul.f32 %v1551, %v1163
      %v2006 = vmul.f32 %v1552, %v1164
      %v2007 = vmul.f32 %v1553, %v1165
      %v2008 = vmul.f32 %v1554, %v1166
      %v2009 = vmul.f32 %v1555, %v1167
      %v2010 = vmul.f32 %v1556, %v1168
      %v2011 = vmul.f32 %v1557, %v1169
      %v2012 = vmul.f32 %v1558, %v1170
      %v2013 = vmul.f32 %v1559, %v1171
      %v2014 = vmul.f32 %v1560, %v1172
      %v2015 = vmul.f32 %v1561, %v1173
      %v2016 = vmul.f32 %v1562, %v1174
      %v2017 = vmul.f32 %v1563, %v1175
      %v2018 = vmul.f32 %v1564, %v1176
      %v2019 = vmul.f32 %v1565, %v1177
      %v2020 = vmul.f32 %v1566, %v1178
      %v2021 = vmul.f32 %v1567, %v1179
      %v2022 = vmul.f32 %v1568, %v1180
      %v2023 = vmul.f32 %v1569, %v1181
      %v2024 = vmul.f32 %v1570, %v1182
      %v2025 = vmul.f32 %v1571, %v1183
      %v2026 = vmul.f32 %v1572, %v1184
      %v2027 = vmul.f32 %v1573, %v1185
      %v2028 = vmul.f32 %v1574, %v1186
      %v2029 = vmul.f32 %v1543, %v1187
      %v2030 = vmul.f32 %v1544, %v1188
      %v2031 = vmul.f32 %v1785, %v1253
      %v2032 = vmul.f32 %v1787, %v1254
      %v2033 = vmul.f32 %v1789, %v1255
      %v2034 = vmul.f32 %v1791, %v1256
      %v2035 = vmul.f32 %v1793, %v1257
      %v2036 = vmul.f32 %v1795, %v1258
      %v2037 = vmul.f32 %v1797, %v1259
      %v2038 = vmul.f32 %v1799, %v1260
      %v2039 = vmul.f32 %v1801, %v1261
      %v2040 = vmul.f32 %v1803, %v1262
      %v2041 = vmul.f32 %v1805, %v1263
      %v2042 = vmul.f32 %v1807, %v1264
      %v2043 = vmul.f32 %v1809, %v1265
      %v2044 = vmul.f32 %v1811, %v1266
      %v2045 = vmul.f32 %v1813, %v1267
      %v2046 = vmul.f32 %v1815, %v1268
      %v2047 = vmul.f32 %v1817, %v1269
      %v2048 = vmul.f32 %v1819, %v1270
      %v2049 = vmul.f32 %v1821, %v1271
      %v2050 = vmul.f32 %v1823, %v1272
      %v2051 = vmul.f32 %v1825, %v1273
      %v2052 = vmul.f32 %v1827, %v1274
      %v2053 = vmul.f32 %v1829, %v1275
      %v2054 = vmul.f32 %v1831, %v1276
      %v2055 = vmul.f32 %v1833, %v1277
      %v2056 = vmul.f32 %v1835, %v1278
      %v2057 = vmul.f32 %v1837, %v1279
      %v2058 = vmul.f32 %v1838, %v1280
      %v2059 = vmul.f32 %v1776, %v1281
      %v2060 = vmul.f32 %v1870, %v1282
      %v2061 = vmul.f32 %v1781, %v1283
      %v2062 = vmul.f32 %v1783, %v1284
      %2095 = vrot.lane.b32.xlu0 %v1741, 3
      %v2096 = vpop.permute.xlu0 %2095
      %2097 = vrot.lane.b32.xlu0 %v1742, 3
      %v2098 = vpop.permute.xlu0 %2097
      %2099 = vrot.lane.b32.xlu0 %v1743, 3
      %v2100 = vpop.permute.xlu0 %2099
      %2101 = vrot.lane.b32.xlu0 %v1744, 3
      %v2102 = vpop.permute.xlu0 %2101
      %2103 = vrot.lane.b32.xlu0 %v1745, 3
      %v2104 = vpop.permute.xlu0 %2103
      %2105 = vrot.lane.b32.xlu0 %v1746, 3
      %v2106 = vpop.permute.xlu0 %2105
      %2107 = vrot.lane.b32.xlu0 %v1747, 3
      %v2108 = vpop.permute.xlu0 %2107
      %2109 = vrot.lane.b32.xlu0 %v1748, 3
      %v2110 = vpop.permute.xlu0 %2109
      %2111 = vrot.lane.b32.xlu0 %v1749, 3
      %v2112 = vpop.permute.xlu0 %2111
      %2113 = vrot.lane.b32.xlu0 %v1750, 3
      %v2114 = vpop.permute.xlu0 %2113
      %2115 = vrot.lane.b32.xlu0 %v1751, 3
      %v2116 = vpop.permute.xlu0 %2115
      %2117 = vrot.lane.b32.xlu0 %v1752, 3
      %v2118 = vpop.permute.xlu0 %2117
      %2119 = vrot.lane.b32.xlu0 %v1753, 3
      %v2120 = vpop.permute.xlu0 %2119
      %2121 = vrot.lane.b32.xlu0 %v1754, 3
      %v2122 = vpop.permute.xlu0 %2121
      %2123 = vrot.lane.b32.xlu0 %v1755, 3
      %v2124 = vpop.permute.xlu0 %2123
      %2125 = vrot.lane.b32.xlu0 %v1756, 3
      %v2126 = vpop.permute.xlu0 %2125
      %2127 = vrot.lane.b32.xlu0 %v1757, 3
      %v2128 = vpop.permute.xlu0 %2127
      %2129 = vrot.lane.b32.xlu0 %v1758, 3
      %v2130 = vpop.permute.xlu0 %2129
      %2131 = vrot.lane.b32.xlu0 %v1759, 3
      %v2132 = vpop.permute.xlu0 %2131
      %2133 = vrot.lane.b32.xlu0 %v1760, 3
      %v2134 = vpop.permute.xlu0 %2133
      %2135 = vrot.lane.b32.xlu0 %v1761, 3
      %v2136 = vpop.permute.xlu0 %2135
      %2137 = vrot.lane.b32.xlu0 %v1762, 3
      %v2138 = vpop.permute.xlu0 %2137
      %2139 = vrot.lane.b32.xlu0 %v1763, 3
      %v2140 = vpop.permute.xlu0 %2139
      %2141 = vrot.lane.b32.xlu0 %v1764, 3
      %v2142 = vpop.permute.xlu0 %2141
      %2143 = vrot.lane.b32.xlu0 %v1765, 3
      %v2144 = vpop.permute.xlu0 %2143
      %2145 = vrot.lane.b32.xlu0 %v1766, 3
      %v2146 = vpop.permute.xlu0 %2145
      %2147 = vrot.lane.b32.xlu0 %v1767, 3
      %v2148 = vpop.permute.xlu0 %2147
      %2149 = vrot.lane.b32.xlu0 %v1768, 3
      %v2150 = vpop.permute.xlu0 %2149
      %2151 = vrot.lane.b32.xlu0 %v1769, 3
      %v2152 = vpop.permute.xlu0 %2151
      %2153 = vrot.lane.b32.xlu0 %v1770, 3
      %v2154 = vpop.permute.xlu0 %2153
      %2155 = vrot.lane.b32.xlu0 %v1771, 3
      %v2156 = vpop.permute.xlu0 %2155
      %2157 = vrot.lane.b32.xlu0 %v1772, 3
      %v2158 = vpop.permute.xlu0 %2157
      %2223 = vrot.lane.b32.xlu0 %v1871, 6
      %v2224 = vpop.permute.xlu0 %2223
      %2225 = vrot.lane.b32.xlu0 %v1872, 6
      %v2226 = vpop.permute.xlu0 %2225
      %2227 = vrot.lane.b32.xlu0 %v1873, 6
      %v2228 = vpop.permute.xlu0 %2227
      %2229 = vrot.lane.b32.xlu0 %v1874, 6
      %v2230 = vpop.permute.xlu0 %2229
      %2231 = vrot.lane.b32.xlu0 %v1875, 6
      %v2232 = vpop.permute.xlu0 %2231
      %2233 = vrot.lane.b32.xlu0 %v1876, 6
      %v2234 = vpop.permute.xlu0 %2233
      %2235 = vrot.lane.b32.xlu0 %v1877, 6
      %v2236 = vpop.permute.xlu0 %2235
      %2237 = vrot.lane.b32.xlu0 %v1878, 6
      %v2238 = vpop.permute.xlu0 %2237
      %2239 = vrot.lane.b32.xlu0 %v1879, 6
      %v2240 = vpop.permute.xlu0 %2239
      %2241 = vrot.lane.b32.xlu0 %v1880, 6
      %v2242 = vpop.permute.xlu0 %2241
      %2243 = vrot.lane.b32.xlu0 %v1881, 6
      %v2244 = vpop.permute.xlu0 %2243
      %2245 = vrot.lane.b32.xlu0 %v1882, 6
      %v2246 = vpop.permute.xlu0 %2245
      %2247 = vrot.lane.b32.xlu0 %v1883, 6
      %v2248 = vpop.permute.xlu0 %2247
      %2249 = vrot.lane.b32.xlu0 %v1884, 6
      %v2250 = vpop.permute.xlu0 %2249
      %2251 = vrot.lane.b32.xlu0 %v1885, 6
      %v2252 = vpop.permute.xlu0 %2251
      %2253 = vrot.lane.b32.xlu0 %v1886, 6
      %v2254 = vpop.permute.xlu0 %2253
      %2255 = vrot.lane.b32.xlu0 %v1887, 6
      %v2256 = vpop.permute.xlu0 %2255
      %2257 = vrot.lane.b32.xlu0 %v1888, 6
      %v2258 = vpop.permute.xlu0 %2257
      %2259 = vrot.lane.b32.xlu0 %v1889, 6
      %v2260 = vpop.permute.xlu0 %2259
      %2261 = vrot.lane.b32.xlu0 %v1890, 6
      %v2262 = vpop.permute.xlu0 %2261
      %2263 = vrot.lane.b32.xlu0 %v1891, 6
      %v2264 = vpop.permute.xlu0 %2263
      %2265 = vrot.lane.b32.xlu0 %v1892, 6
      %v2266 = vpop.permute.xlu0 %2265
      %2267 = vrot.lane.b32.xlu0 %v1893, 6
      %v2268 = vpop.permute.xlu0 %2267
      %2269 = vrot.lane.b32.xlu0 %v1894, 6
      %v2270 = vpop.permute.xlu0 %2269
      %2271 = vrot.lane.b32.xlu0 %v1895, 6
      %v2272 = vpop.permute.xlu0 %2271
      %2273 = vrot.lane.b32.xlu0 %v1896, 6
      %v2274 = vpop.permute.xlu0 %2273
      %2275 = vrot.lane.b32.xlu0 %v1897, 6
      %v2276 = vpop.permute.xlu0 %2275
      %2277 = vrot.lane.b32.xlu0 %v1898, 6
      %v2278 = vpop.permute.xlu0 %2277
      %2279 = vrot.lane.b32.xlu0 %v1899, 6
      %v2280 = vpop.permute.xlu0 %2279
      %2281 = vrot.lane.b32.xlu0 %v1900, 6
      %v2282 = vpop.permute.xlu0 %2281
      %2283 = vrot.lane.b32.xlu0 %v1901, 6
      %v2284 = vpop.permute.xlu0 %2283
      %2285 = vrot.lane.b32.xlu0 %v1902, 6
      %v2286 = vpop.permute.xlu0 %2285
      %2351 = vrot.lane.b32.xlu0 %v1903, 9
      %v2352 = vpop.permute.xlu0 %2351
      %2353 = vrot.lane.b32.xlu0 %v1904, 9
      %v2354 = vpop.permute.xlu0 %2353
      %2355 = vrot.lane.b32.xlu0 %v1905, 9
      %v2356 = vpop.permute.xlu0 %2355
      %2357 = vrot.lane.b32.xlu0 %v1906, 9
      %v2358 = vpop.permute.xlu0 %2357
      %2359 = vrot.lane.b32.xlu0 %v1907, 9
      %v2360 = vpop.permute.xlu0 %2359
      %2361 = vrot.lane.b32.xlu0 %v1908, 9
      %v2362 = vpop.permute.xlu0 %2361
      %2363 = vrot.lane.b32.xlu0 %v1909, 9
      %v2364 = vpop.permute.xlu0 %2363
      %2365 = vrot.lane.b32.xlu0 %v1910, 9
      %v2366 = vpop.permute.xlu0 %2365
      %2367 = vrot.lane.b32.xlu0 %v1911, 9
      %v2368 = vpop.permute.xlu0 %2367
      %2369 = vrot.lane.b32.xlu0 %v1912, 9
      %v2370 = vpop.permute.xlu0 %2369
      %2371 = vrot.lane.b32.xlu0 %v1913, 9
      %v2372 = vpop.permute.xlu0 %2371
      %2373 = vrot.lane.b32.xlu0 %v1914, 9
      %v2374 = vpop.permute.xlu0 %2373
      %2375 = vrot.lane.b32.xlu0 %v1915, 9
      %v2376 = vpop.permute.xlu0 %2375
      %2377 = vrot.lane.b32.xlu0 %v1916, 9
      %v2378 = vpop.permute.xlu0 %2377
      %2379 = vrot.lane.b32.xlu0 %v1917, 9
      %v2380 = vpop.permute.xlu0 %2379
      %2381 = vrot.lane.b32.xlu0 %v1918, 9
      %v2382 = vpop.permute.xlu0 %2381
      %2383 = vrot.lane.b32.xlu0 %v1919, 9
      %v2384 = vpop.permute.xlu0 %2383
      %2385 = vrot.lane.b32.xlu0 %v1920, 9
      %v2386 = vpop.permute.xlu0 %2385
      %2387 = vrot.lane.b32.xlu0 %v1921, 9
      %v2388 = vpop.permute.xlu0 %2387
      %2389 = vrot.lane.b32.xlu0 %v1922, 9
      %v2390 = vpop.permute.xlu0 %2389
      %2391 = vrot.lane.b32.xlu0 %v1923, 9
      %v2392 = vpop.permute.xlu0 %2391
      %2393 = vrot.lane.b32.xlu0 %v1924, 9
      %v2394 = vpop.permute.xlu0 %2393
      %2395 = vrot.lane.b32.xlu0 %v1925, 9
      %v2396 = vpop.permute.xlu0 %2395
      %2397 = vrot.lane.b32.xlu0 %v1926, 9
      %v2398 = vpop.permute.xlu0 %2397
      %2399 = vrot.lane.b32.xlu0 %v1927, 9
      %v2400 = vpop.permute.xlu0 %2399
      %2401 = vrot.lane.b32.xlu0 %v1928, 9
      %v2402 = vpop.permute.xlu0 %2401
      %2403 = vrot.lane.b32.xlu0 %v1929, 9
      %v2404 = vpop.permute.xlu0 %2403
      %2405 = vrot.lane.b32.xlu0 %v1930, 9
      %v2406 = vpop.permute.xlu0 %2405
      %2407 = vrot.lane.b32.xlu0 %v1931, 9
      %v2408 = vpop.permute.xlu0 %2407
      %2409 = vrot.lane.b32.xlu0 %v1932, 9
      %v2410 = vpop.permute.xlu0 %2409
      %2411 = vrot.lane.b32.xlu0 %v1933, 9
      %v2412 = vpop.permute.xlu0 %2411
      %2413 = vrot.lane.b32.xlu0 %v1934, 9
      %v2414 = vpop.permute.xlu0 %2413
      %2447 = vrot.lane.b32.xlu0 %v1543, 12
      %v2448 = vpop.permute.xlu0 %2447
      %2449 = vrot.lane.b32.xlu0 %v1544, 12
      %v2450 = vpop.permute.xlu0 %2449
      %2451 = vrot.lane.b32.xlu0 %v1545, 12
      %v2452 = vpop.permute.xlu0 %2451
      %2453 = vrot.lane.b32.xlu0 %v1546, 12
      %v2454 = vpop.permute.xlu0 %2453
      %2455 = vrot.lane.b32.xlu0 %v1547, 12
      %v2456 = vpop.permute.xlu0 %2455
      %2457 = vrot.lane.b32.xlu0 %v1548, 12
      %v2458 = vpop.permute.xlu0 %2457
      %2459 = vrot.lane.b32.xlu0 %v1549, 12
      %v2460 = vpop.permute.xlu0 %2459
      %2461 = vrot.lane.b32.xlu0 %v1550, 12
      %v2462 = vpop.permute.xlu0 %2461
      %2463 = vrot.lane.b32.xlu0 %v1551, 12
      %v2464 = vpop.permute.xlu0 %2463
      %2465 = vrot.lane.b32.xlu0 %v1552, 12
      %v2466 = vpop.permute.xlu0 %2465
      %2467 = vrot.lane.b32.xlu0 %v1553, 12
      %v2468 = vpop.permute.xlu0 %2467
      %2469 = vrot.lane.b32.xlu0 %v1554, 12
      %v2470 = vpop.permute.xlu0 %2469
      %2471 = vrot.lane.b32.xlu0 %v1555, 12
      %v2472 = vpop.permute.xlu0 %2471
      %2473 = vrot.lane.b32.xlu0 %v1556, 12
      %v2474 = vpop.permute.xlu0 %2473
      %2475 = vrot.lane.b32.xlu0 %v1557, 12
      %v2476 = vpop.permute.xlu0 %2475
      %2477 = vrot.lane.b32.xlu0 %v1558, 12
      %v2478 = vpop.permute.xlu0 %2477
      %2479 = vrot.lane.b32.xlu0 %v1559, 12
      %v2480 = vpop.permute.xlu0 %2479
      %2481 = vrot.lane.b32.xlu0 %v1560, 12
      %v2482 = vpop.permute.xlu0 %2481
      %2483 = vrot.lane.b32.xlu0 %v1561, 12
      %v2484 = vpop.permute.xlu0 %2483
      %2485 = vrot.lane.b32.xlu0 %v1562, 12
      %v2486 = vpop.permute.xlu0 %2485
      %2487 = vrot.lane.b32.xlu0 %v1563, 12
      %v2488 = vpop.permute.xlu0 %2487
      %2489 = vrot.lane.b32.xlu0 %v1564, 12
      %v2490 = vpop.permute.xlu0 %2489
      %2491 = vrot.lane.b32.xlu0 %v1565, 12
      %v2492 = vpop.permute.xlu0 %2491
      %2493 = vrot.lane.b32.xlu0 %v1566, 12
      %v2494 = vpop.permute.xlu0 %2493
      %2495 = vrot.lane.b32.xlu0 %v1567, 12
      %v2496 = vpop.permute.xlu0 %2495
      %2497 = vrot.lane.b32.xlu0 %v1568, 12
      %v2498 = vpop.permute.xlu0 %2497
      %2499 = vrot.lane.b32.xlu0 %v1569, 12
      %v2500 = vpop.permute.xlu0 %2499
      %2501 = vrot.lane.b32.xlu0 %v1570, 12
      %v2502 = vpop.permute.xlu0 %2501
      %2503 = vrot.lane.b32.xlu0 %v1571, 12
      %v2504 = vpop.permute.xlu0 %2503
      %2505 = vrot.lane.b32.xlu0 %v1572, 12
      %v2506 = vpop.permute.xlu0 %2505
      %2507 = vrot.lane.b32.xlu0 %v1573, 12
      %v2508 = vpop.permute.xlu0 %2507
      %2509 = vrot.lane.b32.xlu0 %v1574, 12
      %v2510 = vpop.permute.xlu0 %2509
      %2575 = vrot.lane.b32.xlu0 %v1935, 15
      %v2576 = vpop.permute.xlu0 %2575
      %2577 = vrot.lane.b32.xlu0 %v1936, 15
      %v2578 = vpop.permute.xlu0 %2577
      %2579 = vrot.lane.b32.xlu0 %v1937, 15
      %v2580 = vpop.permute.xlu0 %2579
      %2581 = vrot.lane.b32.xlu0 %v1938, 15
      %v2582 = vpop.permute.xlu0 %2581
      %2583 = vrot.lane.b32.xlu0 %v1939, 15
      %v2584 = vpop.permute.xlu0 %2583
      %2585 = vrot.lane.b32.xlu0 %v1940, 15
      %v2586 = vpop.permute.xlu0 %2585
      %2587 = vrot.lane.b32.xlu0 %v1941, 15
      %v2588 = vpop.permute.xlu0 %2587
      %2589 = vrot.lane.b32.xlu0 %v1942, 15
      %v2590 = vpop.permute.xlu0 %2589
      %2591 = vrot.lane.b32.xlu0 %v1943, 15
      %v2592 = vpop.permute.xlu0 %2591
      %2593 = vrot.lane.b32.xlu0 %v1944, 15
      %v2594 = vpop.permute.xlu0 %2593
      %2595 = vrot.lane.b32.xlu0 %v1945, 15
      %v2596 = vpop.permute.xlu0 %2595
      %2597 = vrot.lane.b32.xlu0 %v1946, 15
      %v2598 = vpop.permute.xlu0 %2597
      %2599 = vrot.lane.b32.xlu0 %v1947, 15
      %v2600 = vpop.permute.xlu0 %2599
      %2601 = vrot.lane.b32.xlu0 %v1948, 15
      %v2602 = vpop.permute.xlu0 %2601
      %2603 = vrot.lane.b32.xlu0 %v1949, 15
      %v2604 = vpop.permute.xlu0 %2603
      %2605 = vrot.lane.b32.xlu0 %v1950, 15
      %v2606 = vpop.permute.xlu0 %2605
      %2607 = vrot.lane.b32.xlu0 %v1951, 15
      %v2608 = vpop.permute.xlu0 %2607
      %2609 = vrot.lane.b32.xlu0 %v1952, 15
      %v2610 = vpop.permute.xlu0 %2609
      %2611 = vrot.lane.b32.xlu0 %v1953, 15
      %v2612 = vpop.permute.xlu0 %2611
      %2613 = vrot.lane.b32.xlu0 %v1954, 15
      %v2614 = vpop.permute.xlu0 %2613
      %2615 = vrot.lane.b32.xlu0 %v1955, 15
      %v2616 = vpop.permute.xlu0 %2615
      %2617 = vrot.lane.b32.xlu0 %v1956, 15
      %v2618 = vpop.permute.xlu0 %2617
      %2619 = vrot.lane.b32.xlu0 %v1957, 15
      %v2620 = vpop.permute.xlu0 %2619
      %2621 = vrot.lane.b32.xlu0 %v1958, 15
      %v2622 = vpop.permute.xlu0 %2621
      %2623 = vrot.lane.b32.xlu0 %v1959, 15
      %v2624 = vpop.permute.xlu0 %2623
      %2625 = vrot.lane.b32.xlu0 %v1960, 15
      %v2626 = vpop.permute.xlu0 %2625
      %2627 = vrot.lane.b32.xlu0 %v1961, 15
      %v2628 = vpop.permute.xlu0 %2627
      %2629 = vrot.lane.b32.xlu0 %v1962, 15
      %v2630 = vpop.permute.xlu0 %2629
      %2631 = vrot.lane.b32.xlu0 %v1963, 15
      %v2632 = vpop.permute.xlu0 %2631
      %2633 = vrot.lane.b32.xlu0 %v1964, 15
      %v2634 = vpop.permute.xlu0 %2633
      %2635 = vrot.lane.b32.xlu0 %v1965, 15
      %v2636 = vpop.permute.xlu0 %2635
      %2637 = vrot.lane.b32.xlu0 %v1966, 15
      %v2638 = vpop.permute.xlu0 %2637
      %2703 = vrot.lane.b32.xlu0 %v1967, 18
      %v2704 = vpop.permute.xlu0 %2703
      %2705 = vrot.lane.b32.xlu0 %v1968, 18
      %v2706 = vpop.permute.xlu0 %2705
      %2707 = vrot.lane.b32.xlu0 %v1969, 18
      %v2708 = vpop.permute.xlu0 %2707
      %2709 = vrot.lane.b32.xlu0 %v1970, 18
      %v2710 = vpop.permute.xlu0 %2709
      %2711 = vrot.lane.b32.xlu0 %v1971, 18
      %v2712 = vpop.permute.xlu0 %2711
      %2713 = vrot.lane.b32.xlu0 %v1972, 18
      %v2714 = vpop.permute.xlu0 %2713
      %2715 = vrot.lane.b32.xlu0 %v1973, 18
      %v2716 = vpop.permute.xlu0 %2715
      %2717 = vrot.lane.b32.xlu0 %v1974, 18
      %v2718 = vpop.permute.xlu0 %2717
      %2719 = vrot.lane.b32.xlu0 %v1975, 18
      %v2720 = vpop.permute.xlu0 %2719
      %2721 = vrot.lane.b32.xlu0 %v1976, 18
      %v2722 = vpop.permute.xlu0 %2721
      %2723 = vrot.lane.b32.xlu0 %v1977, 18
      %v2724 = vpop.permute.xlu0 %2723
      %2725 = vrot.lane.b32.xlu0 %v1978, 18
      %v2726 = vpop.permute.xlu0 %2725
      %2727 = vrot.lane.b32.xlu0 %v1979, 18
      %v2728 = vpop.permute.xlu0 %2727
      %2729 = vrot.lane.b32.xlu0 %v1980, 18
      %v2730 = vpop.permute.xlu0 %2729
      %2731 = vrot.lane.b32.xlu0 %v1981, 18
      %v2732 = vpop.permute.xlu0 %2731
      %2733 = vrot.lane.b32.xlu0 %v1982, 18
      %v2734 = vpop.permute.xlu0 %2733
      %2735 = vrot.lane.b32.xlu0 %v1983, 18
      %v2736 = vpop.permute.xlu0 %2735
      %2737 = vrot.lane.b32.xlu0 %v1984, 18
      %v2738 = vpop.permute.xlu0 %2737
      %2739 = vrot.lane.b32.xlu0 %v1985, 18
      %v2740 = vpop.permute.xlu0 %2739
      %2741 = vrot.lane.b32.xlu0 %v1986, 18
      %v2742 = vpop.permute.xlu0 %2741
      %2743 = vrot.lane.b32.xlu0 %v1987, 18
      %v2744 = vpop.permute.xlu0 %2743
      %2745 = vrot.lane.b32.xlu0 %v1988, 18
      %v2746 = vpop.permute.xlu0 %2745
      %2747 = vrot.lane.b32.xlu0 %v1989, 18
      %v2748 = vpop.permute.xlu0 %2747
      %2749 = vrot.lane.b32.xlu0 %v1990, 18
      %v2750 = vpop.permute.xlu0 %2749
      %2751 = vrot.lane.b32.xlu0 %v1991, 18
      %v2752 = vpop.permute.xlu0 %2751
      %2753 = vrot.lane.b32.xlu0 %v1992, 18
      %v2754 = vpop.permute.xlu0 %2753
      %2755 = vrot.lane.b32.xlu0 %v1993, 18
      %v2756 = vpop.permute.xlu0 %2755
      %2757 = vrot.lane.b32.xlu0 %v1994, 18
      %v2758 = vpop.permute.xlu0 %2757
      %2759 = vrot.lane.b32.xlu0 %v1995, 18
      %v2760 = vpop.permute.xlu0 %2759
      %2761 = vrot.lane.b32.xlu0 %v1996, 18
      %v2762 = vpop.permute.xlu0 %2761
      %2763 = vrot.lane.b32.xlu0 %v1997, 18
      %v2764 = vpop.permute.xlu0 %2763
      %2765 = vrot.lane.b32.xlu0 %v1998, 18
      %v2766 = vpop.permute.xlu0 %2765
      %2831 = vrot.lane.b32.xlu0 %v1999, 21
      %v2832 = vpop.permute.xlu0 %2831
      %2833 = vrot.lane.b32.xlu0 %v2000, 21
      %v2834 = vpop.permute.xlu0 %2833
      %2835 = vrot.lane.b32.xlu0 %v2001, 21
      %v2836 = vpop.permute.xlu0 %2835
      %2837 = vrot.lane.b32.xlu0 %v2002, 21
      %v2838 = vpop.permute.xlu0 %2837
      %2839 = vrot.lane.b32.xlu0 %v2003, 21
      %v2840 = vpop.permute.xlu0 %2839
      %2841 = vrot.lane.b32.xlu0 %v2004, 21
      %v2842 = vpop.permute.xlu0 %2841
      %2843 = vrot.lane.b32.xlu0 %v2005, 21
      %v2844 = vpop.permute.xlu0 %2843
      %2845 = vrot.lane.b32.xlu0 %v2006, 21
      %v2846 = vpop.permute.xlu0 %2845
      %2847 = vrot.lane.b32.xlu0 %v2007, 21
      %v2848 = vpop.permute.xlu0 %2847
      %2849 = vrot.lane.b32.xlu0 %v2008, 21
      %v2850 = vpop.permute.xlu0 %2849
      %2851 = vrot.lane.b32.xlu0 %v2009, 21
      %v2852 = vpop.permute.xlu0 %2851
      %2853 = vrot.lane.b32.xlu0 %v2010, 21
      %v2854 = vpop.permute.xlu0 %2853
      %2855 = vrot.lane.b32.xlu0 %v2011, 21
      %v2856 = vpop.permute.xlu0 %2855
      %2857 = vrot.lane.b32.xlu0 %v2012, 21
      %v2858 = vpop.permute.xlu0 %2857
      %2859 = vrot.lane.b32.xlu0 %v2013, 21
      %v2860 = vpop.permute.xlu0 %2859
      %2861 = vrot.lane.b32.xlu0 %v2014, 21
      %v2862 = vpop.permute.xlu0 %2861
      %2863 = vrot.lane.b32.xlu0 %v2015, 21
      %v2864 = vpop.permute.xlu0 %2863
      %2865 = vrot.lane.b32.xlu0 %v2016, 21
      %v2866 = vpop.permute.xlu0 %2865
      %2867 = vrot.lane.b32.xlu0 %v2017, 21
      %v2868 = vpop.permute.xlu0 %2867
      %2869 = vrot.lane.b32.xlu0 %v2018, 21
      %v2870 = vpop.permute.xlu0 %2869
      %2871 = vrot.lane.b32.xlu0 %v2019, 21
      %v2872 = vpop.permute.xlu0 %2871
      %2873 = vrot.lane.b32.xlu0 %v2020, 21
      %v2874 = vpop.permute.xlu0 %2873
      %2875 = vrot.lane.b32.xlu0 %v2021, 21
      %v2876 = vpop.permute.xlu0 %2875
      %2877 = vrot.lane.b32.xlu0 %v2022, 21
      %v2878 = vpop.permute.xlu0 %2877
      %2879 = vrot.lane.b32.xlu0 %v2023, 21
      %v2880 = vpop.permute.xlu0 %2879
      %2881 = vrot.lane.b32.xlu0 %v2024, 21
      %v2882 = vpop.permute.xlu0 %2881
      %2883 = vrot.lane.b32.xlu0 %v2025, 21
      %v2884 = vpop.permute.xlu0 %2883
      %2885 = vrot.lane.b32.xlu0 %v2026, 21
      %v2886 = vpop.permute.xlu0 %2885
      %2887 = vrot.lane.b32.xlu0 %v2027, 21
      %v2888 = vpop.permute.xlu0 %2887
      %2889 = vrot.lane.b32.xlu0 %v2028, 21
      %v2890 = vpop.permute.xlu0 %2889
      %2891 = vrot.lane.b32.xlu0 %v2029, 21
      %v2892 = vpop.permute.xlu0 %2891
      %2893 = vrot.lane.b32.xlu0 %v2030, 21
      %v2894 = vpop.permute.xlu0 %2893
      %2959 = vrot.lane.b32.xlu0 %v2031, 24
      %v2960 = vpop.permute.xlu0 %2959
      %2961 = vrot.lane.b32.xlu0 %v2032, 24
      %v2962 = vpop.permute.xlu0 %2961
      %2963 = vrot.lane.b32.xlu0 %v2033, 24
      %v2964 = vpop.permute.xlu0 %2963
      %2965 = vrot.lane.b32.xlu0 %v2034, 24
      %v2966 = vpop.permute.xlu0 %2965
      %2967 = vrot.lane.b32.xlu0 %v2035, 24
      %v2968 = vpop.permute.xlu0 %2967
      %2969 = vrot.lane.b32.xlu0 %v2036, 24
      %v2970 = vpop.permute.xlu0 %2969
      %2971 = vrot.lane.b32.xlu0 %v2037, 24
      %v2972 = vpop.permute.xlu0 %2971
      %2973 = vrot.lane.b32.xlu0 %v2038, 24
      %v2974 = vpop.permute.xlu0 %2973
      %2975 = vrot.lane.b32.xlu0 %v2039, 24
      %v2976 = vpop.permute.xlu0 %2975
      %2977 = vrot.lane.b32.xlu0 %v2040, 24
      %v2978 = vpop.permute.xlu0 %2977
      %2979 = vrot.lane.b32.xlu0 %v2041, 24
      %v2980 = vpop.permute.xlu0 %2979
      %2981 = vrot.lane.b32.xlu0 %v2042, 24
      %v2982 = vpop.permute.xlu0 %2981
      %2983 = vrot.lane.b32.xlu0 %v2043, 24
      %v2984 = vpop.permute.xlu0 %2983
      %2985 = vrot.lane.b32.xlu0 %v2044, 24
      %v2986 = vpop.permute.xlu0 %2985
      %2987 = vrot.lane.b32.xlu0 %v2045, 24
      %v2988 = vpop.permute.xlu0 %2987
      %2989 = vrot.lane.b32.xlu0 %v2046, 24
      %v2990 = vpop.permute.xlu0 %2989
      %2991 = vrot.lane.b32.xlu0 %v2047, 24
      %v2992 = vpop.permute.xlu0 %2991
      %2993 = vrot.lane.b32.xlu0 %v2048, 24
      %v2994 = vpop.permute.xlu0 %2993
      %2995 = vrot.lane.b32.xlu0 %v2049, 24
      %v2996 = vpop.permute.xlu0 %2995
      %2997 = vrot.lane.b32.xlu0 %v2050, 24
      %v2998 = vpop.permute.xlu0 %2997
      %2999 = vrot.lane.b32.xlu0 %v2051, 24
      %v3000 = vpop.permute.xlu0 %2999
      %3001 = vrot.lane.b32.xlu0 %v2052, 24
      %v3002 = vpop.permute.xlu0 %3001
      %3003 = vrot.lane.b32.xlu0 %v2053, 24
      %v3004 = vpop.permute.xlu0 %3003
      %3005 = vrot.lane.b32.xlu0 %v2054, 24
      %v3006 = vpop.permute.xlu0 %3005
      %3007 = vrot.lane.b32.xlu0 %v2055, 24
      %v3008 = vpop.permute.xlu0 %3007
      %3009 = vrot.lane.b32.xlu0 %v2056, 24
      %v3010 = vpop.permute.xlu0 %3009
      %3011 = vrot.lane.b32.xlu0 %v2057, 24
      %v3012 = vpop.permute.xlu0 %3011
      %3013 = vrot.lane.b32.xlu0 %v2058, 24
      %v3014 = vpop.permute.xlu0 %3013
      %3015 = vrot.lane.b32.xlu0 %v2059, 24
      %v3016 = vpop.permute.xlu0 %3015
      %3017 = vrot.lane.b32.xlu0 %v2060, 24
      %v3018 = vpop.permute.xlu0 %3017
      %3019 = vrot.lane.b32.xlu0 %v2061, 24
      %v3020 = vpop.permute.xlu0 %3019
      %3021 = vrot.lane.b32.xlu0 %v2062, 24
      %v3022 = vpop.permute.xlu0 %3021
      %vm3055 = vcmask 23552
      %v3056 = vsel %vm3055, %v1709, %v2096
      %v3057 = vsel %vm3055, %v1710, %v2098
      %v3058 = vsel %vm3055, %v1711, %v2100
      %v3059 = vsel %vm3055, %v1712, %v2102
      %v3060 = vsel %vm3055, %v1713, %v2104
      %v3061 = vsel %vm3055, %v1714, %v2106
      %v3062 = vsel %vm3055, %v1715, %v2108
      %v3063 = vsel %vm3055, %v1716, %v2110
      %v3064 = vsel %vm3055, %v1717, %v2112
      %v3065 = vsel %vm3055, %v1718, %v2114
      %v3066 = vsel %vm3055, %v1719, %v2116
      %v3067 = vsel %vm3055, %v1720, %v2118
      %v3068 = vsel %vm3055, %v1721, %v2120
      %v3069 = vsel %vm3055, %v1722, %v2122
      %v3070 = vsel %vm3055, %v1723, %v2124
      %v3071 = vsel %vm3055, %v1724, %v2126
      %v3072 = vsel %vm3055, %v1725, %v2128
      %v3073 = vsel %vm3055, %v1726, %v2130
      %v3074 = vsel %vm3055, %v1727, %v2132
      %v3075 = vsel %vm3055, %v1728, %v2134
      %v3076 = vsel %vm3055, %v1729, %v2136
      %v3077 = vsel %vm3055, %v1730, %v2138
      %v3078 = vsel %vm3055, %v1731, %v2140
      %v3079 = vsel %vm3055, %v1732, %v2142
      %v3080 = vsel %vm3055, %v1733, %v2144
      %v3081 = vsel %vm3055, %v1734, %v2146
      %v3082 = vsel %vm3055, %v1735, %v2148
      %v3083 = vsel %vm3055, %v1736, %v2150
      %v3084 = vsel %vm3055, %v1737, %v2152
      %v3085 = vsel %vm3055, %v1738, %v2154
      %v3086 = vsel %vm3055, %v1739, %v2156
      %v3087 = vsel %vm3055, %v1740, %v2158
      %vm3088 = vcmask 48128
      %v3089 = vsel %vm3088, %v3056, %v2224
      %v3090 = vsel %vm3088, %v3057, %v2226
      %v3091 = vsel %vm3088, %v3058, %v2228
      %v3092 = vsel %vm3088, %v3059, %v2230
      %v3093 = vsel %vm3088, %v3060, %v2232
      %v3094 = vsel %vm3088, %v3061, %v2234
      %v3095 = vsel %vm3088, %v3062, %v2236
      %v3096 = vsel %vm3088, %v3063, %v2238
      %v3097 = vsel %vm3088, %v3064, %v2240
      %v3098 = vsel %vm3088, %v3065, %v2242
      %v3099 = vsel %vm3088, %v3066, %v2244
      %v3100 = vsel %vm3088, %v3067, %v2246
      %v3101 = vsel %vm3088, %v3068, %v2248
      %v3102 = vsel %vm3088, %v3069, %v2250
      %v3103 = vsel %vm3088, %v3070, %v2252
      %v3104 = vsel %vm3088, %v3071, %v2254
      %v3105 = vsel %vm3088, %v3072, %v2256
      %v3106 = vsel %vm3088, %v3073, %v2258
      %v3107 = vsel %vm3088, %v3074, %v2260
      %v3108 = vsel %vm3088, %v3075, %v2262
      %v3109 = vsel %vm3088, %v3076, %v2264
      %v3110 = vsel %vm3088, %v3077, %v2266
      %v3111 = vsel %vm3088, %v3078, %v2268
      %v3112 = vsel %vm3088, %v3079, %v2270
      %v3113 = vsel %vm3088, %v3080, %v2272
      %v3114 = vsel %vm3088, %v3081, %v2274
      %v3115 = vsel %vm3088, %v3082, %v2276
      %v3116 = vsel %vm3088, %v3083, %v2278
      %v3117 = vsel %vm3088, %v3084, %v2280
      %v3118 = vsel %vm3088, %v3085, %v2282
      %v3119 = vsel %vm3088, %v3086, %v2284
      %v3120 = vsel %vm3088, %v3087, %v2286
      %vm3121 = vcmask 72704
      %v3122 = vsel %vm3121, %v3089, %v2352
      %v3123 = vsel %vm3121, %v3090, %v2354
      %v3124 = vsel %vm3121, %v3091, %v2356
      %v3125 = vsel %vm3121, %v3092, %v2358
      %v3126 = vsel %vm3121, %v3093, %v2360
      %v3127 = vsel %vm3121, %v3094, %v2362
      %v3128 = vsel %vm3121, %v3095, %v2364
      %v3129 = vsel %vm3121, %v3096, %v2366
      %v3130 = vsel %vm3121, %v3097, %v2368
      %v3131 = vsel %vm3121, %v3098, %v2370
      %v3132 = vsel %vm3121, %v3099, %v2372
      %v3133 = vsel %vm3121, %v3100, %v2374
      %v3134 = vsel %vm3121, %v3101, %v2376
      %v3135 = vsel %vm3121, %v3102, %v2378
      %v3136 = vsel %vm3121, %v3103, %v2380
      %v3137 = vsel %vm3121, %v3104, %v2382
      %v3138 = vsel %vm3121, %v3105, %v2384
      %v3139 = vsel %vm3121, %v3106, %v2386
      %v3140 = vsel %vm3121, %v3107, %v2388
      %v3141 = vsel %vm3121, %v3108, %v2390
      %v3142 = vsel %vm3121, %v3109, %v2392
      %v3143 = vsel %vm3121, %v3110, %v2394
      %v3144 = vsel %vm3121, %v3111, %v2396
      %v3145 = vsel %vm3121, %v3112, %v2398
      %v3146 = vsel %vm3121, %v3113, %v2400
      %v3147 = vsel %vm3121, %v3114, %v2402
      %v3148 = vsel %vm3121, %v3115, %v2404
      %v3149 = vsel %vm3121, %v3116, %v2406
      %v3150 = vsel %vm3121, %v3117, %v2408
      %v3151 = vsel %vm3121, %v3118, %v2410
      %v3152 = vsel %vm3121, %v3119, %v2412
      %v3153 = vsel %vm3121, %v3120, %v2414
      %vm3154 = vcmask 97280
      %v3155 = vsel %vm3154, %v3122, %v2448
      %v3156 = vsel %vm3154, %v3123, %v2450
      %v3157 = vsel %vm3154, %v3124, %v2452
      %v3158 = vsel %vm3154, %v3125, %v2454
      %v3159 = vsel %vm3154, %v3126, %v2456
      %v3160 = vsel %vm3154, %v3127, %v2458
      %v3161 = vsel %vm3154, %v3128, %v2460
      %v3162 = vsel %vm3154, %v3129, %v2462
      %v3163 = vsel %vm3154, %v3130, %v2464
      %v3164 = vsel %vm3154, %v3131, %v2466
      %v3165 = vsel %vm3154, %v3132, %v2468
      %v3166 = vsel %vm3154, %v3133, %v2470
      %v3167 = vsel %vm3154, %v3134, %v2472
      %v3168 = vsel %vm3154, %v3135, %v2474
      %v3169 = vsel %vm3154, %v3136, %v2476
      %v3170 = vsel %vm3154, %v3137, %v2478
      %v3171 = vsel %vm3154, %v3138, %v2480
      %v3172 = vsel %vm3154, %v3139, %v2482
      %v3173 = vsel %vm3154, %v3140, %v2484
      %v3174 = vsel %vm3154, %v3141, %v2486
      %v3175 = vsel %vm3154, %v3142, %v2488
      %v3176 = vsel %vm3154, %v3143, %v2490
      %v3177 = vsel %vm3154, %v3144, %v2492
      %v3178 = vsel %vm3154, %v3145, %v2494
      %v3179 = vsel %vm3154, %v3146, %v2496
      %v3180 = vsel %vm3154, %v3147, %v2498
      %v3181 = vsel %vm3154, %v3148, %v2500
      %v3182 = vsel %vm3154, %v3149, %v2502
      %v3183 = vsel %vm3154, %v3150, %v2504
      %v3184 = vsel %vm3154, %v3151, %v2506
      %v3185 = vsel %vm3154, %v3152, %v2508
      %v3186 = vsel %vm3154, %v3153, %v2510
      %vm3187 = vcmask 121856
      %v3188 = vsel %vm3187, %v3155, %v2576
      %v3189 = vsel %vm3187, %v3156, %v2578
      %v3190 = vsel %vm3187, %v3157, %v2580
      %v3191 = vsel %vm3187, %v3158, %v2582
      %v3192 = vsel %vm3187, %v3159, %v2584
      %v3193 = vsel %vm3187, %v3160, %v2586
      %v3194 = vsel %vm3187, %v3161, %v2588
      %v3195 = vsel %vm3187, %v3162, %v2590
      %v3196 = vsel %vm3187, %v3163, %v2592
      %v3197 = vsel %vm3187, %v3164, %v2594
      %v3198 = vsel %vm3187, %v3165, %v2596
      %v3199 = vsel %vm3187, %v3166, %v2598
      %v3200 = vsel %vm3187, %v3167, %v2600
      %v3201 = vsel %vm3187, %v3168, %v2602
      %v3202 = vsel %vm3187, %v3169, %v2604
      %v3203 = vsel %vm3187, %v3170, %v2606
      %v3204 = vsel %vm3187, %v3171, %v2608
      %v3205 = vsel %vm3187, %v3172, %v2610
      %v3206 = vsel %vm3187, %v3173, %v2612
      %v3207 = vsel %vm3187, %v3174, %v2614
      %v3208 = vsel %vm3187, %v3175, %v2616
      %v3209 = vsel %vm3187, %v3176, %v2618
      %v3210 = vsel %vm3187, %v3177, %v2620
      %v3211 = vsel %vm3187, %v3178, %v2622
      %v3212 = vsel %vm3187, %v3179, %v2624
      %v3213 = vsel %vm3187, %v3180, %v2626
      %v3214 = vsel %vm3187, %v3181, %v2628
      %v3215 = vsel %vm3187, %v3182, %v2630
      %v3216 = vsel %vm3187, %v3183, %v2632
      %v3217 = vsel %vm3187, %v3184, %v2634
      %v3218 = vsel %vm3187, %v3185, %v2636
      %v3219 = vsel %vm3187, %v3186, %v2638
      %vm3220 = vcmask 146432
      %v3221 = vsel %vm3220, %v3188, %v2704
      %v3222 = vsel %vm3220, %v3189, %v2706
      %v3223 = vsel %vm3220, %v3190, %v2708
      %v3224 = vsel %vm3220, %v3191, %v2710
      %v3225 = vsel %vm3220, %v3192, %v2712
      %v3226 = vsel %vm3220, %v3193, %v2714
      %v3227 = vsel %vm3220, %v3194, %v2716
      %v3228 = vsel %vm3220, %v3195, %v2718
      %v3229 = vsel %vm3220, %v3196, %v2720
      %v3230 = vsel %vm3220, %v3197, %v2722
      %v3231 = vsel %vm3220, %v3198, %v2724
      %v3232 = vsel %vm3220, %v3199, %v2726
      %v3233 = vsel %vm3220, %v3200, %v2728
      %v3234 = vsel %vm3220, %v3201, %v2730
      %v3235 = vsel %vm3220, %v3202, %v2732
      %v3236 = vsel %vm3220, %v3203, %v2734
      %v3237 = vsel %vm3220, %v3204, %v2736
      %v3238 = vsel %vm3220, %v3205, %v2738
      %v3239 = vsel %vm3220, %v3206, %v2740
      %v3240 = vsel %vm3220, %v3207, %v2742
      %v3241 = vsel %vm3220, %v3208, %v2744
      %v3242 = vsel %vm3220, %v3209, %v2746
      %v3243 = vsel %vm3220, %v3210, %v2748
      %v3244 = vsel %vm3220, %v3211, %v2750
      %v3245 = vsel %vm3220, %v3212, %v2752
      %v3246 = vsel %vm3220, %v3213, %v2754
      %v3247 = vsel %vm3220, %v3214, %v2756
      %v3248 = vsel %vm3220, %v3215, %v2758
      %v3249 = vsel %vm3220, %v3216, %v2760
      %v3250 = vsel %vm3220, %v3217, %v2762
      %v3251 = vsel %vm3220, %v3218, %v2764
      %v3252 = vsel %vm3220, %v3219, %v2766
      %vm3253 = vcmask 171008
      %v3254 = vsel %vm3253, %v3221, %v2832
      %v3255 = vsel %vm3253, %v3222, %v2834
      %v3256 = vsel %vm3253, %v3223, %v2836
      %v3257 = vsel %vm3253, %v3224, %v2838
      %v3258 = vsel %vm3253, %v3225, %v2840
      %v3259 = vsel %vm3253, %v3226, %v2842
      %v3260 = vsel %vm3253, %v3227, %v2844
      %v3261 = vsel %vm3253, %v3228, %v2846
      %v3262 = vsel %vm3253, %v3229, %v2848
      %v3263 = vsel %vm3253, %v3230, %v2850
      %v3264 = vsel %vm3253, %v3231, %v2852
      %v3265 = vsel %vm3253, %v3232, %v2854
      %v3266 = vsel %vm3253, %v3233, %v2856
      %v3267 = vsel %vm3253, %v3234, %v2858
      %v3268 = vsel %vm3253, %v3235, %v2860
      %v3269 = vsel %vm3253, %v3236, %v2862
      %v3270 = vsel %vm3253, %v3237, %v2864
      %v3271 = vsel %vm3253, %v3238, %v2866
      %v3272 = vsel %vm3253, %v3239, %v2868
      %v3273 = vsel %vm3253, %v3240, %v2870
      %v3274 = vsel %vm3253, %v3241, %v2872
      %v3275 = vsel %vm3253, %v3242, %v2874
      %v3276 = vsel %vm3253, %v3243, %v2876
      %v3277 = vsel %vm3253, %v3244, %v2878
      %v3278 = vsel %vm3253, %v3245, %v2880
      %v3279 = vsel %vm3253, %v3246, %v2882
      %v3280 = vsel %vm3253, %v3247, %v2884
      %v3281 = vsel %vm3253, %v3248, %v2886
      %v3282 = vsel %vm3253, %v3249, %v2888
      %v3283 = vsel %vm3253, %v3250, %v2890
      %v3284 = vsel %vm3253, %v3251, %v2892
      %v3285 = vsel %vm3253, %v3252, %v2894
      %vm3286 = vcmask 195584
      %v3287 = vsel %vm3286, %v3254, %v2960
      %v3288 = vsel %vm3286, %v3255, %v2962
      %v3289 = vsel %vm3286, %v3256, %v2964
      %v3290 = vsel %vm3286, %v3257, %v2966
      %v3291 = vsel %vm3286, %v3258, %v2968
      %v3292 = vsel %vm3286, %v3259, %v2970
      %v3293 = vsel %vm3286, %v3260, %v2972
      %v3294 = vsel %vm3286, %v3261, %v2974
      %v3295 = vsel %vm3286, %v3262, %v2976
      %v3296 = vsel %vm3286, %v3263, %v2978
      %v3297 = vsel %vm3286, %v3264, %v2980
      %v3298 = vsel %vm3286, %v3265, %v2982
      %v3299 = vsel %vm3286, %v3266, %v2984
      %v3300 = vsel %vm3286, %v3267, %v2986
      %v3301 = vsel %vm3286, %v3268, %v2988
      %v3302 = vsel %vm3286, %v3269, %v2990
      %v3303 = vsel %vm3286, %v3270, %v2992
      %v3304 = vsel %vm3286, %v3271, %v2994
      %v3305 = vsel %vm3286, %v3272, %v2996
      %v3306 = vsel %vm3286, %v3273, %v2998
      %v3307 = vsel %vm3286, %v3274, %v3000
      %v3308 = vsel %vm3286, %v3275, %v3002
      %v3309 = vsel %vm3286, %v3276, %v3004
      %v3310 = vsel %vm3286, %v3277, %v3006
      %v3311 = vsel %vm3286, %v3278, %v3008
      %v3312 = vsel %vm3286, %v3279, %v3010
      %v3313 = vsel %vm3286, %v3280, %v3012
      %v3314 = vsel %vm3286, %v3281, %v3014
      %v3315 = vsel %vm3286, %v3282, %v3016
      %v3316 = vsel %vm3286, %v3283, %v3018
      %v3317 = vsel %vm3286, %v3284, %v3020
      %v3318 = vsel %vm3286, %v3285, %v3022
      %vm3319 = vcmask 220160
      %v3321 = vsel %vm3319, %v3287, 0
      %v3324 = vsel %vm3319, %v3288, 0
      %v3327 = vsel %vm3319, %v3289, 0
      %v3330 = vsel %vm3319, %v3290, 0
      %v3333 = vsel %vm3319, %v3291, 0
      %v3336 = vsel %vm3319, %v3292, 0
      %v3339 = vsel %vm3319, %v3293, 0
      %v3342 = vsel %vm3319, %v3294, 0
      %v3345 = vsel %vm3319, %v3295, 0
      %v3348 = vsel %vm3319, %v3296, 0
      %v3351 = vsel %vm3319, %v3297, 0
      %v3354 = vsel %vm3319, %v3298, 0
      %v3357 = vsel %vm3319, %v3299, 0
      %v3360 = vsel %vm3319, %v3300, 0
      %v3363 = vsel %vm3319, %v3301, 0
      %v3366 = vsel %vm3319, %v3302, 0
      %v3369 = vsel %vm3319, %v3303, 0
      %v3372 = vsel %vm3319, %v3304, 0
      %v3375 = vsel %vm3319, %v3305, 0
      %v3378 = vsel %vm3319, %v3306, 0
      %v3381 = vsel %vm3319, %v3307, 0
      %v3384 = vsel %vm3319, %v3308, 0
      %v3387 = vsel %vm3319, %v3309, 0
      %v3390 = vsel %vm3319, %v3310, 0
      %v3393 = vsel %vm3319, %v3311, 0
      %v3396 = vsel %vm3319, %v3312, 0
      %v3399 = vsel %vm3319, %v3313, 0
      %v3402 = vsel %vm3319, %v3314, 0
      %v3405 = vsel %vm3319, %v3315, 0
      %v3408 = vsel %vm3319, %v3316, 0
      %v3411 = vsel %vm3319, %v3317, 0
      %v3414 = vsel %vm3319, %v3318, 0
      %vm3416 = vcmask 1042432
      %v3418 = vsel %vm3416, %v1578, 0
      %3420 = vmatprep.subr.mxu0 0.0
      %3421 = vmatpush1.msra.mxu0 0.0
      %3422 = vmatprep.subr.mxu0 0.0
      %3423 = vmatpush1.msra.mxu0 0.0
      %3424 = vmatprep.subr.mxu0 0.0
      %3425 = vmatpush1.msra.mxu0 0.0
      %3426 = vmatprep.subr.mxu0 0.0
      %3427 = vmatpush1.msra.mxu0 0.0
      %3428 = vmatprep.subr.mxu0 0.0
      %3429 = vmatpush1.msra.mxu0 0.0
      %3430 = vmatprep.subr.mxu0 0.0
      %3431 = vmatpush1.msra.mxu0 0.0
      %3432 = vmatprep.subr.mxu0 0.0
      %3433 = vmatpush1.msra.mxu0 0.0
      %3434 = vmatprep.subr.mxu0 0.0
      %3435 = vmatpush1.msra.mxu0 0.0
      %3436 = vmatprep.subr.mxu0 0.0
      %3437 = vmatpush1.msra.mxu0 0.0
      %3438 = vmatprep.subr.mxu0 0.0
      %3439 = vmatpush1.msra.mxu0 0.0
      %3440 = vmatprep.subr.mxu0 0.0
      %3441 = vmatpush1.msra.mxu0 0.0
      %3442 = vmatprep.subr.mxu0 0.0
      %3443 = vmatpush1.msra.mxu0 0.0
      %3444 = vmatprep.subr.mxu0 0.0
      %3445 = vmatpush1.msra.mxu0 %v3418
      %3446 = vmatprep.subr.mxu0 0.0
      %3447 = vmatpush1.msra.mxu0 %v1577
      %3448 = vmatprep.subr.mxu0 0.0
      %3449 = vmatpush1.msra.mxu0 %v1576
      %3450 = vmatprep.subr.mxu0 0.0
      %3451 = vmatpush1.msra.mxu0 %v1575
      %3452 = vmatprep.subr.mxu0 0.0
      %3453 = vmatpush2.msra.mxu0 0.0
      %3454 = vmatprep.subr.mxu0 0.0
      %3455 = vmatpush2.msra.mxu0 0.0
      %3456 = vmatprep.subr.mxu0 0.0
      %3457 = vmatpush2.msra.mxu0 0.0
      %3458 = vmatprep.subr.mxu0 0.0
      %3459 = vmatpush2.msra.mxu0 0.0
      %3460 = vmatprep.subr.mxu0 0.0
      %3461 = vmatpush2.msra.mxu0 0.0
      %3462 = vmatprep.subr.mxu0 0.0
      %3463 = vmatpush2.msra.mxu0 0.0
      %3464 = vmatprep.subr.mxu0 0.0
      %3465 = vmatpush2.msra.mxu0 0.0
      %3466 = vmatprep.subr.mxu0 0.0
      %3467 = vmatpush2.msra.mxu0 0.0
      %3468 = vmatprep.subr.mxu0 0.0
      %3469 = vmatpush2.msra.mxu0 0.0
      %3470 = vmatprep.subr.mxu0 0.0
      %3471 = vmatpush2.msra.mxu0 0.0
      %3472 = vmatprep.subr.mxu0 0.0
      %3473 = vmatpush2.msra.mxu0 0.0
      %3474 = vmatprep.subr.mxu0 0.0
      %3475 = vmatpush2.msra.mxu0 0.0
      %3476 = vmatprep.subr.mxu0 0.0
      %3477 = vmatpush2.msra.mxu0 0.0
      %3478 = vmatprep.subr.mxu0 0.0
      %3479 = vmatpush2.msra.mxu0 0.0
      %3480 = vmatprep.subr.mxu0 0.0
      %3481 = vmatpush2.msra.mxu0 0.0
      %3482 = vmatprep.subr.mxu0 0.0
      %3483 = vmatpush2.msra.mxu0 0.0
      %3484 = vmatprep.mubr.f32.mxu0 0.0
      %3485 = vmatmul.mubr.f32.gmra.mxu0 %v3321
      %v3486 = vpop.f32.mrf.mxu0
      %v3487 = vadd.f32 0.0, %v3486
      %v3488 = vpop.f32.mrf.mxu0
      %3489 = vmatprep.mubr.f32.mxu0 0.0
      %3490 = vmatmul.mubr.f32.gmra.mxu0 %v3324
      %v3491 = vpop.f32.mrf.mxu0
      %v3492 = vadd.f32 0.0, %v3491
      %v3493 = vpop.f32.mrf.mxu0
      %3494 = vmatprep.mubr.f32.mxu0 0.0
      %3495 = vmatmul.mubr.f32.gmra.mxu0 %v3327
      %v3496 = vpop.f32.mrf.mxu0
      %v3497 = vadd.f32 0.0, %v3496
      %v3498 = vpop.f32.mrf.mxu0
      %3499 = vmatprep.mubr.f32.mxu0 0.0
      %3500 = vmatmul.mubr.f32.gmra.mxu0 %v3330
      %v3501 = vpop.f32.mrf.mxu0
      %v3502 = vadd.f32 0.0, %v3501
      %v3503 = vpop.f32.mrf.mxu0
      %3504 = vmatprep.mubr.f32.mxu0 0.0
      %3505 = vmatmul.mubr.f32.gmra.mxu0 %v3333
      %v3506 = vpop.f32.mrf.mxu0
      %v3507 = vadd.f32 0.0, %v3506
      %v3508 = vpop.f32.mrf.mxu0
      %3509 = vmatprep.mubr.f32.mxu0 0.0
      %3510 = vmatmul.mubr.f32.gmra.mxu0 %v3336
      %v3511 = vpop.f32.mrf.mxu0
      %v3512 = vadd.f32 0.0, %v3511
      %v3513 = vpop.f32.mrf.mxu0
      %3514 = vmatprep.mubr.f32.mxu0 0.0
      %3515 = vmatmul.mubr.f32.gmra.mxu0 %v3339
      %v3516 = vpop.f32.mrf.mxu0
      %v3517 = vadd.f32 0.0, %v3516
      %v3518 = vpop.f32.mrf.mxu0
      %3519 = vmatprep.mubr.f32.mxu0 0.0
      %3520 = vmatmul.mubr.f32.gmra.mxu0 %v3342
      %v3521 = vpop.f32.mrf.mxu0
      %v3522 = vadd.f32 0.0, %v3521
      %v3523 = vpop.f32.mrf.mxu0
      %3524 = vmatprep.mubr.f32.mxu0 0.0
      %3525 = vmatmul.mubr.f32.gmra.mxu0 %v3345
      %v3526 = vpop.f32.mrf.mxu0
      %v3527 = vadd.f32 0.0, %v3526
      %v3528 = vpop.f32.mrf.mxu0
      %3529 = vmatprep.mubr.f32.mxu0 0.0
      %3530 = vmatmul.mubr.f32.gmra.mxu0 %v3348
      %v3531 = vpop.f32.mrf.mxu0
      %v3532 = vadd.f32 0.0, %v3531
      %v3533 = vpop.f32.mrf.mxu0
      %3534 = vmatprep.mubr.f32.mxu0 0.0
      %3535 = vmatmul.mubr.f32.gmra.mxu0 %v3351
      %v3536 = vpop.f32.mrf.mxu0
      %v3537 = vadd.f32 0.0, %v3536
      %v3538 = vpop.f32.mrf.mxu0
      %3539 = vmatprep.mubr.f32.mxu0 0.0
      %3540 = vmatmul.mubr.f32.gmra.mxu0 %v3354
      %v3541 = vpop.f32.mrf.mxu0
      %v3542 = vadd.f32 0.0, %v3541
      %v3543 = vpop.f32.mrf.mxu0
      %3544 = vmatprep.mubr.f32.mxu0 0.0
      %3545 = vmatmul.mubr.f32.gmra.mxu0 %v3357
      %v3546 = vpop.f32.mrf.mxu0
      %v3547 = vadd.f32 0.0, %v3546
      %v3548 = vpop.f32.mrf.mxu0
      %3549 = vmatprep.mubr.f32.mxu0 0.0
      %3550 = vmatmul.mubr.f32.gmra.mxu0 %v3360
      %v3551 = vpop.f32.mrf.mxu0
      %v3552 = vadd.f32 0.0, %v3551
      %v3553 = vpop.f32.mrf.mxu0
      %3554 = vmatprep.mubr.f32.mxu0 0.0
      %3555 = vmatmul.mubr.f32.gmra.mxu0 %v3363
      %v3556 = vpop.f32.mrf.mxu0
      %v3557 = vadd.f32 0.0, %v3556
      %v3558 = vpop.f32.mrf.mxu0
      %3559 = vmatprep.mubr.f32.mxu0 0.0
      %3560 = vmatmul.mubr.f32.gmra.mxu0 %v3366
      %v3561 = vpop.f32.mrf.mxu0
      %v3562 = vadd.f32 0.0, %v3561
      %v3563 = vpop.f32.mrf.mxu0
      %3564 = vmatprep.mubr.f32.mxu0 0.0
      %3565 = vmatmul.mubr.f32.gmra.mxu0 %v3369
      %v3566 = vpop.f32.mrf.mxu0
      %v3567 = vadd.f32 0.0, %v3566
      %v3568 = vpop.f32.mrf.mxu0
      %3569 = vmatprep.mubr.f32.mxu0 0.0
      %3570 = vmatmul.mubr.f32.gmra.mxu0 %v3372
      %v3571 = vpop.f32.mrf.mxu0
      %v3572 = vadd.f32 0.0, %v3571
      %v3573 = vpop.f32.mrf.mxu0
      %3574 = vmatprep.mubr.f32.mxu0 0.0
      %3575 = vmatmul.mubr.f32.gmra.mxu0 %v3375
      %v3576 = vpop.f32.mrf.mxu0
      %v3577 = vadd.f32 0.0, %v3576
      %v3578 = vpop.f32.mrf.mxu0
      %3579 = vmatprep.mubr.f32.mxu0 0.0
      %3580 = vmatmul.mubr.f32.gmra.mxu0 %v3378
      %v3581 = vpop.f32.mrf.mxu0
      %v3582 = vadd.f32 0.0, %v3581
      %v3583 = vpop.f32.mrf.mxu0
      %3584 = vmatprep.mubr.f32.mxu0 0.0
      %3585 = vmatmul.mubr.f32.gmra.mxu0 %v3381
      %v3586 = vpop.f32.mrf.mxu0
      %v3587 = vadd.f32 0.0, %v3586
      %v3588 = vpop.f32.mrf.mxu0
      %3589 = vmatprep.mubr.f32.mxu0 0.0
      %3590 = vmatmul.mubr.f32.gmra.mxu0 %v3384
      %v3591 = vpop.f32.mrf.mxu0
      %v3592 = vadd.f32 0.0, %v3591
      %v3593 = vpop.f32.mrf.mxu0
      %3594 = vmatprep.mubr.f32.mxu0 0.0
      %3595 = vmatmul.mubr.f32.gmra.mxu0 %v3387
      %v3596 = vpop.f32.mrf.mxu0
      %v3597 = vadd.f32 0.0, %v3596
      %v3598 = vpop.f32.mrf.mxu0
      %3599 = vmatprep.mubr.f32.mxu0 0.0
      %3600 = vmatmul.mubr.f32.gmra.mxu0 %v3390
      %v3601 = vpop.f32.mrf.mxu0
      %v3602 = vadd.f32 0.0, %v3601
      %v3603 = vpop.f32.mrf.mxu0
      %3604 = vmatprep.mubr.f32.mxu0 0.0
      %3605 = vmatmul.mubr.f32.gmra.mxu0 %v3393
      %v3606 = vpop.f32.mrf.mxu0
      %v3607 = vadd.f32 0.0, %v3606
      %v3608 = vpop.f32.mrf.mxu0
      %3609 = vmatprep.mubr.f32.mxu0 0.0
      %3610 = vmatmul.mubr.f32.gmra.mxu0 %v3396
      %v3611 = vpop.f32.mrf.mxu0
      %v3612 = vadd.f32 0.0, %v3611
      %v3613 = vpop.f32.mrf.mxu0
      %3614 = vmatprep.mubr.f32.mxu0 0.0
      %3615 = vmatmul.mubr.f32.gmra.mxu0 %v3399
      %v3616 = vpop.f32.mrf.mxu0
      %v3617 = vadd.f32 0.0, %v3616
      %v3618 = vpop.f32.mrf.mxu0
      %3619 = vmatprep.mubr.f32.mxu0 0.0
      %3620 = vmatmul.mubr.f32.gmra.mxu0 %v3402
      %v3621 = vpop.f32.mrf.mxu0
      %v3622 = vadd.f32 0.0, %v3621
      %v3623 = vpop.f32.mrf.mxu0
      %3624 = vmatprep.mubr.f32.mxu0 0.0
      %3625 = vmatmul.mubr.f32.gmra.mxu0 %v3405
      %v3626 = vpop.f32.mrf.mxu0
      %v3627 = vadd.f32 0.0, %v3626
      %v3628 = vpop.f32.mrf.mxu0
      %3629 = vmatprep.mubr.f32.mxu0 0.0
      %3630 = vmatmul.mubr.f32.gmra.mxu0 %v3408
      %v3631 = vpop.f32.mrf.mxu0
      %v3632 = vadd.f32 0.0, %v3631
      %v3633 = vpop.f32.mrf.mxu0
      %3634 = vmatprep.mubr.f32.mxu0 0.0
      %3635 = vmatmul.mubr.f32.gmra.mxu0 %v3411
      %v3636 = vpop.f32.mrf.mxu0
      %v3637 = vadd.f32 0.0, %v3636
      %v3638 = vpop.f32.mrf.mxu0
      %3639 = vmatprep.mubr.f32.mxu0 0.0
      %3640 = vmatmul.mubr.f32.gmra.mxu0 %v3414
      %v3641 = vpop.f32.mrf.mxu0
      %v3642 = vadd.f32 0.0, %v3641
      %v3643 = vpop.f32.mrf.mxu0
      %3644 = vdwg.mxu0
      %v3645 = vlaneseq
      %v3646 = vshrl.u32 %v3645, 7
      %v3647 = vsub.s32 0, %v3646
      %v3648 = vrot.slane %v412, %v3647
      %v3649 = vmul.f32 %v3487, %v3648
      %v3650 = vmul.f32 %v3492, %v3648
      %v3651 = vmul.f32 %v3497, %v3648
      %v3652 = vmul.f32 %v3502, %v3648
      %v3653 = vmul.f32 %v3507, %v3648
      %v3654 = vmul.f32 %v3512, %v3648
      %v3655 = vmul.f32 %v3517, %v3648
      %v3656 = vmul.f32 %v3522, %v3648
      %v3657 = vmul.f32 %v3527, %v3648
      %v3658 = vmul.f32 %v3532, %v3648
      %v3659 = vmul.f32 %v3537, %v3648
      %v3660 = vmul.f32 %v3542, %v3648
      %v3661 = vmul.f32 %v3547, %v3648
      %v3662 = vmul.f32 %v3552, %v3648
      %v3663 = vmul.f32 %v3557, %v3648
      %v3664 = vmul.f32 %v3562, %v3648
      %v3665 = vmul.f32 %v3567, %v3648
      %v3666 = vmul.f32 %v3572, %v3648
      %v3667 = vmul.f32 %v3577, %v3648
      %v3668 = vmul.f32 %v3582, %v3648
      %v3669 = vmul.f32 %v3587, %v3648
      %v3670 = vmul.f32 %v3592, %v3648
      %v3671 = vmul.f32 %v3597, %v3648
      %v3672 = vmul.f32 %v3602, %v3648
      %v3673 = vmul.f32 %v3607, %v3648
      %v3674 = vmul.f32 %v3612, %v3648
      %v3675 = vmul.f32 %v3617, %v3648
      %v3676 = vmul.f32 %v3622, %v3648
      %v3677 = vmul.f32 %v3627, %v3648
      %v3678 = vmul.f32 %v3632, %v3648
      %v3679 = vmul.f32 %v3637, %v3648
      %v3680 = vmul.f32 %v3642, %v3648
      %v3681 = vlaneseq
      %v3682 = vshrl.u32 %v3681, 7
      %v3683 = vsub.s32 0, %v3682
      %v3684 = vrot.slane %v415, %v3683
      %v3685 = vadd.f32 %v3649, %v3684
      %v3686 = vadd.f32 %v3650, %v3684
      %v3687 = vadd.f32 %v3651, %v3684
      %v3688 = vadd.f32 %v3652, %v3684
      %v3689 = vadd.f32 %v3653, %v3684
      %v3690 = vadd.f32 %v3654, %v3684
      %v3691 = vadd.f32 %v3655, %v3684
      %v3692 = vadd.f32 %v3656, %v3684
      %v3693 = vadd.f32 %v3657, %v3684
      %v3694 = vadd.f32 %v3658, %v3684
      %v3695 = vadd.f32 %v3659, %v3684
      %v3696 = vadd.f32 %v3660, %v3684
      %v3697 = vadd.f32 %v3661, %v3684
      %v3698 = vadd.f32 %v3662, %v3684
      %v3699 = vadd.f32 %v3663, %v3684
      %v3700 = vadd.f32 %v3664, %v3684
      %v3701 = vadd.f32 %v3665, %v3684
      %v3702 = vadd.f32 %v3666, %v3684
      %v3703 = vadd.f32 %v3667, %v3684
      %v3704 = vadd.f32 %v3668, %v3684
      %v3705 = vadd.f32 %v3669, %v3684
      %v3706 = vadd.f32 %v3670, %v3684
      %v3707 = vadd.f32 %v3671, %v3684
      %v3708 = vadd.f32 %v3672, %v3684
      %v3709 = vadd.f32 %v3673, %v3684
      %v3710 = vadd.f32 %v3674, %v3684
      %v3711 = vadd.f32 %v3675, %v3684
      %v3712 = vadd.f32 %v3676, %v3684
      %v3713 = vadd.f32 %v3677, %v3684
      %v3714 = vadd.f32 %v3678, %v3684
      %v3715 = vadd.f32 %v3679, %v3684
      %v3716 = vadd.f32 %v3680, %v3684
      %v3717 = vmax.f32 %v3685, 0.0
      %v3718 = vmax.f32 %v3686, 0.0
      %v3719 = vmax.f32 %v3687, 0.0
      %v3720 = vmax.f32 %v3688, 0.0
      %v3721 = vmax.f32 %v3689, 0.0
      %v3722 = vmax.f32 %v3690, 0.0
      %v3723 = vmax.f32 %v3691, 0.0
      %v3724 = vmax.f32 %v3692, 0.0
      %v3725 = vmax.f32 %v3693, 0.0
      %v3726 = vmax.f32 %v3694, 0.0
      %v3727 = vmax.f32 %v3695, 0.0
      %v3728 = vmax.f32 %v3696, 0.0
      %v3729 = vmax.f32 %v3697, 0.0
      %v3730 = vmax.f32 %v3698, 0.0
      %v3731 = vmax.f32 %v3699, 0.0
      %v3732 = vmax.f32 %v3700, 0.0
      %v3733 = vmax.f32 %v3701, 0.0
      %v3734 = vmax.f32 %v3702, 0.0
      %v3735 = vmax.f32 %v3703, 0.0
      %v3736 = vmax.f32 %v3704, 0.0
      %v3737 = vmax.f32 %v3705, 0.0
      %v3738 = vmax.f32 %v3706, 0.0
      %v3739 = vmax.f32 %v3707, 0.0
      %v3740 = vmax.f32 %v3708, 0.0
      %v3741 = vmax.f32 %v3709, 0.0
      %v3742 = vmax.f32 %v3710, 0.0
      %v3743 = vmax.f32 %v3711, 0.0
      %v3744 = vmax.f32 %v3712, 0.0
      %v3745 = vmax.f32 %v3713, 0.0
      %v3746 = vmax.f32 %v3714, 0.0
      %v3747 = vmax.f32 %v3715, 0.0
      %v3748 = vmax.f32 %v3716, 0.0
      %vm3749 = vcmask 64512
      %v3751 = vsel %vm3749, %v3717, 0
      %v3754 = vsel %vm3749, %v3718, 0
      %v3757 = vsel %vm3749, %v3719, 0
      %v3760 = vsel %vm3749, %v3720, 0
      %v3763 = vsel %vm3749, %v3721, 0
      %v3766 = vsel %vm3749, %v3722, 0
      %v3769 = vsel %vm3749, %v3723, 0
      %v3772 = vsel %vm3749, %v3724, 0
      %v3775 = vsel %vm3749, %v3725, 0
      %v3778 = vsel %vm3749, %v3726, 0
      %v3781 = vsel %vm3749, %v3727, 0
      %v3784 = vsel %vm3749, %v3728, 0
      %v3787 = vsel %vm3749, %v3729, 0
      %v3790 = vsel %vm3749, %v3730, 0
      %v3793 = vsel %vm3749, %v3731, 0
      %v3796 = vsel %vm3749, %v3732, 0
      %v3799 = vsel %vm3749, %v3733, 0
      %v3802 = vsel %vm3749, %v3734, 0
      %v3805 = vsel %vm3749, %v3735, 0
      %v3808 = vsel %vm3749, %v3736, 0
      %v3811 = vsel %vm3749, %v3737, 0
      %v3814 = vsel %vm3749, %v3738, 0
      %v3817 = vsel %vm3749, %v3739, 0
      %v3820 = vsel %vm3749, %v3740, 0
      %v3823 = vsel %vm3749, %v3741, 0
      %v3826 = vsel %vm3749, %v3742, 0
      %v3829 = vsel %vm3749, %v3743, 0
      %v3832 = vsel %vm3749, %v3744, 0
      %v3835 = vsel %vm3749, %v3745, 0
      %v3838 = vsel %vm3749, %v3746, 0
      %v3841 = vsel %vm3749, %v3747, 0
      %v3844 = vsel %vm3749, %v3748, 0
      %3846 = vmatprep.subr.mxu0 0.0
      %3847 = vmatpush1.msra.mxu0 0.0
      %3848 = vmatprep.subr.mxu0 0.0
      %3849 = vmatpush1.msra.mxu0 0.0
      %3850 = vmatprep.subr.mxu0 0.0
      %3851 = vmatpush1.msra.mxu0 0.0
      %3852 = vmatprep.subr.mxu0 0.0
      %3853 = vmatpush1.msra.mxu0 0.0
      %3854 = vmatprep.subr.mxu0 0.0
      %3855 = vmatpush1.msra.mxu0 0.0
      %3856 = vmatprep.subr.mxu0 0.0
      %3857 = vmatpush1.msra.mxu0 0.0
      %3858 = vmatprep.subr.mxu0 0.0
      %3859 = vmatpush1.msra.mxu0 0.0
      %3860 = vmatprep.subr.mxu0 0.0
      %3861 = vmatpush1.msra.mxu0 0.0
      %3862 = vmatprep.subr.mxu0 0.0
      %3863 = vmatpush1.msra.mxu0 0.0
      %3864 = vmatprep.subr.mxu0 0.0
      %3865 = vmatpush1.msra.mxu0 0.0
      %3866 = vmatprep.subr.mxu0 0.0
      %3867 = vmatpush1.msra.mxu0 0.0
      %3868 = vmatprep.subr.mxu0 0.0
      %3869 = vmatpush1.msra.mxu0 0.0
      %3870 = vmatprep.subr.mxu0 0.0
      %3871 = vmatpush1.msra.mxu0 0.0
      %3872 = vmatprep.subr.mxu0 0.0
      %3873 = vmatpush1.msra.mxu0 0.0
      %3874 = vmatprep.subr.mxu0 0.0
      %3875 = vmatpush1.msra.mxu0 0.0
      %3876 = vmatprep.subr.mxu0 0.0
      %3877 = vmatpush1.msra.mxu0 %v385
      %3878 = vmatprep.subr.mxu0 0.0
      %3879 = vmatpush2.msra.mxu0 0.0
      %3880 = vmatprep.subr.mxu0 0.0
      %3881 = vmatpush2.msra.mxu0 0.0
      %3882 = vmatprep.subr.mxu0 0.0
      %3883 = vmatpush2.msra.mxu0 0.0
      %3884 = vmatprep.subr.mxu0 0.0
      %3885 = vmatpush2.msra.mxu0 0.0
      %3886 = vmatprep.subr.mxu0 0.0
      %3887 = vmatpush2.msra.mxu0 0.0
      %3888 = vmatprep.subr.mxu0 0.0
      %3889 = vmatpush2.msra.mxu0 0.0
      %3890 = vmatprep.subr.mxu0 0.0
      %3891 = vmatpush2.msra.mxu0 0.0
      %3892 = vmatprep.subr.mxu0 0.0
      %3893 = vmatpush2.msra.mxu0 0.0
      %3894 = vmatprep.subr.mxu0 0.0
      %3895 = vmatpush2.msra.mxu0 0.0
      %3896 = vmatprep.subr.mxu0 0.0
      %3897 = vmatpush2.msra.mxu0 0.0
      %3898 = vmatprep.subr.mxu0 0.0
      %3899 = vmatpush2.msra.mxu0 0.0
      %3900 = vmatprep.subr.mxu0 0.0
      %3901 = vmatpush2.msra.mxu0 0.0
      %3902 = vmatprep.subr.mxu0 0.0
      %3903 = vmatpush2.msra.mxu0 0.0
      %3904 = vmatprep.subr.mxu0 0.0
      %3905 = vmatpush2.msra.mxu0 0.0
      %3906 = vmatprep.subr.mxu0 0.0
      %3907 = vmatpush2.msra.mxu0 0.0
      %3908 = vmatprep.subr.mxu0 0.0
      %3909 = vmatpush2.msra.mxu0 0.0
      %3910 = vmatprep.mubr.f32.mxu0 0.0
      %3911 = vmatmul.mubr.f32.gmra.mxu0 %v3751
      %v3912 = vpop.f32.mrf.mxu0
      %v3913 = vadd.f32 0.0, %v3912
      %v3914 = vpop.f32.mrf.mxu0
      %3915 = vmatprep.mubr.f32.mxu0 0.0
      %3916 = vmatmul.mubr.f32.gmra.mxu0 %v3754
      %v3917 = vpop.f32.mrf.mxu0
      %v3918 = vadd.f32 0.0, %v3917
      %v3919 = vpop.f32.mrf.mxu0
      %3920 = vmatprep.mubr.f32.mxu0 0.0
      %3921 = vmatmul.mubr.f32.gmra.mxu0 %v3757
      %v3922 = vpop.f32.mrf.mxu0
      %v3923 = vadd.f32 0.0, %v3922
      %v3924 = vpop.f32.mrf.mxu0
      %3925 = vmatprep.mubr.f32.mxu0 0.0
      %3926 = vmatmul.mubr.f32.gmra.mxu0 %v3760
      %v3927 = vpop.f32.mrf.mxu0
      %v3928 = vadd.f32 0.0, %v3927
      %v3929 = vpop.f32.mrf.mxu0
      %3930 = vmatprep.mubr.f32.mxu0 0.0
      %3931 = vmatmul.mubr.f32.gmra.mxu0 %v3763
      %v3932 = vpop.f32.mrf.mxu0
      %v3933 = vadd.f32 0.0, %v3932
      %v3934 = vpop.f32.mrf.mxu0
      %3935 = vmatprep.mubr.f32.mxu0 0.0
      %3936 = vmatmul.mubr.f32.gmra.mxu0 %v3766
      %v3937 = vpop.f32.mrf.mxu0
      %v3938 = vadd.f32 0.0, %v3937
      %v3939 = vpop.f32.mrf.mxu0
      %3940 = vmatprep.mubr.f32.mxu0 0.0
      %3941 = vmatmul.mubr.f32.gmra.mxu0 %v3769
      %v3942 = vpop.f32.mrf.mxu0
      %v3943 = vadd.f32 0.0, %v3942
      %v3944 = vpop.f32.mrf.mxu0
      %3945 = vmatprep.mubr.f32.mxu0 0.0
      %3946 = vmatmul.mubr.f32.gmra.mxu0 %v3772
      %v3947 = vpop.f32.mrf.mxu0
      %v3948 = vadd.f32 0.0, %v3947
      %v3949 = vpop.f32.mrf.mxu0
      %3950 = vmatprep.mubr.f32.mxu0 0.0
      %3951 = vmatmul.mubr.f32.gmra.mxu0 %v3775
      %v3952 = vpop.f32.mrf.mxu0
      %v3953 = vadd.f32 0.0, %v3952
      %v3954 = vpop.f32.mrf.mxu0
      %3955 = vmatprep.mubr.f32.mxu0 0.0
      %3956 = vmatmul.mubr.f32.gmra.mxu0 %v3778
      %v3957 = vpop.f32.mrf.mxu0
      %v3958 = vadd.f32 0.0, %v3957
      %v3959 = vpop.f32.mrf.mxu0
      %3960 = vmatprep.mubr.f32.mxu0 0.0
      %3961 = vmatmul.mubr.f32.gmra.mxu0 %v3781
      %v3962 = vpop.f32.mrf.mxu0
      %v3963 = vadd.f32 0.0, %v3962
      %v3964 = vpop.f32.mrf.mxu0
      %3965 = vmatprep.mubr.f32.mxu0 0.0
      %3966 = vmatmul.mubr.f32.gmra.mxu0 %v3784
      %v3967 = vpop.f32.mrf.mxu0
      %v3968 = vadd.f32 0.0, %v3967
      %v3969 = vpop.f32.mrf.mxu0
      %3970 = vmatprep.mubr.f32.mxu0 0.0
      %3971 = vmatmul.mubr.f32.gmra.mxu0 %v3787
      %v3972 = vpop.f32.mrf.mxu0
      %v3973 = vadd.f32 0.0, %v3972
      %v3974 = vpop.f32.mrf.mxu0
      %3975 = vmatprep.mubr.f32.mxu0 0.0
      %3976 = vmatmul.mubr.f32.gmra.mxu0 %v3790
      %v3977 = vpop.f32.mrf.mxu0
      %v3978 = vadd.f32 0.0, %v3977
      %v3979 = vpop.f32.mrf.mxu0
      %3980 = vmatprep.mubr.f32.mxu0 0.0
      %3981 = vmatmul.mubr.f32.gmra.mxu0 %v3793
      %v3982 = vpop.f32.mrf.mxu0
      %v3983 = vadd.f32 0.0, %v3982
      %v3984 = vpop.f32.mrf.mxu0
      %3985 = vmatprep.mubr.f32.mxu0 0.0
      %3986 = vmatmul.mubr.f32.gmra.mxu0 %v3796
      %v3987 = vpop.f32.mrf.mxu0
      %v3988 = vadd.f32 0.0, %v3987
      %v3989 = vpop.f32.mrf.mxu0
      %3990 = vmatprep.mubr.f32.mxu0 0.0
      %3991 = vmatmul.mubr.f32.gmra.mxu0 %v3799
      %v3992 = vpop.f32.mrf.mxu0
      %v3993 = vadd.f32 0.0, %v3992
      %v3994 = vpop.f32.mrf.mxu0
      %3995 = vmatprep.mubr.f32.mxu0 0.0
      %3996 = vmatmul.mubr.f32.gmra.mxu0 %v3802
      %v3997 = vpop.f32.mrf.mxu0
      %v3998 = vadd.f32 0.0, %v3997
      %v3999 = vpop.f32.mrf.mxu0
      %4000 = vmatprep.mubr.f32.mxu0 0.0
      %4001 = vmatmul.mubr.f32.gmra.mxu0 %v3805
      %v4002 = vpop.f32.mrf.mxu0
      %v4003 = vadd.f32 0.0, %v4002
      %v4004 = vpop.f32.mrf.mxu0
      %4005 = vmatprep.mubr.f32.mxu0 0.0
      %4006 = vmatmul.mubr.f32.gmra.mxu0 %v3808
      %v4007 = vpop.f32.mrf.mxu0
      %v4008 = vadd.f32 0.0, %v4007
      %v4009 = vpop.f32.mrf.mxu0
      %4010 = vmatprep.mubr.f32.mxu0 0.0
      %4011 = vmatmul.mubr.f32.gmra.mxu0 %v3811
      %v4012 = vpop.f32.mrf.mxu0
      %v4013 = vadd.f32 0.0, %v4012
      %v4014 = vpop.f32.mrf.mxu0
      %4015 = vmatprep.mubr.f32.mxu0 0.0
      %4016 = vmatmul.mubr.f32.gmra.mxu0 %v3814
      %v4017 = vpop.f32.mrf.mxu0
      %v4018 = vadd.f32 0.0, %v4017
      %v4019 = vpop.f32.mrf.mxu0
      %4020 = vmatprep.mubr.f32.mxu0 0.0
      %4021 = vmatmul.mubr.f32.gmra.mxu0 %v3817
      %v4022 = vpop.f32.mrf.mxu0
      %v4023 = vadd.f32 0.0, %v4022
      %v4024 = vpop.f32.mrf.mxu0
      %4025 = vmatprep.mubr.f32.mxu0 0.0
      %4026 = vmatmul.mubr.f32.gmra.mxu0 %v3820
      %v4027 = vpop.f32.mrf.mxu0
      %v4028 = vadd.f32 0.0, %v4027
      %v4029 = vpop.f32.mrf.mxu0
      %4030 = vmatprep.mubr.f32.mxu0 0.0
      %4031 = vmatmul.mubr.f32.gmra.mxu0 %v3823
      %v4032 = vpop.f32.mrf.mxu0
      %v4033 = vadd.f32 0.0, %v4032
      %v4034 = vpop.f32.mrf.mxu0
      %4035 = vmatprep.mubr.f32.mxu0 0.0
      %4036 = vmatmul.mubr.f32.gmra.mxu0 %v3826
      %v4037 = vpop.f32.mrf.mxu0
      %v4038 = vadd.f32 0.0, %v4037
      %v4039 = vpop.f32.mrf.mxu0
      %4040 = vmatprep.mubr.f32.mxu0 0.0
      %4041 = vmatmul.mubr.f32.gmra.mxu0 %v3829
      %v4042 = vpop.f32.mrf.mxu0
      %v4043 = vadd.f32 0.0, %v4042
      %v4044 = vpop.f32.mrf.mxu0
      %4045 = vmatprep.mubr.f32.mxu0 0.0
      %4046 = vmatmul.mubr.f32.gmra.mxu0 %v3832
      %v4047 = vpop.f32.mrf.mxu0
      %v4048 = vadd.f32 0.0, %v4047
      %v4049 = vpop.f32.mrf.mxu0
      %4050 = vmatprep.mubr.f32.mxu0 0.0
      %4051 = vmatmul.mubr.f32.gmra.mxu0 %v3835
      %v4052 = vpop.f32.mrf.mxu0
      %v4053 = vadd.f32 0.0, %v4052
      %v4054 = vpop.f32.mrf.mxu0
      %4055 = vmatprep.mubr.f32.mxu0 0.0
      %4056 = vmatmul.mubr.f32.gmra.mxu0 %v3838
      %v4057 = vpop.f32.mrf.mxu0
      %v4058 = vadd.f32 0.0, %v4057
      %v4059 = vpop.f32.mrf.mxu0
      %4060 = vmatprep.mubr.f32.mxu0 0.0
      %4061 = vmatmul.mubr.f32.gmra.mxu0 %v3841
      %v4062 = vpop.f32.mrf.mxu0
      %v4063 = vadd.f32 0.0, %v4062
      %v4064 = vpop.f32.mrf.mxu0
      %4065 = vmatprep.mubr.f32.mxu0 0.0
      %4066 = vmatmul.mubr.f32.gmra.mxu0 %v3844
      %v4067 = vpop.f32.mrf.mxu0
      %v4068 = vadd.f32 0.0, %v4067
      %v4069 = vpop.f32.mrf.mxu0
      %4070 = vdwg.mxu0
      %v4071 = vlaneseq
      %v4072 = vshrl.u32 %v4071, 7
      %v4073 = vsub.s32 1, %v4072
      %v4074 = vrot.slane %v412, %v4073
      %v4075 = vmul.f32 %v3913, %v4074
      %v4076 = vmul.f32 %v3918, %v4074
      %v4077 = vmul.f32 %v3923, %v4074
      %v4078 = vmul.f32 %v3928, %v4074
      %v4079 = vmul.f32 %v3933, %v4074
      %v4080 = vmul.f32 %v3938, %v4074
      %v4081 = vmul.f32 %v3943, %v4074
      %v4082 = vmul.f32 %v3948, %v4074
      %v4083 = vmul.f32 %v3953, %v4074
      %v4084 = vmul.f32 %v3958, %v4074
      %v4085 = vmul.f32 %v3963, %v4074
      %v4086 = vmul.f32 %v3968, %v4074
      %v4087 = vmul.f32 %v3973, %v4074
      %v4088 = vmul.f32 %v3978, %v4074
      %v4089 = vmul.f32 %v3983, %v4074
      %v4090 = vmul.f32 %v3988, %v4074
      %v4091 = vmul.f32 %v3993, %v4074
      %v4092 = vmul.f32 %v3998, %v4074
      %v4093 = vmul.f32 %v4003, %v4074
      %v4094 = vmul.f32 %v4008, %v4074
      %v4095 = vmul.f32 %v4013, %v4074
      %v4096 = vmul.f32 %v4018, %v4074
      %v4097 = vmul.f32 %v4023, %v4074
      %v4098 = vmul.f32 %v4028, %v4074
      %v4099 = vmul.f32 %v4033, %v4074
      %v4100 = vmul.f32 %v4038, %v4074
      %v4101 = vmul.f32 %v4043, %v4074
      %v4102 = vmul.f32 %v4048, %v4074
      %v4103 = vmul.f32 %v4053, %v4074
      %v4104 = vmul.f32 %v4058, %v4074
      %v4105 = vmul.f32 %v4063, %v4074
      %v4106 = vmul.f32 %v4068, %v4074
      %v4107 = vlaneseq
      %v4108 = vshrl.u32 %v4107, 7
      %v4109 = vsub.s32 1, %v4108
      %v4110 = vrot.slane %v415, %v4109
      %v4111 = vadd.f32 %v4075, %v4110
      %v4112 = vadd.f32 %v4076, %v4110
      %v4113 = vadd.f32 %v4077, %v4110
      %v4114 = vadd.f32 %v4078, %v4110
      %v4115 = vadd.f32 %v4079, %v4110
      %v4116 = vadd.f32 %v4080, %v4110
      %v4117 = vadd.f32 %v4081, %v4110
      %v4118 = vadd.f32 %v4082, %v4110
      %v4119 = vadd.f32 %v4083, %v4110
      %v4120 = vadd.f32 %v4084, %v4110
      %v4121 = vadd.f32 %v4085, %v4110
      %v4122 = vadd.f32 %v4086, %v4110
      %v4123 = vadd.f32 %v4087, %v4110
      %v4124 = vadd.f32 %v4088, %v4110
      %v4125 = vadd.f32 %v4089, %v4110
      %v4126 = vadd.f32 %v4090, %v4110
      %v4127 = vadd.f32 %v4091, %v4110
      %v4128 = vadd.f32 %v4092, %v4110
      %v4129 = vadd.f32 %v4093, %v4110
      %v4130 = vadd.f32 %v4094, %v4110
      %v4131 = vadd.f32 %v4095, %v4110
      %v4132 = vadd.f32 %v4096, %v4110
      %v4133 = vadd.f32 %v4097, %v4110
      %v4134 = vadd.f32 %v4098, %v4110
      %v4135 = vadd.f32 %v4099, %v4110
      %v4136 = vadd.f32 %v4100, %v4110
      %v4137 = vadd.f32 %v4101, %v4110
      %v4138 = vadd.f32 %v4102, %v4110
      %v4139 = vadd.f32 %v4103, %v4110
      %v4140 = vadd.f32 %v4104, %v4110
      %v4141 = vadd.f32 %v4105, %v4110
      %v4142 = vadd.f32 %v4106, %v4110
      %v4143 = vmax.f32 %v4111, 0.0
      %v4144 = vmax.f32 %v4112, 0.0
      %v4145 = vmax.f32 %v4113, 0.0
      %v4146 = vmax.f32 %v4114, 0.0
      %v4147 = vmax.f32 %v4115, 0.0
      %v4148 = vmax.f32 %v4116, 0.0
      %v4149 = vmax.f32 %v4117, 0.0
      %v4150 = vmax.f32 %v4118, 0.0
      %v4151 = vmax.f32 %v4119, 0.0
      %v4152 = vmax.f32 %v4120, 0.0
      %v4153 = vmax.f32 %v4121, 0.0
      %v4154 = vmax.f32 %v4122, 0.0
      %v4155 = vmax.f32 %v4123, 0.0
      %v4156 = vmax.f32 %v4124, 0.0
      %v4157 = vmax.f32 %v4125, 0.0
      %v4158 = vmax.f32 %v4126, 0.0
      %v4159 = vmax.f32 %v4127, 0.0
      %v4160 = vmax.f32 %v4128, 0.0
      %v4161 = vmax.f32 %v4129, 0.0
      %v4162 = vmax.f32 %v4130, 0.0
      %v4163 = vmax.f32 %v4131, 0.0
      %v4164 = vmax.f32 %v4132, 0.0
      %v4165 = vmax.f32 %v4133, 0.0
      %v4166 = vmax.f32 %v4134, 0.0
      %v4167 = vmax.f32 %v4135, 0.0
      %v4168 = vmax.f32 %v4136, 0.0
      %v4169 = vmax.f32 %v4137, 0.0
      %v4170 = vmax.f32 %v4138, 0.0
      %v4171 = vmax.f32 %v4139, 0.0
      %v4172 = vmax.f32 %v4140, 0.0
      %v4173 = vmax.f32 %v4141, 0.0
      %v4174 = vmax.f32 %v4142, 0.0
      %v4178 = vrot.slane %v4172, 7
      %v4179 = vrot.slane %v4173, 7
      %v4180 = vsel %vm1582, %v4178, %v4179
      %v4181 = vrot.slane %v4174, 7
      %v4182 = vsel %vm1582, %v4179, %v4181
      %v4215 = vrot.slane %v4143, 7
      %v4216 = vrot.slane %v4144, 7
      %v4217 = vsel %vm1582, %v4215, %v4216
      %v4218 = vrot.slane %v4145, 7
      %v4219 = vsel %vm1582, %v4216, %v4218
      %v4220 = vrot.slane %v4146, 7
      %v4221 = vsel %vm1582, %v4218, %v4220
      %v4222 = vrot.slane %v4147, 7
      %v4223 = vsel %vm1582, %v4220, %v4222
      %v4224 = vrot.slane %v4148, 7
      %v4225 = vsel %vm1582, %v4222, %v4224
      %v4226 = vrot.slane %v4149, 7
      %v4227 = vsel %vm1582, %v4224, %v4226
      %v4228 = vrot.slane %v4150, 7
      %v4229 = vsel %vm1582, %v4226, %v4228
      %v4230 = vrot.slane %v4151, 7
      %v4231 = vsel %vm1582, %v4228, %v4230
      %v4232 = vrot.slane %v4152, 7
      %v4233 = vsel %vm1582, %v4230, %v4232
      %v4234 = vrot.slane %v4153, 7
      %v4235 = vsel %vm1582, %v4232, %v4234
      %v4236 = vrot.slane %v4154, 7
      %v4237 = vsel %vm1582, %v4234, %v4236
      %v4238 = vrot.slane %v4155, 7
      %v4239 = vsel %vm1582, %v4236, %v4238
      %v4240 = vrot.slane %v4156, 7
      %v4241 = vsel %vm1582, %v4238, %v4240
      %v4242 = vrot.slane %v4157, 7
      %v4243 = vsel %vm1582, %v4240, %v4242
      %v4244 = vrot.slane %v4158, 7
      %v4245 = vsel %vm1582, %v4242, %v4244
      %v4246 = vrot.slane %v4159, 7
      %v4247 = vsel %vm1582, %v4244, %v4246
      %v4248 = vrot.slane %v4160, 7
      %v4249 = vsel %vm1582, %v4246, %v4248
      %v4250 = vrot.slane %v4161, 7
      %v4251 = vsel %vm1582, %v4248, %v4250
      %v4252 = vrot.slane %v4162, 7
      %v4253 = vsel %vm1582, %v4250, %v4252
      %v4254 = vrot.slane %v4163, 7
      %v4255 = vsel %vm1582, %v4252, %v4254
      %v4256 = vrot.slane %v4164, 7
      %v4257 = vsel %vm1582, %v4254, %v4256
      %v4258 = vrot.slane %v4165, 7
      %v4259 = vsel %vm1582, %v4256, %v4258
      %v4260 = vrot.slane %v4166, 7
      %v4261 = vsel %vm1582, %v4258, %v4260
      %v4262 = vrot.slane %v4167, 7
      %v4263 = vsel %vm1582, %v4260, %v4262
      %v4264 = vrot.slane %v4168, 7
      %v4265 = vsel %vm1582, %v4262, %v4264
      %v4266 = vrot.slane %v4169, 7
      %v4267 = vsel %vm1582, %v4264, %v4266
      %v4268 = vrot.slane %v4170, 7
      %v4269 = vsel %vm1582, %v4266, %v4268
      %v4270 = vrot.slane %v4171, 7
      %v4271 = vsel %vm1582, %v4268, %v4270
      %v4272 = vsel %vm1582, %v4270, %v4178
      %v4303 = vsel %vm1582, %v4181, %v4215
      %v4304 = vmul.f32 %v4180, %v709
      %v4305 = vmul.f32 %v4182, %v710
      %v4306 = vmul.f32 %v4303, %v711
      %v4307 = vmul.f32 %v4217, %v712
      %v4308 = vmul.f32 %v4219, %v713
      %v4309 = vmul.f32 %v4221, %v714
      %v4310 = vmul.f32 %v4223, %v715
      %v4311 = vmul.f32 %v4225, %v716
      %v4312 = vmul.f32 %v4227, %v717
      %v4313 = vmul.f32 %v4229, %v718
      %v4314 = vmul.f32 %v4231, %v719
      %v4315 = vmul.f32 %v4233, %v720
      %v4316 = vmul.f32 %v4235, %v721
      %v4317 = vmul.f32 %v4237, %v722
      %v4318 = vmul.f32 %v4239, %v723
      %v4319 = vmul.f32 %v4241, %v724
      %v4320 = vmul.f32 %v4243, %v725
      %v4321 = vmul.f32 %v4245, %v726
      %v4322 = vmul.f32 %v4247, %v727
      %v4323 = vmul.f32 %v4249, %v728
      %v4324 = vmul.f32 %v4251, %v729
      %v4325 = vmul.f32 %v4253, %v730
      %v4326 = vmul.f32 %v4255, %v731
      %v4327 = vmul.f32 %v4257, %v732
      %v4328 = vmul.f32 %v4259, %v733
      %v4329 = vmul.f32 %v4261, %v734
      %v4330 = vmul.f32 %v4263, %v735
      %v4331 = vmul.f32 %v4265, %v736
      %v4332 = vmul.f32 %v4267, %v737
      %v4333 = vmul.f32 %v4269, %v738
      %v4334 = vmul.f32 %v4271, %v739
      %v4335 = vmul.f32 %v4272, %v740
      %v4336 = vmul.f32 %v4173, %v773
      %v4337 = vmul.f32 %v4174, %v774
      %v4338 = vmul.f32 %v4143, %v775
      %v4339 = vmul.f32 %v4144, %v776
      %v4340 = vmul.f32 %v4145, %v777
      %v4341 = vmul.f32 %v4146, %v778
      %v4342 = vmul.f32 %v4147, %v779
      %v4343 = vmul.f32 %v4148, %v780
      %v4344 = vmul.f32 %v4149, %v781
      %v4345 = vmul.f32 %v4150, %v782
      %v4346 = vmul.f32 %v4151, %v783
      %v4347 = vmul.f32 %v4152, %v784
      %v4348 = vmul.f32 %v4153, %v785
      %v4349 = vmul.f32 %v4154, %v786
      %v4350 = vmul.f32 %v4155, %v787
      %v4351 = vmul.f32 %v4156, %v788
      %v4352 = vmul.f32 %v4157, %v789
      %v4353 = vmul.f32 %v4158, %v790
      %v4354 = vmul.f32 %v4159, %v791
      %v4355 = vmul.f32 %v4160, %v792
      %v4356 = vmul.f32 %v4161, %v793
      %v4357 = vmul.f32 %v4162, %v794
      %v4358 = vmul.f32 %v4163, %v795
      %v4359 = vmul.f32 %v4164, %v796
      %v4360 = vmul.f32 %v4165, %v797
      %v4361 = vmul.f32 %v4166, %v798
      %v4362 = vmul.f32 %v4167, %v799
      %v4363 = vmul.f32 %v4168, %v800
      %v4364 = vmul.f32 %v4169, %v801
      %v4365 = vmul.f32 %v4170, %v802
      %v4366 = vmul.f32 %v4171, %v803
      %v4367 = vmul.f32 %v4172, %v804
      %v4368 = vrot.slane %v4173, 1
      %v4369 = vrot.slane %v4174, 1
      %v4370 = vsel %vm1773, %v4368, %v4369
      %v4373 = vrot.slane %v4143, 1
      %v4374 = vrot.slane %v4144, 1
      %v4375 = vsel %vm1773, %v4373, %v4374
      %v4376 = vrot.slane %v4145, 1
      %v4377 = vsel %vm1773, %v4374, %v4376
      %v4378 = vrot.slane %v4146, 1
      %v4379 = vsel %vm1773, %v4376, %v4378
      %v4380 = vrot.slane %v4147, 1
      %v4381 = vsel %vm1773, %v4378, %v4380
      %v4382 = vrot.slane %v4148, 1
      %v4383 = vsel %vm1773, %v4380, %v4382
      %v4384 = vrot.slane %v4149, 1
      %v4385 = vsel %vm1773, %v4382, %v4384
      %v4386 = vrot.slane %v4150, 1
      %v4387 = vsel %vm1773, %v4384, %v4386
      %v4388 = vrot.slane %v4151, 1
      %v4389 = vsel %vm1773, %v4386, %v4388
      %v4390 = vrot.slane %v4152, 1
      %v4391 = vsel %vm1773, %v4388, %v4390
      %v4392 = vrot.slane %v4153, 1
      %v4393 = vsel %vm1773, %v4390, %v4392
      %v4394 = vrot.slane %v4154, 1
      %v4395 = vsel %vm1773, %v4392, %v4394
      %v4396 = vrot.slane %v4155, 1
      %v4397 = vsel %vm1773, %v4394, %v4396
      %v4398 = vrot.slane %v4156, 1
      %v4399 = vsel %vm1773, %v4396, %v4398
      %v4400 = vrot.slane %v4157, 1
      %v4401 = vsel %vm1773, %v4398, %v4400
      %v4402 = vrot.slane %v4158, 1
      %v4403 = vsel %vm1773, %v4400, %v4402
      %v4404 = vrot.slane %v4159, 1
      %v4405 = vsel %vm1773, %v4402, %v4404
      %v4406 = vrot.slane %v4160, 1
      %v4407 = vsel %vm1773, %v4404, %v4406
      %v4408 = vrot.slane %v4161, 1
      %v4409 = vsel %vm1773, %v4406, %v4408
      %v4410 = vrot.slane %v4162, 1
      %v4411 = vsel %vm1773, %v4408, %v4410
      %v4412 = vrot.slane %v4163, 1
      %v4413 = vsel %vm1773, %v4410, %v4412
      %v4414 = vrot.slane %v4164, 1
      %v4415 = vsel %vm1773, %v4412, %v4414
      %v4416 = vrot.slane %v4165, 1
      %v4417 = vsel %vm1773, %v4414, %v4416
      %v4418 = vrot.slane %v4166, 1
      %v4419 = vsel %vm1773, %v4416, %v4418
      %v4420 = vrot.slane %v4167, 1
      %v4421 = vsel %vm1773, %v4418, %v4420
      %v4422 = vrot.slane %v4168, 1
      %v4423 = vsel %vm1773, %v4420, %v4422
      %v4424 = vrot.slane %v4169, 1
      %v4425 = vsel %vm1773, %v4422, %v4424
      %v4426 = vrot.slane %v4170, 1
      %v4427 = vsel %vm1773, %v4424, %v4426
      %v4428 = vrot.slane %v4171, 1
      %v4429 = vsel %vm1773, %v4426, %v4428
      %v4430 = vrot.slane %v4172, 1
      %v4431 = vsel %vm1773, %v4428, %v4430
      %v4432 = vsel %vm1773, %v4430, %v4368
      %v4464 = vsel %vm1773, %v4369, %v4373
      %v4465 = vmul.f32 %v4370, %v869
      %v4466 = vmul.f32 %v4464, %v870
      %v4467 = vmul.f32 %v4375, %v871
      %v4468 = vmul.f32 %v4377, %v872
      %v4469 = vmul.f32 %v4379, %v873
      %v4470 = vmul.f32 %v4381, %v874
      %v4471 = vmul.f32 %v4383, %v875
      %v4472 = vmul.f32 %v4385, %v876
      %v4473 = vmul.f32 %v4387, %v877
      %v4474 = vmul.f32 %v4389, %v878
      %v4475 = vmul.f32 %v4391, %v879
      %v4476 = vmul.f32 %v4393, %v880
      %v4477 = vmul.f32 %v4395, %v881
      %v4478 = vmul.f32 %v4397, %v882
      %v4479 = vmul.f32 %v4399, %v883
      %v4480 = vmul.f32 %v4401, %v884
      %v4481 = vmul.f32 %v4403, %v885
      %v4482 = vmul.f32 %v4405, %v886
      %v4483 = vmul.f32 %v4407, %v887
      %v4484 = vmul.f32 %v4409, %v888
      %v4485 = vmul.f32 %v4411, %v889
      %v4486 = vmul.f32 %v4413, %v890
      %v4487 = vmul.f32 %v4415, %v891
      %v4488 = vmul.f32 %v4417, %v892
      %v4489 = vmul.f32 %v4419, %v893
      %v4490 = vmul.f32 %v4421, %v894
      %v4491 = vmul.f32 %v4423, %v895
      %v4492 = vmul.f32 %v4425, %v896
      %v4493 = vmul.f32 %v4427, %v897
      %v4494 = vmul.f32 %v4429, %v898
      %v4495 = vmul.f32 %v4431, %v899
      %v4496 = vmul.f32 %v4432, %v900
      %v4497 = vmul.f32 %v4303, %v933
      %v4498 = vmul.f32 %v4217, %v934
      %v4499 = vmul.f32 %v4219, %v935
      %v4500 = vmul.f32 %v4221, %v936
      %v4501 = vmul.f32 %v4223, %v937
      %v4502 = vmul.f32 %v4225, %v938
      %v4503 = vmul.f32 %v4227, %v939
      %v4504 = vmul.f32 %v4229, %v940
      %v4505 = vmul.f32 %v4231, %v941
      %v4506 = vmul.f32 %v4233, %v942
      %v4507 = vmul.f32 %v4235, %v943
      %v4508 = vmul.f32 %v4237, %v944
      %v4509 = vmul.f32 %v4239, %v945
      %v4510 = vmul.f32 %v4241, %v946
      %v4511 = vmul.f32 %v4243, %v947
      %v4512 = vmul.f32 %v4245, %v948
      %v4513 = vmul.f32 %v4247, %v949
      %v4514 = vmul.f32 %v4249, %v950
      %v4515 = vmul.f32 %v4251, %v951
      %v4516 = vmul.f32 %v4253, %v952
      %v4517 = vmul.f32 %v4255, %v953
      %v4518 = vmul.f32 %v4257, %v954
      %v4519 = vmul.f32 %v4259, %v955
      %v4520 = vmul.f32 %v4261, %v956
      %v4521 = vmul.f32 %v4263, %v957
      %v4522 = vmul.f32 %v4265, %v958
      %v4523 = vmul.f32 %v4267, %v959
      %v4524 = vmul.f32 %v4269, %v960
      %v4525 = vmul.f32 %v4271, %v961
      %v4526 = vmul.f32 %v4272, %v962
      %v4527 = vmul.f32 %v4180, %v963
      %v4528 = vmul.f32 %v4182, %v964
      %v4529 = vmul.f32 %v4375, %v997
      %v4530 = vmul.f32 %v4377, %v998
      %v4531 = vmul.f32 %v4379, %v999
      %v4532 = vmul.f32 %v4381, %v1000
      %v4533 = vmul.f32 %v4383, %v1001
      %v4534 = vmul.f32 %v4385, %v1002
      %v4535 = vmul.f32 %v4387, %v1003
      %v4536 = vmul.f32 %v4389, %v1004
      %v4537 = vmul.f32 %v4391, %v1005
      %v4538 = vmul.f32 %v4393, %v1006
      %v4539 = vmul.f32 %v4395, %v1007
      %v4540 = vmul.f32 %v4397, %v1008
      %v4541 = vmul.f32 %v4399, %v1009
      %v4542 = vmul.f32 %v4401, %v1010
      %v4543 = vmul.f32 %v4403, %v1011
      %v4544 = vmul.f32 %v4405, %v1012
      %v4545 = vmul.f32 %v4407, %v1013
      %v4546 = vmul.f32 %v4409, %v1014
      %v4547 = vmul.f32 %v4411, %v1015
      %v4548 = vmul.f32 %v4413, %v1016
      %v4549 = vmul.f32 %v4415, %v1017
      %v4550 = vmul.f32 %v4417, %v1018
      %v4551 = vmul.f32 %v4419, %v1019
      %v4552 = vmul.f32 %v4421, %v1020
      %v4553 = vmul.f32 %v4423, %v1021
      %v4554 = vmul.f32 %v4425, %v1022
      %v4555 = vmul.f32 %v4427, %v1023
      %v4556 = vmul.f32 %v4429, %v1024
      %v4557 = vmul.f32 %v4431, %v1025
      %v4558 = vmul.f32 %v4432, %v1026
      %v4559 = vmul.f32 %v4370, %v1027
      %v4560 = vmul.f32 %v4464, %v1028
      %v4561 = vmul.f32 %v4219, %v1093
      %v4562 = vmul.f32 %v4221, %v1094
      %v4563 = vmul.f32 %v4223, %v1095
      %v4564 = vmul.f32 %v4225, %v1096
      %v4565 = vmul.f32 %v4227, %v1097
      %v4566 = vmul.f32 %v4229, %v1098
      %v4567 = vmul.f32 %v4231, %v1099
      %v4568 = vmul.f32 %v4233, %v1100
      %v4569 = vmul.f32 %v4235, %v1101
      %v4570 = vmul.f32 %v4237, %v1102
      %v4571 = vmul.f32 %v4239, %v1103
      %v4572 = vmul.f32 %v4241, %v1104
      %v4573 = vmul.f32 %v4243, %v1105
      %v4574 = vmul.f32 %v4245, %v1106
      %v4575 = vmul.f32 %v4247, %v1107
      %v4576 = vmul.f32 %v4249, %v1108
      %v4577 = vmul.f32 %v4251, %v1109
      %v4578 = vmul.f32 %v4253, %v1110
      %v4579 = vmul.f32 %v4255, %v1111
      %v4580 = vmul.f32 %v4257, %v1112
      %v4581 = vmul.f32 %v4259, %v1113
      %v4582 = vmul.f32 %v4261, %v1114
      %v4583 = vmul.f32 %v4263, %v1115
      %v4584 = vmul.f32 %v4265, %v1116
      %v4585 = vmul.f32 %v4267, %v1117
      %v4586 = vmul.f32 %v4269, %v1118
      %v4587 = vmul.f32 %v4271, %v1119
      %v4588 = vmul.f32 %v4272, %v1120
      %v4589 = vmul.f32 %v4180, %v1121
      %v4590 = vmul.f32 %v4182, %v1122
      %v4591 = vmul.f32 %v4303, %v1123
      %v4592 = vmul.f32 %v4217, %v1124
      %v4593 = vmul.f32 %v4145, %v1157
      %v4594 = vmul.f32 %v4146, %v1158
      %v4595 = vmul.f32 %v4147, %v1159
      %v4596 = vmul.f32 %v4148, %v1160
      %v4597 = vmul.f32 %v4149, %v1161
      %v4598 = vmul.f32 %v4150, %v1162
      %v4599 = vmul.f32 %v4151, %v1163
      %v4600 = vmul.f32 %v4152, %v1164
      %v4601 = vmul.f32 %v4153, %v1165
      %v4602 = vmul.f32 %v4154, %v1166
      %v4603 = vmul.f32 %v4155, %v1167
      %v4604 = vmul.f32 %v4156, %v1168
      %v4605 = vmul.f32 %v4157, %v1169
      %v4606 = vmul.f32 %v4158, %v1170
      %v4607 = vmul.f32 %v4159, %v1171
      %v4608 = vmul.f32 %v4160, %v1172
      %v4609 = vmul.f32 %v4161, %v1173
      %v4610 = vmul.f32 %v4162, %v1174
      %v4611 = vmul.f32 %v4163, %v1175
      %v4612 = vmul.f32 %v4164, %v1176
      %v4613 = vmul.f32 %v4165, %v1177
      %v4614 = vmul.f32 %v4166, %v1178
      %v4615 = vmul.f32 %v4167, %v1179
      %v4616 = vmul.f32 %v4168, %v1180
      %v4617 = vmul.f32 %v4169, %v1181
      %v4618 = vmul.f32 %v4170, %v1182
      %v4619 = vmul.f32 %v4171, %v1183
      %v4620 = vmul.f32 %v4172, %v1184
      %v4621 = vmul.f32 %v4173, %v1185
      %v4622 = vmul.f32 %v4174, %v1186
      %v4623 = vmul.f32 %v4143, %v1187
      %v4624 = vmul.f32 %v4144, %v1188
      %v4625 = vmul.f32 %v4379, %v1253
      %v4626 = vmul.f32 %v4381, %v1254
      %v4627 = vmul.f32 %v4383, %v1255
      %v4628 = vmul.f32 %v4385, %v1256
      %v4629 = vmul.f32 %v4387, %v1257
      %v4630 = vmul.f32 %v4389, %v1258
      %v4631 = vmul.f32 %v4391, %v1259
      %v4632 = vmul.f32 %v4393, %v1260
      %v4633 = vmul.f32 %v4395, %v1261
      %v4634 = vmul.f32 %v4397, %v1262
      %v4635 = vmul.f32 %v4399, %v1263
      %v4636 = vmul.f32 %v4401, %v1264
      %v4637 = vmul.f32 %v4403, %v1265
      %v4638 = vmul.f32 %v4405, %v1266
      %v4639 = vmul.f32 %v4407, %v1267
      %v4640 = vmul.f32 %v4409, %v1268
      %v4641 = vmul.f32 %v4411, %v1269
      %v4642 = vmul.f32 %v4413, %v1270
      %v4643 = vmul.f32 %v4415, %v1271
      %v4644 = vmul.f32 %v4417, %v1272
      %v4645 = vmul.f32 %v4419, %v1273
      %v4646 = vmul.f32 %v4421, %v1274
      %v4647 = vmul.f32 %v4423, %v1275
      %v4648 = vmul.f32 %v4425, %v1276
      %v4649 = vmul.f32 %v4427, %v1277
      %v4650 = vmul.f32 %v4429, %v1278
      %v4651 = vmul.f32 %v4431, %v1279
      %v4652 = vmul.f32 %v4432, %v1280
      %v4653 = vmul.f32 %v4370, %v1281
      %v4654 = vmul.f32 %v4464, %v1282
      %v4655 = vmul.f32 %v4375, %v1283
      %v4656 = vmul.f32 %v4377, %v1284
      %4689 = vrot.lane.b32.xlu0 %v4336, 16
      %v4690 = vpop.permute.xlu0 %4689
      %4691 = vrot.lane.b32.xlu0 %v4337, 16
      %v4692 = vpop.permute.xlu0 %4691
      %4693 = vrot.lane.b32.xlu0 %v4338, 16
      %v4694 = vpop.permute.xlu0 %4693
      %4695 = vrot.lane.b32.xlu0 %v4339, 16
      %v4696 = vpop.permute.xlu0 %4695
      %4697 = vrot.lane.b32.xlu0 %v4340, 16
      %v4698 = vpop.permute.xlu0 %4697
      %4699 = vrot.lane.b32.xlu0 %v4341, 16
      %v4700 = vpop.permute.xlu0 %4699
      %4701 = vrot.lane.b32.xlu0 %v4342, 16
      %v4702 = vpop.permute.xlu0 %4701
      %4703 = vrot.lane.b32.xlu0 %v4343, 16
      %v4704 = vpop.permute.xlu0 %4703
      %4705 = vrot.lane.b32.xlu0 %v4344, 16
      %v4706 = vpop.permute.xlu0 %4705
      %4707 = vrot.lane.b32.xlu0 %v4345, 16
      %v4708 = vpop.permute.xlu0 %4707
      %4709 = vrot.lane.b32.xlu0 %v4346, 16
      %v4710 = vpop.permute.xlu0 %4709
      %4711 = vrot.lane.b32.xlu0 %v4347, 16
      %v4712 = vpop.permute.xlu0 %4711
      %4713 = vrot.lane.b32.xlu0 %v4348, 16
      %v4714 = vpop.permute.xlu0 %4713
      %4715 = vrot.lane.b32.xlu0 %v4349, 16
      %v4716 = vpop.permute.xlu0 %4715
      %4717 = vrot.lane.b32.xlu0 %v4350, 16
      %v4718 = vpop.permute.xlu0 %4717
      %4719 = vrot.lane.b32.xlu0 %v4351, 16
      %v4720 = vpop.permute.xlu0 %4719
      %4721 = vrot.lane.b32.xlu0 %v4352, 16
      %v4722 = vpop.permute.xlu0 %4721
      %4723 = vrot.lane.b32.xlu0 %v4353, 16
      %v4724 = vpop.permute.xlu0 %4723
      %4725 = vrot.lane.b32.xlu0 %v4354, 16
      %v4726 = vpop.permute.xlu0 %4725
      %4727 = vrot.lane.b32.xlu0 %v4355, 16
      %v4728 = vpop.permute.xlu0 %4727
      %4729 = vrot.lane.b32.xlu0 %v4356, 16
      %v4730 = vpop.permute.xlu0 %4729
      %4731 = vrot.lane.b32.xlu0 %v4357, 16
      %v4732 = vpop.permute.xlu0 %4731
      %4733 = vrot.lane.b32.xlu0 %v4358, 16
      %v4734 = vpop.permute.xlu0 %4733
      %4735 = vrot.lane.b32.xlu0 %v4359, 16
      %v4736 = vpop.permute.xlu0 %4735
      %4737 = vrot.lane.b32.xlu0 %v4360, 16
      %v4738 = vpop.permute.xlu0 %4737
      %4739 = vrot.lane.b32.xlu0 %v4361, 16
      %v4740 = vpop.permute.xlu0 %4739
      %4741 = vrot.lane.b32.xlu0 %v4362, 16
      %v4742 = vpop.permute.xlu0 %4741
      %4743 = vrot.lane.b32.xlu0 %v4363, 16
      %v4744 = vpop.permute.xlu0 %4743
      %4745 = vrot.lane.b32.xlu0 %v4364, 16
      %v4746 = vpop.permute.xlu0 %4745
      %4747 = vrot.lane.b32.xlu0 %v4365, 16
      %v4748 = vpop.permute.xlu0 %4747
      %4749 = vrot.lane.b32.xlu0 %v4366, 16
      %v4750 = vpop.permute.xlu0 %4749
      %4751 = vrot.lane.b32.xlu0 %v4367, 16
      %v4752 = vpop.permute.xlu0 %4751
      %4817 = vrot.lane.b32.xlu0 %v4465, 32
      %v4818 = vpop.permute.xlu0 %4817
      %4819 = vrot.lane.b32.xlu0 %v4466, 32
      %v4820 = vpop.permute.xlu0 %4819
      %4821 = vrot.lane.b32.xlu0 %v4467, 32
      %v4822 = vpop.permute.xlu0 %4821
      %4823 = vrot.lane.b32.xlu0 %v4468, 32
      %v4824 = vpop.permute.xlu0 %4823
      %4825 = vrot.lane.b32.xlu0 %v4469, 32
      %v4826 = vpop.permute.xlu0 %4825
      %4827 = vrot.lane.b32.xlu0 %v4470, 32
      %v4828 = vpop.permute.xlu0 %4827
      %4829 = vrot.lane.b32.xlu0 %v4471, 32
      %v4830 = vpop.permute.xlu0 %4829
      %4831 = vrot.lane.b32.xlu0 %v4472, 32
      %v4832 = vpop.permute.xlu0 %4831
      %4833 = vrot.lane.b32.xlu0 %v4473, 32
      %v4834 = vpop.permute.xlu0 %4833
      %4835 = vrot.lane.b32.xlu0 %v4474, 32
      %v4836 = vpop.permute.xlu0 %4835
      %4837 = vrot.lane.b32.xlu0 %v4475, 32
      %v4838 = vpop.permute.xlu0 %4837
      %4839 = vrot.lane.b32.xlu0 %v4476, 32
      %v4840 = vpop.permute.xlu0 %4839
      %4841 = vrot.lane.b32.xlu0 %v4477, 32
      %v4842 = vpop.permute.xlu0 %4841
      %4843 = vrot.lane.b32.xlu0 %v4478, 32
      %v4844 = vpop.permute.xlu0 %4843
      %4845 = vrot.lane.b32.xlu0 %v4479, 32
      %v4846 = vpop.permute.xlu0 %4845
      %4847 = vrot.lane.b32.xlu0 %v4480, 32
      %v4848 = vpop.permute.xlu0 %4847
      %4849 = vrot.lane.b32.xlu0 %v4481, 32
      %v4850 = vpop.permute.xlu0 %4849
      %4851 = vrot.lane.b32.xlu0 %v4482, 32
      %v4852 = vpop.permute.xlu0 %4851
      %4853 = vrot.lane.b32.xlu0 %v4483, 32
      %v4854 = vpop.permute.xlu0 %4853
      %4855 = vrot.lane.b32.xlu0 %v4484, 32
      %v4856 = vpop.permute.xlu0 %4855
      %4857 = vrot.lane.b32.xlu0 %v4485, 32
      %v4858 = vpop.permute.xlu0 %4857
      %4859 = vrot.lane.b32.xlu0 %v4486, 32
      %v4860 = vpop.permute.xlu0 %4859
      %4861 = vrot.lane.b32.xlu0 %v4487, 32
      %v4862 = vpop.permute.xlu0 %4861
      %4863 = vrot.lane.b32.xlu0 %v4488, 32
      %v4864 = vpop.permute.xlu0 %4863
      %4865 = vrot.lane.b32.xlu0 %v4489, 32
      %v4866 = vpop.permute.xlu0 %4865
      %4867 = vrot.lane.b32.xlu0 %v4490, 32
      %v4868 = vpop.permute.xlu0 %4867
      %4869 = vrot.lane.b32.xlu0 %v4491, 32
      %v4870 = vpop.permute.xlu0 %4869
      %4871 = vrot.lane.b32.xlu0 %v4492, 32
      %v4872 = vpop.permute.xlu0 %4871
      %4873 = vrot.lane.b32.xlu0 %v4493, 32
      %v4874 = vpop.permute.xlu0 %4873
      %4875 = vrot.lane.b32.xlu0 %v4494, 32
      %v4876 = vpop.permute.xlu0 %4875
      %4877 = vrot.lane.b32.xlu0 %v4495, 32
      %v4878 = vpop.permute.xlu0 %4877
      %4879 = vrot.lane.b32.xlu0 %v4496, 32
      %v4880 = vpop.permute.xlu0 %4879
      %4945 = vrot.lane.b32.xlu0 %v4497, 48
      %v4946 = vpop.permute.xlu0 %4945
      %4947 = vrot.lane.b32.xlu0 %v4498, 48
      %v4948 = vpop.permute.xlu0 %4947
      %4949 = vrot.lane.b32.xlu0 %v4499, 48
      %v4950 = vpop.permute.xlu0 %4949
      %4951 = vrot.lane.b32.xlu0 %v4500, 48
      %v4952 = vpop.permute.xlu0 %4951
      %4953 = vrot.lane.b32.xlu0 %v4501, 48
      %v4954 = vpop.permute.xlu0 %4953
      %4955 = vrot.lane.b32.xlu0 %v4502, 48
      %v4956 = vpop.permute.xlu0 %4955
      %4957 = vrot.lane.b32.xlu0 %v4503, 48
      %v4958 = vpop.permute.xlu0 %4957
      %4959 = vrot.lane.b32.xlu0 %v4504, 48
      %v4960 = vpop.permute.xlu0 %4959
      %4961 = vrot.lane.b32.xlu0 %v4505, 48
      %v4962 = vpop.permute.xlu0 %4961
      %4963 = vrot.lane.b32.xlu0 %v4506, 48
      %v4964 = vpop.permute.xlu0 %4963
      %4965 = vrot.lane.b32.xlu0 %v4507, 48
      %v4966 = vpop.permute.xlu0 %4965
      %4967 = vrot.lane.b32.xlu0 %v4508, 48
      %v4968 = vpop.permute.xlu0 %4967
      %4969 = vrot.lane.b32.xlu0 %v4509, 48
      %v4970 = vpop.permute.xlu0 %4969
      %4971 = vrot.lane.b32.xlu0 %v4510, 48
      %v4972 = vpop.permute.xlu0 %4971
      %4973 = vrot.lane.b32.xlu0 %v4511, 48
      %v4974 = vpop.permute.xlu0 %4973
      %4975 = vrot.lane.b32.xlu0 %v4512, 48
      %v4976 = vpop.permute.xlu0 %4975
      %4977 = vrot.lane.b32.xlu0 %v4513, 48
      %v4978 = vpop.permute.xlu0 %4977
      %4979 = vrot.lane.b32.xlu0 %v4514, 48
      %v4980 = vpop.permute.xlu0 %4979
      %4981 = vrot.lane.b32.xlu0 %v4515, 48
      %v4982 = vpop.permute.xlu0 %4981
      %4983 = vrot.lane.b32.xlu0 %v4516, 48
      %v4984 = vpop.permute.xlu0 %4983
      %4985 = vrot.lane.b32.xlu0 %v4517, 48
      %v4986 = vpop.permute.xlu0 %4985
      %4987 = vrot.lane.b32.xlu0 %v4518, 48
      %v4988 = vpop.permute.xlu0 %4987
      %4989 = vrot.lane.b32.xlu0 %v4519, 48
      %v4990 = vpop.permute.xlu0 %4989
      %4991 = vrot.lane.b32.xlu0 %v4520, 48
      %v4992 = vpop.permute.xlu0 %4991
      %4993 = vrot.lane.b32.xlu0 %v4521, 48
      %v4994 = vpop.permute.xlu0 %4993
      %4995 = vrot.lane.b32.xlu0 %v4522, 48
      %v4996 = vpop.permute.xlu0 %4995
      %4997 = vrot.lane.b32.xlu0 %v4523, 48
      %v4998 = vpop.permute.xlu0 %4997
      %4999 = vrot.lane.b32.xlu0 %v4524, 48
      %v5000 = vpop.permute.xlu0 %4999
      %5001 = vrot.lane.b32.xlu0 %v4525, 48
      %v5002 = vpop.permute.xlu0 %5001
      %5003 = vrot.lane.b32.xlu0 %v4526, 48
      %v5004 = vpop.permute.xlu0 %5003
      %5005 = vrot.lane.b32.xlu0 %v4527, 48
      %v5006 = vpop.permute.xlu0 %5005
      %5007 = vrot.lane.b32.xlu0 %v4528, 48
      %v5008 = vpop.permute.xlu0 %5007
      %5041 = vrot.lane.b32.xlu0 %v4143, 64
      %v5042 = vpop.permute.xlu0 %5041
      %5043 = vrot.lane.b32.xlu0 %v4144, 64
      %v5044 = vpop.permute.xlu0 %5043
      %5045 = vrot.lane.b32.xlu0 %v4145, 64
      %v5046 = vpop.permute.xlu0 %5045
      %5047 = vrot.lane.b32.xlu0 %v4146, 64
      %v5048 = vpop.permute.xlu0 %5047
      %5049 = vrot.lane.b32.xlu0 %v4147, 64
      %v5050 = vpop.permute.xlu0 %5049
      %5051 = vrot.lane.b32.xlu0 %v4148, 64
      %v5052 = vpop.permute.xlu0 %5051
      %5053 = vrot.lane.b32.xlu0 %v4149, 64
      %v5054 = vpop.permute.xlu0 %5053
      %5055 = vrot.lane.b32.xlu0 %v4150, 64
      %v5056 = vpop.permute.xlu0 %5055
      %5057 = vrot.lane.b32.xlu0 %v4151, 64
      %v5058 = vpop.permute.xlu0 %5057
      %5059 = vrot.lane.b32.xlu0 %v4152, 64
      %v5060 = vpop.permute.xlu0 %5059
      %5061 = vrot.lane.b32.xlu0 %v4153, 64
      %v5062 = vpop.permute.xlu0 %5061
      %5063 = vrot.lane.b32.xlu0 %v4154, 64
      %v5064 = vpop.permute.xlu0 %5063
      %5065 = vrot.lane.b32.xlu0 %v4155, 64
      %v5066 = vpop.permute.xlu0 %5065
      %5067 = vrot.lane.b32.xlu0 %v4156, 64
      %v5068 = vpop.permute.xlu0 %5067
      %5069 = vrot.lane.b32.xlu0 %v4157, 64
      %v5070 = vpop.permute.xlu0 %5069
      %5071 = vrot.lane.b32.xlu0 %v4158, 64
      %v5072 = vpop.permute.xlu0 %5071
      %5073 = vrot.lane.b32.xlu0 %v4159, 64
      %v5074 = vpop.permute.xlu0 %5073
      %5075 = vrot.lane.b32.xlu0 %v4160, 64
      %v5076 = vpop.permute.xlu0 %5075
      %5077 = vrot.lane.b32.xlu0 %v4161, 64
      %v5078 = vpop.permute.xlu0 %5077
      %5079 = vrot.lane.b32.xlu0 %v4162, 64
      %v5080 = vpop.permute.xlu0 %5079
      %5081 = vrot.lane.b32.xlu0 %v4163, 64
      %v5082 = vpop.permute.xlu0 %5081
      %5083 = vrot.lane.b32.xlu0 %v4164, 64
      %v5084 = vpop.permute.xlu0 %5083
      %5085 = vrot.lane.b32.xlu0 %v4165, 64
      %v5086 = vpop.permute.xlu0 %5085
      %5087 = vrot.lane.b32.xlu0 %v4166, 64
      %v5088 = vpop.permute.xlu0 %5087
      %5089 = vrot.lane.b32.xlu0 %v4167, 64
      %v5090 = vpop.permute.xlu0 %5089
      %5091 = vrot.lane.b32.xlu0 %v4168, 64
      %v5092 = vpop.permute.xlu0 %5091
      %5093 = vrot.lane.b32.xlu0 %v4169, 64
      %v5094 = vpop.permute.xlu0 %5093
      %5095 = vrot.lane.b32.xlu0 %v4170, 64
      %v5096 = vpop.permute.xlu0 %5095
      %5097 = vrot.lane.b32.xlu0 %v4171, 64
      %v5098 = vpop.permute.xlu0 %5097
      %5099 = vrot.lane.b32.xlu0 %v4172, 64
      %v5100 = vpop.permute.xlu0 %5099
      %5101 = vrot.lane.b32.xlu0 %v4173, 64
      %v5102 = vpop.permute.xlu0 %5101
      %5103 = vrot.lane.b32.xlu0 %v4174, 64
      %v5104 = vpop.permute.xlu0 %5103
      %5169 = vrot.lane.b32.xlu0 %v4529, 80
      %v5170 = vpop.permute.xlu0 %5169
      %5171 = vrot.lane.b32.xlu0 %v4530, 80
      %v5172 = vpop.permute.xlu0 %5171
      %5173 = vrot.lane.b32.xlu0 %v4531, 80
      %v5174 = vpop.permute.xlu0 %5173
      %5175 = vrot.lane.b32.xlu0 %v4532, 80
      %v5176 = vpop.permute.xlu0 %5175
      %5177 = vrot.lane.b32.xlu0 %v4533, 80
      %v5178 = vpop.permute.xlu0 %5177
      %5179 = vrot.lane.b32.xlu0 %v4534, 80
      %v5180 = vpop.permute.xlu0 %5179
      %5181 = vrot.lane.b32.xlu0 %v4535, 80
      %v5182 = vpop.permute.xlu0 %5181
      %5183 = vrot.lane.b32.xlu0 %v4536, 80
      %v5184 = vpop.permute.xlu0 %5183
      %5185 = vrot.lane.b32.xlu0 %v4537, 80
      %v5186 = vpop.permute.xlu0 %5185
      %5187 = vrot.lane.b32.xlu0 %v4538, 80
      %v5188 = vpop.permute.xlu0 %5187
      %5189 = vrot.lane.b32.xlu0 %v4539, 80
      %v5190 = vpop.permute.xlu0 %5189
      %5191 = vrot.lane.b32.xlu0 %v4540, 80
      %v5192 = vpop.permute.xlu0 %5191
      %5193 = vrot.lane.b32.xlu0 %v4541, 80
      %v5194 = vpop.permute.xlu0 %5193
      %5195 = vrot.lane.b32.xlu0 %v4542, 80
      %v5196 = vpop.permute.xlu0 %5195
      %5197 = vrot.lane.b32.xlu0 %v4543, 80
      %v5198 = vpop.permute.xlu0 %5197
      %5199 = vrot.lane.b32.xlu0 %v4544, 80
      %v5200 = vpop.permute.xlu0 %5199
      %5201 = vrot.lane.b32.xlu0 %v4545, 80
      %v5202 = vpop.permute.xlu0 %5201
      %5203 = vrot.lane.b32.xlu0 %v4546, 80
      %v5204 = vpop.permute.xlu0 %5203
      %5205 = vrot.lane.b32.xlu0 %v4547, 80
      %v5206 = vpop.permute.xlu0 %5205
      %5207 = vrot.lane.b32.xlu0 %v4548, 80
      %v5208 = vpop.permute.xlu0 %5207
      %5209 = vrot.lane.b32.xlu0 %v4549, 80
      %v5210 = vpop.permute.xlu0 %5209
      %5211 = vrot.lane.b32.xlu0 %v4550, 80
      %v5212 = vpop.permute.xlu0 %5211
      %5213 = vrot.lane.b32.xlu0 %v4551, 80
      %v5214 = vpop.permute.xlu0 %5213
      %5215 = vrot.lane.b32.xlu0 %v4552, 80
      %v5216 = vpop.permute.xlu0 %5215
      %5217 = vrot.lane.b32.xlu0 %v4553, 80
      %v5218 = vpop.permute.xlu0 %5217
      %5219 = vrot.lane.b32.xlu0 %v4554, 80
      %v5220 = vpop.permute.xlu0 %5219
      %5221 = vrot.lane.b32.xlu0 %v4555, 80
      %v5222 = vpop.permute.xlu0 %5221
      %5223 = vrot.lane.b32.xlu0 %v4556, 80
      %v5224 = vpop.permute.xlu0 %5223
      %5225 = vrot.lane.b32.xlu0 %v4557, 80
      %v5226 = vpop.permute.xlu0 %5225
      %5227 = vrot.lane.b32.xlu0 %v4558, 80
      %v5228 = vpop.permute.xlu0 %5227
      %5229 = vrot.lane.b32.xlu0 %v4559, 80
      %v5230 = vpop.permute.xlu0 %5229
      %5231 = vrot.lane.b32.xlu0 %v4560, 80
      %v5232 = vpop.permute.xlu0 %5231
      %5297 = vrot.lane.b32.xlu0 %v4561, 96
      %v5298 = vpop.permute.xlu0 %5297
      %5299 = vrot.lane.b32.xlu0 %v4562, 96
      %v5300 = vpop.permute.xlu0 %5299
      %5301 = vrot.lane.b32.xlu0 %v4563, 96
      %v5302 = vpop.permute.xlu0 %5301
      %5303 = vrot.lane.b32.xlu0 %v4564, 96
      %v5304 = vpop.permute.xlu0 %5303
      %5305 = vrot.lane.b32.xlu0 %v4565, 96
      %v5306 = vpop.permute.xlu0 %5305
      %5307 = vrot.lane.b32.xlu0 %v4566, 96
      %v5308 = vpop.permute.xlu0 %5307
      %5309 = vrot.lane.b32.xlu0 %v4567, 96
      %v5310 = vpop.permute.xlu0 %5309
      %5311 = vrot.lane.b32.xlu0 %v4568, 96
      %v5312 = vpop.permute.xlu0 %5311
      %5313 = vrot.lane.b32.xlu0 %v4569, 96
      %v5314 = vpop.permute.xlu0 %5313
      %5315 = vrot.lane.b32.xlu0 %v4570, 96
      %v5316 = vpop.permute.xlu0 %5315
      %5317 = vrot.lane.b32.xlu0 %v4571, 96
      %v5318 = vpop.permute.xlu0 %5317
      %5319 = vrot.lane.b32.xlu0 %v4572, 96
      %v5320 = vpop.permute.xlu0 %5319
      %5321 = vrot.lane.b32.xlu0 %v4573, 96
      %v5322 = vpop.permute.xlu0 %5321
      %5323 = vrot.lane.b32.xlu0 %v4574, 96
      %v5324 = vpop.permute.xlu0 %5323
      %5325 = vrot.lane.b32.xlu0 %v4575, 96
      %v5326 = vpop.permute.xlu0 %5325
      %5327 = vrot.lane.b32.xlu0 %v4576, 96
      %v5328 = vpop.permute.xlu0 %5327
      %5329 = vrot.lane.b32.xlu0 %v4577, 96
      %v5330 = vpop.permute.xlu0 %5329
      %5331 = vrot.lane.b32.xlu0 %v4578, 96
      %v5332 = vpop.permute.xlu0 %5331
      %5333 = vrot.lane.b32.xlu0 %v4579, 96
      %v5334 = vpop.permute.xlu0 %5333
      %5335 = vrot.lane.b32.xlu0 %v4580, 96
      %v5336 = vpop.permute.xlu0 %5335
      %5337 = vrot.lane.b32.xlu0 %v4581, 96
      %v5338 = vpop.permute.xlu0 %5337
      %5339 = vrot.lane.b32.xlu0 %v4582, 96
      %v5340 = vpop.permute.xlu0 %5339
      %5341 = vrot.lane.b32.xlu0 %v4583, 96
      %v5342 = vpop.permute.xlu0 %5341
      %5343 = vrot.lane.b32.xlu0 %v4584, 96
      %v5344 = vpop.permute.xlu0 %5343
      %5345 = vrot.lane.b32.xlu0 %v4585, 96
      %v5346 = vpop.permute.xlu0 %5345
      %5347 = vrot.lane.b32.xlu0 %v4586, 96
      %v5348 = vpop.permute.xlu0 %5347
      %5349 = vrot.lane.b32.xlu0 %v4587, 96
      %v5350 = vpop.permute.xlu0 %5349
      %5351 = vrot.lane.b32.xlu0 %v4588, 96
      %v5352 = vpop.permute.xlu0 %5351
      %5353 = vrot.lane.b32.xlu0 %v4589, 96
      %v5354 = vpop.permute.xlu0 %5353
      %5355 = vrot.lane.b32.xlu0 %v4590, 96
      %v5356 = vpop.permute.xlu0 %5355
      %5357 = vrot.lane.b32.xlu0 %v4591, 96
      %v5358 = vpop.permute.xlu0 %5357
      %5359 = vrot.lane.b32.xlu0 %v4592, 96
      %v5360 = vpop.permute.xlu0 %5359
      %5425 = vrot.lane.b32.xlu0 %v4593, 112
      %v5426 = vpop.permute.xlu0 %5425
      %5427 = vrot.lane.b32.xlu0 %v4594, 112
      %v5428 = vpop.permute.xlu0 %5427
      %5429 = vrot.lane.b32.xlu0 %v4595, 112
      %v5430 = vpop.permute.xlu0 %5429
      %5431 = vrot.lane.b32.xlu0 %v4596, 112
      %v5432 = vpop.permute.xlu0 %5431
      %5433 = vrot.lane.b32.xlu0 %v4597, 112
      %v5434 = vpop.permute.xlu0 %5433
      %5435 = vrot.lane.b32.xlu0 %v4598, 112
      %v5436 = vpop.permute.xlu0 %5435
      %5437 = vrot.lane.b32.xlu0 %v4599, 112
      %v5438 = vpop.permute.xlu0 %5437
      %5439 = vrot.lane.b32.xlu0 %v4600, 112
      %v5440 = vpop.permute.xlu0 %5439
      %5441 = vrot.lane.b32.xlu0 %v4601, 112
      %v5442 = vpop.permute.xlu0 %5441
      %5443 = vrot.lane.b32.xlu0 %v4602, 112
      %v5444 = vpop.permute.xlu0 %5443
      %5445 = vrot.lane.b32.xlu0 %v4603, 112
      %v5446 = vpop.permute.xlu0 %5445
      %5447 = vrot.lane.b32.xlu0 %v4604, 112
      %v5448 = vpop.permute.xlu0 %5447
      %5449 = vrot.lane.b32.xlu0 %v4605, 112
      %v5450 = vpop.permute.xlu0 %5449
      %5451 = vrot.lane.b32.xlu0 %v4606, 112
      %v5452 = vpop.permute.xlu0 %5451
      %5453 = vrot.lane.b32.xlu0 %v4607, 112
      %v5454 = vpop.permute.xlu0 %5453
      %5455 = vrot.lane.b32.xlu0 %v4608, 112
      %v5456 = vpop.permute.xlu0 %5455
      %5457 = vrot.lane.b32.xlu0 %v4609, 112
      %v5458 = vpop.permute.xlu0 %5457
      %5459 = vrot.lane.b32.xlu0 %v4610, 112
      %v5460 = vpop.permute.xlu0 %5459
      %5461 = vrot.lane.b32.xlu0 %v4611, 112
      %v5462 = vpop.permute.xlu0 %5461
      %5463 = vrot.lane.b32.xlu0 %v4612, 112
      %v5464 = vpop.permute.xlu0 %5463
      %5465 = vrot.lane.b32.xlu0 %v4613, 112
      %v5466 = vpop.permute.xlu0 %5465
      %5467 = vrot.lane.b32.xlu0 %v4614, 112
      %v5468 = vpop.permute.xlu0 %5467
      %5469 = vrot.lane.b32.xlu0 %v4615, 112
      %v5470 = vpop.permute.xlu0 %5469
      %5471 = vrot.lane.b32.xlu0 %v4616, 112
      %v5472 = vpop.permute.xlu0 %5471
      %5473 = vrot.lane.b32.xlu0 %v4617, 112
      %v5474 = vpop.permute.xlu0 %5473
      %5475 = vrot.lane.b32.xlu0 %v4618, 112
      %v5476 = vpop.permute.xlu0 %5475
      %5477 = vrot.lane.b32.xlu0 %v4619, 112
      %v5478 = vpop.permute.xlu0 %5477
      %5479 = vrot.lane.b32.xlu0 %v4620, 112
      %v5480 = vpop.permute.xlu0 %5479
      %5481 = vrot.lane.b32.xlu0 %v4621, 112
      %v5482 = vpop.permute.xlu0 %5481
      %5483 = vrot.lane.b32.xlu0 %v4622, 112
      %v5484 = vpop.permute.xlu0 %5483
      %5485 = vrot.lane.b32.xlu0 %v4623, 112
      %v5486 = vpop.permute.xlu0 %5485
      %5487 = vrot.lane.b32.xlu0 %v4624, 112
      %v5488 = vpop.permute.xlu0 %5487
      %vm5521 = vcmask 130048
      %v5522 = vsel %vm5521, %v4304, %v4690
      %v5523 = vsel %vm5521, %v4305, %v4692
      %v5524 = vsel %vm5521, %v4306, %v4694
      %v5525 = vsel %vm5521, %v4307, %v4696
      %v5526 = vsel %vm5521, %v4308, %v4698
      %v5527 = vsel %vm5521, %v4309, %v4700
      %v5528 = vsel %vm5521, %v4310, %v4702
      %v5529 = vsel %vm5521, %v4311, %v4704
      %v5530 = vsel %vm5521, %v4312, %v4706
      %v5531 = vsel %vm5521, %v4313, %v4708
      %v5532 = vsel %vm5521, %v4314, %v4710
      %v5533 = vsel %vm5521, %v4315, %v4712
      %v5534 = vsel %vm5521, %v4316, %v4714
      %v5535 = vsel %vm5521, %v4317, %v4716
      %v5536 = vsel %vm5521, %v4318, %v4718
      %v5537 = vsel %vm5521, %v4319, %v4720
      %v5538 = vsel %vm5521, %v4320, %v4722
      %v5539 = vsel %vm5521, %v4321, %v4724
      %v5540 = vsel %vm5521, %v4322, %v4726
      %v5541 = vsel %vm5521, %v4323, %v4728
      %v5542 = vsel %vm5521, %v4324, %v4730
      %v5543 = vsel %vm5521, %v4325, %v4732
      %v5544 = vsel %vm5521, %v4326, %v4734
      %v5545 = vsel %vm5521, %v4327, %v4736
      %v5546 = vsel %vm5521, %v4328, %v4738
      %v5547 = vsel %vm5521, %v4329, %v4740
      %v5548 = vsel %vm5521, %v4330, %v4742
      %v5549 = vsel %vm5521, %v4331, %v4744
      %v5550 = vsel %vm5521, %v4332, %v4746
      %v5551 = vsel %vm5521, %v4333, %v4748
      %v5552 = vsel %vm5521, %v4334, %v4750
      %v5553 = vsel %vm5521, %v4335, %v4752
      %vm5554 = vcmask 261120
      %v5555 = vsel %vm5554, %v5522, %v4818
      %v5556 = vsel %vm5554, %v5523, %v4820
      %v5557 = vsel %vm5554, %v5524, %v4822
      %v5558 = vsel %vm5554, %v5525, %v4824
      %v5559 = vsel %vm5554, %v5526, %v4826
      %v5560 = vsel %vm5554, %v5527, %v4828
      %v5561 = vsel %vm5554, %v5528, %v4830
      %v5562 = vsel %vm5554, %v5529, %v4832
      %v5563 = vsel %vm5554, %v5530, %v4834
      %v5564 = vsel %vm5554, %v5531, %v4836
      %v5565 = vsel %vm5554, %v5532, %v4838
      %v5566 = vsel %vm5554, %v5533, %v4840
      %v5567 = vsel %vm5554, %v5534, %v4842
      %v5568 = vsel %vm5554, %v5535, %v4844
      %v5569 = vsel %vm5554, %v5536, %v4846
      %v5570 = vsel %vm5554, %v5537, %v4848
      %v5571 = vsel %vm5554, %v5538, %v4850
      %v5572 = vsel %vm5554, %v5539, %v4852
      %v5573 = vsel %vm5554, %v5540, %v4854
      %v5574 = vsel %vm5554, %v5541, %v4856
      %v5575 = vsel %vm5554, %v5542, %v4858
      %v5576 = vsel %vm5554, %v5543, %v4860
      %v5577 = vsel %vm5554, %v5544, %v4862
      %v5578 = vsel %vm5554, %v5545, %v4864
      %v5579 = vsel %vm5554, %v5546, %v4866
      %v5580 = vsel %vm5554, %v5547, %v4868
      %v5581 = vsel %vm5554, %v5548, %v4870
      %v5582 = vsel %vm5554, %v5549, %v4872
      %v5583 = vsel %vm5554, %v5550, %v4874
      %v5584 = vsel %vm5554, %v5551, %v4876
      %v5585 = vsel %vm5554, %v5552, %v4878
      %v5586 = vsel %vm5554, %v5553, %v4880
      %vm5587 = vcmask 392192
      %v5588 = vsel %vm5587, %v5555, %v4946
      %v5589 = vsel %vm5587, %v5556, %v4948
      %v5590 = vsel %vm5587, %v5557, %v4950
      %v5591 = vsel %vm5587, %v5558, %v4952
      %v5592 = vsel %vm5587, %v5559, %v4954
      %v5593 = vsel %vm5587, %v5560, %v4956
      %v5594 = vsel %vm5587, %v5561, %v4958
      %v5595 = vsel %vm5587, %v5562, %v4960
      %v5596 = vsel %vm5587, %v5563, %v4962
      %v5597 = vsel %vm5587, %v5564, %v4964
      %v5598 = vsel %vm5587, %v5565, %v4966
      %v5599 = vsel %vm5587, %v5566, %v4968
      %v5600 = vsel %vm5587, %v5567, %v4970
      %v5601 = vsel %vm5587, %v5568, %v4972
      %v5602 = vsel %vm5587, %v5569, %v4974
      %v5603 = vsel %vm5587, %v5570, %v4976
      %v5604 = vsel %vm5587, %v5571, %v4978
      %v5605 = vsel %vm5587, %v5572, %v4980
      %v5606 = vsel %vm5587, %v5573, %v4982
      %v5607 = vsel %vm5587, %v5574, %v4984
      %v5608 = vsel %vm5587, %v5575, %v4986
      %v5609 = vsel %vm5587, %v5576, %v4988
      %v5610 = vsel %vm5587, %v5577, %v4990
      %v5611 = vsel %vm5587, %v5578, %v4992
      %v5612 = vsel %vm5587, %v5579, %v4994
      %v5613 = vsel %vm5587, %v5580, %v4996
      %v5614 = vsel %vm5587, %v5581, %v4998
      %v5615 = vsel %vm5587, %v5582, %v5000
      %v5616 = vsel %vm5587, %v5583, %v5002
      %v5617 = vsel %vm5587, %v5584, %v5004
      %v5618 = vsel %vm5587, %v5585, %v5006
      %v5619 = vsel %vm5587, %v5586, %v5008
      %vm5620 = vcmask 523264
      %v5621 = vsel %vm5620, %v5588, %v5042
      %v5622 = vsel %vm5620, %v5589, %v5044
      %v5623 = vsel %vm5620, %v5590, %v5046
      %v5624 = vsel %vm5620, %v5591, %v5048
      %v5625 = vsel %vm5620, %v5592, %v5050
      %v5626 = vsel %vm5620, %v5593, %v5052
      %v5627 = vsel %vm5620, %v5594, %v5054
      %v5628 = vsel %vm5620, %v5595, %v5056
      %v5629 = vsel %vm5620, %v5596, %v5058
      %v5630 = vsel %vm5620, %v5597, %v5060
      %v5631 = vsel %vm5620, %v5598, %v5062
      %v5632 = vsel %vm5620, %v5599, %v5064
      %v5633 = vsel %vm5620, %v5600, %v5066
      %v5634 = vsel %vm5620, %v5601, %v5068
      %v5635 = vsel %vm5620, %v5602, %v5070
      %v5636 = vsel %vm5620, %v5603, %v5072
      %v5637 = vsel %vm5620, %v5604, %v5074
      %v5638 = vsel %vm5620, %v5605, %v5076
      %v5639 = vsel %vm5620, %v5606, %v5078
      %v5640 = vsel %vm5620, %v5607, %v5080
      %v5641 = vsel %vm5620, %v5608, %v5082
      %v5642 = vsel %vm5620, %v5609, %v5084
      %v5643 = vsel %vm5620, %v5610, %v5086
      %v5644 = vsel %vm5620, %v5611, %v5088
      %v5645 = vsel %vm5620, %v5612, %v5090
      %v5646 = vsel %vm5620, %v5613, %v5092
      %v5647 = vsel %vm5620, %v5614, %v5094
      %v5648 = vsel %vm5620, %v5615, %v5096
      %v5649 = vsel %vm5620, %v5616, %v5098
      %v5650 = vsel %vm5620, %v5617, %v5100
      %v5651 = vsel %vm5620, %v5618, %v5102
      %v5652 = vsel %vm5620, %v5619, %v5104
      %vm5653 = vcmask 654336
      %v5654 = vsel %vm5653, %v5621, %v5170
      %v5655 = vsel %vm5653, %v5622, %v5172
      %v5656 = vsel %vm5653, %v5623, %v5174
      %v5657 = vsel %vm5653, %v5624, %v5176
      %v5658 = vsel %vm5653, %v5625, %v5178
      %v5659 = vsel %vm5653, %v5626, %v5180
      %v5660 = vsel %vm5653, %v5627, %v5182
      %v5661 = vsel %vm5653, %v5628, %v5184
      %v5662 = vsel %vm5653, %v5629, %v5186
      %v5663 = vsel %vm5653, %v5630, %v5188
      %v5664 = vsel %vm5653, %v5631, %v5190
      %v5665 = vsel %vm5653, %v5632, %v5192
      %v5666 = vsel %vm5653, %v5633, %v5194
      %v5667 = vsel %vm5653, %v5634, %v5196
      %v5668 = vsel %vm5653, %v5635, %v5198
      %v5669 = vsel %vm5653, %v5636, %v5200
      %v5670 = vsel %vm5653, %v5637, %v5202
      %v5671 = vsel %vm5653, %v5638, %v5204
      %v5672 = vsel %vm5653, %v5639, %v5206
      %v5673 = vsel %vm5653, %v5640, %v5208
      %v5674 = vsel %vm5653, %v5641, %v5210
      %v5675 = vsel %vm5653, %v5642, %v5212
      %v5676 = vsel %vm5653, %v5643, %v5214
      %v5677 = vsel %vm5653, %v5644, %v5216
      %v5678 = vsel %vm5653, %v5645, %v5218
      %v5679 = vsel %vm5653, %v5646, %v5220
      %v5680 = vsel %vm5653, %v5647, %v5222
      %v5681 = vsel %vm5653, %v5648, %v5224
      %v5682 = vsel %vm5653, %v5649, %v5226
      %v5683 = vsel %vm5653, %v5650, %v5228
      %v5684 = vsel %vm5653, %v5651, %v5230
      %v5685 = vsel %vm5653, %v5652, %v5232
      %vm5686 = vcmask 785408
      %v5687 = vsel %vm5686, %v5654, %v5298
      %v5688 = vsel %vm5686, %v5655, %v5300
      %v5689 = vsel %vm5686, %v5656, %v5302
      %v5690 = vsel %vm5686, %v5657, %v5304
      %v5691 = vsel %vm5686, %v5658, %v5306
      %v5692 = vsel %vm5686, %v5659, %v5308
      %v5693 = vsel %vm5686, %v5660, %v5310
      %v5694 = vsel %vm5686, %v5661, %v5312
      %v5695 = vsel %vm5686, %v5662, %v5314
      %v5696 = vsel %vm5686, %v5663, %v5316
      %v5697 = vsel %vm5686, %v5664, %v5318
      %v5698 = vsel %vm5686, %v5665, %v5320
      %v5699 = vsel %vm5686, %v5666, %v5322
      %v5700 = vsel %vm5686, %v5667, %v5324
      %v5701 = vsel %vm5686, %v5668, %v5326
      %v5702 = vsel %vm5686, %v5669, %v5328
      %v5703 = vsel %vm5686, %v5670, %v5330
      %v5704 = vsel %vm5686, %v5671, %v5332
      %v5705 = vsel %vm5686, %v5672, %v5334
      %v5706 = vsel %vm5686, %v5673, %v5336
      %v5707 = vsel %vm5686, %v5674, %v5338
      %v5708 = vsel %vm5686, %v5675, %v5340
      %v5709 = vsel %vm5686, %v5676, %v5342
      %v5710 = vsel %vm5686, %v5677, %v5344
      %v5711 = vsel %vm5686, %v5678, %v5346
      %v5712 = vsel %vm5686, %v5679, %v5348
      %v5713 = vsel %vm5686, %v5680, %v5350
      %v5714 = vsel %vm5686, %v5681, %v5352
      %v5715 = vsel %vm5686, %v5682, %v5354
      %v5716 = vsel %vm5686, %v5683, %v5356
      %v5717 = vsel %vm5686, %v5684, %v5358
      %v5718 = vsel %vm5686, %v5685, %v5360
      %vm5719 = vcmask 916480
      %v5720 = vsel %vm5719, %v5687, %v5426
      %v5721 = vsel %vm5719, %v5688, %v5428
      %v5722 = vsel %vm5719, %v5689, %v5430
      %v5723 = vsel %vm5719, %v5690, %v5432
      %v5724 = vsel %vm5719, %v5691, %v5434
      %v5725 = vsel %vm5719, %v5692, %v5436
      %v5726 = vsel %vm5719, %v5693, %v5438
      %v5727 = vsel %vm5719, %v5694, %v5440
      %v5728 = vsel %vm5719, %v5695, %v5442
      %v5729 = vsel %vm5719, %v5696, %v5444
      %v5730 = vsel %vm5719, %v5697, %v5446
      %v5731 = vsel %vm5719, %v5698, %v5448
      %v5732 = vsel %vm5719, %v5699, %v5450
      %v5733 = vsel %vm5719, %v5700, %v5452
      %v5734 = vsel %vm5719, %v5701, %v5454
      %v5735 = vsel %vm5719, %v5702, %v5456
      %v5736 = vsel %vm5719, %v5703, %v5458
      %v5737 = vsel %vm5719, %v5704, %v5460
      %v5738 = vsel %vm5719, %v5705, %v5462
      %v5739 = vsel %vm5719, %v5706, %v5464
      %v5740 = vsel %vm5719, %v5707, %v5466
      %v5741 = vsel %vm5719, %v5708, %v5468
      %v5742 = vsel %vm5719, %v5709, %v5470
      %v5743 = vsel %vm5719, %v5710, %v5472
      %v5744 = vsel %vm5719, %v5711, %v5474
      %v5745 = vsel %vm5719, %v5712, %v5476
      %v5746 = vsel %vm5719, %v5713, %v5478
      %v5747 = vsel %vm5719, %v5714, %v5480
      %v5748 = vsel %vm5719, %v5715, %v5482
      %v5749 = vsel %vm5719, %v5716, %v5484
      %v5750 = vsel %vm5719, %v5717, %v5486
      %v5751 = vsel %vm5719, %v5718, %v5488
      %v5753 = vsel %vm5521, %v4625, 0
      %v5756 = vsel %vm5521, %v4626, 0
      %v5759 = vsel %vm5521, %v4627, 0
      %v5762 = vsel %vm5521, %v4628, 0
      %v5765 = vsel %vm5521, %v4629, 0
      %v5768 = vsel %vm5521, %v4630, 0
      %v5771 = vsel %vm5521, %v4631, 0
      %v5774 = vsel %vm5521, %v4632, 0
      %v5777 = vsel %vm5521, %v4633, 0
      %v5780 = vsel %vm5521, %v4634, 0
      %v5783 = vsel %vm5521, %v4635, 0
      %v5786 = vsel %vm5521, %v4636, 0
      %v5789 = vsel %vm5521, %v4637, 0
      %v5792 = vsel %vm5521, %v4638, 0
      %v5795 = vsel %vm5521, %v4639, 0
      %v5798 = vsel %vm5521, %v4640, 0
      %v5801 = vsel %vm5521, %v4641, 0
      %v5804 = vsel %vm5521, %v4642, 0
      %v5807 = vsel %vm5521, %v4643, 0
      %v5810 = vsel %vm5521, %v4644, 0
      %v5813 = vsel %vm5521, %v4645, 0
      %v5816 = vsel %vm5521, %v4646, 0
      %v5819 = vsel %vm5521, %v4647, 0
      %v5822 = vsel %vm5521, %v4648, 0
      %v5825 = vsel %vm5521, %v4649, 0
      %v5828 = vsel %vm5521, %v4650, 0
      %v5831 = vsel %vm5521, %v4651, 0
      %v5834 = vsel %vm5521, %v4652, 0
      %v5837 = vsel %vm5521, %v4653, 0
      %v5840 = vsel %vm5521, %v4654, 0
      %v5843 = vsel %vm5521, %v4655, 0
      %v5846 = vsel %vm5521, %v4656, 0
      %5848 = vmatprep.subr.mxu0 0.0
      %5849 = vmatpush1.msra.mxu0 %v409
      %5850 = vmatprep.subr.mxu0 0.0
      %5851 = vmatpush1.msra.mxu0 %v408
      %5852 = vmatprep.subr.mxu0 0.0
      %5853 = vmatpush1.msra.mxu0 %v407
      %5854 = vmatprep.subr.mxu0 0.0
      %5855 = vmatpush1.msra.mxu0 %v406
      %5856 = vmatprep.subr.mxu0 0.0
      %5857 = vmatpush1.msra.mxu0 %v405
      %5858 = vmatprep.subr.mxu0 0.0
      %5859 = vmatpush1.msra.mxu0 %v404
      %5860 = vmatprep.subr.mxu0 0.0
      %5861 = vmatpush1.msra.mxu0 %v403
      %5862 = vmatprep.subr.mxu0 0.0
      %5863 = vmatpush1.msra.mxu0 %v402
      %5864 = vmatprep.subr.mxu0 0.0
      %5865 = vmatpush1.msra.mxu0 %v401
      %5866 = vmatprep.subr.mxu0 0.0
      %5867 = vmatpush1.msra.mxu0 %v400
      %5868 = vmatprep.subr.mxu0 0.0
      %5869 = vmatpush1.msra.mxu0 %v399
      %5870 = vmatprep.subr.mxu0 0.0
      %5871 = vmatpush1.msra.mxu0 %v398
      %5872 = vmatprep.subr.mxu0 0.0
      %5873 = vmatpush1.msra.mxu0 %v397
      %5874 = vmatprep.subr.mxu0 0.0
      %5875 = vmatpush1.msra.mxu0 %v396
      %5876 = vmatprep.subr.mxu0 0.0
      %5877 = vmatpush1.msra.mxu0 %v395
      %5878 = vmatprep.subr.mxu0 0.0
      %5879 = vmatpush1.msra.mxu0 %v394
      %5880 = vmatprep.subr.mxu0 0.0
      %5881 = vmatpush2.msra.mxu0 0.0
      %5882 = vmatprep.subr.mxu0 0.0
      %5883 = vmatpush2.msra.mxu0 0.0
      %5884 = vmatprep.subr.mxu0 0.0
      %5885 = vmatpush2.msra.mxu0 0.0
      %5886 = vmatprep.subr.mxu0 0.0
      %5887 = vmatpush2.msra.mxu0 0.0
      %5888 = vmatprep.subr.mxu0 0.0
      %5889 = vmatpush2.msra.mxu0 0.0
      %5890 = vmatprep.subr.mxu0 0.0
      %5891 = vmatpush2.msra.mxu0 0.0
      %5892 = vmatprep.subr.mxu0 0.0
      %5893 = vmatpush2.msra.mxu0 0.0
      %5894 = vmatprep.subr.mxu0 0.0
      %5895 = vmatpush2.msra.mxu0 0.0
      %5896 = vmatprep.subr.mxu0 0.0
      %5897 = vmatpush2.msra.mxu0 0.0
      %5898 = vmatprep.subr.mxu0 0.0
      %5899 = vmatpush2.msra.mxu0 0.0
      %5900 = vmatprep.subr.mxu0 0.0
      %5901 = vmatpush2.msra.mxu0 0.0
      %5902 = vmatprep.subr.mxu0 0.0
      %5903 = vmatpush2.msra.mxu0 0.0
      %5904 = vmatprep.subr.mxu0 0.0
      %5905 = vmatpush2.msra.mxu0 0.0
      %5906 = vmatprep.subr.mxu0 0.0
      %5907 = vmatpush2.msra.mxu0 0.0
      %5908 = vmatprep.subr.mxu0 0.0
      %5909 = vmatpush2.msra.mxu0 %v411
      %5910 = vmatprep.subr.mxu0 0.0
      %5911 = vmatpush2.msra.mxu0 %v410
      %5912 = vmatprep.mubr.f32.mxu0 %v5753
      %5913 = vmatmul.mubr.f32.gmra.mxu0 %v5720
      %v5914 = vpop.f32.mrf.mxu0
      %v5915 = vadd.f32 0.0, %v5914
      %v5916 = vpop.f32.mrf.mxu0
      %5917 = vmatprep.mubr.f32.mxu0 %v5756
      %5918 = vmatmul.mubr.f32.gmra.mxu0 %v5721
      %v5919 = vpop.f32.mrf.mxu0
      %v5920 = vadd.f32 0.0, %v5919
      %v5921 = vpop.f32.mrf.mxu0
      %5922 = vmatprep.mubr.f32.mxu0 %v5759
      %5923 = vmatmul.mubr.f32.gmra.mxu0 %v5722
      %v5924 = vpop.f32.mrf.mxu0
      %v5925 = vadd.f32 0.0, %v5924
      %v5926 = vpop.f32.mrf.mxu0
      %5927 = vmatprep.mubr.f32.mxu0 %v5762
      %5928 = vmatmul.mubr.f32.gmra.mxu0 %v5723
      %v5929 = vpop.f32.mrf.mxu0
      %v5930 = vadd.f32 0.0, %v5929
      %v5931 = vpop.f32.mrf.mxu0
      %5932 = vmatprep.mubr.f32.mxu0 %v5765
      %5933 = vmatmul.mubr.f32.gmra.mxu0 %v5724
      %v5934 = vpop.f32.mrf.mxu0
      %v5935 = vadd.f32 0.0, %v5934
      %v5936 = vpop.f32.mrf.mxu0
      %5937 = vmatprep.mubr.f32.mxu0 %v5768
      %5938 = vmatmul.mubr.f32.gmra.mxu0 %v5725
      %v5939 = vpop.f32.mrf.mxu0
      %v5940 = vadd.f32 0.0, %v5939
      %v5941 = vpop.f32.mrf.mxu0
      %5942 = vmatprep.mubr.f32.mxu0 %v5771
      %5943 = vmatmul.mubr.f32.gmra.mxu0 %v5726
      %v5944 = vpop.f32.mrf.mxu0
      %v5945 = vadd.f32 0.0, %v5944
      %v5946 = vpop.f32.mrf.mxu0
      %5947 = vmatprep.mubr.f32.mxu0 %v5774
      %5948 = vmatmul.mubr.f32.gmra.mxu0 %v5727
      %v5949 = vpop.f32.mrf.mxu0
      %v5950 = vadd.f32 0.0, %v5949
      %v5951 = vpop.f32.mrf.mxu0
      %5952 = vmatprep.mubr.f32.mxu0 %v5777
      %5953 = vmatmul.mubr.f32.gmra.mxu0 %v5728
      %v5954 = vpop.f32.mrf.mxu0
      %v5955 = vadd.f32 0.0, %v5954
      %v5956 = vpop.f32.mrf.mxu0
      %5957 = vmatprep.mubr.f32.mxu0 %v5780
      %5958 = vmatmul.mubr.f32.gmra.mxu0 %v5729
      %v5959 = vpop.f32.mrf.mxu0
      %v5960 = vadd.f32 0.0, %v5959
      %v5961 = vpop.f32.mrf.mxu0
      %5962 = vmatprep.mubr.f32.mxu0 %v5783
      %5963 = vmatmul.mubr.f32.gmra.mxu0 %v5730
      %v5964 = vpop.f32.mrf.mxu0
      %v5965 = vadd.f32 0.0, %v5964
      %v5966 = vpop.f32.mrf.mxu0
      %5967 = vmatprep.mubr.f32.mxu0 %v5786
      %5968 = vmatmul.mubr.f32.gmra.mxu0 %v5731
      %v5969 = vpop.f32.mrf.mxu0
      %v5970 = vadd.f32 0.0, %v5969
      %v5971 = vpop.f32.mrf.mxu0
      %5972 = vmatprep.mubr.f32.mxu0 %v5789
      %5973 = vmatmul.mubr.f32.gmra.mxu0 %v5732
      %v5974 = vpop.f32.mrf.mxu0
      %v5975 = vadd.f32 0.0, %v5974
      %v5976 = vpop.f32.mrf.mxu0
      %5977 = vmatprep.mubr.f32.mxu0 %v5792
      %5978 = vmatmul.mubr.f32.gmra.mxu0 %v5733
      %v5979 = vpop.f32.mrf.mxu0
      %v5980 = vadd.f32 0.0, %v5979
      %v5981 = vpop.f32.mrf.mxu0
      %5982 = vmatprep.mubr.f32.mxu0 %v5795
      %5983 = vmatmul.mubr.f32.gmra.mxu0 %v5734
      %v5984 = vpop.f32.mrf.mxu0
      %v5985 = vadd.f32 0.0, %v5984
      %v5986 = vpop.f32.mrf.mxu0
      %5987 = vmatprep.mubr.f32.mxu0 %v5798
      %5988 = vmatmul.mubr.f32.gmra.mxu0 %v5735
      %v5989 = vpop.f32.mrf.mxu0
      %v5990 = vadd.f32 0.0, %v5989
      %v5991 = vpop.f32.mrf.mxu0
      %5992 = vmatprep.mubr.f32.mxu0 %v5801
      %5993 = vmatmul.mubr.f32.gmra.mxu0 %v5736
      %v5994 = vpop.f32.mrf.mxu0
      %v5995 = vadd.f32 0.0, %v5994
      %v5996 = vpop.f32.mrf.mxu0
      %5997 = vmatprep.mubr.f32.mxu0 %v5804
      %5998 = vmatmul.mubr.f32.gmra.mxu0 %v5737
      %v5999 = vpop.f32.mrf.mxu0
      %v6000 = vadd.f32 0.0, %v5999
      %v6001 = vpop.f32.mrf.mxu0
      %6002 = vmatprep.mubr.f32.mxu0 %v5807
      %6003 = vmatmul.mubr.f32.gmra.mxu0 %v5738
      %v6004 = vpop.f32.mrf.mxu0
      %v6005 = vadd.f32 0.0, %v6004
      %v6006 = vpop.f32.mrf.mxu0
      %6007 = vmatprep.mubr.f32.mxu0 %v5810
      %6008 = vmatmul.mubr.f32.gmra.mxu0 %v5739
      %v6009 = vpop.f32.mrf.mxu0
      %v6010 = vadd.f32 0.0, %v6009
      %v6011 = vpop.f32.mrf.mxu0
      %6012 = vmatprep.mubr.f32.mxu0 %v5813
      %6013 = vmatmul.mubr.f32.gmra.mxu0 %v5740
      %v6014 = vpop.f32.mrf.mxu0
      %v6015 = vadd.f32 0.0, %v6014
      %v6016 = vpop.f32.mrf.mxu0
      %6017 = vmatprep.mubr.f32.mxu0 %v5816
      %6018 = vmatmul.mubr.f32.gmra.mxu0 %v5741
      %v6019 = vpop.f32.mrf.mxu0
      %v6020 = vadd.f32 0.0, %v6019
      %v6021 = vpop.f32.mrf.mxu0
      %6022 = vmatprep.mubr.f32.mxu0 %v5819
      %6023 = vmatmul.mubr.f32.gmra.mxu0 %v5742
      %v6024 = vpop.f32.mrf.mxu0
      %v6025 = vadd.f32 0.0, %v6024
      %v6026 = vpop.f32.mrf.mxu0
      %6027 = vmatprep.mubr.f32.mxu0 %v5822
      %6028 = vmatmul.mubr.f32.gmra.mxu0 %v5743
      %v6029 = vpop.f32.mrf.mxu0
      %v6030 = vadd.f32 0.0, %v6029
      %v6031 = vpop.f32.mrf.mxu0
      %6032 = vmatprep.mubr.f32.mxu0 %v5825
      %6033 = vmatmul.mubr.f32.gmra.mxu0 %v5744
      %v6034 = vpop.f32.mrf.mxu0
      %v6035 = vadd.f32 0.0, %v6034
      %v6036 = vpop.f32.mrf.mxu0
      %6037 = vmatprep.mubr.f32.mxu0 %v5828
      %6038 = vmatmul.mubr.f32.gmra.mxu0 %v5745
      %v6039 = vpop.f32.mrf.mxu0
      %v6040 = vadd.f32 0.0, %v6039
      %v6041 = vpop.f32.mrf.mxu0
      %6042 = vmatprep.mubr.f32.mxu0 %v5831
      %6043 = vmatmul.mubr.f32.gmra.mxu0 %v5746
      %v6044 = vpop.f32.mrf.mxu0
      %v6045 = vadd.f32 0.0, %v6044
      %v6046 = vpop.f32.mrf.mxu0
      %6047 = vmatprep.mubr.f32.mxu0 %v5834
      %6048 = vmatmul.mubr.f32.gmra.mxu0 %v5747
      %v6049 = vpop.f32.mrf.mxu0
      %v6050 = vadd.f32 0.0, %v6049
      %v6051 = vpop.f32.mrf.mxu0
      %6052 = vmatprep.mubr.f32.mxu0 %v5837
      %6053 = vmatmul.mubr.f32.gmra.mxu0 %v5748
      %v6054 = vpop.f32.mrf.mxu0
      %v6055 = vadd.f32 0.0, %v6054
      %v6056 = vpop.f32.mrf.mxu0
      %6057 = vmatprep.mubr.f32.mxu0 %v5840
      %6058 = vmatmul.mubr.f32.gmra.mxu0 %v5749
      %v6059 = vpop.f32.mrf.mxu0
      %v6060 = vadd.f32 0.0, %v6059
      %v6061 = vpop.f32.mrf.mxu0
      %6062 = vmatprep.mubr.f32.mxu0 %v5843
      %6063 = vmatmul.mubr.f32.gmra.mxu0 %v5750
      %v6064 = vpop.f32.mrf.mxu0
      %v6065 = vadd.f32 0.0, %v6064
      %v6066 = vpop.f32.mrf.mxu0
      %6067 = vmatprep.mubr.f32.mxu0 %v5846
      %6068 = vmatmul.mubr.f32.gmra.mxu0 %v5751
      %v6069 = vpop.f32.mrf.mxu0
      %v6070 = vadd.f32 0.0, %v6069
      %v6071 = vpop.f32.mrf.mxu0
      %6072 = vdwg.mxu0
      %6105 = vrot.lane.b32.xlu0 %v5915, 8
      %v6106 = vpop.permute.xlu0 %6105
      %6107 = vrot.lane.b32.xlu0 %v5920, 8
      %v6108 = vpop.permute.xlu0 %6107
      %6109 = vrot.lane.b32.xlu0 %v5925, 8
      %v6110 = vpop.permute.xlu0 %6109
      %6111 = vrot.lane.b32.xlu0 %v5930, 8
      %v6112 = vpop.permute.xlu0 %6111
      %6113 = vrot.lane.b32.xlu0 %v5935, 8
      %v6114 = vpop.permute.xlu0 %6113
      %6115 = vrot.lane.b32.xlu0 %v5940, 8
      %v6116 = vpop.permute.xlu0 %6115
      %6117 = vrot.lane.b32.xlu0 %v5945, 8
      %v6118 = vpop.permute.xlu0 %6117
      %6119 = vrot.lane.b32.xlu0 %v5950, 8
      %v6120 = vpop.permute.xlu0 %6119
      %6121 = vrot.lane.b32.xlu0 %v5955, 8
      %v6122 = vpop.permute.xlu0 %6121
      %6123 = vrot.lane.b32.xlu0 %v5960, 8
      %v6124 = vpop.permute.xlu0 %6123
      %6125 = vrot.lane.b32.xlu0 %v5965, 8
      %v6126 = vpop.permute.xlu0 %6125
      %6127 = vrot.lane.b32.xlu0 %v5970, 8
      %v6128 = vpop.permute.xlu0 %6127
      %6129 = vrot.lane.b32.xlu0 %v5975, 8
      %v6130 = vpop.permute.xlu0 %6129
      %6131 = vrot.lane.b32.xlu0 %v5980, 8
      %v6132 = vpop.permute.xlu0 %6131
      %6133 = vrot.lane.b32.xlu0 %v5985, 8
      %v6134 = vpop.permute.xlu0 %6133
      %6135 = vrot.lane.b32.xlu0 %v5990, 8
      %v6136 = vpop.permute.xlu0 %6135
      %6137 = vrot.lane.b32.xlu0 %v5995, 8
      %v6138 = vpop.permute.xlu0 %6137
      %6139 = vrot.lane.b32.xlu0 %v6000, 8
      %v6140 = vpop.permute.xlu0 %6139
      %6141 = vrot.lane.b32.xlu0 %v6005, 8
      %v6142 = vpop.permute.xlu0 %6141
      %6143 = vrot.lane.b32.xlu0 %v6010, 8
      %v6144 = vpop.permute.xlu0 %6143
      %6145 = vrot.lane.b32.xlu0 %v6015, 8
      %v6146 = vpop.permute.xlu0 %6145
      %6147 = vrot.lane.b32.xlu0 %v6020, 8
      %v6148 = vpop.permute.xlu0 %6147
      %6149 = vrot.lane.b32.xlu0 %v6025, 8
      %v6150 = vpop.permute.xlu0 %6149
      %6151 = vrot.lane.b32.xlu0 %v6030, 8
      %v6152 = vpop.permute.xlu0 %6151
      %6153 = vrot.lane.b32.xlu0 %v6035, 8
      %v6154 = vpop.permute.xlu0 %6153
      %6155 = vrot.lane.b32.xlu0 %v6040, 8
      %v6156 = vpop.permute.xlu0 %6155
      %6157 = vrot.lane.b32.xlu0 %v6045, 8
      %v6158 = vpop.permute.xlu0 %6157
      %6159 = vrot.lane.b32.xlu0 %v6050, 8
      %v6160 = vpop.permute.xlu0 %6159
      %6161 = vrot.lane.b32.xlu0 %v6055, 8
      %v6162 = vpop.permute.xlu0 %6161
      %6163 = vrot.lane.b32.xlu0 %v6060, 8
      %v6164 = vpop.permute.xlu0 %6163
      %6165 = vrot.lane.b32.xlu0 %v6065, 8
      %v6166 = vpop.permute.xlu0 %6165
      %6167 = vrot.lane.b32.xlu0 %v6070, 8
      %v6168 = vpop.permute.xlu0 %6167
      %v6201 = vsel %vm3749, %v3487, %v6106
      %v6202 = vsel %vm3749, %v3492, %v6108
      %v6203 = vsel %vm3749, %v3497, %v6110
      %v6204 = vsel %vm3749, %v3502, %v6112
      %v6205 = vsel %vm3749, %v3507, %v6114
      %v6206 = vsel %vm3749, %v3512, %v6116
      %v6207 = vsel %vm3749, %v3517, %v6118
      %v6208 = vsel %vm3749, %v3522, %v6120
      %v6209 = vsel %vm3749, %v3527, %v6122
      %v6210 = vsel %vm3749, %v3532, %v6124
      %v6211 = vsel %vm3749, %v3537, %v6126
      %v6212 = vsel %vm3749, %v3542, %v6128
      %v6213 = vsel %vm3749, %v3547, %v6130
      %v6214 = vsel %vm3749, %v3552, %v6132
      %v6215 = vsel %vm3749, %v3557, %v6134
      %v6216 = vsel %vm3749, %v3562, %v6136
      %v6217 = vsel %vm3749, %v3567, %v6138
      %v6218 = vsel %vm3749, %v3572, %v6140
      %v6219 = vsel %vm3749, %v3577, %v6142
      %v6220 = vsel %vm3749, %v3582, %v6144
      %v6221 = vsel %vm3749, %v3587, %v6146
      %v6222 = vsel %vm3749, %v3592, %v6148
      %v6223 = vsel %vm3749, %v3597, %v6150
      %v6224 = vsel %vm3749, %v3602, %v6152
      %v6225 = vsel %vm3749, %v3607, %v6154
      %v6226 = vsel %vm3749, %v3612, %v6156
      %v6227 = vsel %vm3749, %v3617, %v6158
      %v6228 = vsel %vm3749, %v3622, %v6160
      %v6229 = vsel %vm3749, %v3627, %v6162
      %v6230 = vsel %vm3749, %v3632, %v6164
      %v6231 = vsel %vm3749, %v3637, %v6166
      %v6232 = vsel %vm3749, %v3642, %v6168
      %v6233 = vlaneseq
      %v6234 = vshrl.u32 %v6233, 7
      %v6235 = vsub.s32 2, %v6234
      %v6236 = vrot.slane %v412, %v6235
      %v6237 = vmul.f32 %v6201, %v6236
      %v6238 = vmul.f32 %v6202, %v6236
      %v6239 = vmul.f32 %v6203, %v6236
      %v6240 = vmul.f32 %v6204, %v6236
      %v6241 = vmul.f32 %v6205, %v6236
      %v6242 = vmul.f32 %v6206, %v6236
      %v6243 = vmul.f32 %v6207, %v6236
      %v6244 = vmul.f32 %v6208, %v6236
      %v6245 = vmul.f32 %v6209, %v6236
      %v6246 = vmul.f32 %v6210, %v6236
      %v6247 = vmul.f32 %v6211, %v6236
      %v6248 = vmul.f32 %v6212, %v6236
      %v6249 = vmul.f32 %v6213, %v6236
      %v6250 = vmul.f32 %v6214, %v6236
      %v6251 = vmul.f32 %v6215, %v6236
      %v6252 = vmul.f32 %v6216, %v6236
      %v6253 = vmul.f32 %v6217, %v6236
      %v6254 = vmul.f32 %v6218, %v6236
      %v6255 = vmul.f32 %v6219, %v6236
      %v6256 = vmul.f32 %v6220, %v6236
      %v6257 = vmul.f32 %v6221, %v6236
      %v6258 = vmul.f32 %v6222, %v6236
      %v6259 = vmul.f32 %v6223, %v6236
      %v6260 = vmul.f32 %v6224, %v6236
      %v6261 = vmul.f32 %v6225, %v6236
      %v6262 = vmul.f32 %v6226, %v6236
      %v6263 = vmul.f32 %v6227, %v6236
      %v6264 = vmul.f32 %v6228, %v6236
      %v6265 = vmul.f32 %v6229, %v6236
      %v6266 = vmul.f32 %v6230, %v6236
      %v6267 = vmul.f32 %v6231, %v6236
      %v6268 = vmul.f32 %v6232, %v6236
      %v6269 = vlaneseq
      %v6270 = vshrl.u32 %v6269, 7
      %v6271 = vsub.s32 2, %v6270
      %v6272 = vrot.slane %v415, %v6271
      %v6273 = vadd.f32 %v6237, %v6272
      %v6274 = vadd.f32 %v6238, %v6272
      %v6275 = vadd.f32 %v6239, %v6272
      %v6276 = vadd.f32 %v6240, %v6272
      %v6277 = vadd.f32 %v6241, %v6272
      %v6278 = vadd.f32 %v6242, %v6272
      %v6279 = vadd.f32 %v6243, %v6272
      %v6280 = vadd.f32 %v6244, %v6272
      %v6281 = vadd.f32 %v6245, %v6272
      %v6282 = vadd.f32 %v6246, %v6272
      %v6283 = vadd.f32 %v6247, %v6272
      %v6284 = vadd.f32 %v6248, %v6272
      %v6285 = vadd.f32 %v6249, %v6272
      %v6286 = vadd.f32 %v6250, %v6272
      %v6287 = vadd.f32 %v6251, %v6272
      %v6288 = vadd.f32 %v6252, %v6272
      %v6289 = vadd.f32 %v6253, %v6272
      %v6290 = vadd.f32 %v6254, %v6272
      %v6291 = vadd.f32 %v6255, %v6272
      %v6292 = vadd.f32 %v6256, %v6272
      %v6293 = vadd.f32 %v6257, %v6272
      %v6294 = vadd.f32 %v6258, %v6272
      %v6295 = vadd.f32 %v6259, %v6272
      %v6296 = vadd.f32 %v6260, %v6272
      %v6297 = vadd.f32 %v6261, %v6272
      %v6298 = vadd.f32 %v6262, %v6272
      %v6299 = vadd.f32 %v6263, %v6272
      %v6300 = vadd.f32 %v6264, %v6272
      %v6301 = vadd.f32 %v6265, %v6272
      %v6302 = vadd.f32 %v6266, %v6272
      %v6303 = vadd.f32 %v6267, %v6272
      %v6304 = vadd.f32 %v6268, %v6272
      %v6305 = vmax.f32 %v6273, 0.0
      %v6306 = vmax.f32 %v6274, 0.0
      %v6307 = vmax.f32 %v6275, 0.0
      %v6308 = vmax.f32 %v6276, 0.0
      %v6309 = vmax.f32 %v6277, 0.0
      %v6310 = vmax.f32 %v6278, 0.0
      %v6311 = vmax.f32 %v6279, 0.0
      %v6312 = vmax.f32 %v6280, 0.0
      %v6313 = vmax.f32 %v6281, 0.0
      %v6314 = vmax.f32 %v6282, 0.0
      %v6315 = vmax.f32 %v6283, 0.0
      %v6316 = vmax.f32 %v6284, 0.0
      %v6317 = vmax.f32 %v6285, 0.0
      %v6318 = vmax.f32 %v6286, 0.0
      %v6319 = vmax.f32 %v6287, 0.0
      %v6320 = vmax.f32 %v6288, 0.0
      %v6321 = vmax.f32 %v6289, 0.0
      %v6322 = vmax.f32 %v6290, 0.0
      %v6323 = vmax.f32 %v6291, 0.0
      %v6324 = vmax.f32 %v6292, 0.0
      %v6325 = vmax.f32 %v6293, 0.0
      %v6326 = vmax.f32 %v6294, 0.0
      %v6327 = vmax.f32 %v6295, 0.0
      %v6328 = vmax.f32 %v6296, 0.0
      %v6329 = vmax.f32 %v6297, 0.0
      %v6330 = vmax.f32 %v6298, 0.0
      %v6331 = vmax.f32 %v6299, 0.0
      %v6332 = vmax.f32 %v6300, 0.0
      %v6333 = vmax.f32 %v6301, 0.0
      %v6334 = vmax.f32 %v6302, 0.0
      %v6335 = vmax.f32 %v6303, 0.0
      %v6336 = vmax.f32 %v6304, 0.0
      %v6338 = vsel %vm3154, %v6305, 0
      %v6341 = vsel %vm3154, %v6306, 0
      %v6344 = vsel %vm3154, %v6307, 0
      %v6347 = vsel %vm3154, %v6308, 0
      %v6350 = vsel %vm3154, %v6309, 0
      %v6353 = vsel %vm3154, %v6310, 0
      %v6356 = vsel %vm3154, %v6311, 0
      %v6359 = vsel %vm3154, %v6312, 0
      %v6362 = vsel %vm3154, %v6313, 0
      %v6365 = vsel %vm3154, %v6314, 0
      %v6368 = vsel %vm3154, %v6315, 0
      %v6371 = vsel %vm3154, %v6316, 0
      %v6374 = vsel %vm3154, %v6317, 0
      %v6377 = vsel %vm3154, %v6318, 0
      %v6380 = vsel %vm3154, %v6319, 0
      %v6383 = vsel %vm3154, %v6320, 0
      %v6386 = vsel %vm3154, %v6321, 0
      %v6389 = vsel %vm3154, %v6322, 0
      %v6392 = vsel %vm3154, %v6323, 0
      %v6395 = vsel %vm3154, %v6324, 0
      %v6398 = vsel %vm3154, %v6325, 0
      %v6401 = vsel %vm3154, %v6326, 0
      %v6404 = vsel %vm3154, %v6327, 0
      %v6407 = vsel %vm3154, %v6328, 0
      %v6410 = vsel %vm3154, %v6329, 0
      %v6413 = vsel %vm3154, %v6330, 0
      %v6416 = vsel %vm3154, %v6331, 0
      %v6419 = vsel %vm3154, %v6332, 0
      %v6422 = vsel %vm3154, %v6333, 0
      %v6425 = vsel %vm3154, %v6334, 0
      %v6428 = vsel %vm3154, %v6335, 0
      %v6431 = vsel %vm3154, %v6336, 0
      %vm6433 = vcmask 1043456
      %v6435 = vsel %vm6433, %v387, 0
      %6437 = vmatprep.subr.mxu0 0.0
      %6438 = vmatpush1.msra.mxu0 0.0
      %6439 = vmatprep.subr.mxu0 0.0
      %6440 = vmatpush1.msra.mxu0 0.0
      %6441 = vmatprep.subr.mxu0 0.0
      %6442 = vmatpush1.msra.mxu0 0.0
      %6443 = vmatprep.subr.mxu0 0.0
      %6444 = vmatpush1.msra.mxu0 0.0
      %6445 = vmatprep.subr.mxu0 0.0
      %6446 = vmatpush1.msra.mxu0 0.0
      %6447 = vmatprep.subr.mxu0 0.0
      %6448 = vmatpush1.msra.mxu0 0.0
      %6449 = vmatprep.subr.mxu0 0.0
      %6450 = vmatpush1.msra.mxu0 0.0
      %6451 = vmatprep.subr.mxu0 0.0
      %6452 = vmatpush1.msra.mxu0 0.0
      %6453 = vmatprep.subr.mxu0 0.0
      %6454 = vmatpush1.msra.mxu0 0.0
      %6455 = vmatprep.subr.mxu0 0.0
      %6456 = vmatpush1.msra.mxu0 0.0
      %6457 = vmatprep.subr.mxu0 0.0
      %6458 = vmatpush1.msra.mxu0 0.0
      %6459 = vmatprep.subr.mxu0 0.0
      %6460 = vmatpush1.msra.mxu0 0.0
      %6461 = vmatprep.subr.mxu0 0.0
      %6462 = vmatpush1.msra.mxu0 0.0
      %6463 = vmatprep.subr.mxu0 0.0
      %6464 = vmatpush1.msra.mxu0 0.0
      %6465 = vmatprep.subr.mxu0 0.0
      %6466 = vmatpush1.msra.mxu0 %v6435
      %6467 = vmatprep.subr.mxu0 0.0
      %6468 = vmatpush1.msra.mxu0 %v386
      %6469 = vmatprep.subr.mxu0 0.0
      %6470 = vmatpush2.msra.mxu0 0.0
      %6471 = vmatprep.subr.mxu0 0.0
      %6472 = vmatpush2.msra.mxu0 0.0
      %6473 = vmatprep.subr.mxu0 0.0
      %6474 = vmatpush2.msra.mxu0 0.0
      %6475 = vmatprep.subr.mxu0 0.0
      %6476 = vmatpush2.msra.mxu0 0.0
      %6477 = vmatprep.subr.mxu0 0.0
      %6478 = vmatpush2.msra.mxu0 0.0
      %6479 = vmatprep.subr.mxu0 0.0
      %6480 = vmatpush2.msra.mxu0 0.0
      %6481 = vmatprep.subr.mxu0 0.0
      %6482 = vmatpush2.msra.mxu0 0.0
      %6483 = vmatprep.subr.mxu0 0.0
      %6484 = vmatpush2.msra.mxu0 0.0
      %6485 = vmatprep.subr.mxu0 0.0
      %6486 = vmatpush2.msra.mxu0 0.0
      %6487 = vmatprep.subr.mxu0 0.0
      %6488 = vmatpush2.msra.mxu0 0.0
      %6489 = vmatprep.subr.mxu0 0.0
      %6490 = vmatpush2.msra.mxu0 0.0
      %6491 = vmatprep.subr.mxu0 0.0
      %6492 = vmatpush2.msra.mxu0 0.0
      %6493 = vmatprep.subr.mxu0 0.0
      %6494 = vmatpush2.msra.mxu0 0.0
      %6495 = vmatprep.subr.mxu0 0.0
      %6496 = vmatpush2.msra.mxu0 0.0
      %6497 = vmatprep.subr.mxu0 0.0
      %6498 = vmatpush2.msra.mxu0 0.0
      %6499 = vmatprep.subr.mxu0 0.0
      %6500 = vmatpush2.msra.mxu0 0.0
      %6501 = vmatprep.mubr.f32.mxu0 0.0
      %6502 = vmatmul.mubr.f32.gmra.mxu0 %v6338
      %v6503 = vpop.f32.mrf.mxu0
      %v6504 = vadd.f32 0.0, %v6503
      %v6505 = vpop.f32.mrf.mxu0
      %6506 = vmatprep.mubr.f32.mxu0 0.0
      %6507 = vmatmul.mubr.f32.gmra.mxu0 %v6341
      %v6508 = vpop.f32.mrf.mxu0
      %v6509 = vadd.f32 0.0, %v6508
      %v6510 = vpop.f32.mrf.mxu0
      %6511 = vmatprep.mubr.f32.mxu0 0.0
      %6512 = vmatmul.mubr.f32.gmra.mxu0 %v6344
      %v6513 = vpop.f32.mrf.mxu0
      %v6514 = vadd.f32 0.0, %v6513
      %v6515 = vpop.f32.mrf.mxu0
      %6516 = vmatprep.mubr.f32.mxu0 0.0
      %6517 = vmatmul.mubr.f32.gmra.mxu0 %v6347
      %v6518 = vpop.f32.mrf.mxu0
      %v6519 = vadd.f32 0.0, %v6518
      %v6520 = vpop.f32.mrf.mxu0
      %6521 = vmatprep.mubr.f32.mxu0 0.0
      %6522 = vmatmul.mubr.f32.gmra.mxu0 %v6350
      %v6523 = vpop.f32.mrf.mxu0
      %v6524 = vadd.f32 0.0, %v6523
      %v6525 = vpop.f32.mrf.mxu0
      %6526 = vmatprep.mubr.f32.mxu0 0.0
      %6527 = vmatmul.mubr.f32.gmra.mxu0 %v6353
      %v6528 = vpop.f32.mrf.mxu0
      %v6529 = vadd.f32 0.0, %v6528
      %v6530 = vpop.f32.mrf.mxu0
      %6531 = vmatprep.mubr.f32.mxu0 0.0
      %6532 = vmatmul.mubr.f32.gmra.mxu0 %v6356
      %v6533 = vpop.f32.mrf.mxu0
      %v6534 = vadd.f32 0.0, %v6533
      %v6535 = vpop.f32.mrf.mxu0
      %6536 = vmatprep.mubr.f32.mxu0 0.0
      %6537 = vmatmul.mubr.f32.gmra.mxu0 %v6359
      %v6538 = vpop.f32.mrf.mxu0
      %v6539 = vadd.f32 0.0, %v6538
      %v6540 = vpop.f32.mrf.mxu0
      %6541 = vmatprep.mubr.f32.mxu0 0.0
      %6542 = vmatmul.mubr.f32.gmra.mxu0 %v6362
      %v6543 = vpop.f32.mrf.mxu0
      %v6544 = vadd.f32 0.0, %v6543
      %v6545 = vpop.f32.mrf.mxu0
      %6546 = vmatprep.mubr.f32.mxu0 0.0
      %6547 = vmatmul.mubr.f32.gmra.mxu0 %v6365
      %v6548 = vpop.f32.mrf.mxu0
      %v6549 = vadd.f32 0.0, %v6548
      %v6550 = vpop.f32.mrf.mxu0
      %6551 = vmatprep.mubr.f32.mxu0 0.0
      %6552 = vmatmul.mubr.f32.gmra.mxu0 %v6368
      %v6553 = vpop.f32.mrf.mxu0
      %v6554 = vadd.f32 0.0, %v6553
      %v6555 = vpop.f32.mrf.mxu0
      %6556 = vmatprep.mubr.f32.mxu0 0.0
      %6557 = vmatmul.mubr.f32.gmra.mxu0 %v6371
      %v6558 = vpop.f32.mrf.mxu0
      %v6559 = vadd.f32 0.0, %v6558
      %v6560 = vpop.f32.mrf.mxu0
      %6561 = vmatprep.mubr.f32.mxu0 0.0
      %6562 = vmatmul.mubr.f32.gmra.mxu0 %v6374
      %v6563 = vpop.f32.mrf.mxu0
      %v6564 = vadd.f32 0.0, %v6563
      %v6565 = vpop.f32.mrf.mxu0
      %6566 = vmatprep.mubr.f32.mxu0 0.0
      %6567 = vmatmul.mubr.f32.gmra.mxu0 %v6377
      %v6568 = vpop.f32.mrf.mxu0
      %v6569 = vadd.f32 0.0, %v6568
      %v6570 = vpop.f32.mrf.mxu0
      %6571 = vmatprep.mubr.f32.mxu0 0.0
      %6572 = vmatmul.mubr.f32.gmra.mxu0 %v6380
      %v6573 = vpop.f32.mrf.mxu0
      %v6574 = vadd.f32 0.0, %v6573
      %v6575 = vpop.f32.mrf.mxu0
      %6576 = vmatprep.mubr.f32.mxu0 0.0
      %6577 = vmatmul.mubr.f32.gmra.mxu0 %v6383
      %v6578 = vpop.f32.mrf.mxu0
      %v6579 = vadd.f32 0.0, %v6578
      %v6580 = vpop.f32.mrf.mxu0
      %6581 = vmatprep.mubr.f32.mxu0 0.0
      %6582 = vmatmul.mubr.f32.gmra.mxu0 %v6386
      %v6583 = vpop.f32.mrf.mxu0
      %v6584 = vadd.f32 0.0, %v6583
      %v6585 = vpop.f32.mrf.mxu0
      %6586 = vmatprep.mubr.f32.mxu0 0.0
      %6587 = vmatmul.mubr.f32.gmra.mxu0 %v6389
      %v6588 = vpop.f32.mrf.mxu0
      %v6589 = vadd.f32 0.0, %v6588
      %v6590 = vpop.f32.mrf.mxu0
      %6591 = vmatprep.mubr.f32.mxu0 0.0
      %6592 = vmatmul.mubr.f32.gmra.mxu0 %v6392
      %v6593 = vpop.f32.mrf.mxu0
      %v6594 = vadd.f32 0.0, %v6593
      %v6595 = vpop.f32.mrf.mxu0
      %6596 = vmatprep.mubr.f32.mxu0 0.0
      %6597 = vmatmul.mubr.f32.gmra.mxu0 %v6395
      %v6598 = vpop.f32.mrf.mxu0
      %v6599 = vadd.f32 0.0, %v6598
      %v6600 = vpop.f32.mrf.mxu0
      %6601 = vmatprep.mubr.f32.mxu0 0.0
      %6602 = vmatmul.mubr.f32.gmra.mxu0 %v6398
      %v6603 = vpop.f32.mrf.mxu0
      %v6604 = vadd.f32 0.0, %v6603
      %v6605 = vpop.f32.mrf.mxu0
      %6606 = vmatprep.mubr.f32.mxu0 0.0
      %6607 = vmatmul.mubr.f32.gmra.mxu0 %v6401
      %v6608 = vpop.f32.mrf.mxu0
      %v6609 = vadd.f32 0.0, %v6608
      %v6610 = vpop.f32.mrf.mxu0
      %6611 = vmatprep.mubr.f32.mxu0 0.0
      %6612 = vmatmul.mubr.f32.gmra.mxu0 %v6404
      %v6613 = vpop.f32.mrf.mxu0
      %v6614 = vadd.f32 0.0, %v6613
      %v6615 = vpop.f32.mrf.mxu0
      %6616 = vmatprep.mubr.f32.mxu0 0.0
      %6617 = vmatmul.mubr.f32.gmra.mxu0 %v6407
      %v6618 = vpop.f32.mrf.mxu0
      %v6619 = vadd.f32 0.0, %v6618
      %v6620 = vpop.f32.mrf.mxu0
      %6621 = vmatprep.mubr.f32.mxu0 0.0
      %6622 = vmatmul.mubr.f32.gmra.mxu0 %v6410
      %v6623 = vpop.f32.mrf.mxu0
      %v6624 = vadd.f32 0.0, %v6623
      %v6625 = vpop.f32.mrf.mxu0
      %6626 = vmatprep.mubr.f32.mxu0 0.0
      %6627 = vmatmul.mubr.f32.gmra.mxu0 %v6413
      %v6628 = vpop.f32.mrf.mxu0
      %v6629 = vadd.f32 0.0, %v6628
      %v6630 = vpop.f32.mrf.mxu0
      %6631 = vmatprep.mubr.f32.mxu0 0.0
      %6632 = vmatmul.mubr.f32.gmra.mxu0 %v6416
      %v6633 = vpop.f32.mrf.mxu0
      %v6634 = vadd.f32 0.0, %v6633
      %v6635 = vpop.f32.mrf.mxu0
      %6636 = vmatprep.mubr.f32.mxu0 0.0
      %6637 = vmatmul.mubr.f32.gmra.mxu0 %v6419
      %v6638 = vpop.f32.mrf.mxu0
      %v6639 = vadd.f32 0.0, %v6638
      %v6640 = vpop.f32.mrf.mxu0
      %6641 = vmatprep.mubr.f32.mxu0 0.0
      %6642 = vmatmul.mubr.f32.gmra.mxu0 %v6422
      %v6643 = vpop.f32.mrf.mxu0
      %v6644 = vadd.f32 0.0, %v6643
      %v6645 = vpop.f32.mrf.mxu0
      %6646 = vmatprep.mubr.f32.mxu0 0.0
      %6647 = vmatmul.mubr.f32.gmra.mxu0 %v6425
      %v6648 = vpop.f32.mrf.mxu0
      %v6649 = vadd.f32 0.0, %v6648
      %v6650 = vpop.f32.mrf.mxu0
      %6651 = vmatprep.mubr.f32.mxu0 0.0
      %6652 = vmatmul.mubr.f32.gmra.mxu0 %v6428
      %v6653 = vpop.f32.mrf.mxu0
      %v6654 = vadd.f32 0.0, %v6653
      %v6655 = vpop.f32.mrf.mxu0
      %6656 = vmatprep.mubr.f32.mxu0 0.0
      %6657 = vmatmul.mubr.f32.gmra.mxu0 %v6431
      %v6658 = vpop.f32.mrf.mxu0
      %v6659 = vadd.f32 0.0, %v6658
      %v6660 = vpop.f32.mrf.mxu0
      %6661 = vdwg.mxu0
      %v6662 = vlaneseq
      %v6663 = vshrl.u32 %v6662, 7
      %v6664 = vsub.s32 3, %v6663
      %v6665 = vrot.slane %v412, %v6664
      %v6666 = vmul.f32 %v6504, %v6665
      %v6667 = vmul.f32 %v6509, %v6665
      %v6668 = vmul.f32 %v6514, %v6665
      %v6669 = vmul.f32 %v6519, %v6665
      %v6670 = vmul.f32 %v6524, %v6665
      %v6671 = vmul.f32 %v6529, %v6665
      %v6672 = vmul.f32 %v6534, %v6665
      %v6673 = vmul.f32 %v6539, %v6665
      %v6674 = vmul.f32 %v6544, %v6665
      %v6675 = vmul.f32 %v6549, %v6665
      %v6676 = vmul.f32 %v6554, %v6665
      %v6677 = vmul.f32 %v6559, %v6665
      %v6678 = vmul.f32 %v6564, %v6665
      %v6679 = vmul.f32 %v6569, %v6665
      %v6680 = vmul.f32 %v6574, %v6665
      %v6681 = vmul.f32 %v6579, %v6665
      %v6682 = vmul.f32 %v6584, %v6665
      %v6683 = vmul.f32 %v6589, %v6665
      %v6684 = vmul.f32 %v6594, %v6665
      %v6685 = vmul.f32 %v6599, %v6665
      %v6686 = vmul.f32 %v6604, %v6665
      %v6687 = vmul.f32 %v6609, %v6665
      %v6688 = vmul.f32 %v6614, %v6665
      %v6689 = vmul.f32 %v6619, %v6665
      %v6690 = vmul.f32 %v6624, %v6665
      %v6691 = vmul.f32 %v6629, %v6665
      %v6692 = vmul.f32 %v6634, %v6665
      %v6693 = vmul.f32 %v6639, %v6665
      %v6694 = vmul.f32 %v6644, %v6665
      %v6695 = vmul.f32 %v6649, %v6665
      %v6696 = vmul.f32 %v6654, %v6665
      %v6697 = vmul.f32 %v6659, %v6665
      %v6698 = vlaneseq
      %v6699 = vshrl.u32 %v6698, 7
      %v6700 = vsub.s32 3, %v6699
      %v6701 = vrot.slane %v415, %v6700
      %v6702 = vadd.f32 %v6666, %v6701
      %v6703 = vadd.f32 %v6667, %v6701
      %v6704 = vadd.f32 %v6668, %v6701
      %v6705 = vadd.f32 %v6669, %v6701
      %v6706 = vadd.f32 %v6670, %v6701
      %v6707 = vadd.f32 %v6671, %v6701
      %v6708 = vadd.f32 %v6672, %v6701
      %v6709 = vadd.f32 %v6673, %v6701
      %v6710 = vadd.f32 %v6674, %v6701
      %v6711 = vadd.f32 %v6675, %v6701
      %v6712 = vadd.f32 %v6676, %v6701
      %v6713 = vadd.f32 %v6677, %v6701
      %v6714 = vadd.f32 %v6678, %v6701
      %v6715 = vadd.f32 %v6679, %v6701
      %v6716 = vadd.f32 %v6680, %v6701
      %v6717 = vadd.f32 %v6681, %v6701
      %v6718 = vadd.f32 %v6682, %v6701
      %v6719 = vadd.f32 %v6683, %v6701
      %v6720 = vadd.f32 %v6684, %v6701
      %v6721 = vadd.f32 %v6685, %v6701
      %v6722 = vadd.f32 %v6686, %v6701
      %v6723 = vadd.f32 %v6687, %v6701
      %v6724 = vadd.f32 %v6688, %v6701
      %v6725 = vadd.f32 %v6689, %v6701
      %v6726 = vadd.f32 %v6690, %v6701
      %v6727 = vadd.f32 %v6691, %v6701
      %v6728 = vadd.f32 %v6692, %v6701
      %v6729 = vadd.f32 %v6693, %v6701
      %v6730 = vadd.f32 %v6694, %v6701
      %v6731 = vadd.f32 %v6695, %v6701
      %v6732 = vadd.f32 %v6696, %v6701
      %v6733 = vadd.f32 %v6697, %v6701
      %v6734 = vmax.f32 %v6702, 0.0
      %v6735 = vmax.f32 %v6703, 0.0
      %v6736 = vmax.f32 %v6704, 0.0
      %v6737 = vmax.f32 %v6705, 0.0
      %v6738 = vmax.f32 %v6706, 0.0
      %v6739 = vmax.f32 %v6707, 0.0
      %v6740 = vmax.f32 %v6708, 0.0
      %v6741 = vmax.f32 %v6709, 0.0
      %v6742 = vmax.f32 %v6710, 0.0
      %v6743 = vmax.f32 %v6711, 0.0
      %v6744 = vmax.f32 %v6712, 0.0
      %v6745 = vmax.f32 %v6713, 0.0
      %v6746 = vmax.f32 %v6714, 0.0
      %v6747 = vmax.f32 %v6715, 0.0
      %v6748 = vmax.f32 %v6716, 0.0
      %v6749 = vmax.f32 %v6717, 0.0
      %v6750 = vmax.f32 %v6718, 0.0
      %v6751 = vmax.f32 %v6719, 0.0
      %v6752 = vmax.f32 %v6720, 0.0
      %v6753 = vmax.f32 %v6721, 0.0
      %v6754 = vmax.f32 %v6722, 0.0
      %v6755 = vmax.f32 %v6723, 0.0
      %v6756 = vmax.f32 %v6724, 0.0
      %v6757 = vmax.f32 %v6725, 0.0
      %v6758 = vmax.f32 %v6726, 0.0
      %v6759 = vmax.f32 %v6727, 0.0
      %v6760 = vmax.f32 %v6728, 0.0
      %v6761 = vmax.f32 %v6729, 0.0
      %v6762 = vmax.f32 %v6730, 0.0
      %v6763 = vmax.f32 %v6731, 0.0
      %v6764 = vmax.f32 %v6732, 0.0
      %v6765 = vmax.f32 %v6733, 0.0
      %v6769 = vrot.slane %v6763, 7
      %v6770 = vrot.slane %v6764, 7
      %v6771 = vsel %vm1582, %v6769, %v6770
      %v6772 = vrot.slane %v6765, 7
      %v6773 = vsel %vm1582, %v6770, %v6772
      %v6806 = vrot.slane %v6734, 7
      %v6807 = vrot.slane %v6735, 7
      %v6808 = vsel %vm1582, %v6806, %v6807
      %v6809 = vrot.slane %v6736, 7
      %v6810 = vsel %vm1582, %v6807, %v6809
      %v6811 = vrot.slane %v6737, 7
      %v6812 = vsel %vm1582, %v6809, %v6811
      %v6813 = vrot.slane %v6738, 7
      %v6814 = vsel %vm1582, %v6811, %v6813
      %v6815 = vrot.slane %v6739, 7
      %v6816 = vsel %vm1582, %v6813, %v6815
      %v6817 = vrot.slane %v6740, 7
      %v6818 = vsel %vm1582, %v6815, %v6817
      %v6819 = vrot.slane %v6741, 7
      %v6820 = vsel %vm1582, %v6817, %v6819
      %v6821 = vrot.slane %v6742, 7
      %v6822 = vsel %vm1582, %v6819, %v6821
      %v6823 = vrot.slane %v6743, 7
      %v6824 = vsel %vm1582, %v6821, %v6823
      %v6825 = vrot.slane %v6744, 7
      %v6826 = vsel %vm1582, %v6823, %v6825
      %v6827 = vrot.slane %v6745, 7
      %v6828 = vsel %vm1582, %v6825, %v6827
      %v6829 = vrot.slane %v6746, 7
      %v6830 = vsel %vm1582, %v6827, %v6829
      %v6831 = vrot.slane %v6747, 7
      %v6832 = vsel %vm1582, %v6829, %v6831
      %v6833 = vrot.slane %v6748, 7
      %v6834 = vsel %vm1582, %v6831, %v6833
      %v6835 = vrot.slane %v6749, 7
      %v6836 = vsel %vm1582, %v6833, %v6835
      %v6837 = vrot.slane %v6750, 7
      %v6838 = vsel %vm1582, %v6835, %v6837
      %v6839 = vrot.slane %v6751, 7
      %v6840 = vsel %vm1582, %v6837, %v6839
      %v6841 = vrot.slane %v6752, 7
      %v6842 = vsel %vm1582, %v6839, %v6841
      %v6843 = vrot.slane %v6753, 7
      %v6844 = vsel %vm1582, %v6841, %v6843
      %v6845 = vrot.slane %v6754, 7
      %v6846 = vsel %vm1582, %v6843, %v6845
      %v6847 = vrot.slane %v6755, 7
      %v6848 = vsel %vm1582, %v6845, %v6847
      %v6849 = vrot.slane %v6756, 7
      %v6850 = vsel %vm1582, %v6847, %v6849
      %v6851 = vrot.slane %v6757, 7
      %v6852 = vsel %vm1582, %v6849, %v6851
      %v6853 = vrot.slane %v6758, 7
      %v6854 = vsel %vm1582, %v6851, %v6853
      %v6855 = vrot.slane %v6759, 7
      %v6856 = vsel %vm1582, %v6853, %v6855
      %v6857 = vrot.slane %v6760, 7
      %v6858 = vsel %vm1582, %v6855, %v6857
      %v6859 = vrot.slane %v6761, 7
      %v6860 = vsel %vm1582, %v6857, %v6859
      %v6861 = vrot.slane %v6762, 7
      %v6862 = vsel %vm1582, %v6859, %v6861
      %v6863 = vsel %vm1582, %v6861, %v6769
      %v6894 = vsel %vm1582, %v6772, %v6806
      %v6895 = vmul.f32 %v6771, %v709
      %v6896 = vmul.f32 %v6773, %v710
      %v6897 = vmul.f32 %v6894, %v711
      %v6898 = vmul.f32 %v6808, %v712
      %v6899 = vmul.f32 %v6810, %v713
      %v6900 = vmul.f32 %v6812, %v714
      %v6901 = vmul.f32 %v6814, %v715
      %v6902 = vmul.f32 %v6816, %v716
      %v6903 = vmul.f32 %v6818, %v717
      %v6904 = vmul.f32 %v6820, %v718
      %v6905 = vmul.f32 %v6822, %v719
      %v6906 = vmul.f32 %v6824, %v720
      %v6907 = vmul.f32 %v6826, %v721
      %v6908 = vmul.f32 %v6828, %v722
      %v6909 = vmul.f32 %v6830, %v723
      %v6910 = vmul.f32 %v6832, %v724
      %v6911 = vmul.f32 %v6834, %v725
      %v6912 = vmul.f32 %v6836, %v726
      %v6913 = vmul.f32 %v6838, %v727
      %v6914 = vmul.f32 %v6840, %v728
      %v6915 = vmul.f32 %v6842, %v729
      %v6916 = vmul.f32 %v6844, %v730
      %v6917 = vmul.f32 %v6846, %v731
      %v6918 = vmul.f32 %v6848, %v732
      %v6919 = vmul.f32 %v6850, %v733
      %v6920 = vmul.f32 %v6852, %v734
      %v6921 = vmul.f32 %v6854, %v735
      %v6922 = vmul.f32 %v6856, %v736
      %v6923 = vmul.f32 %v6858, %v737
      %v6924 = vmul.f32 %v6860, %v738
      %v6925 = vmul.f32 %v6862, %v739
      %v6926 = vmul.f32 %v6863, %v740
      %v6927 = vmul.f32 %v6764, %v773
      %v6928 = vmul.f32 %v6765, %v774
      %v6929 = vmul.f32 %v6734, %v775
      %v6930 = vmul.f32 %v6735, %v776
      %v6931 = vmul.f32 %v6736, %v777
      %v6932 = vmul.f32 %v6737, %v778
      %v6933 = vmul.f32 %v6738, %v779
      %v6934 = vmul.f32 %v6739, %v780
      %v6935 = vmul.f32 %v6740, %v781
      %v6936 = vmul.f32 %v6741, %v782
      %v6937 = vmul.f32 %v6742, %v783
      %v6938 = vmul.f32 %v6743, %v784
      %v6939 = vmul.f32 %v6744, %v785
      %v6940 = vmul.f32 %v6745, %v786
      %v6941 = vmul.f32 %v6746, %v787
      %v6942 = vmul.f32 %v6747, %v788
      %v6943 = vmul.f32 %v6748, %v789
      %v6944 = vmul.f32 %v6749, %v790
      %v6945 = vmul.f32 %v6750, %v791
      %v6946 = vmul.f32 %v6751, %v792
      %v6947 = vmul.f32 %v6752, %v793
      %v6948 = vmul.f32 %v6753, %v794
      %v6949 = vmul.f32 %v6754, %v795
      %v6950 = vmul.f32 %v6755, %v796
      %v6951 = vmul.f32 %v6756, %v797
      %v6952 = vmul.f32 %v6757, %v798
      %v6953 = vmul.f32 %v6758, %v799
      %v6954 = vmul.f32 %v6759, %v800
      %v6955 = vmul.f32 %v6760, %v801
      %v6956 = vmul.f32 %v6761, %v802
      %v6957 = vmul.f32 %v6762, %v803
      %v6958 = vmul.f32 %v6763, %v804
      %v6959 = vrot.slane %v6764, 1
      %v6960 = vrot.slane %v6765, 1
      %v6961 = vsel %vm1773, %v6959, %v6960
      %v6964 = vrot.slane %v6734, 1
      %v6965 = vrot.slane %v6735, 1
      %v6966 = vsel %vm1773, %v6964, %v6965
      %v6967 = vrot.slane %v6736, 1
      %v6968 = vsel %vm1773, %v6965, %v6967
      %v6969 = vrot.slane %v6737, 1
      %v6970 = vsel %vm1773, %v6967, %v6969
      %v6971 = vrot.slane %v6738, 1
      %v6972 = vsel %vm1773, %v6969, %v6971
      %v6973 = vrot.slane %v6739, 1
      %v6974 = vsel %vm1773, %v6971, %v6973
      %v6975 = vrot.slane %v6740, 1
      %v6976 = vsel %vm1773, %v6973, %v6975
      %v6977 = vrot.slane %v6741, 1
      %v6978 = vsel %vm1773, %v6975, %v6977
      %v6979 = vrot.slane %v6742, 1
      %v6980 = vsel %vm1773, %v6977, %v6979
      %v6981 = vrot.slane %v6743, 1
      %v6982 = vsel %vm1773, %v6979, %v6981
      %v6983 = vrot.slane %v6744, 1
      %v6984 = vsel %vm1773, %v6981, %v6983
      %v6985 = vrot.slane %v6745, 1
      %v6986 = vsel %vm1773, %v6983, %v6985
      %v6987 = vrot.slane %v6746, 1
      %v6988 = vsel %vm1773, %v6985, %v6987
      %v6989 = vrot.slane %v6747, 1
      %v6990 = vsel %vm1773, %v6987, %v6989
      %v6991 = vrot.slane %v6748, 1
      %v6992 = vsel %vm1773, %v6989, %v6991
      %v6993 = vrot.slane %v6749, 1
      %v6994 = vsel %vm1773, %v6991, %v6993
      %v6995 = vrot.slane %v6750, 1
      %v6996 = vsel %vm1773, %v6993, %v6995
      %v6997 = vrot.slane %v6751, 1
      %v6998 = vsel %vm1773, %v6995, %v6997
      %v6999 = vrot.slane %v6752, 1
      %v7000 = vsel %vm1773, %v6997, %v6999
      %v7001 = vrot.slane %v6753, 1
      %v7002 = vsel %vm1773, %v6999, %v7001
      %v7003 = vrot.slane %v6754, 1
      %v7004 = vsel %vm1773, %v7001, %v7003
      %v7005 = vrot.slane %v6755, 1
      %v7006 = vsel %vm1773, %v7003, %v7005
      %v7007 = vrot.slane %v6756, 1
      %v7008 = vsel %vm1773, %v7005, %v7007
      %v7009 = vrot.slane %v6757, 1
      %v7010 = vsel %vm1773, %v7007, %v7009
      %v7011 = vrot.slane %v6758, 1
      %v7012 = vsel %vm1773, %v7009, %v7011
      %v7013 = vrot.slane %v6759, 1
      %v7014 = vsel %vm1773, %v7011, %v7013
      %v7015 = vrot.slane %v6760, 1
      %v7016 = vsel %vm1773, %v7013, %v7015
      %v7017 = vrot.slane %v6761, 1
      %v7018 = vsel %vm1773, %v7015, %v7017
      %v7019 = vrot.slane %v6762, 1
      %v7020 = vsel %vm1773, %v7017, %v7019
      %v7021 = vrot.slane %v6763, 1
      %v7022 = vsel %vm1773, %v7019, %v7021
      %v7023 = vsel %vm1773, %v7021, %v6959
      %v7055 = vsel %vm1773, %v6960, %v6964
      %v7056 = vmul.f32 %v6961, %v869
      %v7057 = vmul.f32 %v7055, %v870
      %v7058 = vmul.f32 %v6966, %v871
      %v7059 = vmul.f32 %v6968, %v872
      %v7060 = vmul.f32 %v6970, %v873
      %v7061 = vmul.f32 %v6972, %v874
      %v7062 = vmul.f32 %v6974, %v875
      %v7063 = vmul.f32 %v6976, %v876
      %v7064 = vmul.f32 %v6978, %v877
      %v7065 = vmul.f32 %v6980, %v878
      %v7066 = vmul.f32 %v6982, %v879
      %v7067 = vmul.f32 %v6984, %v880
      %v7068 = vmul.f32 %v6986, %v881
      %v7069 = vmul.f32 %v6988, %v882
      %v7070 = vmul.f32 %v6990, %v883
      %v7071 = vmul.f32 %v6992, %v884
      %v7072 = vmul.f32 %v6994, %v885
      %v7073 = vmul.f32 %v6996, %v886
      %v7074 = vmul.f32 %v6998, %v887
      %v7075 = vmul.f32 %v7000, %v888
      %v7076 = vmul.f32 %v7002, %v889
      %v7077 = vmul.f32 %v7004, %v890
      %v7078 = vmul.f32 %v7006, %v891
      %v7079 = vmul.f32 %v7008, %v892
      %v7080 = vmul.f32 %v7010, %v893
      %v7081 = vmul.f32 %v7012, %v894
      %v7082 = vmul.f32 %v7014, %v895
      %v7083 = vmul.f32 %v7016, %v896
      %v7084 = vmul.f32 %v7018, %v897
      %v7085 = vmul.f32 %v7020, %v898
      %v7086 = vmul.f32 %v7022, %v899
      %v7087 = vmul.f32 %v7023, %v900
      %v7088 = vmul.f32 %v6894, %v933
      %v7089 = vmul.f32 %v6808, %v934
      %v7090 = vmul.f32 %v6810, %v935
      %v7091 = vmul.f32 %v6812, %v936
      %v7092 = vmul.f32 %v6814, %v937
      %v7093 = vmul.f32 %v6816, %v938
      %v7094 = vmul.f32 %v6818, %v939
      %v7095 = vmul.f32 %v6820, %v940
      %v7096 = vmul.f32 %v6822, %v941
      %v7097 = vmul.f32 %v6824, %v942
      %v7098 = vmul.f32 %v6826, %v943
      %v7099 = vmul.f32 %v6828, %v944
      %v7100 = vmul.f32 %v6830, %v945
      %v7101 = vmul.f32 %v6832, %v946
      %v7102 = vmul.f32 %v6834, %v947
      %v7103 = vmul.f32 %v6836, %v948
      %v7104 = vmul.f32 %v6838, %v949
      %v7105 = vmul.f32 %v6840, %v950
      %v7106 = vmul.f32 %v6842, %v951
      %v7107 = vmul.f32 %v6844, %v952
      %v7108 = vmul.f32 %v6846, %v953
      %v7109 = vmul.f32 %v6848, %v954
      %v7110 = vmul.f32 %v6850, %v955
      %v7111 = vmul.f32 %v6852, %v956
      %v7112 = vmul.f32 %v6854, %v957
      %v7113 = vmul.f32 %v6856, %v958
      %v7114 = vmul.f32 %v6858, %v959
      %v7115 = vmul.f32 %v6860, %v960
      %v7116 = vmul.f32 %v6862, %v961
      %v7117 = vmul.f32 %v6863, %v962
      %v7118 = vmul.f32 %v6771, %v963
      %v7119 = vmul.f32 %v6773, %v964
      %v7120 = vmul.f32 %v6966, %v997
      %v7121 = vmul.f32 %v6968, %v998
      %v7122 = vmul.f32 %v6970, %v999
      %v7123 = vmul.f32 %v6972, %v1000
      %v7124 = vmul.f32 %v6974, %v1001
      %v7125 = vmul.f32 %v6976, %v1002
      %v7126 = vmul.f32 %v6978, %v1003
      %v7127 = vmul.f32 %v6980, %v1004
      %v7128 = vmul.f32 %v6982, %v1005
      %v7129 = vmul.f32 %v6984, %v1006
      %v7130 = vmul.f32 %v6986, %v1007
      %v7131 = vmul.f32 %v6988, %v1008
      %v7132 = vmul.f32 %v6990, %v1009
      %v7133 = vmul.f32 %v6992, %v1010
      %v7134 = vmul.f32 %v6994, %v1011
      %v7135 = vmul.f32 %v6996, %v1012
      %v7136 = vmul.f32 %v6998, %v1013
      %v7137 = vmul.f32 %v7000, %v1014
      %v7138 = vmul.f32 %v7002, %v1015
      %v7139 = vmul.f32 %v7004, %v1016
      %v7140 = vmul.f32 %v7006, %v1017
      %v7141 = vmul.f32 %v7008, %v1018
      %v7142 = vmul.f32 %v7010, %v1019
      %v7143 = vmul.f32 %v7012, %v1020
      %v7144 = vmul.f32 %v7014, %v1021
      %v7145 = vmul.f32 %v7016, %v1022
      %v7146 = vmul.f32 %v7018, %v1023
      %v7147 = vmul.f32 %v7020, %v1024
      %v7148 = vmul.f32 %v7022, %v1025
      %v7149 = vmul.f32 %v7023, %v1026
      %v7150 = vmul.f32 %v6961, %v1027
      %v7151 = vmul.f32 %v7055, %v1028
      %v7152 = vmul.f32 %v6810, %v1093
      %v7153 = vmul.f32 %v6812, %v1094
      %v7154 = vmul.f32 %v6814, %v1095
      %v7155 = vmul.f32 %v6816, %v1096
      %v7156 = vmul.f32 %v6818, %v1097
      %v7157 = vmul.f32 %v6820, %v1098
      %v7158 = vmul.f32 %v6822, %v1099
      %v7159 = vmul.f32 %v6824, %v1100
      %v7160 = vmul.f32 %v6826, %v1101
      %v7161 = vmul.f32 %v6828, %v1102
      %v7162 = vmul.f32 %v6830, %v1103
      %v7163 = vmul.f32 %v6832, %v1104
      %v7164 = vmul.f32 %v6834, %v1105
      %v7165 = vmul.f32 %v6836, %v1106
      %v7166 = vmul.f32 %v6838, %v1107
      %v7167 = vmul.f32 %v6840, %v1108
      %v7168 = vmul.f32 %v6842, %v1109
      %v7169 = vmul.f32 %v6844, %v1110
      %v7170 = vmul.f32 %v6846, %v1111
      %v7171 = vmul.f32 %v6848, %v1112
      %v7172 = vmul.f32 %v6850, %v1113
      %v7173 = vmul.f32 %v6852, %v1114
      %v7174 = vmul.f32 %v6854, %v1115
      %v7175 = vmul.f32 %v6856, %v1116
      %v7176 = vmul.f32 %v6858, %v1117
      %v7177 = vmul.f32 %v6860, %v1118
      %v7178 = vmul.f32 %v6862, %v1119
      %v7179 = vmul.f32 %v6863, %v1120
      %v7180 = vmul.f32 %v6771, %v1121
      %v7181 = vmul.f32 %v6773, %v1122
      %v7182 = vmul.f32 %v6894, %v1123
      %v7183 = vmul.f32 %v6808, %v1124
      %v7184 = vmul.f32 %v6736, %v1157
      %v7185 = vmul.f32 %v6737, %v1158
      %v7186 = vmul.f32 %v6738, %v1159
      %v7187 = vmul.f32 %v6739, %v1160
      %v7188 = vmul.f32 %v6740, %v1161
      %v7189 = vmul.f32 %v6741, %v1162
      %v7190 = vmul.f32 %v6742, %v1163
      %v7191 = vmul.f32 %v6743, %v1164
      %v7192 = vmul.f32 %v6744, %v1165
      %v7193 = vmul.f32 %v6745, %v1166
      %v7194 = vmul.f32 %v6746, %v1167
      %v7195 = vmul.f32 %v6747, %v1168
      %v7196 = vmul.f32 %v6748, %v1169
      %v7197 = vmul.f32 %v6749, %v1170
      %v7198 = vmul.f32 %v6750, %v1171
      %v7199 = vmul.f32 %v6751, %v1172
      %v7200 = vmul.f32 %v6752, %v1173
      %v7201 = vmul.f32 %v6753, %v1174
      %v7202 = vmul.f32 %v6754, %v1175
      %v7203 = vmul.f32 %v6755, %v1176
      %v7204 = vmul.f32 %v6756, %v1177
      %v7205 = vmul.f32 %v6757, %v1178
      %v7206 = vmul.f32 %v6758, %v1179
      %v7207 = vmul.f32 %v6759, %v1180
      %v7208 = vmul.f32 %v6760, %v1181
      %v7209 = vmul.f32 %v6761, %v1182
      %v7210 = vmul.f32 %v6762, %v1183
      %v7211 = vmul.f32 %v6763, %v1184
      %v7212 = vmul.f32 %v6764, %v1185
      %v7213 = vmul.f32 %v6765, %v1186
      %v7214 = vmul.f32 %v6734, %v1187
      %v7215 = vmul.f32 %v6735, %v1188
      %v7216 = vmul.f32 %v6970, %v1253
      %v7217 = vmul.f32 %v6972, %v1254
      %v7218 = vmul.f32 %v6974, %v1255
      %v7219 = vmul.f32 %v6976, %v1256
      %v7220 = vmul.f32 %v6978, %v1257
      %v7221 = vmul.f32 %v6980, %v1258
      %v7222 = vmul.f32 %v6982, %v1259
      %v7223 = vmul.f32 %v6984, %v1260
      %v7224 = vmul.f32 %v6986, %v1261
      %v7225 = vmul.f32 %v6988, %v1262
      %v7226 = vmul.f32 %v6990, %v1263
      %v7227 = vmul.f32 %v6992, %v1264
      %v7228 = vmul.f32 %v6994, %v1265
      %v7229 = vmul.f32 %v6996, %v1266
      %v7230 = vmul.f32 %v6998, %v1267
      %v7231 = vmul.f32 %v7000, %v1268
      %v7232 = vmul.f32 %v7002, %v1269
      %v7233 = vmul.f32 %v7004, %v1270
      %v7234 = vmul.f32 %v7006, %v1271
      %v7235 = vmul.f32 %v7008, %v1272
      %v7236 = vmul.f32 %v7010, %v1273
      %v7237 = vmul.f32 %v7012, %v1274
      %v7238 = vmul.f32 %v7014, %v1275
      %v7239 = vmul.f32 %v7016, %v1276
      %v7240 = vmul.f32 %v7018, %v1277
      %v7241 = vmul.f32 %v7020, %v1278
      %v7242 = vmul.f32 %v7022, %v1279
      %v7243 = vmul.f32 %v7023, %v1280
      %v7244 = vmul.f32 %v6961, %v1281
      %v7245 = vmul.f32 %v7055, %v1282
      %v7246 = vmul.f32 %v6966, %v1283
      %v7247 = vmul.f32 %v6968, %v1284
      %7280 = vrot.lane.b32.xlu0 %v6927, 16
      %v7281 = vpop.permute.xlu0 %7280
      %7282 = vrot.lane.b32.xlu0 %v6928, 16
      %v7283 = vpop.permute.xlu0 %7282
      %7284 = vrot.lane.b32.xlu0 %v6929, 16
      %v7285 = vpop.permute.xlu0 %7284
      %7286 = vrot.lane.b32.xlu0 %v6930, 16
      %v7287 = vpop.permute.xlu0 %7286
      %7288 = vrot.lane.b32.xlu0 %v6931, 16
      %v7289 = vpop.permute.xlu0 %7288
      %7290 = vrot.lane.b32.xlu0 %v6932, 16
      %v7291 = vpop.permute.xlu0 %7290
      %7292 = vrot.lane.b32.xlu0 %v6933, 16
      %v7293 = vpop.permute.xlu0 %7292
      %7294 = vrot.lane.b32.xlu0 %v6934, 16
      %v7295 = vpop.permute.xlu0 %7294
      %7296 = vrot.lane.b32.xlu0 %v6935, 16
      %v7297 = vpop.permute.xlu0 %7296
      %7298 = vrot.lane.b32.xlu0 %v6936, 16
      %v7299 = vpop.permute.xlu0 %7298
      %7300 = vrot.lane.b32.xlu0 %v6937, 16
      %v7301 = vpop.permute.xlu0 %7300
      %7302 = vrot.lane.b32.xlu0 %v6938, 16
      %v7303 = vpop.permute.xlu0 %7302
      %7304 = vrot.lane.b32.xlu0 %v6939, 16
      %v7305 = vpop.permute.xlu0 %7304
      %7306 = vrot.lane.b32.xlu0 %v6940, 16
      %v7307 = vpop.permute.xlu0 %7306
      %7308 = vrot.lane.b32.xlu0 %v6941, 16
      %v7309 = vpop.permute.xlu0 %7308
      %7310 = vrot.lane.b32.xlu0 %v6942, 16
      %v7311 = vpop.permute.xlu0 %7310
      %7312 = vrot.lane.b32.xlu0 %v6943, 16
      %v7313 = vpop.permute.xlu0 %7312
      %7314 = vrot.lane.b32.xlu0 %v6944, 16
      %v7315 = vpop.permute.xlu0 %7314
      %7316 = vrot.lane.b32.xlu0 %v6945, 16
      %v7317 = vpop.permute.xlu0 %7316
      %7318 = vrot.lane.b32.xlu0 %v6946, 16
      %v7319 = vpop.permute.xlu0 %7318
      %7320 = vrot.lane.b32.xlu0 %v6947, 16
      %v7321 = vpop.permute.xlu0 %7320
      %7322 = vrot.lane.b32.xlu0 %v6948, 16
      %v7323 = vpop.permute.xlu0 %7322
      %7324 = vrot.lane.b32.xlu0 %v6949, 16
      %v7325 = vpop.permute.xlu0 %7324
      %7326 = vrot.lane.b32.xlu0 %v6950, 16
      %v7327 = vpop.permute.xlu0 %7326
      %7328 = vrot.lane.b32.xlu0 %v6951, 16
      %v7329 = vpop.permute.xlu0 %7328
      %7330 = vrot.lane.b32.xlu0 %v6952, 16
      %v7331 = vpop.permute.xlu0 %7330
      %7332 = vrot.lane.b32.xlu0 %v6953, 16
      %v7333 = vpop.permute.xlu0 %7332
      %7334 = vrot.lane.b32.xlu0 %v6954, 16
      %v7335 = vpop.permute.xlu0 %7334
      %7336 = vrot.lane.b32.xlu0 %v6955, 16
      %v7337 = vpop.permute.xlu0 %7336
      %7338 = vrot.lane.b32.xlu0 %v6956, 16
      %v7339 = vpop.permute.xlu0 %7338
      %7340 = vrot.lane.b32.xlu0 %v6957, 16
      %v7341 = vpop.permute.xlu0 %7340
      %7342 = vrot.lane.b32.xlu0 %v6958, 16
      %v7343 = vpop.permute.xlu0 %7342
      %7408 = vrot.lane.b32.xlu0 %v7056, 32
      %v7409 = vpop.permute.xlu0 %7408
      %7410 = vrot.lane.b32.xlu0 %v7057, 32
      %v7411 = vpop.permute.xlu0 %7410
      %7412 = vrot.lane.b32.xlu0 %v7058, 32
      %v7413 = vpop.permute.xlu0 %7412
      %7414 = vrot.lane.b32.xlu0 %v7059, 32
      %v7415 = vpop.permute.xlu0 %7414
      %7416 = vrot.lane.b32.xlu0 %v7060, 32
      %v7417 = vpop.permute.xlu0 %7416
      %7418 = vrot.lane.b32.xlu0 %v7061, 32
      %v7419 = vpop.permute.xlu0 %7418
      %7420 = vrot.lane.b32.xlu0 %v7062, 32
      %v7421 = vpop.permute.xlu0 %7420
      %7422 = vrot.lane.b32.xlu0 %v7063, 32
      %v7423 = vpop.permute.xlu0 %7422
      %7424 = vrot.lane.b32.xlu0 %v7064, 32
      %v7425 = vpop.permute.xlu0 %7424
      %7426 = vrot.lane.b32.xlu0 %v7065, 32
      %v7427 = vpop.permute.xlu0 %7426
      %7428 = vrot.lane.b32.xlu0 %v7066, 32
      %v7429 = vpop.permute.xlu0 %7428
      %7430 = vrot.lane.b32.xlu0 %v7067, 32
      %v7431 = vpop.permute.xlu0 %7430
      %7432 = vrot.lane.b32.xlu0 %v7068, 32
      %v7433 = vpop.permute.xlu0 %7432
      %7434 = vrot.lane.b32.xlu0 %v7069, 32
      %v7435 = vpop.permute.xlu0 %7434
      %7436 = vrot.lane.b32.xlu0 %v7070, 32
      %v7437 = vpop.permute.xlu0 %7436
      %7438 = vrot.lane.b32.xlu0 %v7071, 32
      %v7439 = vpop.permute.xlu0 %7438
      %7440 = vrot.lane.b32.xlu0 %v7072, 32
      %v7441 = vpop.permute.xlu0 %7440
      %7442 = vrot.lane.b32.xlu0 %v7073, 32
      %v7443 = vpop.permute.xlu0 %7442
      %7444 = vrot.lane.b32.xlu0 %v7074, 32
      %v7445 = vpop.permute.xlu0 %7444
      %7446 = vrot.lane.b32.xlu0 %v7075, 32
      %v7447 = vpop.permute.xlu0 %7446
      %7448 = vrot.lane.b32.xlu0 %v7076, 32
      %v7449 = vpop.permute.xlu0 %7448
      %7450 = vrot.lane.b32.xlu0 %v7077, 32
      %v7451 = vpop.permute.xlu0 %7450
      %7452 = vrot.lane.b32.xlu0 %v7078, 32
      %v7453 = vpop.permute.xlu0 %7452
      %7454 = vrot.lane.b32.xlu0 %v7079, 32
      %v7455 = vpop.permute.xlu0 %7454
      %7456 = vrot.lane.b32.xlu0 %v7080, 32
      %v7457 = vpop.permute.xlu0 %7456
      %7458 = vrot.lane.b32.xlu0 %v7081, 32
      %v7459 = vpop.permute.xlu0 %7458
      %7460 = vrot.lane.b32.xlu0 %v7082, 32
      %v7461 = vpop.permute.xlu0 %7460
      %7462 = vrot.lane.b32.xlu0 %v7083, 32
      %v7463 = vpop.permute.xlu0 %7462
      %7464 = vrot.lane.b32.xlu0 %v7084, 32
      %v7465 = vpop.permute.xlu0 %7464
      %7466 = vrot.lane.b32.xlu0 %v7085, 32
      %v7467 = vpop.permute.xlu0 %7466
      %7468 = vrot.lane.b32.xlu0 %v7086, 32
      %v7469 = vpop.permute.xlu0 %7468
      %7470 = vrot.lane.b32.xlu0 %v7087, 32
      %v7471 = vpop.permute.xlu0 %7470
      %7536 = vrot.lane.b32.xlu0 %v7088, 48
      %v7537 = vpop.permute.xlu0 %7536
      %7538 = vrot.lane.b32.xlu0 %v7089, 48
      %v7539 = vpop.permute.xlu0 %7538
      %7540 = vrot.lane.b32.xlu0 %v7090, 48
      %v7541 = vpop.permute.xlu0 %7540
      %7542 = vrot.lane.b32.xlu0 %v7091, 48
      %v7543 = vpop.permute.xlu0 %7542
      %7544 = vrot.lane.b32.xlu0 %v7092, 48
      %v7545 = vpop.permute.xlu0 %7544
      %7546 = vrot.lane.b32.xlu0 %v7093, 48
      %v7547 = vpop.permute.xlu0 %7546
      %7548 = vrot.lane.b32.xlu0 %v7094, 48
      %v7549 = vpop.permute.xlu0 %7548
      %7550 = vrot.lane.b32.xlu0 %v7095, 48
      %v7551 = vpop.permute.xlu0 %7550
      %7552 = vrot.lane.b32.xlu0 %v7096, 48
      %v7553 = vpop.permute.xlu0 %7552
      %7554 = vrot.lane.b32.xlu0 %v7097, 48
      %v7555 = vpop.permute.xlu0 %7554
      %7556 = vrot.lane.b32.xlu0 %v7098, 48
      %v7557 = vpop.permute.xlu0 %7556
      %7558 = vrot.lane.b32.xlu0 %v7099, 48
      %v7559 = vpop.permute.xlu0 %7558
      %7560 = vrot.lane.b32.xlu0 %v7100, 48
      %v7561 = vpop.permute.xlu0 %7560
      %7562 = vrot.lane.b32.xlu0 %v7101, 48
      %v7563 = vpop.permute.xlu0 %7562
      %7564 = vrot.lane.b32.xlu0 %v7102, 48
      %v7565 = vpop.permute.xlu0 %7564
      %7566 = vrot.lane.b32.xlu0 %v7103, 48
      %v7567 = vpop.permute.xlu0 %7566
      %7568 = vrot.lane.b32.xlu0 %v7104, 48
      %v7569 = vpop.permute.xlu0 %7568
      %7570 = vrot.lane.b32.xlu0 %v7105, 48
      %v7571 = vpop.permute.xlu0 %7570
      %7572 = vrot.lane.b32.xlu0 %v7106, 48
      %v7573 = vpop.permute.xlu0 %7572
      %7574 = vrot.lane.b32.xlu0 %v7107, 48
      %v7575 = vpop.permute.xlu0 %7574
      %7576 = vrot.lane.b32.xlu0 %v7108, 48
      %v7577 = vpop.permute.xlu0 %7576
      %7578 = vrot.lane.b32.xlu0 %v7109, 48
      %v7579 = vpop.permute.xlu0 %7578
      %7580 = vrot.lane.b32.xlu0 %v7110, 48
      %v7581 = vpop.permute.xlu0 %7580
      %7582 = vrot.lane.b32.xlu0 %v7111, 48
      %v7583 = vpop.permute.xlu0 %7582
      %7584 = vrot.lane.b32.xlu0 %v7112, 48
      %v7585 = vpop.permute.xlu0 %7584
      %7586 = vrot.lane.b32.xlu0 %v7113, 48
      %v7587 = vpop.permute.xlu0 %7586
      %7588 = vrot.lane.b32.xlu0 %v7114, 48
      %v7589 = vpop.permute.xlu0 %7588
      %7590 = vrot.lane.b32.xlu0 %v7115, 48
      %v7591 = vpop.permute.xlu0 %7590
      %7592 = vrot.lane.b32.xlu0 %v7116, 48
      %v7593 = vpop.permute.xlu0 %7592
      %7594 = vrot.lane.b32.xlu0 %v7117, 48
      %v7595 = vpop.permute.xlu0 %7594
      %7596 = vrot.lane.b32.xlu0 %v7118, 48
      %v7597 = vpop.permute.xlu0 %7596
      %7598 = vrot.lane.b32.xlu0 %v7119, 48
      %v7599 = vpop.permute.xlu0 %7598
      %7632 = vrot.lane.b32.xlu0 %v6734, 64
      %v7633 = vpop.permute.xlu0 %7632
      %7634 = vrot.lane.b32.xlu0 %v6735, 64
      %v7635 = vpop.permute.xlu0 %7634
      %7636 = vrot.lane.b32.xlu0 %v6736, 64
      %v7637 = vpop.permute.xlu0 %7636
      %7638 = vrot.lane.b32.xlu0 %v6737, 64
      %v7639 = vpop.permute.xlu0 %7638
      %7640 = vrot.lane.b32.xlu0 %v6738, 64
      %v7641 = vpop.permute.xlu0 %7640
      %7642 = vrot.lane.b32.xlu0 %v6739, 64
      %v7643 = vpop.permute.xlu0 %7642
      %7644 = vrot.lane.b32.xlu0 %v6740, 64
      %v7645 = vpop.permute.xlu0 %7644
      %7646 = vrot.lane.b32.xlu0 %v6741, 64
      %v7647 = vpop.permute.xlu0 %7646
      %7648 = vrot.lane.b32.xlu0 %v6742, 64
      %v7649 = vpop.permute.xlu0 %7648
      %7650 = vrot.lane.b32.xlu0 %v6743, 64
      %v7651 = vpop.permute.xlu0 %7650
      %7652 = vrot.lane.b32.xlu0 %v6744, 64
      %v7653 = vpop.permute.xlu0 %7652
      %7654 = vrot.lane.b32.xlu0 %v6745, 64
      %v7655 = vpop.permute.xlu0 %7654
      %7656 = vrot.lane.b32.xlu0 %v6746, 64
      %v7657 = vpop.permute.xlu0 %7656
      %7658 = vrot.lane.b32.xlu0 %v6747, 64
      %v7659 = vpop.permute.xlu0 %7658
      %7660 = vrot.lane.b32.xlu0 %v6748, 64
      %v7661 = vpop.permute.xlu0 %7660
      %7662 = vrot.lane.b32.xlu0 %v6749, 64
      %v7663 = vpop.permute.xlu0 %7662
      %7664 = vrot.lane.b32.xlu0 %v6750, 64
      %v7665 = vpop.permute.xlu0 %7664
      %7666 = vrot.lane.b32.xlu0 %v6751, 64
      %v7667 = vpop.permute.xlu0 %7666
      %7668 = vrot.lane.b32.xlu0 %v6752, 64
      %v7669 = vpop.permute.xlu0 %7668
      %7670 = vrot.lane.b32.xlu0 %v6753, 64
      %v7671 = vpop.permute.xlu0 %7670
      %7672 = vrot.lane.b32.xlu0 %v6754, 64
      %v7673 = vpop.permute.xlu0 %7672
      %7674 = vrot.lane.b32.xlu0 %v6755, 64
      %v7675 = vpop.permute.xlu0 %7674
      %7676 = vrot.lane.b32.xlu0 %v6756, 64
      %v7677 = vpop.permute.xlu0 %7676
      %7678 = vrot.lane.b32.xlu0 %v6757, 64
      %v7679 = vpop.permute.xlu0 %7678
      %7680 = vrot.lane.b32.xlu0 %v6758, 64
      %v7681 = vpop.permute.xlu0 %7680
      %7682 = vrot.lane.b32.xlu0 %v6759, 64
      %v7683 = vpop.permute.xlu0 %7682
      %7684 = vrot.lane.b32.xlu0 %v6760, 64
      %v7685 = vpop.permute.xlu0 %7684
      %7686 = vrot.lane.b32.xlu0 %v6761, 64
      %v7687 = vpop.permute.xlu0 %7686
      %7688 = vrot.lane.b32.xlu0 %v6762, 64
      %v7689 = vpop.permute.xlu0 %7688
      %7690 = vrot.lane.b32.xlu0 %v6763, 64
      %v7691 = vpop.permute.xlu0 %7690
      %7692 = vrot.lane.b32.xlu0 %v6764, 64
      %v7693 = vpop.permute.xlu0 %7692
      %7694 = vrot.lane.b32.xlu0 %v6765, 64
      %v7695 = vpop.permute.xlu0 %7694
      %7760 = vrot.lane.b32.xlu0 %v7120, 80
      %v7761 = vpop.permute.xlu0 %7760
      %7762 = vrot.lane.b32.xlu0 %v7121, 80
      %v7763 = vpop.permute.xlu0 %7762
      %7764 = vrot.lane.b32.xlu0 %v7122, 80
      %v7765 = vpop.permute.xlu0 %7764
      %7766 = vrot.lane.b32.xlu0 %v7123, 80
      %v7767 = vpop.permute.xlu0 %7766
      %7768 = vrot.lane.b32.xlu0 %v7124, 80
      %v7769 = vpop.permute.xlu0 %7768
      %7770 = vrot.lane.b32.xlu0 %v7125, 80
      %v7771 = vpop.permute.xlu0 %7770
      %7772 = vrot.lane.b32.xlu0 %v7126, 80
      %v7773 = vpop.permute.xlu0 %7772
      %7774 = vrot.lane.b32.xlu0 %v7127, 80
      %v7775 = vpop.permute.xlu0 %7774
      %7776 = vrot.lane.b32.xlu0 %v7128, 80
      %v7777 = vpop.permute.xlu0 %7776
      %7778 = vrot.lane.b32.xlu0 %v7129, 80
      %v7779 = vpop.permute.xlu0 %7778
      %7780 = vrot.lane.b32.xlu0 %v7130, 80
      %v7781 = vpop.permute.xlu0 %7780
      %7782 = vrot.lane.b32.xlu0 %v7131, 80
      %v7783 = vpop.permute.xlu0 %7782
      %7784 = vrot.lane.b32.xlu0 %v7132, 80
      %v7785 = vpop.permute.xlu0 %7784
      %7786 = vrot.lane.b32.xlu0 %v7133, 80
      %v7787 = vpop.permute.xlu0 %7786
      %7788 = vrot.lane.b32.xlu0 %v7134, 80
      %v7789 = vpop.permute.xlu0 %7788
      %7790 = vrot.lane.b32.xlu0 %v7135, 80
      %v7791 = vpop.permute.xlu0 %7790
      %7792 = vrot.lane.b32.xlu0 %v7136, 80
      %v7793 = vpop.permute.xlu0 %7792
      %7794 = vrot.lane.b32.xlu0 %v7137, 80
      %v7795 = vpop.permute.xlu0 %7794
      %7796 = vrot.lane.b32.xlu0 %v7138, 80
      %v7797 = vpop.permute.xlu0 %7796
      %7798 = vrot.lane.b32.xlu0 %v7139, 80
      %v7799 = vpop.permute.xlu0 %7798
      %7800 = vrot.lane.b32.xlu0 %v7140, 80
      %v7801 = vpop.permute.xlu0 %7800
      %7802 = vrot.lane.b32.xlu0 %v7141, 80
      %v7803 = vpop.permute.xlu0 %7802
      %7804 = vrot.lane.b32.xlu0 %v7142, 80
      %v7805 = vpop.permute.xlu0 %7804
      %7806 = vrot.lane.b32.xlu0 %v7143, 80
      %v7807 = vpop.permute.xlu0 %7806
      %7808 = vrot.lane.b32.xlu0 %v7144, 80
      %v7809 = vpop.permute.xlu0 %7808
      %7810 = vrot.lane.b32.xlu0 %v7145, 80
      %v7811 = vpop.permute.xlu0 %7810
      %7812 = vrot.lane.b32.xlu0 %v7146, 80
      %v7813 = vpop.permute.xlu0 %7812
      %7814 = vrot.lane.b32.xlu0 %v7147, 80
      %v7815 = vpop.permute.xlu0 %7814
      %7816 = vrot.lane.b32.xlu0 %v7148, 80
      %v7817 = vpop.permute.xlu0 %7816
      %7818 = vrot.lane.b32.xlu0 %v7149, 80
      %v7819 = vpop.permute.xlu0 %7818
      %7820 = vrot.lane.b32.xlu0 %v7150, 80
      %v7821 = vpop.permute.xlu0 %7820
      %7822 = vrot.lane.b32.xlu0 %v7151, 80
      %v7823 = vpop.permute.xlu0 %7822
      %7888 = vrot.lane.b32.xlu0 %v7152, 96
      %v7889 = vpop.permute.xlu0 %7888
      %7890 = vrot.lane.b32.xlu0 %v7153, 96
      %v7891 = vpop.permute.xlu0 %7890
      %7892 = vrot.lane.b32.xlu0 %v7154, 96
      %v7893 = vpop.permute.xlu0 %7892
      %7894 = vrot.lane.b32.xlu0 %v7155, 96
      %v7895 = vpop.permute.xlu0 %7894
      %7896 = vrot.lane.b32.xlu0 %v7156, 96
      %v7897 = vpop.permute.xlu0 %7896
      %7898 = vrot.lane.b32.xlu0 %v7157, 96
      %v7899 = vpop.permute.xlu0 %7898
      %7900 = vrot.lane.b32.xlu0 %v7158, 96
      %v7901 = vpop.permute.xlu0 %7900
      %7902 = vrot.lane.b32.xlu0 %v7159, 96
      %v7903 = vpop.permute.xlu0 %7902
      %7904 = vrot.lane.b32.xlu0 %v7160, 96
      %v7905 = vpop.permute.xlu0 %7904
      %7906 = vrot.lane.b32.xlu0 %v7161, 96
      %v7907 = vpop.permute.xlu0 %7906
      %7908 = vrot.lane.b32.xlu0 %v7162, 96
      %v7909 = vpop.permute.xlu0 %7908
      %7910 = vrot.lane.b32.xlu0 %v7163, 96
      %v7911 = vpop.permute.xlu0 %7910
      %7912 = vrot.lane.b32.xlu0 %v7164, 96
      %v7913 = vpop.permute.xlu0 %7912
      %7914 = vrot.lane.b32.xlu0 %v7165, 96
      %v7915 = vpop.permute.xlu0 %7914
      %7916 = vrot.lane.b32.xlu0 %v7166, 96
      %v7917 = vpop.permute.xlu0 %7916
      %7918 = vrot.lane.b32.xlu0 %v7167, 96
      %v7919 = vpop.permute.xlu0 %7918
      %7920 = vrot.lane.b32.xlu0 %v7168, 96
      %v7921 = vpop.permute.xlu0 %7920
      %7922 = vrot.lane.b32.xlu0 %v7169, 96
      %v7923 = vpop.permute.xlu0 %7922
      %7924 = vrot.lane.b32.xlu0 %v7170, 96
      %v7925 = vpop.permute.xlu0 %7924
      %7926 = vrot.lane.b32.xlu0 %v7171, 96
      %v7927 = vpop.permute.xlu0 %7926
      %7928 = vrot.lane.b32.xlu0 %v7172, 96
      %v7929 = vpop.permute.xlu0 %7928
      %7930 = vrot.lane.b32.xlu0 %v7173, 96
      %v7931 = vpop.permute.xlu0 %7930
      %7932 = vrot.lane.b32.xlu0 %v7174, 96
      %v7933 = vpop.permute.xlu0 %7932
      %7934 = vrot.lane.b32.xlu0 %v7175, 96
      %v7935 = vpop.permute.xlu0 %7934
      %7936 = vrot.lane.b32.xlu0 %v7176, 96
      %v7937 = vpop.permute.xlu0 %7936
      %7938 = vrot.lane.b32.xlu0 %v7177, 96
      %v7939 = vpop.permute.xlu0 %7938
      %7940 = vrot.lane.b32.xlu0 %v7178, 96
      %v7941 = vpop.permute.xlu0 %7940
      %7942 = vrot.lane.b32.xlu0 %v7179, 96
      %v7943 = vpop.permute.xlu0 %7942
      %7944 = vrot.lane.b32.xlu0 %v7180, 96
      %v7945 = vpop.permute.xlu0 %7944
      %7946 = vrot.lane.b32.xlu0 %v7181, 96
      %v7947 = vpop.permute.xlu0 %7946
      %7948 = vrot.lane.b32.xlu0 %v7182, 96
      %v7949 = vpop.permute.xlu0 %7948
      %7950 = vrot.lane.b32.xlu0 %v7183, 96
      %v7951 = vpop.permute.xlu0 %7950
      %8016 = vrot.lane.b32.xlu0 %v7184, 112
      %v8017 = vpop.permute.xlu0 %8016
      %8018 = vrot.lane.b32.xlu0 %v7185, 112
      %v8019 = vpop.permute.xlu0 %8018
      %8020 = vrot.lane.b32.xlu0 %v7186, 112
      %v8021 = vpop.permute.xlu0 %8020
      %8022 = vrot.lane.b32.xlu0 %v7187, 112
      %v8023 = vpop.permute.xlu0 %8022
      %8024 = vrot.lane.b32.xlu0 %v7188, 112
      %v8025 = vpop.permute.xlu0 %8024
      %8026 = vrot.lane.b32.xlu0 %v7189, 112
      %v8027 = vpop.permute.xlu0 %8026
      %8028 = vrot.lane.b32.xlu0 %v7190, 112
      %v8029 = vpop.permute.xlu0 %8028
      %8030 = vrot.lane.b32.xlu0 %v7191, 112
      %v8031 = vpop.permute.xlu0 %8030
      %8032 = vrot.lane.b32.xlu0 %v7192, 112
      %v8033 = vpop.permute.xlu0 %8032
      %8034 = vrot.lane.b32.xlu0 %v7193, 112
      %v8035 = vpop.permute.xlu0 %8034
      %8036 = vrot.lane.b32.xlu0 %v7194, 112
      %v8037 = vpop.permute.xlu0 %8036
      %8038 = vrot.lane.b32.xlu0 %v7195, 112
      %v8039 = vpop.permute.xlu0 %8038
      %8040 = vrot.lane.b32.xlu0 %v7196, 112
      %v8041 = vpop.permute.xlu0 %8040
      %8042 = vrot.lane.b32.xlu0 %v7197, 112
      %v8043 = vpop.permute.xlu0 %8042
      %8044 = vrot.lane.b32.xlu0 %v7198, 112
      %v8045 = vpop.permute.xlu0 %8044
      %8046 = vrot.lane.b32.xlu0 %v7199, 112
      %v8047 = vpop.permute.xlu0 %8046
      %8048 = vrot.lane.b32.xlu0 %v7200, 112
      %v8049 = vpop.permute.xlu0 %8048
      %8050 = vrot.lane.b32.xlu0 %v7201, 112
      %v8051 = vpop.permute.xlu0 %8050
      %8052 = vrot.lane.b32.xlu0 %v7202, 112
      %v8053 = vpop.permute.xlu0 %8052
      %8054 = vrot.lane.b32.xlu0 %v7203, 112
      %v8055 = vpop.permute.xlu0 %8054
      %8056 = vrot.lane.b32.xlu0 %v7204, 112
      %v8057 = vpop.permute.xlu0 %8056
      %8058 = vrot.lane.b32.xlu0 %v7205, 112
      %v8059 = vpop.permute.xlu0 %8058
      %8060 = vrot.lane.b32.xlu0 %v7206, 112
      %v8061 = vpop.permute.xlu0 %8060
      %8062 = vrot.lane.b32.xlu0 %v7207, 112
      %v8063 = vpop.permute.xlu0 %8062
      %8064 = vrot.lane.b32.xlu0 %v7208, 112
      %v8065 = vpop.permute.xlu0 %8064
      %8066 = vrot.lane.b32.xlu0 %v7209, 112
      %v8067 = vpop.permute.xlu0 %8066
      %8068 = vrot.lane.b32.xlu0 %v7210, 112
      %v8069 = vpop.permute.xlu0 %8068
      %8070 = vrot.lane.b32.xlu0 %v7211, 112
      %v8071 = vpop.permute.xlu0 %8070
      %8072 = vrot.lane.b32.xlu0 %v7212, 112
      %v8073 = vpop.permute.xlu0 %8072
      %8074 = vrot.lane.b32.xlu0 %v7213, 112
      %v8075 = vpop.permute.xlu0 %8074
      %8076 = vrot.lane.b32.xlu0 %v7214, 112
      %v8077 = vpop.permute.xlu0 %8076
      %8078 = vrot.lane.b32.xlu0 %v7215, 112
      %v8079 = vpop.permute.xlu0 %8078
      %v8112 = vsel %vm5521, %v6895, %v7281
      %v8113 = vsel %vm5521, %v6896, %v7283
      %v8114 = vsel %vm5521, %v6897, %v7285
      %v8115 = vsel %vm5521, %v6898, %v7287
      %v8116 = vsel %vm5521, %v6899, %v7289
      %v8117 = vsel %vm5521, %v6900, %v7291
      %v8118 = vsel %vm5521, %v6901, %v7293
      %v8119 = vsel %vm5521, %v6902, %v7295
      %v8120 = vsel %vm5521, %v6903, %v7297
      %v8121 = vsel %vm5521, %v6904, %v7299
      %v8122 = vsel %vm5521, %v6905, %v7301
      %v8123 = vsel %vm5521, %v6906, %v7303
      %v8124 = vsel %vm5521, %v6907, %v7305
      %v8125 = vsel %vm5521, %v6908, %v7307
      %v8126 = vsel %vm5521, %v6909, %v7309
      %v8127 = vsel %vm5521, %v6910, %v7311
      %v8128 = vsel %vm5521, %v6911, %v7313
      %v8129 = vsel %vm5521, %v6912, %v7315
      %v8130 = vsel %vm5521, %v6913, %v7317
      %v8131 = vsel %vm5521, %v6914, %v7319
      %v8132 = vsel %vm5521, %v6915, %v7321
      %v8133 = vsel %vm5521, %v6916, %v7323
      %v8134 = vsel %vm5521, %v6917, %v7325
      %v8135 = vsel %vm5521, %v6918, %v7327
      %v8136 = vsel %vm5521, %v6919, %v7329
      %v8137 = vsel %vm5521, %v6920, %v7331
      %v8138 = vsel %vm5521, %v6921, %v7333
      %v8139 = vsel %vm5521, %v6922, %v7335
      %v8140 = vsel %vm5521, %v6923, %v7337
      %v8141 = vsel %vm5521, %v6924, %v7339
      %v8142 = vsel %vm5521, %v6925, %v7341
      %v8143 = vsel %vm5521, %v6926, %v7343
      %v8144 = vsel %vm5554, %v8112, %v7409
      %v8145 = vsel %vm5554, %v8113, %v7411
      %v8146 = vsel %vm5554, %v8114, %v7413
      %v8147 = vsel %vm5554, %v8115, %v7415
      %v8148 = vsel %vm5554, %v8116, %v7417
      %v8149 = vsel %vm5554, %v8117, %v7419
      %v8150 = vsel %vm5554, %v8118, %v7421
      %v8151 = vsel %vm5554, %v8119, %v7423
      %v8152 = vsel %vm5554, %v8120, %v7425
      %v8153 = vsel %vm5554, %v8121, %v7427
      %v8154 = vsel %vm5554, %v8122, %v7429
      %v8155 = vsel %vm5554, %v8123, %v7431
      %v8156 = vsel %vm5554, %v8124, %v7433
      %v8157 = vsel %vm5554, %v8125, %v7435
      %v8158 = vsel %vm5554, %v8126, %v7437
      %v8159 = vsel %vm5554, %v8127, %v7439
      %v8160 = vsel %vm5554, %v8128, %v7441
      %v8161 = vsel %vm5554, %v8129, %v7443
      %v8162 = vsel %vm5554, %v8130, %v7445
      %v8163 = vsel %vm5554, %v8131, %v7447
      %v8164 = vsel %vm5554, %v8132, %v7449
      %v8165 = vsel %vm5554, %v8133, %v7451
      %v8166 = vsel %vm5554, %v8134, %v7453
      %v8167 = vsel %vm5554, %v8135, %v7455
      %v8168 = vsel %vm5554, %v8136, %v7457
      %v8169 = vsel %vm5554, %v8137, %v7459
      %v8170 = vsel %vm5554, %v8138, %v7461
      %v8171 = vsel %vm5554, %v8139, %v7463
      %v8172 = vsel %vm5554, %v8140, %v7465
      %v8173 = vsel %vm5554, %v8141, %v7467
      %v8174 = vsel %vm5554, %v8142, %v7469
      %v8175 = vsel %vm5554, %v8143, %v7471
      %v8176 = vsel %vm5587, %v8144, %v7537
      %v8177 = vsel %vm5587, %v8145, %v7539
      %v8178 = vsel %vm5587, %v8146, %v7541
      %v8179 = vsel %vm5587, %v8147, %v7543
      %v8180 = vsel %vm5587, %v8148, %v7545
      %v8181 = vsel %vm5587, %v8149, %v7547
      %v8182 = vsel %vm5587, %v8150, %v7549
      %v8183 = vsel %vm5587, %v8151, %v7551
      %v8184 = vsel %vm5587, %v8152, %v7553
      %v8185 = vsel %vm5587, %v8153, %v7555
      %v8186 = vsel %vm5587, %v8154, %v7557
      %v8187 = vsel %vm5587, %v8155, %v7559
      %v8188 = vsel %vm5587, %v8156, %v7561
      %v8189 = vsel %vm5587, %v8157, %v7563
      %v8190 = vsel %vm5587, %v8158, %v7565
      %v8191 = vsel %vm5587, %v8159, %v7567
      %v8192 = vsel %vm5587, %v8160, %v7569
      %v8193 = vsel %vm5587, %v8161, %v7571
      %v8194 = vsel %vm5587, %v8162, %v7573
      %v8195 = vsel %vm5587, %v8163, %v7575
      %v8196 = vsel %vm5587, %v8164, %v7577
      %v8197 = vsel %vm5587, %v8165, %v7579
      %v8198 = vsel %vm5587, %v8166, %v7581
      %v8199 = vsel %vm5587, %v8167, %v7583
      %v8200 = vsel %vm5587, %v8168, %v7585
      %v8201 = vsel %vm5587, %v8169, %v7587
      %v8202 = vsel %vm5587, %v8170, %v7589
      %v8203 = vsel %vm5587, %v8171, %v7591
      %v8204 = vsel %vm5587, %v8172, %v7593
      %v8205 = vsel %vm5587, %v8173, %v7595
      %v8206 = vsel %vm5587, %v8174, %v7597
      %v8207 = vsel %vm5587, %v8175, %v7599
      %v8208 = vsel %vm5620, %v8176, %v7633
      %v8209 = vsel %vm5620, %v8177, %v7635
      %v8210 = vsel %vm5620, %v8178, %v7637
      %v8211 = vsel %vm5620, %v8179, %v7639
      %v8212 = vsel %vm5620, %v8180, %v7641
      %v8213 = vsel %vm5620, %v8181, %v7643
      %v8214 = vsel %vm5620, %v8182, %v7645
      %v8215 = vsel %vm5620, %v8183, %v7647
      %v8216 = vsel %vm5620, %v8184, %v7649
      %v8217 = vsel %vm5620, %v8185, %v7651
      %v8218 = vsel %vm5620, %v8186, %v7653
      %v8219 = vsel %vm5620, %v8187, %v7655
      %v8220 = vsel %vm5620, %v8188, %v7657
      %v8221 = vsel %vm5620, %v8189, %v7659
      %v8222 = vsel %vm5620, %v8190, %v7661
      %v8223 = vsel %vm5620, %v8191, %v7663
      %v8224 = vsel %vm5620, %v8192, %v7665
      %v8225 = vsel %vm5620, %v8193, %v7667
      %v8226 = vsel %vm5620, %v8194, %v7669
      %v8227 = vsel %vm5620, %v8195, %v7671
      %v8228 = vsel %vm5620, %v8196, %v7673
      %v8229 = vsel %vm5620, %v8197, %v7675
      %v8230 = vsel %vm5620, %v8198, %v7677
      %v8231 = vsel %vm5620, %v8199, %v7679
      %v8232 = vsel %vm5620, %v8200, %v7681
      %v8233 = vsel %vm5620, %v8201, %v7683
      %v8234 = vsel %vm5620, %v8202, %v7685
      %v8235 = vsel %vm5620, %v8203, %v7687
      %v8236 = vsel %vm5620, %v8204, %v7689
      %v8237 = vsel %vm5620, %v8205, %v7691
      %v8238 = vsel %vm5620, %v8206, %v7693
      %v8239 = vsel %vm5620, %v8207, %v7695
      %v8240 = vsel %vm5653, %v8208, %v7761
      %v8241 = vsel %vm5653, %v8209, %v7763
      %v8242 = vsel %vm5653, %v8210, %v7765
      %v8243 = vsel %vm5653, %v8211, %v7767
      %v8244 = vsel %vm5653, %v8212, %v7769
      %v8245 = vsel %vm5653, %v8213, %v7771
      %v8246 = vsel %vm5653, %v8214, %v7773
      %v8247 = vsel %vm5653, %v8215, %v7775
      %v8248 = vsel %vm5653, %v8216, %v7777
      %v8249 = vsel %vm5653, %v8217, %v7779
      %v8250 = vsel %vm5653, %v8218, %v7781
      %v8251 = vsel %vm5653, %v8219, %v7783
      %v8252 = vsel %vm5653, %v8220, %v7785
      %v8253 = vsel %vm5653, %v8221, %v7787
      %v8254 = vsel %vm5653, %v8222, %v7789
      %v8255 = vsel %vm5653, %v8223, %v7791
      %v8256 = vsel %vm5653, %v8224, %v7793
      %v8257 = vsel %vm5653, %v8225, %v7795
      %v8258 = vsel %vm5653, %v8226, %v7797
      %v8259 = vsel %vm5653, %v8227, %v7799
      %v8260 = vsel %vm5653, %v8228, %v7801
      %v8261 = vsel %vm5653, %v8229, %v7803
      %v8262 = vsel %vm5653, %v8230, %v7805
      %v8263 = vsel %vm5653, %v8231, %v7807
      %v8264 = vsel %vm5653, %v8232, %v7809
      %v8265 = vsel %vm5653, %v8233, %v7811
      %v8266 = vsel %vm5653, %v8234, %v7813
      %v8267 = vsel %vm5653, %v8235, %v7815
      %v8268 = vsel %vm5653, %v8236, %v7817
      %v8269 = vsel %vm5653, %v8237, %v7819
      %v8270 = vsel %vm5653, %v8238, %v7821
      %v8271 = vsel %vm5653, %v8239, %v7823
      %v8272 = vsel %vm5686, %v8240, %v7889
      %v8273 = vsel %vm5686, %v8241, %v7891
      %v8274 = vsel %vm5686, %v8242, %v7893
      %v8275 = vsel %vm5686, %v8243, %v7895
      %v8276 = vsel %vm5686, %v8244, %v7897
      %v8277 = vsel %vm5686, %v8245, %v7899
      %v8278 = vsel %vm5686, %v8246, %v7901
      %v8279 = vsel %vm5686, %v8247, %v7903
      %v8280 = vsel %vm5686, %v8248, %v7905
      %v8281 = vsel %vm5686, %v8249, %v7907
      %v8282 = vsel %vm5686, %v8250, %v7909
      %v8283 = vsel %vm5686, %v8251, %v7911
      %v8284 = vsel %vm5686, %v8252, %v7913
      %v8285 = vsel %vm5686, %v8253, %v7915
      %v8286 = vsel %vm5686, %v8254, %v7917
      %v8287 = vsel %vm5686, %v8255, %v7919
      %v8288 = vsel %vm5686, %v8256, %v7921
      %v8289 = vsel %vm5686, %v8257, %v7923
      %v8290 = vsel %vm5686, %v8258, %v7925
      %v8291 = vsel %vm5686, %v8259, %v7927
      %v8292 = vsel %vm5686, %v8260, %v7929
      %v8293 = vsel %vm5686, %v8261, %v7931
      %v8294 = vsel %vm5686, %v8262, %v7933
      %v8295 = vsel %vm5686, %v8263, %v7935
      %v8296 = vsel %vm5686, %v8264, %v7937
      %v8297 = vsel %vm5686, %v8265, %v7939
      %v8298 = vsel %vm5686, %v8266, %v7941
      %v8299 = vsel %vm5686, %v8267, %v7943
      %v8300 = vsel %vm5686, %v8268, %v7945
      %v8301 = vsel %vm5686, %v8269, %v7947
      %v8302 = vsel %vm5686, %v8270, %v7949
      %v8303 = vsel %vm5686, %v8271, %v7951
      %v8304 = vsel %vm5719, %v8272, %v8017
      %v8305 = vsel %vm5719, %v8273, %v8019
      %v8306 = vsel %vm5719, %v8274, %v8021
      %v8307 = vsel %vm5719, %v8275, %v8023
      %v8308 = vsel %vm5719, %v8276, %v8025
      %v8309 = vsel %vm5719, %v8277, %v8027
      %v8310 = vsel %vm5719, %v8278, %v8029
      %v8311 = vsel %vm5719, %v8279, %v8031
      %v8312 = vsel %vm5719, %v8280, %v8033
      %v8313 = vsel %vm5719, %v8281, %v8035
      %v8314 = vsel %vm5719, %v8282, %v8037
      %v8315 = vsel %vm5719, %v8283, %v8039
      %v8316 = vsel %vm5719, %v8284, %v8041
      %v8317 = vsel %vm5719, %v8285, %v8043
      %v8318 = vsel %vm5719, %v8286, %v8045
      %v8319 = vsel %vm5719, %v8287, %v8047
      %v8320 = vsel %vm5719, %v8288, %v8049
      %v8321 = vsel %vm5719, %v8289, %v8051
      %v8322 = vsel %vm5719, %v8290, %v8053
      %v8323 = vsel %vm5719, %v8291, %v8055
      %v8324 = vsel %vm5719, %v8292, %v8057
      %v8325 = vsel %vm5719, %v8293, %v8059
      %v8326 = vsel %vm5719, %v8294, %v8061
      %v8327 = vsel %vm5719, %v8295, %v8063
      %v8328 = vsel %vm5719, %v8296, %v8065
      %v8329 = vsel %vm5719, %v8297, %v8067
      %v8330 = vsel %vm5719, %v8298, %v8069
      %v8331 = vsel %vm5719, %v8299, %v8071
      %v8332 = vsel %vm5719, %v8300, %v8073
      %v8333 = vsel %vm5719, %v8301, %v8075
      %v8334 = vsel %vm5719, %v8302, %v8077
      %v8335 = vsel %vm5719, %v8303, %v8079
      %8354 = vrot.lane.b32.xlu0 %v394, 124
      %v8355 = vpop.permute.xlu0 %8354
      %8356 = vrot.lane.b32.xlu0 %v395, 124
      %v8357 = vpop.permute.xlu0 %8356
      %8358 = vrot.lane.b32.xlu0 %v396, 124
      %v8359 = vpop.permute.xlu0 %8358
      %8360 = vrot.lane.b32.xlu0 %v397, 124
      %v8361 = vpop.permute.xlu0 %8360
      %8362 = vrot.lane.b32.xlu0 %v398, 124
      %v8363 = vpop.permute.xlu0 %8362
      %8364 = vrot.lane.b32.xlu0 %v399, 124
      %v8365 = vpop.permute.xlu0 %8364
      %8366 = vrot.lane.b32.xlu0 %v400, 124
      %v8367 = vpop.permute.xlu0 %8366
      %8368 = vrot.lane.b32.xlu0 %v401, 124
      %v8369 = vpop.permute.xlu0 %8368
      %8370 = vrot.lane.b32.xlu0 %v402, 124
      %v8371 = vpop.permute.xlu0 %8370
      %8372 = vrot.lane.b32.xlu0 %v403, 124
      %v8373 = vpop.permute.xlu0 %8372
      %8374 = vrot.lane.b32.xlu0 %v404, 124
      %v8375 = vpop.permute.xlu0 %8374
      %8376 = vrot.lane.b32.xlu0 %v405, 124
      %v8377 = vpop.permute.xlu0 %8376
      %8378 = vrot.lane.b32.xlu0 %v406, 124
      %v8379 = vpop.permute.xlu0 %8378
      %8380 = vrot.lane.b32.xlu0 %v407, 124
      %v8381 = vpop.permute.xlu0 %8380
      %8382 = vrot.lane.b32.xlu0 %v408, 124
      %v8383 = vpop.permute.xlu0 %8382
      %8384 = vrot.lane.b32.xlu0 %v409, 124
      %v8385 = vpop.permute.xlu0 %8384
      %8386 = vrot.lane.b32.xlu0 %v410, 124
      %v8387 = vpop.permute.xlu0 %8386
      %8388 = vrot.lane.b32.xlu0 %v411, 124
      %v8389 = vpop.permute.xlu0 %8388
      %v8409 = vsel %vm5521, %v7216, 0
      %v8412 = vsel %vm5521, %v7217, 0
      %v8415 = vsel %vm5521, %v7218, 0
      %v8418 = vsel %vm5521, %v7219, 0
      %v8421 = vsel %vm5521, %v7220, 0
      %v8424 = vsel %vm5521, %v7221, 0
      %v8427 = vsel %vm5521, %v7222, 0
      %v8430 = vsel %vm5521, %v7223, 0
      %v8433 = vsel %vm5521, %v7224, 0
      %v8436 = vsel %vm5521, %v7225, 0
      %v8439 = vsel %vm5521, %v7226, 0
      %v8442 = vsel %vm5521, %v7227, 0
      %v8445 = vsel %vm5521, %v7228, 0
      %v8448 = vsel %vm5521, %v7229, 0
      %v8451 = vsel %vm5521, %v7230, 0
      %v8454 = vsel %vm5521, %v7231, 0
      %v8457 = vsel %vm5521, %v7232, 0
      %v8460 = vsel %vm5521, %v7233, 0
      %v8463 = vsel %vm5521, %v7234, 0
      %v8466 = vsel %vm5521, %v7235, 0
      %v8469 = vsel %vm5521, %v7236, 0
      %v8472 = vsel %vm5521, %v7237, 0
      %v8475 = vsel %vm5521, %v7238, 0
      %v8478 = vsel %vm5521, %v7239, 0
      %v8481 = vsel %vm5521, %v7240, 0
      %v8484 = vsel %vm5521, %v7241, 0
      %v8487 = vsel %vm5521, %v7242, 0
      %v8490 = vsel %vm5521, %v7243, 0
      %v8493 = vsel %vm5521, %v7244, 0
      %v8496 = vsel %vm5521, %v7245, 0
      %v8499 = vsel %vm5521, %v7246, 0
      %v8502 = vsel %vm5521, %v7247, 0
      %8504 = vmatprep.subr.mxu0 0.0
      %8505 = vmatpush1.msra.mxu0 %v8385
      %8506 = vmatprep.subr.mxu0 0.0
      %8507 = vmatpush1.msra.mxu0 %v8383
      %8508 = vmatprep.subr.mxu0 0.0
      %8509 = vmatpush1.msra.mxu0 %v8381
      %8510 = vmatprep.subr.mxu0 0.0
      %8511 = vmatpush1.msra.mxu0 %v8379
      %8512 = vmatprep.subr.mxu0 0.0
      %8513 = vmatpush1.msra.mxu0 %v8377
      %8514 = vmatprep.subr.mxu0 0.0
      %8515 = vmatpush1.msra.mxu0 %v8375
      %8516 = vmatprep.subr.mxu0 0.0
      %8517 = vmatpush1.msra.mxu0 %v8373
      %8518 = vmatprep.subr.mxu0 0.0
      %8519 = vmatpush1.msra.mxu0 %v8371
      %8520 = vmatprep.subr.mxu0 0.0
      %8521 = vmatpush1.msra.mxu0 %v8369
      %8522 = vmatprep.subr.mxu0 0.0
      %8523 = vmatpush1.msra.mxu0 %v8367
      %8524 = vmatprep.subr.mxu0 0.0
      %8525 = vmatpush1.msra.mxu0 %v8365
      %8526 = vmatprep.subr.mxu0 0.0
      %8527 = vmatpush1.msra.mxu0 %v8363
      %8528 = vmatprep.subr.mxu0 0.0
      %8529 = vmatpush1.msra.mxu0 %v8361
      %8530 = vmatprep.subr.mxu0 0.0
      %8531 = vmatpush1.msra.mxu0 %v8359
      %8532 = vmatprep.subr.mxu0 0.0
      %8533 = vmatpush1.msra.mxu0 %v8357
      %8534 = vmatprep.subr.mxu0 0.0
      %8535 = vmatpush1.msra.mxu0 %v8355
      %8536 = vmatprep.subr.mxu0 0.0
      %8537 = vmatpush2.msra.mxu0 0.0
      %8538 = vmatprep.subr.mxu0 0.0
      %8539 = vmatpush2.msra.mxu0 0.0
      %8540 = vmatprep.subr.mxu0 0.0
      %8541 = vmatpush2.msra.mxu0 0.0
      %8542 = vmatprep.subr.mxu0 0.0
      %8543 = vmatpush2.msra.mxu0 0.0
      %8544 = vmatprep.subr.mxu0 0.0
      %8545 = vmatpush2.msra.mxu0 0.0
      %8546 = vmatprep.subr.mxu0 0.0
      %8547 = vmatpush2.msra.mxu0 0.0
      %8548 = vmatprep.subr.mxu0 0.0
      %8549 = vmatpush2.msra.mxu0 0.0
      %8550 = vmatprep.subr.mxu0 0.0
      %8551 = vmatpush2.msra.mxu0 0.0
      %8552 = vmatprep.subr.mxu0 0.0
      %8553 = vmatpush2.msra.mxu0 0.0
      %8554 = vmatprep.subr.mxu0 0.0
      %8555 = vmatpush2.msra.mxu0 0.0
      %8556 = vmatprep.subr.mxu0 0.0
      %8557 = vmatpush2.msra.mxu0 0.0
      %8558 = vmatprep.subr.mxu0 0.0
      %8559 = vmatpush2.msra.mxu0 0.0
      %8560 = vmatprep.subr.mxu0 0.0
      %8561 = vmatpush2.msra.mxu0 0.0
      %8562 = vmatprep.subr.mxu0 0.0
      %8563 = vmatpush2.msra.mxu0 0.0
      %8564 = vmatprep.subr.mxu0 0.0
      %8565 = vmatpush2.msra.mxu0 %v8389
      %8566 = vmatprep.subr.mxu0 0.0
      %8567 = vmatpush2.msra.mxu0 %v8387
      %8568 = vmatprep.mubr.f32.mxu0 %v8409
      %8569 = vmatmul.mubr.f32.gmra.mxu0 %v8304
      %v8570 = vpop.f32.mrf.mxu0
      %v8571 = vadd.f32 0.0, %v8570
      %v8572 = vpop.f32.mrf.mxu0
      %8573 = vmatprep.mubr.f32.mxu0 %v8412
      %8574 = vmatmul.mubr.f32.gmra.mxu0 %v8305
      %v8575 = vpop.f32.mrf.mxu0
      %v8576 = vadd.f32 0.0, %v8575
      %v8577 = vpop.f32.mrf.mxu0
      %8578 = vmatprep.mubr.f32.mxu0 %v8415
      %8579 = vmatmul.mubr.f32.gmra.mxu0 %v8306
      %v8580 = vpop.f32.mrf.mxu0
      %v8581 = vadd.f32 0.0, %v8580
      %v8582 = vpop.f32.mrf.mxu0
      %8583 = vmatprep.mubr.f32.mxu0 %v8418
      %8584 = vmatmul.mubr.f32.gmra.mxu0 %v8307
      %v8585 = vpop.f32.mrf.mxu0
      %v8586 = vadd.f32 0.0, %v8585
      %v8587 = vpop.f32.mrf.mxu0
      %8588 = vmatprep.mubr.f32.mxu0 %v8421
      %8589 = vmatmul.mubr.f32.gmra.mxu0 %v8308
      %v8590 = vpop.f32.mrf.mxu0
      %v8591 = vadd.f32 0.0, %v8590
      %v8592 = vpop.f32.mrf.mxu0
      %8593 = vmatprep.mubr.f32.mxu0 %v8424
      %8594 = vmatmul.mubr.f32.gmra.mxu0 %v8309
      %v8595 = vpop.f32.mrf.mxu0
      %v8596 = vadd.f32 0.0, %v8595
      %v8597 = vpop.f32.mrf.mxu0
      %8598 = vmatprep.mubr.f32.mxu0 %v8427
      %8599 = vmatmul.mubr.f32.gmra.mxu0 %v8310
      %v8600 = vpop.f32.mrf.mxu0
      %v8601 = vadd.f32 0.0, %v8600
      %v8602 = vpop.f32.mrf.mxu0
      %8603 = vmatprep.mubr.f32.mxu0 %v8430
      %8604 = vmatmul.mubr.f32.gmra.mxu0 %v8311
      %v8605 = vpop.f32.mrf.mxu0
      %v8606 = vadd.f32 0.0, %v8605
      %v8607 = vpop.f32.mrf.mxu0
      %8608 = vmatprep.mubr.f32.mxu0 %v8433
      %8609 = vmatmul.mubr.f32.gmra.mxu0 %v8312
      %v8610 = vpop.f32.mrf.mxu0
      %v8611 = vadd.f32 0.0, %v8610
      %v8612 = vpop.f32.mrf.mxu0
      %8613 = vmatprep.mubr.f32.mxu0 %v8436
      %8614 = vmatmul.mubr.f32.gmra.mxu0 %v8313
      %v8615 = vpop.f32.mrf.mxu0
      %v8616 = vadd.f32 0.0, %v8615
      %v8617 = vpop.f32.mrf.mxu0
      %8618 = vmatprep.mubr.f32.mxu0 %v8439
      %8619 = vmatmul.mubr.f32.gmra.mxu0 %v8314
      %v8620 = vpop.f32.mrf.mxu0
      %v8621 = vadd.f32 0.0, %v8620
      %v8622 = vpop.f32.mrf.mxu0
      %8623 = vmatprep.mubr.f32.mxu0 %v8442
      %8624 = vmatmul.mubr.f32.gmra.mxu0 %v8315
      %v8625 = vpop.f32.mrf.mxu0
      %v8626 = vadd.f32 0.0, %v8625
      %v8627 = vpop.f32.mrf.mxu0
      %8628 = vmatprep.mubr.f32.mxu0 %v8445
      %8629 = vmatmul.mubr.f32.gmra.mxu0 %v8316
      %v8630 = vpop.f32.mrf.mxu0
      %v8631 = vadd.f32 0.0, %v8630
      %v8632 = vpop.f32.mrf.mxu0
      %8633 = vmatprep.mubr.f32.mxu0 %v8448
      %8634 = vmatmul.mubr.f32.gmra.mxu0 %v8317
      %v8635 = vpop.f32.mrf.mxu0
      %v8636 = vadd.f32 0.0, %v8635
      %v8637 = vpop.f32.mrf.mxu0
      %8638 = vmatprep.mubr.f32.mxu0 %v8451
      %8639 = vmatmul.mubr.f32.gmra.mxu0 %v8318
      %v8640 = vpop.f32.mrf.mxu0
      %v8641 = vadd.f32 0.0, %v8640
      %v8642 = vpop.f32.mrf.mxu0
      %8643 = vmatprep.mubr.f32.mxu0 %v8454
      %8644 = vmatmul.mubr.f32.gmra.mxu0 %v8319
      %v8645 = vpop.f32.mrf.mxu0
      %v8646 = vadd.f32 0.0, %v8645
      %v8647 = vpop.f32.mrf.mxu0
      %8648 = vmatprep.mubr.f32.mxu0 %v8457
      %8649 = vmatmul.mubr.f32.gmra.mxu0 %v8320
      %v8650 = vpop.f32.mrf.mxu0
      %v8651 = vadd.f32 0.0, %v8650
      %v8652 = vpop.f32.mrf.mxu0
      %8653 = vmatprep.mubr.f32.mxu0 %v8460
      %8654 = vmatmul.mubr.f32.gmra.mxu0 %v8321
      %v8655 = vpop.f32.mrf.mxu0
      %v8656 = vadd.f32 0.0, %v8655
      %v8657 = vpop.f32.mrf.mxu0
      %8658 = vmatprep.mubr.f32.mxu0 %v8463
      %8659 = vmatmul.mubr.f32.gmra.mxu0 %v8322
      %v8660 = vpop.f32.mrf.mxu0
      %v8661 = vadd.f32 0.0, %v8660
      %v8662 = vpop.f32.mrf.mxu0
      %8663 = vmatprep.mubr.f32.mxu0 %v8466
      %8664 = vmatmul.mubr.f32.gmra.mxu0 %v8323
      %v8665 = vpop.f32.mrf.mxu0
      %v8666 = vadd.f32 0.0, %v8665
      %v8667 = vpop.f32.mrf.mxu0
      %8668 = vmatprep.mubr.f32.mxu0 %v8469
      %8669 = vmatmul.mubr.f32.gmra.mxu0 %v8324
      %v8670 = vpop.f32.mrf.mxu0
      %v8671 = vadd.f32 0.0, %v8670
      %v8672 = vpop.f32.mrf.mxu0
      %8673 = vmatprep.mubr.f32.mxu0 %v8472
      %8674 = vmatmul.mubr.f32.gmra.mxu0 %v8325
      %v8675 = vpop.f32.mrf.mxu0
      %v8676 = vadd.f32 0.0, %v8675
      %v8677 = vpop.f32.mrf.mxu0
      %8678 = vmatprep.mubr.f32.mxu0 %v8475
      %8679 = vmatmul.mubr.f32.gmra.mxu0 %v8326
      %v8680 = vpop.f32.mrf.mxu0
      %v8681 = vadd.f32 0.0, %v8680
      %v8682 = vpop.f32.mrf.mxu0
      %8683 = vmatprep.mubr.f32.mxu0 %v8478
      %8684 = vmatmul.mubr.f32.gmra.mxu0 %v8327
      %v8685 = vpop.f32.mrf.mxu0
      %v8686 = vadd.f32 0.0, %v8685
      %v8687 = vpop.f32.mrf.mxu0
      %8688 = vmatprep.mubr.f32.mxu0 %v8481
      %8689 = vmatmul.mubr.f32.gmra.mxu0 %v8328
      %v8690 = vpop.f32.mrf.mxu0
      %v8691 = vadd.f32 0.0, %v8690
      %v8692 = vpop.f32.mrf.mxu0
      %8693 = vmatprep.mubr.f32.mxu0 %v8484
      %8694 = vmatmul.mubr.f32.gmra.mxu0 %v8329
      %v8695 = vpop.f32.mrf.mxu0
      %v8696 = vadd.f32 0.0, %v8695
      %v8697 = vpop.f32.mrf.mxu0
      %8698 = vmatprep.mubr.f32.mxu0 %v8487
      %8699 = vmatmul.mubr.f32.gmra.mxu0 %v8330
      %v8700 = vpop.f32.mrf.mxu0
      %v8701 = vadd.f32 0.0, %v8700
      %v8702 = vpop.f32.mrf.mxu0
      %8703 = vmatprep.mubr.f32.mxu0 %v8490
      %8704 = vmatmul.mubr.f32.gmra.mxu0 %v8331
      %v8705 = vpop.f32.mrf.mxu0
      %v8706 = vadd.f32 0.0, %v8705
      %v8707 = vpop.f32.mrf.mxu0
      %8708 = vmatprep.mubr.f32.mxu0 %v8493
      %8709 = vmatmul.mubr.f32.gmra.mxu0 %v8332
      %v8710 = vpop.f32.mrf.mxu0
      %v8711 = vadd.f32 0.0, %v8710
      %v8712 = vpop.f32.mrf.mxu0
      %8713 = vmatprep.mubr.f32.mxu0 %v8496
      %8714 = vmatmul.mubr.f32.gmra.mxu0 %v8333
      %v8715 = vpop.f32.mrf.mxu0
      %v8716 = vadd.f32 0.0, %v8715
      %v8717 = vpop.f32.mrf.mxu0
      %8718 = vmatprep.mubr.f32.mxu0 %v8499
      %8719 = vmatmul.mubr.f32.gmra.mxu0 %v8334
      %v8720 = vpop.f32.mrf.mxu0
      %v8721 = vadd.f32 0.0, %v8720
      %v8722 = vpop.f32.mrf.mxu0
      %8723 = vmatprep.mubr.f32.mxu0 %v8502
      %8724 = vmatmul.mubr.f32.gmra.mxu0 %v8335
      %v8725 = vpop.f32.mrf.mxu0
      %v8726 = vadd.f32 0.0, %v8725
      %v8727 = vpop.f32.mrf.mxu0
      %8728 = vdwg.mxu0
      %8761 = vrot.lane.b32.xlu0 %v8571, 12
      %v8762 = vpop.permute.xlu0 %8761
      %8763 = vrot.lane.b32.xlu0 %v8576, 12
      %v8764 = vpop.permute.xlu0 %8763
      %8765 = vrot.lane.b32.xlu0 %v8581, 12
      %v8766 = vpop.permute.xlu0 %8765
      %8767 = vrot.lane.b32.xlu0 %v8586, 12
      %v8768 = vpop.permute.xlu0 %8767
      %8769 = vrot.lane.b32.xlu0 %v8591, 12
      %v8770 = vpop.permute.xlu0 %8769
      %8771 = vrot.lane.b32.xlu0 %v8596, 12
      %v8772 = vpop.permute.xlu0 %8771
      %8773 = vrot.lane.b32.xlu0 %v8601, 12
      %v8774 = vpop.permute.xlu0 %8773
      %8775 = vrot.lane.b32.xlu0 %v8606, 12
      %v8776 = vpop.permute.xlu0 %8775
      %8777 = vrot.lane.b32.xlu0 %v8611, 12
      %v8778 = vpop.permute.xlu0 %8777
      %8779 = vrot.lane.b32.xlu0 %v8616, 12
      %v8780 = vpop.permute.xlu0 %8779
      %8781 = vrot.lane.b32.xlu0 %v8621, 12
      %v8782 = vpop.permute.xlu0 %8781
      %8783 = vrot.lane.b32.xlu0 %v8626, 12
      %v8784 = vpop.permute.xlu0 %8783
      %8785 = vrot.lane.b32.xlu0 %v8631, 12
      %v8786 = vpop.permute.xlu0 %8785
      %8787 = vrot.lane.b32.xlu0 %v8636, 12
      %v8788 = vpop.permute.xlu0 %8787
      %8789 = vrot.lane.b32.xlu0 %v8641, 12
      %v8790 = vpop.permute.xlu0 %8789
      %8791 = vrot.lane.b32.xlu0 %v8646, 12
      %v8792 = vpop.permute.xlu0 %8791
      %8793 = vrot.lane.b32.xlu0 %v8651, 12
      %v8794 = vpop.permute.xlu0 %8793
      %8795 = vrot.lane.b32.xlu0 %v8656, 12
      %v8796 = vpop.permute.xlu0 %8795
      %8797 = vrot.lane.b32.xlu0 %v8661, 12
      %v8798 = vpop.permute.xlu0 %8797
      %8799 = vrot.lane.b32.xlu0 %v8666, 12
      %v8800 = vpop.permute.xlu0 %8799
      %8801 = vrot.lane.b32.xlu0 %v8671, 12
      %v8802 = vpop.permute.xlu0 %8801
      %8803 = vrot.lane.b32.xlu0 %v8676, 12
      %v8804 = vpop.permute.xlu0 %8803
      %8805 = vrot.lane.b32.xlu0 %v8681, 12
      %v8806 = vpop.permute.xlu0 %8805
      %8807 = vrot.lane.b32.xlu0 %v8686, 12
      %v8808 = vpop.permute.xlu0 %8807
      %8809 = vrot.lane.b32.xlu0 %v8691, 12
      %v8810 = vpop.permute.xlu0 %8809
      %8811 = vrot.lane.b32.xlu0 %v8696, 12
      %v8812 = vpop.permute.xlu0 %8811
      %8813 = vrot.lane.b32.xlu0 %v8701, 12
      %v8814 = vpop.permute.xlu0 %8813
      %8815 = vrot.lane.b32.xlu0 %v8706, 12
      %v8816 = vpop.permute.xlu0 %8815
      %8817 = vrot.lane.b32.xlu0 %v8711, 12
      %v8818 = vpop.permute.xlu0 %8817
      %8819 = vrot.lane.b32.xlu0 %v8716, 12
      %v8820 = vpop.permute.xlu0 %8819
      %8821 = vrot.lane.b32.xlu0 %v8721, 12
      %v8822 = vpop.permute.xlu0 %8821
      %8823 = vrot.lane.b32.xlu0 %v8726, 12
      %v8824 = vpop.permute.xlu0 %8823
      %v8857 = vsel %vm3154, %v6201, %v8762
      %v8858 = vsel %vm3154, %v6202, %v8764
      %v8859 = vsel %vm3154, %v6203, %v8766
      %v8860 = vsel %vm3154, %v6204, %v8768
      %v8861 = vsel %vm3154, %v6205, %v8770
      %v8862 = vsel %vm3154, %v6206, %v8772
      %v8863 = vsel %vm3154, %v6207, %v8774
      %v8864 = vsel %vm3154, %v6208, %v8776
      %v8865 = vsel %vm3154, %v6209, %v8778
      %v8866 = vsel %vm3154, %v6210, %v8780
      %v8867 = vsel %vm3154, %v6211, %v8782
      %v8868 = vsel %vm3154, %v6212, %v8784
      %v8869 = vsel %vm3154, %v6213, %v8786
      %v8870 = vsel %vm3154, %v6214, %v8788
      %v8871 = vsel %vm3154, %v6215, %v8790
      %v8872 = vsel %vm3154, %v6216, %v8792
      %v8873 = vsel %vm3154, %v6217, %v8794
      %v8874 = vsel %vm3154, %v6218, %v8796
      %v8875 = vsel %vm3154, %v6219, %v8798
      %v8876 = vsel %vm3154, %v6220, %v8800
      %v8877 = vsel %vm3154, %v6221, %v8802
      %v8878 = vsel %vm3154, %v6222, %v8804
      %v8879 = vsel %vm3154, %v6223, %v8806
      %v8880 = vsel %vm3154, %v6224, %v8808
      %v8881 = vsel %vm3154, %v6225, %v8810
      %v8882 = vsel %vm3154, %v6226, %v8812
      %v8883 = vsel %vm3154, %v6227, %v8814
      %v8884 = vsel %vm3154, %v6228, %v8816
      %v8885 = vsel %vm3154, %v6229, %v8818
      %v8886 = vsel %vm3154, %v6230, %v8820
      %v8887 = vsel %vm3154, %v6231, %v8822
      %v8888 = vsel %vm3154, %v6232, %v8824
      %v8889 = vld [vmem:[%s9] sm:$0xff]
      %v8890 = vld [vmem:[%s9 + $0x8] sm:$0xff]
      %v8891 = vld [vmem:[%s9 + $0x10] sm:$0xff]
      %v8892 = vld [vmem:[%s9 + $0x18] sm:$0xff]
      %v8893 = vld [vmem:[%s9 + $0x20] sm:$0xff]
      %v8894 = vld [vmem:[%s9 + $0x28] sm:$0xff]
      %v8895 = vld [vmem:[%s9 + $0x30] sm:$0xff]
      %v8896 = vld [vmem:[%s9 + $0x38] sm:$0xff]
      %v8897 = vld [vmem:[%s9 + $0x40] sm:$0xff]
      %v8898 = vld [vmem:[%s9 + $0x48] sm:$0xff]
      %v8899 = vld [vmem:[%s9 + $0x50] sm:$0xff]
      %v8900 = vld [vmem:[%s9 + $0x58] sm:$0xff]
      %v8901 = vld [vmem:[%s9 + $0x60] sm:$0xff]
      %v8902 = vld [vmem:[%s9 + $0x68] sm:$0xff]
      %v8903 = vld [vmem:[%s9 + $0x70] sm:$0xff]
      %v8904 = vld [vmem:[%s9 + $0x78] sm:$0xff]
      %v8905 = vlaneseq
      %v8906 = vshrl.u32 %v8905, 7
      %v8907 = vsub.s32 4, %v8906
      %v8908 = vrot.slane %v412, %v8907
      %v8909 = vmul.f32 %v8857, %v8908
      %v8910 = vmul.f32 %v8858, %v8908
      %v8911 = vmul.f32 %v8859, %v8908
      %v8912 = vmul.f32 %v8860, %v8908
      %v8913 = vmul.f32 %v8861, %v8908
      %v8914 = vmul.f32 %v8862, %v8908
      %v8915 = vmul.f32 %v8863, %v8908
      %v8916 = vmul.f32 %v8864, %v8908
      %v8917 = vmul.f32 %v8865, %v8908
      %v8918 = vmul.f32 %v8866, %v8908
      %v8919 = vmul.f32 %v8867, %v8908
      %v8920 = vmul.f32 %v8868, %v8908
      %v8921 = vmul.f32 %v8869, %v8908
      %v8922 = vmul.f32 %v8870, %v8908
      %v8923 = vmul.f32 %v8871, %v8908
      %v8924 = vmul.f32 %v8872, %v8908
      %v8925 = vmul.f32 %v8873, %v8908
      %v8926 = vmul.f32 %v8874, %v8908
      %v8927 = vmul.f32 %v8875, %v8908
      %v8928 = vmul.f32 %v8876, %v8908
      %v8929 = vmul.f32 %v8877, %v8908
      %v8930 = vmul.f32 %v8878, %v8908
      %v8931 = vmul.f32 %v8879, %v8908
      %v8932 = vmul.f32 %v8880, %v8908
      %v8933 = vmul.f32 %v8881, %v8908
      %v8934 = vmul.f32 %v8882, %v8908
      %v8935 = vmul.f32 %v8883, %v8908
      %v8936 = vmul.f32 %v8884, %v8908
      %v8937 = vmul.f32 %v8885, %v8908
      %v8938 = vmul.f32 %v8886, %v8908
      %v8939 = vmul.f32 %v8887, %v8908
      %v8940 = vmul.f32 %v8888, %v8908
      %v8941 = vlaneseq
      %v8942 = vshrl.u32 %v8941, 7
      %v8943 = vsub.s32 4, %v8942
      %v8944 = vrot.slane %v415, %v8943
      %v8945 = vadd.f32 %v8909, %v8944
      %v8946 = vadd.f32 %v8910, %v8944
      %v8947 = vadd.f32 %v8911, %v8944
      %v8948 = vadd.f32 %v8912, %v8944
      %v8949 = vadd.f32 %v8913, %v8944
      %v8950 = vadd.f32 %v8914, %v8944
      %v8951 = vadd.f32 %v8915, %v8944
      %v8952 = vadd.f32 %v8916, %v8944
      %v8953 = vadd.f32 %v8917, %v8944
      %v8954 = vadd.f32 %v8918, %v8944
      %v8955 = vadd.f32 %v8919, %v8944
      %v8956 = vadd.f32 %v8920, %v8944
      %v8957 = vadd.f32 %v8921, %v8944
      %v8958 = vadd.f32 %v8922, %v8944
      %v8959 = vadd.f32 %v8923, %v8944
      %v8960 = vadd.f32 %v8924, %v8944
      %v8961 = vadd.f32 %v8925, %v8944
      %v8962 = vadd.f32 %v8926, %v8944
      %v8963 = vadd.f32 %v8927, %v8944
      %v8964 = vadd.f32 %v8928, %v8944
      %v8965 = vadd.f32 %v8929, %v8944
      %v8966 = vadd.f32 %v8930, %v8944
      %v8967 = vadd.f32 %v8931, %v8944
      %v8968 = vadd.f32 %v8932, %v8944
      %v8969 = vadd.f32 %v8933, %v8944
      %v8970 = vadd.f32 %v8934, %v8944
      %v8971 = vadd.f32 %v8935, %v8944
      %v8972 = vadd.f32 %v8936, %v8944
      %v8973 = vadd.f32 %v8937, %v8944
      %v8974 = vadd.f32 %v8938, %v8944
      %v8975 = vadd.f32 %v8939, %v8944
      %v8976 = vadd.f32 %v8940, %v8944
      %v8977 = vmax.f32 %v8945, 0.0
      %v8978 = vmax.f32 %v8946, 0.0
      %v8979 = vmax.f32 %v8947, 0.0
      %v8980 = vmax.f32 %v8948, 0.0
      %v8981 = vmax.f32 %v8949, 0.0
      %v8982 = vmax.f32 %v8950, 0.0
      %v8983 = vmax.f32 %v8951, 0.0
      %v8984 = vmax.f32 %v8952, 0.0
      %v8985 = vmax.f32 %v8953, 0.0
      %v8986 = vmax.f32 %v8954, 0.0
      %v8987 = vmax.f32 %v8955, 0.0
      %v8988 = vmax.f32 %v8956, 0.0
      %v8989 = vmax.f32 %v8957, 0.0
      %v8990 = vmax.f32 %v8958, 0.0
      %v8991 = vmax.f32 %v8959, 0.0
      %v8992 = vmax.f32 %v8960, 0.0
      %v8993 = vmax.f32 %v8961, 0.0
      %v8994 = vmax.f32 %v8962, 0.0
      %v8995 = vmax.f32 %v8963, 0.0
      %v8996 = vmax.f32 %v8964, 0.0
      %v8997 = vmax.f32 %v8965, 0.0
      %v8998 = vmax.f32 %v8966, 0.0
      %v8999 = vmax.f32 %v8967, 0.0
      %v9000 = vmax.f32 %v8968, 0.0
      %v9001 = vmax.f32 %v8969, 0.0
      %v9002 = vmax.f32 %v8970, 0.0
      %v9003 = vmax.f32 %v8971, 0.0
      %v9004 = vmax.f32 %v8972, 0.0
      %v9005 = vmax.f32 %v8973, 0.0
      %v9006 = vmax.f32 %v8974, 0.0
      %v9007 = vmax.f32 %v8975, 0.0
      %v9008 = vmax.f32 %v8976, 0.0
      %v9010 = vsel %vm5521, %v8977, 0
      %v9013 = vsel %vm5521, %v8978, 0
      %v9016 = vsel %vm5521, %v8979, 0
      %v9019 = vsel %vm5521, %v8980, 0
      %v9022 = vsel %vm5521, %v8981, 0
      %v9025 = vsel %vm5521, %v8982, 0
      %v9028 = vsel %vm5521, %v8983, 0
      %v9031 = vsel %vm5521, %v8984, 0
      %v9034 = vsel %vm5521, %v8985, 0
      %v9037 = vsel %vm5521, %v8986, 0
      %v9040 = vsel %vm5521, %v8987, 0
      %v9043 = vsel %vm5521, %v8988, 0
      %v9046 = vsel %vm5521, %v8989, 0
      %v9049 = vsel %vm5521, %v8990, 0
      %v9052 = vsel %vm5521, %v8991, 0
      %v9055 = vsel %vm5521, %v8992, 0
      %v9058 = vsel %vm5521, %v8993, 0
      %v9061 = vsel %vm5521, %v8994, 0
      %v9064 = vsel %vm5521, %v8995, 0
      %v9067 = vsel %vm5521, %v8996, 0
      %v9070 = vsel %vm5521, %v8997, 0
      %v9073 = vsel %vm5521, %v8998, 0
      %v9076 = vsel %vm5521, %v8999, 0
      %v9079 = vsel %vm5521, %v9000, 0
      %v9082 = vsel %vm5521, %v9001, 0
      %v9085 = vsel %vm5521, %v9002, 0
      %v9088 = vsel %vm5521, %v9003, 0
      %v9091 = vsel %vm5521, %v9004, 0
      %v9094 = vsel %vm5521, %v9005, 0
      %v9097 = vsel %vm5521, %v9006, 0
      %v9100 = vsel %vm5521, %v9007, 0
      %v9103 = vsel %vm5521, %v9008, 0
      %9105 = vmatprep.subr.mxu0 0.0
      %9106 = vmatpush1.msra.mxu0 0.0
      %9107 = vmatprep.subr.mxu0 0.0
      %9108 = vmatpush1.msra.mxu0 0.0
      %9109 = vmatprep.subr.mxu0 0.0
      %9110 = vmatpush1.msra.mxu0 0.0
      %9111 = vmatprep.subr.mxu0 0.0
      %9112 = vmatpush1.msra.mxu0 0.0
      %9113 = vmatprep.subr.mxu0 0.0
      %9114 = vmatpush1.msra.mxu0 0.0
      %9115 = vmatprep.subr.mxu0 0.0
      %9116 = vmatpush1.msra.mxu0 0.0
      %9117 = vmatprep.subr.mxu0 0.0
      %9118 = vmatpush1.msra.mxu0 0.0
      %9119 = vmatprep.subr.mxu0 0.0
      %9120 = vmatpush1.msra.mxu0 0.0
      %9121 = vmatprep.subr.mxu0 0.0
      %9122 = vmatpush1.msra.mxu0 0.0
      %9123 = vmatprep.subr.mxu0 0.0
      %9124 = vmatpush1.msra.mxu0 0.0
      %9125 = vmatprep.subr.mxu0 0.0
      %9126 = vmatpush1.msra.mxu0 0.0
      %9127 = vmatprep.subr.mxu0 0.0
      %9128 = vmatpush1.msra.mxu0 0.0
      %9129 = vmatprep.subr.mxu0 0.0
      %9130 = vmatpush1.msra.mxu0 0.0
      %9131 = vmatprep.subr.mxu0 0.0
      %9132 = vmatpush1.msra.mxu0 0.0
      %9133 = vmatprep.subr.mxu0 0.0
      %9134 = vmatpush1.msra.mxu0 %v419
      %9135 = vmatprep.subr.mxu0 0.0
      %9136 = vmatpush1.msra.mxu0 %v418
      %9137 = vmatprep.subr.mxu0 0.0
      %9138 = vmatpush2.msra.mxu0 0.0
      %9139 = vmatprep.subr.mxu0 0.0
      %9140 = vmatpush2.msra.mxu0 0.0
      %9141 = vmatprep.subr.mxu0 0.0
      %9142 = vmatpush2.msra.mxu0 0.0
      %9143 = vmatprep.subr.mxu0 0.0
      %9144 = vmatpush2.msra.mxu0 0.0
      %9145 = vmatprep.subr.mxu0 0.0
      %9146 = vmatpush2.msra.mxu0 0.0
      %9147 = vmatprep.subr.mxu0 0.0
      %9148 = vmatpush2.msra.mxu0 0.0
      %9149 = vmatprep.subr.mxu0 0.0
      %9150 = vmatpush2.msra.mxu0 0.0
      %9151 = vmatprep.subr.mxu0 0.0
      %9152 = vmatpush2.msra.mxu0 0.0
      %9153 = vmatprep.subr.mxu0 0.0
      %9154 = vmatpush2.msra.mxu0 0.0
      %9155 = vmatprep.subr.mxu0 0.0
      %9156 = vmatpush2.msra.mxu0 0.0
      %9157 = vmatprep.subr.mxu0 0.0
      %9158 = vmatpush2.msra.mxu0 0.0
      %9159 = vmatprep.subr.mxu0 0.0
      %9160 = vmatpush2.msra.mxu0 0.0
      %9161 = vmatprep.subr.mxu0 0.0
      %9162 = vmatpush2.msra.mxu0 0.0
      %9163 = vmatprep.subr.mxu0 0.0
      %9164 = vmatpush2.msra.mxu0 0.0
      %9165 = vmatprep.subr.mxu0 0.0
      %9166 = vmatpush2.msra.mxu0 0.0
      %9167 = vmatprep.subr.mxu0 0.0
      %9168 = vmatpush2.msra.mxu0 0.0
      %9169 = vmatprep.mubr.f32.mxu0 0.0
      %9170 = vmatmul.mubr.f32.gmra.mxu0 %v9010
      %v9171 = vpop.f32.mrf.mxu0
      %v9172 = vadd.f32 0.0, %v9171
      %v9173 = vpop.f32.mrf.mxu0
      %9174 = vmatprep.mubr.f32.mxu0 0.0
      %9175 = vmatmul.mubr.f32.gmra.mxu0 %v9013
      %v9176 = vpop.f32.mrf.mxu0
      %v9177 = vadd.f32 0.0, %v9176
      %v9178 = vpop.f32.mrf.mxu0
      %9179 = vmatprep.mubr.f32.mxu0 0.0
      %9180 = vmatmul.mubr.f32.gmra.mxu0 %v9016
      %v9181 = vpop.f32.mrf.mxu0
      %v9182 = vadd.f32 0.0, %v9181
      %v9183 = vpop.f32.mrf.mxu0
      %9184 = vmatprep.mubr.f32.mxu0 0.0
      %9185 = vmatmul.mubr.f32.gmra.mxu0 %v9019
      %v9186 = vpop.f32.mrf.mxu0
      %v9187 = vadd.f32 0.0, %v9186
      %v9188 = vpop.f32.mrf.mxu0
      %9189 = vmatprep.mubr.f32.mxu0 0.0
      %9190 = vmatmul.mubr.f32.gmra.mxu0 %v9022
      %v9191 = vpop.f32.mrf.mxu0
      %v9192 = vadd.f32 0.0, %v9191
      %v9193 = vpop.f32.mrf.mxu0
      %9194 = vmatprep.mubr.f32.mxu0 0.0
      %9195 = vmatmul.mubr.f32.gmra.mxu0 %v9025
      %v9196 = vpop.f32.mrf.mxu0
      %v9197 = vadd.f32 0.0, %v9196
      %v9198 = vpop.f32.mrf.mxu0
      %9199 = vmatprep.mubr.f32.mxu0 0.0
      %9200 = vmatmul.mubr.f32.gmra.mxu0 %v9028
      %v9201 = vpop.f32.mrf.mxu0
      %v9202 = vadd.f32 0.0, %v9201
      %v9203 = vpop.f32.mrf.mxu0
      %9204 = vmatprep.mubr.f32.mxu0 0.0
      %9205 = vmatmul.mubr.f32.gmra.mxu0 %v9031
      %v9206 = vpop.f32.mrf.mxu0
      %v9207 = vadd.f32 0.0, %v9206
      %v9208 = vpop.f32.mrf.mxu0
      %9209 = vmatprep.mubr.f32.mxu0 0.0
      %9210 = vmatmul.mubr.f32.gmra.mxu0 %v9034
      %v9211 = vpop.f32.mrf.mxu0
      %v9212 = vadd.f32 0.0, %v9211
      %v9213 = vpop.f32.mrf.mxu0
      %9214 = vmatprep.mubr.f32.mxu0 0.0
      %9215 = vmatmul.mubr.f32.gmra.mxu0 %v9037
      %v9216 = vpop.f32.mrf.mxu0
      %v9217 = vadd.f32 0.0, %v9216
      %v9218 = vpop.f32.mrf.mxu0
      %9219 = vmatprep.mubr.f32.mxu0 0.0
      %9220 = vmatmul.mubr.f32.gmra.mxu0 %v9040
      %v9221 = vpop.f32.mrf.mxu0
      %v9222 = vadd.f32 0.0, %v9221
      %v9223 = vpop.f32.mrf.mxu0
      %9224 = vmatprep.mubr.f32.mxu0 0.0
      %9225 = vmatmul.mubr.f32.gmra.mxu0 %v9043
      %v9226 = vpop.f32.mrf.mxu0
      %v9227 = vadd.f32 0.0, %v9226
      %v9228 = vpop.f32.mrf.mxu0
      %9229 = vmatprep.mubr.f32.mxu0 0.0
      %9230 = vmatmul.mubr.f32.gmra.mxu0 %v9046
      %v9231 = vpop.f32.mrf.mxu0
      %v9232 = vadd.f32 0.0, %v9231
      %v9233 = vpop.f32.mrf.mxu0
      %9234 = vmatprep.mubr.f32.mxu0 0.0
      %9235 = vmatmul.mubr.f32.gmra.mxu0 %v9049
      %v9236 = vpop.f32.mrf.mxu0
      %v9237 = vadd.f32 0.0, %v9236
      %v9238 = vpop.f32.mrf.mxu0
      %9239 = vmatprep.mubr.f32.mxu0 0.0
      %9240 = vmatmul.mubr.f32.gmra.mxu0 %v9052
      %v9241 = vpop.f32.mrf.mxu0
      %v9242 = vadd.f32 0.0, %v9241
      %v9243 = vpop.f32.mrf.mxu0
      %9244 = vmatprep.mubr.f32.mxu0 0.0
      %9245 = vmatmul.mubr.f32.gmra.mxu0 %v9055
      %v9246 = vpop.f32.mrf.mxu0
      %v9247 = vadd.f32 0.0, %v9246
      %v9248 = vpop.f32.mrf.mxu0
      %9249 = vmatprep.mubr.f32.mxu0 0.0
      %9250 = vmatmul.mubr.f32.gmra.mxu0 %v9058
      %v9251 = vpop.f32.mrf.mxu0
      %v9252 = vadd.f32 0.0, %v9251
      %v9253 = vpop.f32.mrf.mxu0
      %9254 = vmatprep.mubr.f32.mxu0 0.0
      %9255 = vmatmul.mubr.f32.gmra.mxu0 %v9061
      %v9256 = vpop.f32.mrf.mxu0
      %v9257 = vadd.f32 0.0, %v9256
      %v9258 = vpop.f32.mrf.mxu0
      %9259 = vmatprep.mubr.f32.mxu0 0.0
      %9260 = vmatmul.mubr.f32.gmra.mxu0 %v9064
      %v9261 = vpop.f32.mrf.mxu0
      %v9262 = vadd.f32 0.0, %v9261
      %v9263 = vpop.f32.mrf.mxu0
      %9264 = vmatprep.mubr.f32.mxu0 0.0
      %9265 = vmatmul.mubr.f32.gmra.mxu0 %v9067
      %v9266 = vpop.f32.mrf.mxu0
      %v9267 = vadd.f32 0.0, %v9266
      %v9268 = vpop.f32.mrf.mxu0
      %9269 = vmatprep.mubr.f32.mxu0 0.0
      %9270 = vmatmul.mubr.f32.gmra.mxu0 %v9070
      %v9271 = vpop.f32.mrf.mxu0
      %v9272 = vadd.f32 0.0, %v9271
      %v9273 = vpop.f32.mrf.mxu0
      %9274 = vmatprep.mubr.f32.mxu0 0.0
      %9275 = vmatmul.mubr.f32.gmra.mxu0 %v9073
      %v9276 = vpop.f32.mrf.mxu0
      %v9277 = vadd.f32 0.0, %v9276
      %v9278 = vpop.f32.mrf.mxu0
      %9279 = vmatprep.mubr.f32.mxu0 0.0
      %9280 = vmatmul.mubr.f32.gmra.mxu0 %v9076
      %v9281 = vpop.f32.mrf.mxu0
      %v9282 = vadd.f32 0.0, %v9281
      %v9283 = vpop.f32.mrf.mxu0
      %9284 = vmatprep.mubr.f32.mxu0 0.0
      %9285 = vmatmul.mubr.f32.gmra.mxu0 %v9079
      %v9286 = vpop.f32.mrf.mxu0
      %v9287 = vadd.f32 0.0, %v9286
      %v9288 = vpop.f32.mrf.mxu0
      %9289 = vmatprep.mubr.f32.mxu0 0.0
      %9290 = vmatmul.mubr.f32.gmra.mxu0 %v9082
      %v9291 = vpop.f32.mrf.mxu0
      %v9292 = vadd.f32 0.0, %v9291
      %v9293 = vpop.f32.mrf.mxu0
      %9294 = vmatprep.mubr.f32.mxu0 0.0
      %9295 = vmatmul.mubr.f32.gmra.mxu0 %v9085
      %v9296 = vpop.f32.mrf.mxu0
      %v9297 = vadd.f32 0.0, %v9296
      %v9298 = vpop.f32.mrf.mxu0
      %9299 = vmatprep.mubr.f32.mxu0 0.0
      %9300 = vmatmul.mubr.f32.gmra.mxu0 %v9088
      %v9301 = vpop.f32.mrf.mxu0
      %v9302 = vadd.f32 0.0, %v9301
      %v9303 = vpop.f32.mrf.mxu0
      %9304 = vmatprep.mubr.f32.mxu0 0.0
      %9305 = vmatmul.mubr.f32.gmra.mxu0 %v9091
      %v9306 = vpop.f32.mrf.mxu0
      %v9307 = vadd.f32 0.0, %v9306
      %v9308 = vpop.f32.mrf.mxu0
      %9309 = vmatprep.mubr.f32.mxu0 0.0
      %9310 = vmatmul.mubr.f32.gmra.mxu0 %v9094
      %v9311 = vpop.f32.mrf.mxu0
      %v9312 = vadd.f32 0.0, %v9311
      %v9313 = vpop.f32.mrf.mxu0
      %9314 = vmatprep.mubr.f32.mxu0 0.0
      %9315 = vmatmul.mubr.f32.gmra.mxu0 %v9097
      %v9316 = vpop.f32.mrf.mxu0
      %v9317 = vadd.f32 0.0, %v9316
      %v9318 = vpop.f32.mrf.mxu0
      %9319 = vmatprep.mubr.f32.mxu0 0.0
      %9320 = vmatmul.mubr.f32.gmra.mxu0 %v9100
      %v9321 = vpop.f32.mrf.mxu0
      %v9322 = vadd.f32 0.0, %v9321
      %v9323 = vpop.f32.mrf.mxu0
      %9324 = vmatprep.mubr.f32.mxu0 0.0
      %9325 = vmatmul.mubr.f32.gmra.mxu0 %v9103
      %v9326 = vpop.f32.mrf.mxu0
      %v9327 = vadd.f32 0.0, %v9326
      %v9328 = vpop.f32.mrf.mxu0
      %9329 = vdwg.mxu0
      %9330 = vmatprep.subr.mxu0 0.0
      %9331 = vmatpush1.msra.mxu0 %v9247
      %9332 = vmatprep.subr.mxu0 0.0
      %9333 = vmatpush1.msra.mxu0 %v9242
      %9334 = vmatprep.subr.mxu0 0.0
      %9335 = vmatpush1.msra.mxu0 %v9237
      %9336 = vmatprep.subr.mxu0 0.0
      %9337 = vmatpush1.msra.mxu0 %v9232
      %9338 = vmatprep.subr.mxu0 0.0
      %9339 = vmatpush1.msra.mxu0 %v9227
      %9340 = vmatprep.subr.mxu0 0.0
      %9341 = vmatpush1.msra.mxu0 %v9222
      %9342 = vmatprep.subr.mxu0 0.0
      %9343 = vmatpush1.msra.mxu0 %v9217
      %9344 = vmatprep.subr.mxu0 0.0
      %9345 = vmatpush1.msra.mxu0 %v9212
      %9346 = vmatprep.subr.mxu0 0.0
      %9347 = vmatpush1.msra.mxu0 %v9207
      %9348 = vmatprep.subr.mxu0 0.0
      %9349 = vmatpush1.msra.mxu0 %v9202
      %9350 = vmatprep.subr.mxu0 0.0
      %9351 = vmatpush1.msra.mxu0 %v9197
      %9352 = vmatprep.subr.mxu0 0.0
      %9353 = vmatpush1.msra.mxu0 %v9192
      %9354 = vmatprep.subr.mxu0 0.0
      %9355 = vmatpush1.msra.mxu0 %v9187
      %9356 = vmatprep.subr.mxu0 0.0
      %9357 = vmatpush1.msra.mxu0 %v9182
      %9358 = vmatprep.subr.mxu0 0.0
      %9359 = vmatpush1.msra.mxu0 %v9177
      %9360 = vmatprep.subr.mxu0 0.0
      %9361 = vmatpush1.msra.mxu0 %v9172
      %9362 = vmatprep.subr.mxu0 0.0
      %9363 = vmatpush2.msra.mxu0 %v9327
      %9364 = vmatprep.subr.mxu0 0.0
      %9365 = vmatpush2.msra.mxu0 %v9322
      %9366 = vmatprep.subr.mxu0 0.0
      %9367 = vmatpush2.msra.mxu0 %v9317
      %9368 = vmatprep.subr.mxu0 0.0
      %9369 = vmatpush2.msra.mxu0 %v9312
      %9370 = vmatprep.subr.mxu0 0.0
      %9371 = vmatpush2.msra.mxu0 %v9307
      %9372 = vmatprep.subr.mxu0 0.0
      %9373 = vmatpush2.msra.mxu0 %v9302
      %9374 = vmatprep.subr.mxu0 0.0
      %9375 = vmatpush2.msra.mxu0 %v9297
      %9376 = vmatprep.subr.mxu0 0.0
      %9377 = vmatpush2.msra.mxu0 %v9292
      %9378 = vmatprep.subr.mxu0 0.0
      %9379 = vmatpush2.msra.mxu0 %v9287
      %9380 = vmatprep.subr.mxu0 0.0
      %9381 = vmatpush2.msra.mxu0 %v9282
      %9382 = vmatprep.subr.mxu0 0.0
      %9383 = vmatpush2.msra.mxu0 %v9277
      %9384 = vmatprep.subr.mxu0 0.0
      %9385 = vmatpush2.msra.mxu0 %v9272
      %9386 = vmatprep.subr.mxu0 0.0
      %9387 = vmatpush2.msra.mxu0 %v9267
      %9388 = vmatprep.subr.mxu0 0.0
      %9389 = vmatpush2.msra.mxu0 %v9262
      %9390 = vmatprep.subr.mxu0 0.0
      %9391 = vmatpush2.msra.mxu0 %v9257
      %9392 = vmatprep.subr.mxu0 0.0
      %9393 = vmatpush2.msra.mxu0 %v9252
      %9394 = vmatprep.mubr.f32.mxu0 %v8890
      %9395 = vmatmul.mubr.f32.gmra.mxu0 %v8889
      %v9396 = vpop.f32.mrf.mxu0
      %v9397 = vadd.f32 0.0, %v9396
      %v9398 = vpop.f32.mrf.mxu0
      %9399 = vmatprep.mubr.f32.mxu0 %v8892
      %9400 = vmatmul.mubr.f32.gmra.mxu0 %v8891
      %v9401 = vpop.f32.mrf.mxu0
      %v9402 = vadd.f32 0.0, %v9401
      %v9403 = vpop.f32.mrf.mxu0
      %9404 = vmatprep.mubr.f32.mxu0 %v8894
      %9405 = vmatmul.mubr.f32.gmra.mxu0 %v8893
      %v9406 = vpop.f32.mrf.mxu0
      %v9407 = vadd.f32 0.0, %v9406
      %v9408 = vpop.f32.mrf.mxu0
      %9409 = vmatprep.mubr.f32.mxu0 %v8896
      %9410 = vmatmul.mubr.f32.gmra.mxu0 %v8895
      %v9411 = vpop.f32.mrf.mxu0
      %v9412 = vadd.f32 0.0, %v9411
      %v9413 = vpop.f32.mrf.mxu0
      %9414 = vmatprep.mubr.f32.mxu0 %v8898
      %9415 = vmatmul.mubr.f32.gmra.mxu0 %v8897
      %v9416 = vpop.f32.mrf.mxu0
      %v9417 = vadd.f32 0.0, %v9416
      %v9418 = vpop.f32.mrf.mxu0
      %9419 = vmatprep.mubr.f32.mxu0 %v8900
      %9420 = vmatmul.mubr.f32.gmra.mxu0 %v8899
      %v9421 = vpop.f32.mrf.mxu0
      %v9422 = vadd.f32 0.0, %v9421
      %v9423 = vpop.f32.mrf.mxu0
      %9424 = vmatprep.mubr.f32.mxu0 %v8902
      %9425 = vmatmul.mubr.f32.gmra.mxu0 %v8901
      %v9426 = vpop.f32.mrf.mxu0
      %v9427 = vadd.f32 0.0, %v9426
      %v9428 = vpop.f32.mrf.mxu0
      %9429 = vmatprep.mubr.f32.mxu0 %v8904
      %9430 = vmatmul.mubr.f32.gmra.mxu0 %v8903
      %v9431 = vpop.f32.mrf.mxu0
      %v9432 = vadd.f32 0.0, %v9431
      %v9433 = vpop.f32.mrf.mxu0
      %9434 = vdwg.mxu0
      %v9435 = vlaneseq
      %v9436 = vshrl.u32 %v9435, 7
      %v9437 = vsub.s32 5, %v9436
      %v9438 = vrot.slane %v412, %v9437
      %v9439 = vmul.f32 %v9397, %v9438
      %v9440 = vmul.f32 %v9402, %v9438
      %v9441 = vmul.f32 %v9407, %v9438
      %v9442 = vmul.f32 %v9412, %v9438
      %v9443 = vmul.f32 %v9417, %v9438
      %v9444 = vmul.f32 %v9422, %v9438
      %v9445 = vmul.f32 %v9427, %v9438
      %v9446 = vmul.f32 %v9432, %v9438
      %v9447 = vlaneseq
      %v9448 = vshrl.u32 %v9447, 7
      %v9449 = vsub.s32 5, %v9448
      %v9450 = vrot.slane %v415, %v9449
      %v9451 = vadd.f32 %v9439, %v9450
      %v9452 = vadd.f32 %v9440, %v9450
      %v9453 = vadd.f32 %v9441, %v9450
      %v9454 = vadd.f32 %v9442, %v9450
      %v9455 = vadd.f32 %v9443, %v9450
      %v9456 = vadd.f32 %v9444, %v9450
      %v9457 = vadd.f32 %v9445, %v9450
      %v9458 = vadd.f32 %v9446, %v9450
      %v9459 = vmax.f32 %v9451, 0.0
      %v9460 = vmax.f32 %v9452, 0.0
      %v9461 = vmax.f32 %v9453, 0.0
      %v9462 = vmax.f32 %v9454, 0.0
      %v9463 = vmax.f32 %v9455, 0.0
      %v9464 = vmax.f32 %v9456, 0.0
      %v9465 = vmax.f32 %v9457, 0.0
      %v9466 = vmax.f32 %v9458, 0.0
      %v9468 = vsel %vm3749, %v9459, 0
      %v9471 = vsel %vm3749, %v9460, 0
      %v9474 = vsel %vm3749, %v9461, 0
      %v9477 = vsel %vm3749, %v9462, 0
      %v9480 = vsel %vm3749, %v9463, 0
      %v9483 = vsel %vm3749, %v9464, 0
      %v9486 = vsel %vm3749, %v9465, 0
      %v9489 = vsel %vm3749, %v9466, 0
      %9491 = vmatprep.subr.mxu0 0.0
      %9492 = vmatpush1.msra.mxu0 0.0
      %9493 = vmatprep.subr.mxu0 0.0
      %9494 = vmatpush1.msra.mxu0 0.0
      %9495 = vmatprep.subr.mxu0 0.0
      %9496 = vmatpush1.msra.mxu0 0.0
      %9497 = vmatprep.subr.mxu0 0.0
      %9498 = vmatpush1.msra.mxu0 0.0
      %9499 = vmatprep.subr.mxu0 0.0
      %9500 = vmatpush1.msra.mxu0 0.0
      %9501 = vmatprep.subr.mxu0 0.0
      %9502 = vmatpush1.msra.mxu0 0.0
      %9503 = vmatprep.subr.mxu0 0.0
      %9504 = vmatpush1.msra.mxu0 0.0
      %9505 = vmatprep.subr.mxu0 0.0
      %9506 = vmatpush1.msra.mxu0 0.0
      %9507 = vmatprep.subr.mxu0 0.0
      %9508 = vmatpush1.msra.mxu0 0.0
      %9509 = vmatprep.subr.mxu0 0.0
      %9510 = vmatpush1.msra.mxu0 0.0
      %9511 = vmatprep.subr.mxu0 0.0
      %9512 = vmatpush1.msra.mxu0 0.0
      %9513 = vmatprep.subr.mxu0 0.0
      %9514 = vmatpush1.msra.mxu0 0.0
      %9515 = vmatprep.subr.mxu0 0.0
      %9516 = vmatpush1.msra.mxu0 0.0
      %9517 = vmatprep.subr.mxu0 0.0
      %9518 = vmatpush1.msra.mxu0 0.0
      %9519 = vmatprep.subr.mxu0 0.0
      %9520 = vmatpush1.msra.mxu0 0.0
      %9521 = vmatprep.subr.mxu0 0.0
      %9522 = vmatpush1.msra.mxu0 %v388
      %9523 = vmatprep.subr.mxu0 0.0
      %9524 = vmatpush2.msra.mxu0 0.0
      %9525 = vmatprep.subr.mxu0 0.0
      %9526 = vmatpush2.msra.mxu0 0.0
      %9527 = vmatprep.subr.mxu0 0.0
      %9528 = vmatpush2.msra.mxu0 0.0
      %9529 = vmatprep.subr.mxu0 0.0
      %9530 = vmatpush2.msra.mxu0 0.0
      %9531 = vmatprep.subr.mxu0 0.0
      %9532 = vmatpush2.msra.mxu0 0.0
      %9533 = vmatprep.subr.mxu0 0.0
      %9534 = vmatpush2.msra.mxu0 0.0
      %9535 = vmatprep.subr.mxu0 0.0
      %9536 = vmatpush2.msra.mxu0 0.0
      %9537 = vmatprep.subr.mxu0 0.0
      %9538 = vmatpush2.msra.mxu0 0.0
      %9539 = vmatprep.subr.mxu0 0.0
      %9540 = vmatpush2.msra.mxu0 0.0
      %9541 = vmatprep.subr.mxu0 0.0
      %9542 = vmatpush2.msra.mxu0 0.0
      %9543 = vmatprep.subr.mxu0 0.0
      %9544 = vmatpush2.msra.mxu0 0.0
      %9545 = vmatprep.subr.mxu0 0.0
      %9546 = vmatpush2.msra.mxu0 0.0
      %9547 = vmatprep.subr.mxu0 0.0
      %9548 = vmatpush2.msra.mxu0 0.0
      %9549 = vmatprep.subr.mxu0 0.0
      %9550 = vmatpush2.msra.mxu0 0.0
      %9551 = vmatprep.subr.mxu0 0.0
      %9552 = vmatpush2.msra.mxu0 0.0
      %9553 = vmatprep.subr.mxu0 0.0
      %9554 = vmatpush2.msra.mxu0 0.0
      %9555 = vmatprep.mubr.f32.mxu0 0.0
      %9556 = vmatmul.mubr.f32.gmra.mxu0 %v9468
      %v9557 = vpop.f32.mrf.mxu0
      %v9558 = vadd.f32 0.0, %v9557
      %v9559 = vpop.f32.mrf.mxu0
      %9560 = vmatprep.mubr.f32.mxu0 0.0
      %9561 = vmatmul.mubr.f32.gmra.mxu0 %v9471
      %v9562 = vpop.f32.mrf.mxu0
      %v9563 = vadd.f32 0.0, %v9562
      %v9564 = vpop.f32.mrf.mxu0
      %9565 = vmatprep.mubr.f32.mxu0 0.0
      %9566 = vmatmul.mubr.f32.gmra.mxu0 %v9474
      %v9567 = vpop.f32.mrf.mxu0
      %v9568 = vadd.f32 0.0, %v9567
      %v9569 = vpop.f32.mrf.mxu0
      %9570 = vmatprep.mubr.f32.mxu0 0.0
      %9571 = vmatmul.mubr.f32.gmra.mxu0 %v9477
      %v9572 = vpop.f32.mrf.mxu0
      %v9573 = vadd.f32 0.0, %v9572
      %v9574 = vpop.f32.mrf.mxu0
      %9575 = vmatprep.mubr.f32.mxu0 0.0
      %9576 = vmatmul.mubr.f32.gmra.mxu0 %v9480
      %v9577 = vpop.f32.mrf.mxu0
      %v9578 = vadd.f32 0.0, %v9577
      %v9579 = vpop.f32.mrf.mxu0
      %9580 = vmatprep.mubr.f32.mxu0 0.0
      %9581 = vmatmul.mubr.f32.gmra.mxu0 %v9483
      %v9582 = vpop.f32.mrf.mxu0
      %v9583 = vadd.f32 0.0, %v9582
      %v9584 = vpop.f32.mrf.mxu0
      %9585 = vmatprep.mubr.f32.mxu0 0.0
      %9586 = vmatmul.mubr.f32.gmra.mxu0 %v9486
      %v9587 = vpop.f32.mrf.mxu0
      %v9588 = vadd.f32 0.0, %v9587
      %v9589 = vpop.f32.mrf.mxu0
      %9590 = vmatprep.mubr.f32.mxu0 0.0
      %9591 = vmatmul.mubr.f32.gmra.mxu0 %v9489
      %v9592 = vpop.f32.mrf.mxu0
      %v9593 = vadd.f32 0.0, %v9592
      %v9594 = vpop.f32.mrf.mxu0
      %9595 = vdwg.mxu0
      %v9596 = vlaneseq
      %v9597 = vshrl.u32 %v9596, 7
      %v9598 = vsub.s32 6, %v9597
      %v9599 = vrot.slane %v412, %v9598
      %v9600 = vmul.f32 %v9558, %v9599
      %v9601 = vmul.f32 %v9563, %v9599
      %v9602 = vmul.f32 %v9568, %v9599
      %v9603 = vmul.f32 %v9573, %v9599
      %v9604 = vmul.f32 %v9578, %v9599
      %v9605 = vmul.f32 %v9583, %v9599
      %v9606 = vmul.f32 %v9588, %v9599
      %v9607 = vmul.f32 %v9593, %v9599
      %v9608 = vlaneseq
      %v9609 = vshrl.u32 %v9608, 7
      %v9610 = vsub.s32 6, %v9609
      %v9611 = vrot.slane %v415, %v9610
      %v9612 = vadd.f32 %v9600, %v9611
      %v9613 = vadd.f32 %v9601, %v9611
      %v9614 = vadd.f32 %v9602, %v9611
      %v9615 = vadd.f32 %v9603, %v9611
      %v9616 = vadd.f32 %v9604, %v9611
      %v9617 = vadd.f32 %v9605, %v9611
      %v9618 = vadd.f32 %v9606, %v9611
      %v9619 = vadd.f32 %v9607, %v9611
      %v9620 = vmax.f32 %v9612, 0.0
      %v9621 = vmax.f32 %v9613, 0.0
      %v9622 = vmax.f32 %v9614, 0.0
      %v9623 = vmax.f32 %v9615, 0.0
      %v9624 = vmax.f32 %v9616, 0.0
      %v9625 = vmax.f32 %v9617, 0.0
      %v9626 = vmax.f32 %v9618, 0.0
      %v9627 = vmax.f32 %v9619, 0.0
      %v9630 = vrot.slane %v9626, 7
      %v9631 = vrot.slane %v9627, 7
      %v9632 = vsel %vm1582, %v9630, %v9631
      %v9641 = vrot.slane %v9620, 7
      %v9642 = vrot.slane %v9621, 7
      %v9643 = vsel %vm1582, %v9641, %v9642
      %v9644 = vrot.slane %v9622, 7
      %v9645 = vsel %vm1582, %v9642, %v9644
      %v9646 = vrot.slane %v9623, 7
      %v9647 = vsel %vm1582, %v9644, %v9646
      %v9648 = vrot.slane %v9624, 7
      %v9649 = vsel %vm1582, %v9646, %v9648
      %v9650 = vrot.slane %v9625, 7
      %v9651 = vsel %vm1582, %v9648, %v9650
      %v9652 = vsel %vm1582, %v9650, %v9630
      %v9660 = vsel %vm1582, %v9631, %v9641
      %v9661 = vmul.f32 %v9632, %v1349
      %v9662 = vmul.f32 %v9660, %v1350
      %v9663 = vmul.f32 %v9643, %v1351
      %v9664 = vmul.f32 %v9645, %v1352
      %v9665 = vmul.f32 %v9647, %v1353
      %v9666 = vmul.f32 %v9649, %v1354
      %v9667 = vmul.f32 %v9651, %v1355
      %v9668 = vmul.f32 %v9652, %v1356
      %v9669 = vmul.f32 %v9627, %v1365
      %v9670 = vmul.f32 %v9620, %v1366
      %v9671 = vmul.f32 %v9621, %v1367
      %v9672 = vmul.f32 %v9622, %v1368
      %v9673 = vmul.f32 %v9623, %v1369
      %v9674 = vmul.f32 %v9624, %v1370
      %v9675 = vmul.f32 %v9625, %v1371
      %v9676 = vmul.f32 %v9626, %v1372
      %v9677 = vrot.slane %v9627, 1
      %v9679 = vrot.slane %v9620, 1
      %v9680 = vrot.slane %v9621, 1
      %v9681 = vsel %vm1773, %v9679, %v9680
      %v9682 = vrot.slane %v9622, 1
      %v9683 = vsel %vm1773, %v9680, %v9682
      %v9684 = vrot.slane %v9623, 1
      %v9685 = vsel %vm1773, %v9682, %v9684
      %v9686 = vrot.slane %v9624, 1
      %v9687 = vsel %vm1773, %v9684, %v9686
      %v9688 = vrot.slane %v9625, 1
      %v9689 = vsel %vm1773, %v9686, %v9688
      %v9690 = vrot.slane %v9626, 1
      %v9691 = vsel %vm1773, %v9688, %v9690
      %v9692 = vsel %vm1773, %v9690, %v9677
      %v9701 = vsel %vm1773, %v9677, %v9679
      %v9702 = vmul.f32 %v9701, %v1389
      %v9703 = vmul.f32 %v9681, %v1390
      %v9704 = vmul.f32 %v9683, %v1391
      %v9705 = vmul.f32 %v9685, %v1392
      %v9706 = vmul.f32 %v9687, %v1393
      %v9707 = vmul.f32 %v9689, %v1394
      %v9708 = vmul.f32 %v9691, %v1395
      %v9709 = vmul.f32 %v9692, %v1396
      %v9710 = vmul.f32 %v9660, %v1405
      %v9711 = vmul.f32 %v9643, %v1406
      %v9712 = vmul.f32 %v9645, %v1407
      %v9713 = vmul.f32 %v9647, %v1408
      %v9714 = vmul.f32 %v9649, %v1409
      %v9715 = vmul.f32 %v9651, %v1410
      %v9716 = vmul.f32 %v9652, %v1411
      %v9717 = vmul.f32 %v9632, %v1412
      %v9718 = vmul.f32 %v9681, %v1421
      %v9719 = vmul.f32 %v9683, %v1422
      %v9720 = vmul.f32 %v9685, %v1423
      %v9721 = vmul.f32 %v9687, %v1424
      %v9722 = vmul.f32 %v9689, %v1425
      %v9723 = vmul.f32 %v9691, %v1426
      %v9724 = vmul.f32 %v9692, %v1427
      %v9725 = vmul.f32 %v9701, %v1428
      %v9726 = vmul.f32 %v9643, %v1445
      %v9727 = vmul.f32 %v9645, %v1446
      %v9728 = vmul.f32 %v9647, %v1447
      %v9729 = vmul.f32 %v9649, %v1448
      %v9730 = vmul.f32 %v9651, %v1449
      %v9731 = vmul.f32 %v9652, %v1450
      %v9732 = vmul.f32 %v9632, %v1451
      %v9733 = vmul.f32 %v9660, %v1452
      %v9734 = vmul.f32 %v9621, %v1461
      %v9735 = vmul.f32 %v9622, %v1462
      %v9736 = vmul.f32 %v9623, %v1463
      %v9737 = vmul.f32 %v9624, %v1464
      %v9738 = vmul.f32 %v9625, %v1465
      %v9739 = vmul.f32 %v9626, %v1466
      %v9740 = vmul.f32 %v9627, %v1467
      %v9741 = vmul.f32 %v9620, %v1468
      %v9742 = vmul.f32 %v9683, %v1485
      %v9743 = vmul.f32 %v9685, %v1486
      %v9744 = vmul.f32 %v9687, %v1487
      %v9745 = vmul.f32 %v9689, %v1488
      %v9746 = vmul.f32 %v9691, %v1489
      %v9747 = vmul.f32 %v9692, %v1490
      %v9748 = vmul.f32 %v9701, %v1491
      %v9749 = vmul.f32 %v9681, %v1492
      %9758 = vrot.lane.b32.xlu0 %v9669, 16
      %v9759 = vpop.permute.xlu0 %9758
      %9760 = vrot.lane.b32.xlu0 %v9670, 16
      %v9761 = vpop.permute.xlu0 %9760
      %9762 = vrot.lane.b32.xlu0 %v9671, 16
      %v9763 = vpop.permute.xlu0 %9762
      %9764 = vrot.lane.b32.xlu0 %v9672, 16
      %v9765 = vpop.permute.xlu0 %9764
      %9766 = vrot.lane.b32.xlu0 %v9673, 16
      %v9767 = vpop.permute.xlu0 %9766
      %9768 = vrot.lane.b32.xlu0 %v9674, 16
      %v9769 = vpop.permute.xlu0 %9768
      %9770 = vrot.lane.b32.xlu0 %v9675, 16
      %v9771 = vpop.permute.xlu0 %9770
      %9772 = vrot.lane.b32.xlu0 %v9676, 16
      %v9773 = vpop.permute.xlu0 %9772
      %9790 = vrot.lane.b32.xlu0 %v9702, 32
      %v9791 = vpop.permute.xlu0 %9790
      %9792 = vrot.lane.b32.xlu0 %v9703, 32
      %v9793 = vpop.permute.xlu0 %9792
      %9794 = vrot.lane.b32.xlu0 %v9704, 32
      %v9795 = vpop.permute.xlu0 %9794
      %9796 = vrot.lane.b32.xlu0 %v9705, 32
      %v9797 = vpop.permute.xlu0 %9796
      %9798 = vrot.lane.b32.xlu0 %v9706, 32
      %v9799 = vpop.permute.xlu0 %9798
      %9800 = vrot.lane.b32.xlu0 %v9707, 32
      %v9801 = vpop.permute.xlu0 %9800
      %9802 = vrot.lane.b32.xlu0 %v9708, 32
      %v9803 = vpop.permute.xlu0 %9802
      %9804 = vrot.lane.b32.xlu0 %v9709, 32
      %v9805 = vpop.permute.xlu0 %9804
      %9822 = vrot.lane.b32.xlu0 %v9710, 48
      %v9823 = vpop.permute.xlu0 %9822
      %9824 = vrot.lane.b32.xlu0 %v9711, 48
      %v9825 = vpop.permute.xlu0 %9824
      %9826 = vrot.lane.b32.xlu0 %v9712, 48
      %v9827 = vpop.permute.xlu0 %9826
      %9828 = vrot.lane.b32.xlu0 %v9713, 48
      %v9829 = vpop.permute.xlu0 %9828
      %9830 = vrot.lane.b32.xlu0 %v9714, 48
      %v9831 = vpop.permute.xlu0 %9830
      %9832 = vrot.lane.b32.xlu0 %v9715, 48
      %v9833 = vpop.permute.xlu0 %9832
      %9834 = vrot.lane.b32.xlu0 %v9716, 48
      %v9835 = vpop.permute.xlu0 %9834
      %9836 = vrot.lane.b32.xlu0 %v9717, 48
      %v9837 = vpop.permute.xlu0 %9836
      %9846 = vrot.lane.b32.xlu0 %v9620, 64
      %v9847 = vpop.permute.xlu0 %9846
      %9848 = vrot.lane.b32.xlu0 %v9621, 64
      %v9849 = vpop.permute.xlu0 %9848
      %9850 = vrot.lane.b32.xlu0 %v9622, 64
      %v9851 = vpop.permute.xlu0 %9850
      %9852 = vrot.lane.b32.xlu0 %v9623, 64
      %v9853 = vpop.permute.xlu0 %9852
      %9854 = vrot.lane.b32.xlu0 %v9624, 64
      %v9855 = vpop.permute.xlu0 %9854
      %9856 = vrot.lane.b32.xlu0 %v9625, 64
      %v9857 = vpop.permute.xlu0 %9856
      %9858 = vrot.lane.b32.xlu0 %v9626, 64
      %v9859 = vpop.permute.xlu0 %9858
      %9860 = vrot.lane.b32.xlu0 %v9627, 64
      %v9861 = vpop.permute.xlu0 %9860
      %9878 = vrot.lane.b32.xlu0 %v9718, 80
      %v9879 = vpop.permute.xlu0 %9878
      %9880 = vrot.lane.b32.xlu0 %v9719, 80
      %v9881 = vpop.permute.xlu0 %9880
      %9882 = vrot.lane.b32.xlu0 %v9720, 80
      %v9883 = vpop.permute.xlu0 %9882
      %9884 = vrot.lane.b32.xlu0 %v9721, 80
      %v9885 = vpop.permute.xlu0 %9884
      %9886 = vrot.lane.b32.xlu0 %v9722, 80
      %v9887 = vpop.permute.xlu0 %9886
      %9888 = vrot.lane.b32.xlu0 %v9723, 80
      %v9889 = vpop.permute.xlu0 %9888
      %9890 = vrot.lane.b32.xlu0 %v9724, 80
      %v9891 = vpop.permute.xlu0 %9890
      %9892 = vrot.lane.b32.xlu0 %v9725, 80
      %v9893 = vpop.permute.xlu0 %9892
      %9910 = vrot.lane.b32.xlu0 %v9726, 96
      %v9911 = vpop.permute.xlu0 %9910
      %9912 = vrot.lane.b32.xlu0 %v9727, 96
      %v9913 = vpop.permute.xlu0 %9912
      %9914 = vrot.lane.b32.xlu0 %v9728, 96
      %v9915 = vpop.permute.xlu0 %9914
      %9916 = vrot.lane.b32.xlu0 %v9729, 96
      %v9917 = vpop.permute.xlu0 %9916
      %9918 = vrot.lane.b32.xlu0 %v9730, 96
      %v9919 = vpop.permute.xlu0 %9918
      %9920 = vrot.lane.b32.xlu0 %v9731, 96
      %v9921 = vpop.permute.xlu0 %9920
      %9922 = vrot.lane.b32.xlu0 %v9732, 96
      %v9923 = vpop.permute.xlu0 %9922
      %9924 = vrot.lane.b32.xlu0 %v9733, 96
      %v9925 = vpop.permute.xlu0 %9924
      %9942 = vrot.lane.b32.xlu0 %v9734, 112
      %v9943 = vpop.permute.xlu0 %9942
      %9944 = vrot.lane.b32.xlu0 %v9735, 112
      %v9945 = vpop.permute.xlu0 %9944
      %9946 = vrot.lane.b32.xlu0 %v9736, 112
      %v9947 = vpop.permute.xlu0 %9946
      %9948 = vrot.lane.b32.xlu0 %v9737, 112
      %v9949 = vpop.permute.xlu0 %9948
      %9950 = vrot.lane.b32.xlu0 %v9738, 112
      %v9951 = vpop.permute.xlu0 %9950
      %9952 = vrot.lane.b32.xlu0 %v9739, 112
      %v9953 = vpop.permute.xlu0 %9952
      %9954 = vrot.lane.b32.xlu0 %v9740, 112
      %v9955 = vpop.permute.xlu0 %9954
      %9956 = vrot.lane.b32.xlu0 %v9741, 112
      %v9957 = vpop.permute.xlu0 %9956
      %v9966 = vsel %vm5521, %v9661, %v9759
      %v9967 = vsel %vm5521, %v9662, %v9761
      %v9968 = vsel %vm5521, %v9663, %v9763
      %v9969 = vsel %vm5521, %v9664, %v9765
      %v9970 = vsel %vm5521, %v9665, %v9767
      %v9971 = vsel %vm5521, %v9666, %v9769
      %v9972 = vsel %vm5521, %v9667, %v9771
      %v9973 = vsel %vm5521, %v9668, %v9773
      %v9974 = vsel %vm5554, %v9966, %v9791
      %v9975 = vsel %vm5554, %v9967, %v9793
      %v9976 = vsel %vm5554, %v9968, %v9795
      %v9977 = vsel %vm5554, %v9969, %v9797
      %v9978 = vsel %vm5554, %v9970, %v9799
      %v9979 = vsel %vm5554, %v9971, %v9801
      %v9980 = vsel %vm5554, %v9972, %v9803
      %v9981 = vsel %vm5554, %v9973, %v9805
      %v9982 = vsel %vm5587, %v9974, %v9823
      %v9983 = vsel %vm5587, %v9975, %v9825
      %v9984 = vsel %vm5587, %v9976, %v9827
      %v9985 = vsel %vm5587, %v9977, %v9829
      %v9986 = vsel %vm5587, %v9978, %v9831
      %v9987 = vsel %vm5587, %v9979, %v9833
      %v9988 = vsel %vm5587, %v9980, %v9835
      %v9989 = vsel %vm5587, %v9981, %v9837
      %v9990 = vsel %vm5620, %v9982, %v9847
      %v9991 = vsel %vm5620, %v9983, %v9849
      %v9992 = vsel %vm5620, %v9984, %v9851
      %v9993 = vsel %vm5620, %v9985, %v9853
      %v9994 = vsel %vm5620, %v9986, %v9855
      %v9995 = vsel %vm5620, %v9987, %v9857
      %v9996 = vsel %vm5620, %v9988, %v9859
      %v9997 = vsel %vm5620, %v9989, %v9861
      %v9998 = vsel %vm5653, %v9990, %v9879
      %v9999 = vsel %vm5653, %v9991, %v9881
      %v10000 = vsel %vm5653, %v9992, %v9883
      %v10001 = vsel %vm5653, %v9993, %v9885
      %v10002 = vsel %vm5653, %v9994, %v9887
      %v10003 = vsel %vm5653, %v9995, %v9889
      %v10004 = vsel %vm5653, %v9996, %v9891
      %v10005 = vsel %vm5653, %v9997, %v9893
      %v10006 = vsel %vm5686, %v9998, %v9911
      %v10007 = vsel %vm5686, %v9999, %v9913
      %v10008 = vsel %vm5686, %v10000, %v9915
      %v10009 = vsel %vm5686, %v10001, %v9917
      %v10010 = vsel %vm5686, %v10002, %v9919
      %v10011 = vsel %vm5686, %v10003, %v9921
      %v10012 = vsel %vm5686, %v10004, %v9923
      %v10013 = vsel %vm5686, %v10005, %v9925
      %v10014 = vsel %vm5719, %v10006, %v9943
      %v10015 = vsel %vm5719, %v10007, %v9945
      %v10016 = vsel %vm5719, %v10008, %v9947
      %v10017 = vsel %vm5719, %v10009, %v9949
      %v10018 = vsel %vm5719, %v10010, %v9951
      %v10019 = vsel %vm5719, %v10011, %v9953
      %v10020 = vsel %vm5719, %v10012, %v9955
      %v10021 = vsel %vm5719, %v10013, %v9957
      %10022 = vrot.lane.b32.xlu0 %v394, 120
      %v10023 = vpop.permute.xlu0 %10022
      %10024 = vrot.lane.b32.xlu0 %v395, 120
      %v10025 = vpop.permute.xlu0 %10024
      %10026 = vrot.lane.b32.xlu0 %v396, 120
      %v10027 = vpop.permute.xlu0 %10026
      %10028 = vrot.lane.b32.xlu0 %v397, 120
      %v10029 = vpop.permute.xlu0 %10028
      %10030 = vrot.lane.b32.xlu0 %v398, 120
      %v10031 = vpop.permute.xlu0 %10030
      %10032 = vrot.lane.b32.xlu0 %v399, 120
      %v10033 = vpop.permute.xlu0 %10032
      %10034 = vrot.lane.b32.xlu0 %v400, 120
      %v10035 = vpop.permute.xlu0 %10034
      %10036 = vrot.lane.b32.xlu0 %v401, 120
      %v10037 = vpop.permute.xlu0 %10036
      %10038 = vrot.lane.b32.xlu0 %v402, 120
      %v10039 = vpop.permute.xlu0 %10038
      %10040 = vrot.lane.b32.xlu0 %v403, 120
      %v10041 = vpop.permute.xlu0 %10040
      %10042 = vrot.lane.b32.xlu0 %v404, 120
      %v10043 = vpop.permute.xlu0 %10042
      %10044 = vrot.lane.b32.xlu0 %v405, 120
      %v10045 = vpop.permute.xlu0 %10044
      %10046 = vrot.lane.b32.xlu0 %v406, 120
      %v10047 = vpop.permute.xlu0 %10046
      %10048 = vrot.lane.b32.xlu0 %v407, 120
      %v10049 = vpop.permute.xlu0 %10048
      %10050 = vrot.lane.b32.xlu0 %v408, 120
      %v10051 = vpop.permute.xlu0 %10050
      %10052 = vrot.lane.b32.xlu0 %v409, 120
      %v10053 = vpop.permute.xlu0 %10052
      %10054 = vrot.lane.b32.xlu0 %v410, 120
      %v10055 = vpop.permute.xlu0 %10054
      %10056 = vrot.lane.b32.xlu0 %v411, 120
      %v10057 = vpop.permute.xlu0 %10056
      %v10077 = vsel %vm5521, %v9742, 0
      %v10080 = vsel %vm5521, %v9743, 0
      %v10083 = vsel %vm5521, %v9744, 0
      %v10086 = vsel %vm5521, %v9745, 0
      %v10089 = vsel %vm5521, %v9746, 0
      %v10092 = vsel %vm5521, %v9747, 0
      %v10095 = vsel %vm5521, %v9748, 0
      %v10098 = vsel %vm5521, %v9749, 0
      %10100 = vmatprep.subr.mxu0 0.0
      %10101 = vmatpush1.msra.mxu0 %v10053
      %10102 = vmatprep.subr.mxu0 0.0
      %10103 = vmatpush1.msra.mxu0 %v10051
      %10104 = vmatprep.subr.mxu0 0.0
      %10105 = vmatpush1.msra.mxu0 %v10049
      %10106 = vmatprep.subr.mxu0 0.0
      %10107 = vmatpush1.msra.mxu0 %v10047
      %10108 = vmatprep.subr.mxu0 0.0
      %10109 = vmatpush1.msra.mxu0 %v10045
      %10110 = vmatprep.subr.mxu0 0.0
      %10111 = vmatpush1.msra.mxu0 %v10043
      %10112 = vmatprep.subr.mxu0 0.0
      %10113 = vmatpush1.msra.mxu0 %v10041
      %10114 = vmatprep.subr.mxu0 0.0
      %10115 = vmatpush1.msra.mxu0 %v10039
      %10116 = vmatprep.subr.mxu0 0.0
      %10117 = vmatpush1.msra.mxu0 %v10037
      %10118 = vmatprep.subr.mxu0 0.0
      %10119 = vmatpush1.msra.mxu0 %v10035
      %10120 = vmatprep.subr.mxu0 0.0
      %10121 = vmatpush1.msra.mxu0 %v10033
      %10122 = vmatprep.subr.mxu0 0.0
      %10123 = vmatpush1.msra.mxu0 %v10031
      %10124 = vmatprep.subr.mxu0 0.0
      %10125 = vmatpush1.msra.mxu0 %v10029
      %10126 = vmatprep.subr.mxu0 0.0
      %10127 = vmatpush1.msra.mxu0 %v10027
      %10128 = vmatprep.subr.mxu0 0.0
      %10129 = vmatpush1.msra.mxu0 %v10025
      %10130 = vmatprep.subr.mxu0 0.0
      %10131 = vmatpush1.msra.mxu0 %v10023
      %10132 = vmatprep.subr.mxu0 0.0
      %10133 = vmatpush2.msra.mxu0 0.0
      %10134 = vmatprep.subr.mxu0 0.0
      %10135 = vmatpush2.msra.mxu0 0.0
      %10136 = vmatprep.subr.mxu0 0.0
      %10137 = vmatpush2.msra.mxu0 0.0
      %10138 = vmatprep.subr.mxu0 0.0
      %10139 = vmatpush2.msra.mxu0 0.0
      %10140 = vmatprep.subr.mxu0 0.0
      %10141 = vmatpush2.msra.mxu0 0.0
      %10142 = vmatprep.subr.mxu0 0.0
      %10143 = vmatpush2.msra.mxu0 0.0
      %10144 = vmatprep.subr.mxu0 0.0
      %10145 = vmatpush2.msra.mxu0 0.0
      %10146 = vmatprep.subr.mxu0 0.0
      %10147 = vmatpush2.msra.mxu0 0.0
      %10148 = vmatprep.subr.mxu0 0.0
      %10149 = vmatpush2.msra.mxu0 0.0
      %10150 = vmatprep.subr.mxu0 0.0
      %10151 = vmatpush2.msra.mxu0 0.0
      %10152 = vmatprep.subr.mxu0 0.0
      %10153 = vmatpush2.msra.mxu0 0.0
      %10154 = vmatprep.subr.mxu0 0.0
      %10155 = vmatpush2.msra.mxu0 0.0
      %10156 = vmatprep.subr.mxu0 0.0
      %10157 = vmatpush2.msra.mxu0 0.0
      %10158 = vmatprep.subr.mxu0 0.0
      %10159 = vmatpush2.msra.mxu0 0.0
      %10160 = vmatprep.subr.mxu0 0.0
      %10161 = vmatpush2.msra.mxu0 %v10057
      %10162 = vmatprep.subr.mxu0 0.0
      %10163 = vmatpush2.msra.mxu0 %v10055
      %10164 = vmatprep.mubr.f32.mxu0 %v10077
      %10165 = vmatmul.mubr.f32.gmra.mxu0 %v10014
      %v10166 = vpop.f32.mrf.mxu0
      %v10167 = vadd.f32 0.0, %v10166
      %v10168 = vpop.f32.mrf.mxu0
      %10169 = vmatprep.mubr.f32.mxu0 %v10080
      %10170 = vmatmul.mubr.f32.gmra.mxu0 %v10015
      %v10171 = vpop.f32.mrf.mxu0
      %v10172 = vadd.f32 0.0, %v10171
      %v10173 = vpop.f32.mrf.mxu0
      %10174 = vmatprep.mubr.f32.mxu0 %v10083
      %10175 = vmatmul.mubr.f32.gmra.mxu0 %v10016
      %v10176 = vpop.f32.mrf.mxu0
      %v10177 = vadd.f32 0.0, %v10176
      %v10178 = vpop.f32.mrf.mxu0
      %10179 = vmatprep.mubr.f32.mxu0 %v10086
      %10180 = vmatmul.mubr.f32.gmra.mxu0 %v10017
      %v10181 = vpop.f32.mrf.mxu0
      %v10182 = vadd.f32 0.0, %v10181
      %v10183 = vpop.f32.mrf.mxu0
      %10184 = vmatprep.mubr.f32.mxu0 %v10089
      %10185 = vmatmul.mubr.f32.gmra.mxu0 %v10018
      %v10186 = vpop.f32.mrf.mxu0
      %v10187 = vadd.f32 0.0, %v10186
      %v10188 = vpop.f32.mrf.mxu0
      %10189 = vmatprep.mubr.f32.mxu0 %v10092
      %10190 = vmatmul.mubr.f32.gmra.mxu0 %v10019
      %v10191 = vpop.f32.mrf.mxu0
      %v10192 = vadd.f32 0.0, %v10191
      %v10193 = vpop.f32.mrf.mxu0
      %10194 = vmatprep.mubr.f32.mxu0 %v10095
      %10195 = vmatmul.mubr.f32.gmra.mxu0 %v10020
      %v10196 = vpop.f32.mrf.mxu0
      %v10197 = vadd.f32 0.0, %v10196
      %v10198 = vpop.f32.mrf.mxu0
      %10199 = vmatprep.mubr.f32.mxu0 %v10098
      %10200 = vmatmul.mubr.f32.gmra.mxu0 %v10021
      %v10201 = vpop.f32.mrf.mxu0
      %v10202 = vadd.f32 0.0, %v10201
      %v10203 = vpop.f32.mrf.mxu0
      %10204 = vdwg.mxu0
      %10213 = vrot.lane.b32.xlu0 %v10167, 8
      %v10214 = vpop.permute.xlu0 %10213
      %10215 = vrot.lane.b32.xlu0 %v10172, 8
      %v10216 = vpop.permute.xlu0 %10215
      %10217 = vrot.lane.b32.xlu0 %v10177, 8
      %v10218 = vpop.permute.xlu0 %10217
      %10219 = vrot.lane.b32.xlu0 %v10182, 8
      %v10220 = vpop.permute.xlu0 %10219
      %10221 = vrot.lane.b32.xlu0 %v10187, 8
      %v10222 = vpop.permute.xlu0 %10221
      %10223 = vrot.lane.b32.xlu0 %v10192, 8
      %v10224 = vpop.permute.xlu0 %10223
      %10225 = vrot.lane.b32.xlu0 %v10197, 8
      %v10226 = vpop.permute.xlu0 %10225
      %10227 = vrot.lane.b32.xlu0 %v10202, 8
      %v10228 = vpop.permute.xlu0 %10227
      %v10237 = vsel %vm3749, %v9397, %v10214
      %v10238 = vsel %vm3749, %v9402, %v10216
      %v10239 = vsel %vm3749, %v9407, %v10218
      %v10240 = vsel %vm3749, %v9412, %v10220
      %v10241 = vsel %vm3749, %v9417, %v10222
      %v10242 = vsel %vm3749, %v9422, %v10224
      %v10243 = vsel %vm3749, %v9427, %v10226
      %v10244 = vsel %vm3749, %v9432, %v10228
      %v10245 = vlaneseq
      %v10246 = vshrl.u32 %v10245, 7
      %v10247 = vsub.s32 7, %v10246
      %v10248 = vrot.slane %v412, %v10247
      %v10249 = vmul.f32 %v10237, %v10248
      %v10250 = vmul.f32 %v10238, %v10248
      %v10251 = vmul.f32 %v10239, %v10248
      %v10252 = vmul.f32 %v10240, %v10248
      %v10253 = vmul.f32 %v10241, %v10248
      %v10254 = vmul.f32 %v10242, %v10248
      %v10255 = vmul.f32 %v10243, %v10248
      %v10256 = vmul.f32 %v10244, %v10248
      %v10257 = vlaneseq
      %v10258 = vshrl.u32 %v10257, 7
      %v10259 = vsub.s32 7, %v10258
      %v10260 = vrot.slane %v415, %v10259
      %v10261 = vadd.f32 %v10249, %v10260
      %v10262 = vadd.f32 %v10250, %v10260
      %v10263 = vadd.f32 %v10251, %v10260
      %v10264 = vadd.f32 %v10252, %v10260
      %v10265 = vadd.f32 %v10253, %v10260
      %v10266 = vadd.f32 %v10254, %v10260
      %v10267 = vadd.f32 %v10255, %v10260
      %v10268 = vadd.f32 %v10256, %v10260
      %v10269 = vmax.f32 %v10261, 0.0
      %v10270 = vmax.f32 %v10262, 0.0
      %v10271 = vmax.f32 %v10263, 0.0
      %v10272 = vmax.f32 %v10264, 0.0
      %v10273 = vmax.f32 %v10265, 0.0
      %v10274 = vmax.f32 %v10266, 0.0
      %v10275 = vmax.f32 %v10267, 0.0
      %v10276 = vmax.f32 %v10268, 0.0
      %v10278 = vsel %vm3154, %v10269, 0
      %v10281 = vsel %vm3154, %v10270, 0
      %v10284 = vsel %vm3154, %v10271, 0
      %v10287 = vsel %vm3154, %v10272, 0
      %v10290 = vsel %vm3154, %v10273, 0
      %v10293 = vsel %vm3154, %v10274, 0
      %v10296 = vsel %vm3154, %v10275, 0
      %v10299 = vsel %vm3154, %v10276, 0
      %v10302 = vsel %vm6433, %v390, 0
      %10304 = vmatprep.subr.mxu0 0.0
      %10305 = vmatpush1.msra.mxu0 0.0
      %10306 = vmatprep.subr.mxu0 0.0
      %10307 = vmatpush1.msra.mxu0 0.0
      %10308 = vmatprep.subr.mxu0 0.0
      %10309 = vmatpush1.msra.mxu0 0.0
      %10310 = vmatprep.subr.mxu0 0.0
      %10311 = vmatpush1.msra.mxu0 0.0
      %10312 = vmatprep.subr.mxu0 0.0
      %10313 = vmatpush1.msra.mxu0 0.0
      %10314 = vmatprep.subr.mxu0 0.0
      %10315 = vmatpush1.msra.mxu0 0.0
      %10316 = vmatprep.subr.mxu0 0.0
      %10317 = vmatpush1.msra.mxu0 0.0
      %10318 = vmatprep.subr.mxu0 0.0
      %10319 = vmatpush1.msra.mxu0 0.0
      %10320 = vmatprep.subr.mxu0 0.0
      %10321 = vmatpush1.msra.mxu0 0.0
      %10322 = vmatprep.subr.mxu0 0.0
      %10323 = vmatpush1.msra.mxu0 0.0
      %10324 = vmatprep.subr.mxu0 0.0
      %10325 = vmatpush1.msra.mxu0 0.0
      %10326 = vmatprep.subr.mxu0 0.0
      %10327 = vmatpush1.msra.mxu0 0.0
      %10328 = vmatprep.subr.mxu0 0.0
      %10329 = vmatpush1.msra.mxu0 0.0
      %10330 = vmatprep.subr.mxu0 0.0
      %10331 = vmatpush1.msra.mxu0 0.0
      %10332 = vmatprep.subr.mxu0 0.0
      %10333 = vmatpush1.msra.mxu0 %v10302
      %10334 = vmatprep.subr.mxu0 0.0
      %10335 = vmatpush1.msra.mxu0 %v389
      %10336 = vmatprep.subr.mxu0 0.0
      %10337 = vmatpush2.msra.mxu0 0.0
      %10338 = vmatprep.subr.mxu0 0.0
      %10339 = vmatpush2.msra.mxu0 0.0
      %10340 = vmatprep.subr.mxu0 0.0
      %10341 = vmatpush2.msra.mxu0 0.0
      %10342 = vmatprep.subr.mxu0 0.0
      %10343 = vmatpush2.msra.mxu0 0.0
      %10344 = vmatprep.subr.mxu0 0.0
      %10345 = vmatpush2.msra.mxu0 0.0
      %10346 = vmatprep.subr.mxu0 0.0
      %10347 = vmatpush2.msra.mxu0 0.0
      %10348 = vmatprep.subr.mxu0 0.0
      %10349 = vmatpush2.msra.mxu0 0.0
      %10350 = vmatprep.subr.mxu0 0.0
      %10351 = vmatpush2.msra.mxu0 0.0
      %10352 = vmatprep.subr.mxu0 0.0
      %10353 = vmatpush2.msra.mxu0 0.0
      %10354 = vmatprep.subr.mxu0 0.0
      %10355 = vmatpush2.msra.mxu0 0.0
      %10356 = vmatprep.subr.mxu0 0.0
      %10357 = vmatpush2.msra.mxu0 0.0
      %10358 = vmatprep.subr.mxu0 0.0
      %10359 = vmatpush2.msra.mxu0 0.0
      %10360 = vmatprep.subr.mxu0 0.0
      %10361 = vmatpush2.msra.mxu0 0.0
      %10362 = vmatprep.subr.mxu0 0.0
      %10363 = vmatpush2.msra.mxu0 0.0
      %10364 = vmatprep.subr.mxu0 0.0
      %10365 = vmatpush2.msra.mxu0 0.0
      %10366 = vmatprep.subr.mxu0 0.0
      %10367 = vmatpush2.msra.mxu0 0.0
      %10368 = vmatprep.mubr.f32.mxu0 0.0
      %10369 = vmatmul.mubr.f32.gmra.mxu0 %v10278
      %v10370 = vpop.f32.mrf.mxu0
      %v10371 = vadd.f32 0.0, %v10370
      %v10372 = vpop.f32.mrf.mxu0
      %10373 = vmatprep.mubr.f32.mxu0 0.0
      %10374 = vmatmul.mubr.f32.gmra.mxu0 %v10281
      %v10375 = vpop.f32.mrf.mxu0
      %v10376 = vadd.f32 0.0, %v10375
      %v10377 = vpop.f32.mrf.mxu0
      %10378 = vmatprep.mubr.f32.mxu0 0.0
      %10379 = vmatmul.mubr.f32.gmra.mxu0 %v10284
      %v10380 = vpop.f32.mrf.mxu0
      %v10381 = vadd.f32 0.0, %v10380
      %v10382 = vpop.f32.mrf.mxu0
      %10383 = vmatprep.mubr.f32.mxu0 0.0
      %10384 = vmatmul.mubr.f32.gmra.mxu0 %v10287
      %v10385 = vpop.f32.mrf.mxu0
      %v10386 = vadd.f32 0.0, %v10385
      %v10387 = vpop.f32.mrf.mxu0
      %10388 = vmatprep.mubr.f32.mxu0 0.0
      %10389 = vmatmul.mubr.f32.gmra.mxu0 %v10290
      %v10390 = vpop.f32.mrf.mxu0
      %v10391 = vadd.f32 0.0, %v10390
      %v10392 = vpop.f32.mrf.mxu0
      %10393 = vmatprep.mubr.f32.mxu0 0.0
      %10394 = vmatmul.mubr.f32.gmra.mxu0 %v10293
      %v10395 = vpop.f32.mrf.mxu0
      %v10396 = vadd.f32 0.0, %v10395
      %v10397 = vpop.f32.mrf.mxu0
      %10398 = vmatprep.mubr.f32.mxu0 0.0
      %10399 = vmatmul.mubr.f32.gmra.mxu0 %v10296
      %v10400 = vpop.f32.mrf.mxu0
      %v10401 = vadd.f32 0.0, %v10400
      %v10402 = vpop.f32.mrf.mxu0
      %10403 = vmatprep.mubr.f32.mxu0 0.0
      %10404 = vmatmul.mubr.f32.gmra.mxu0 %v10299
      %v10405 = vpop.f32.mrf.mxu0
      %v10406 = vadd.f32 0.0, %v10405
      %v10407 = vpop.f32.mrf.mxu0
      %10408 = vdwg.mxu0
      %v10409 = vlaneseq
      %v10410 = vshrl.u32 %v10409, 7
      %v10411 = vsub.s32 0, %v10410
      %v10412 = vrot.slane %v413, %v10411
      %v10413 = vmul.f32 %v10371, %v10412
      %v10414 = vmul.f32 %v10376, %v10412
      %v10415 = vmul.f32 %v10381, %v10412
      %v10416 = vmul.f32 %v10386, %v10412
      %v10417 = vmul.f32 %v10391, %v10412
      %v10418 = vmul.f32 %v10396, %v10412
      %v10419 = vmul.f32 %v10401, %v10412
      %v10420 = vmul.f32 %v10406, %v10412
      %v10421 = vlaneseq
      %v10422 = vshrl.u32 %v10421, 7
      %v10423 = vsub.s32 0, %v10422
      %v10424 = vrot.slane %v416, %v10423
      %v10425 = vadd.f32 %v10413, %v10424
      %v10426 = vadd.f32 %v10414, %v10424
      %v10427 = vadd.f32 %v10415, %v10424
      %v10428 = vadd.f32 %v10416, %v10424
      %v10429 = vadd.f32 %v10417, %v10424
      %v10430 = vadd.f32 %v10418, %v10424
      %v10431 = vadd.f32 %v10419, %v10424
      %v10432 = vadd.f32 %v10420, %v10424
      %v10433 = vmax.f32 %v10425, 0.0
      %v10434 = vmax.f32 %v10426, 0.0
      %v10435 = vmax.f32 %v10427, 0.0
      %v10436 = vmax.f32 %v10428, 0.0
      %v10437 = vmax.f32 %v10429, 0.0
      %v10438 = vmax.f32 %v10430, 0.0
      %v10439 = vmax.f32 %v10431, 0.0
      %v10440 = vmax.f32 %v10432, 0.0
      %v10443 = vrot.slane %v10439, 7
      %v10444 = vrot.slane %v10440, 7
      %v10445 = vsel %vm1582, %v10443, %v10444
      %v10454 = vrot.slane %v10433, 7
      %v10455 = vrot.slane %v10434, 7
      %v10456 = vsel %vm1582, %v10454, %v10455
      %v10457 = vrot.slane %v10435, 7
      %v10458 = vsel %vm1582, %v10455, %v10457
      %v10459 = vrot.slane %v10436, 7
      %v10460 = vsel %vm1582, %v10457, %v10459
      %v10461 = vrot.slane %v10437, 7
      %v10462 = vsel %vm1582, %v10459, %v10461
      %v10463 = vrot.slane %v10438, 7
      %v10464 = vsel %vm1582, %v10461, %v10463
      %v10465 = vsel %vm1582, %v10463, %v10443
      %v10473 = vsel %vm1582, %v10444, %v10454
      %v10474 = vmul.f32 %v10445, %v1349
      %v10475 = vmul.f32 %v10473, %v1350
      %v10476 = vmul.f32 %v10456, %v1351
      %v10477 = vmul.f32 %v10458, %v1352
      %v10478 = vmul.f32 %v10460, %v1353
      %v10479 = vmul.f32 %v10462, %v1354
      %v10480 = vmul.f32 %v10464, %v1355
      %v10481 = vmul.f32 %v10465, %v1356
      %v10482 = vmul.f32 %v10440, %v1365
      %v10483 = vmul.f32 %v10433, %v1366
      %v10484 = vmul.f32 %v10434, %v1367
      %v10485 = vmul.f32 %v10435, %v1368
      %v10486 = vmul.f32 %v10436, %v1369
      %v10487 = vmul.f32 %v10437, %v1370
      %v10488 = vmul.f32 %v10438, %v1371
      %v10489 = vmul.f32 %v10439, %v1372
      %v10490 = vrot.slane %v10440, 1
      %v10492 = vrot.slane %v10433, 1
      %v10493 = vrot.slane %v10434, 1
      %v10494 = vsel %vm1773, %v10492, %v10493
      %v10495 = vrot.slane %v10435, 1
      %v10496 = vsel %vm1773, %v10493, %v10495
      %v10497 = vrot.slane %v10436, 1
      %v10498 = vsel %vm1773, %v10495, %v10497
      %v10499 = vrot.slane %v10437, 1
      %v10500 = vsel %vm1773, %v10497, %v10499
      %v10501 = vrot.slane %v10438, 1
      %v10502 = vsel %vm1773, %v10499, %v10501
      %v10503 = vrot.slane %v10439, 1
      %v10504 = vsel %vm1773, %v10501, %v10503
      %v10505 = vsel %vm1773, %v10503, %v10490
      %v10514 = vsel %vm1773, %v10490, %v10492
      %v10515 = vmul.f32 %v10514, %v1389
      %v10516 = vmul.f32 %v10494, %v1390
      %v10517 = vmul.f32 %v10496, %v1391
      %v10518 = vmul.f32 %v10498, %v1392
      %v10519 = vmul.f32 %v10500, %v1393
      %v10520 = vmul.f32 %v10502, %v1394
      %v10521 = vmul.f32 %v10504, %v1395
      %v10522 = vmul.f32 %v10505, %v1396
      %v10523 = vmul.f32 %v10473, %v1405
      %v10524 = vmul.f32 %v10456, %v1406
      %v10525 = vmul.f32 %v10458, %v1407
      %v10526 = vmul.f32 %v10460, %v1408
      %v10527 = vmul.f32 %v10462, %v1409
      %v10528 = vmul.f32 %v10464, %v1410
      %v10529 = vmul.f32 %v10465, %v1411
      %v10530 = vmul.f32 %v10445, %v1412
      %v10531 = vmul.f32 %v10494, %v1421
      %v10532 = vmul.f32 %v10496, %v1422
      %v10533 = vmul.f32 %v10498, %v1423
      %v10534 = vmul.f32 %v10500, %v1424
      %v10535 = vmul.f32 %v10502, %v1425
      %v10536 = vmul.f32 %v10504, %v1426
      %v10537 = vmul.f32 %v10505, %v1427
      %v10538 = vmul.f32 %v10514, %v1428
      %v10539 = vmul.f32 %v10456, %v1445
      %v10540 = vmul.f32 %v10458, %v1446
      %v10541 = vmul.f32 %v10460, %v1447
      %v10542 = vmul.f32 %v10462, %v1448
      %v10543 = vmul.f32 %v10464, %v1449
      %v10544 = vmul.f32 %v10465, %v1450
      %v10545 = vmul.f32 %v10445, %v1451
      %v10546 = vmul.f32 %v10473, %v1452
      %v10547 = vmul.f32 %v10434, %v1461
      %v10548 = vmul.f32 %v10435, %v1462
      %v10549 = vmul.f32 %v10436, %v1463
      %v10550 = vmul.f32 %v10437, %v1464
      %v10551 = vmul.f32 %v10438, %v1465
      %v10552 = vmul.f32 %v10439, %v1466
      %v10553 = vmul.f32 %v10440, %v1467
      %v10554 = vmul.f32 %v10433, %v1468
      %v10555 = vmul.f32 %v10496, %v1485
      %v10556 = vmul.f32 %v10498, %v1486
      %v10557 = vmul.f32 %v10500, %v1487
      %v10558 = vmul.f32 %v10502, %v1488
      %v10559 = vmul.f32 %v10504, %v1489
      %v10560 = vmul.f32 %v10505, %v1490
      %v10561 = vmul.f32 %v10514, %v1491
      %v10562 = vmul.f32 %v10494, %v1492
      %10571 = vrot.lane.b32.xlu0 %v10482, 16
      %v10572 = vpop.permute.xlu0 %10571
      %10573 = vrot.lane.b32.xlu0 %v10483, 16
      %v10574 = vpop.permute.xlu0 %10573
      %10575 = vrot.lane.b32.xlu0 %v10484, 16
      %v10576 = vpop.permute.xlu0 %10575
      %10577 = vrot.lane.b32.xlu0 %v10485, 16
      %v10578 = vpop.permute.xlu0 %10577
      %10579 = vrot.lane.b32.xlu0 %v10486, 16
      %v10580 = vpop.permute.xlu0 %10579
      %10581 = vrot.lane.b32.xlu0 %v10487, 16
      %v10582 = vpop.permute.xlu0 %10581
      %10583 = vrot.lane.b32.xlu0 %v10488, 16
      %v10584 = vpop.permute.xlu0 %10583
      %10585 = vrot.lane.b32.xlu0 %v10489, 16
      %v10586 = vpop.permute.xlu0 %10585
      %10603 = vrot.lane.b32.xlu0 %v10515, 32
      %v10604 = vpop.permute.xlu0 %10603
      %10605 = vrot.lane.b32.xlu0 %v10516, 32
      %v10606 = vpop.permute.xlu0 %10605
      %10607 = vrot.lane.b32.xlu0 %v10517, 32
      %v10608 = vpop.permute.xlu0 %10607
      %10609 = vrot.lane.b32.xlu0 %v10518, 32
      %v10610 = vpop.permute.xlu0 %10609
      %10611 = vrot.lane.b32.xlu0 %v10519, 32
      %v10612 = vpop.permute.xlu0 %10611
      %10613 = vrot.lane.b32.xlu0 %v10520, 32
      %v10614 = vpop.permute.xlu0 %10613
      %10615 = vrot.lane.b32.xlu0 %v10521, 32
      %v10616 = vpop.permute.xlu0 %10615
      %10617 = vrot.lane.b32.xlu0 %v10522, 32
      %v10618 = vpop.permute.xlu0 %10617
      %10635 = vrot.lane.b32.xlu0 %v10523, 48
      %v10636 = vpop.permute.xlu0 %10635
      %10637 = vrot.lane.b32.xlu0 %v10524, 48
      %v10638 = vpop.permute.xlu0 %10637
      %10639 = vrot.lane.b32.xlu0 %v10525, 48
      %v10640 = vpop.permute.xlu0 %10639
      %10641 = vrot.lane.b32.xlu0 %v10526, 48
      %v10642 = vpop.permute.xlu0 %10641
      %10643 = vrot.lane.b32.xlu0 %v10527, 48
      %v10644 = vpop.permute.xlu0 %10643
      %10645 = vrot.lane.b32.xlu0 %v10528, 48
      %v10646 = vpop.permute.xlu0 %10645
      %10647 = vrot.lane.b32.xlu0 %v10529, 48
      %v10648 = vpop.permute.xlu0 %10647
      %10649 = vrot.lane.b32.xlu0 %v10530, 48
      %v10650 = vpop.permute.xlu0 %10649
      %10659 = vrot.lane.b32.xlu0 %v10433, 64
      %v10660 = vpop.permute.xlu0 %10659
      %10661 = vrot.lane.b32.xlu0 %v10434, 64
      %v10662 = vpop.permute.xlu0 %10661
      %10663 = vrot.lane.b32.xlu0 %v10435, 64
      %v10664 = vpop.permute.xlu0 %10663
      %10665 = vrot.lane.b32.xlu0 %v10436, 64
      %v10666 = vpop.permute.xlu0 %10665
      %10667 = vrot.lane.b32.xlu0 %v10437, 64
      %v10668 = vpop.permute.xlu0 %10667
      %10669 = vrot.lane.b32.xlu0 %v10438, 64
      %v10670 = vpop.permute.xlu0 %10669
      %10671 = vrot.lane.b32.xlu0 %v10439, 64
      %v10672 = vpop.permute.xlu0 %10671
      %10673 = vrot.lane.b32.xlu0 %v10440, 64
      %v10674 = vpop.permute.xlu0 %10673
      %10691 = vrot.lane.b32.xlu0 %v10531, 80
      %v10692 = vpop.permute.xlu0 %10691
      %10693 = vrot.lane.b32.xlu0 %v10532, 80
      %v10694 = vpop.permute.xlu0 %10693
      %10695 = vrot.lane.b32.xlu0 %v10533, 80
      %v10696 = vpop.permute.xlu0 %10695
      %10697 = vrot.lane.b32.xlu0 %v10534, 80
      %v10698 = vpop.permute.xlu0 %10697
      %10699 = vrot.lane.b32.xlu0 %v10535, 80
      %v10700 = vpop.permute.xlu0 %10699
      %10701 = vrot.lane.b32.xlu0 %v10536, 80
      %v10702 = vpop.permute.xlu0 %10701
      %10703 = vrot.lane.b32.xlu0 %v10537, 80
      %v10704 = vpop.permute.xlu0 %10703
      %10705 = vrot.lane.b32.xlu0 %v10538, 80
      %v10706 = vpop.permute.xlu0 %10705
      %10723 = vrot.lane.b32.xlu0 %v10539, 96
      %v10724 = vpop.permute.xlu0 %10723
      %10725 = vrot.lane.b32.xlu0 %v10540, 96
      %v10726 = vpop.permute.xlu0 %10725
      %10727 = vrot.lane.b32.xlu0 %v10541, 96
      %v10728 = vpop.permute.xlu0 %10727
      %10729 = vrot.lane.b32.xlu0 %v10542, 96
      %v10730 = vpop.permute.xlu0 %10729
      %10731 = vrot.lane.b32.xlu0 %v10543, 96
      %v10732 = vpop.permute.xlu0 %10731
      %10733 = vrot.lane.b32.xlu0 %v10544, 96
      %v10734 = vpop.permute.xlu0 %10733
      %10735 = vrot.lane.b32.xlu0 %v10545, 96
      %v10736 = vpop.permute.xlu0 %10735
      %10737 = vrot.lane.b32.xlu0 %v10546, 96
      %v10738 = vpop.permute.xlu0 %10737
      %10755 = vrot.lane.b32.xlu0 %v10547, 112
      %v10756 = vpop.permute.xlu0 %10755
      %10757 = vrot.lane.b32.xlu0 %v10548, 112
      %v10758 = vpop.permute.xlu0 %10757
      %10759 = vrot.lane.b32.xlu0 %v10549, 112
      %v10760 = vpop.permute.xlu0 %10759
      %10761 = vrot.lane.b32.xlu0 %v10550, 112
      %v10762 = vpop.permute.xlu0 %10761
      %10763 = vrot.lane.b32.xlu0 %v10551, 112
      %v10764 = vpop.permute.xlu0 %10763
      %10765 = vrot.lane.b32.xlu0 %v10552, 112
      %v10766 = vpop.permute.xlu0 %10765
      %10767 = vrot.lane.b32.xlu0 %v10553, 112
      %v10768 = vpop.permute.xlu0 %10767
      %10769 = vrot.lane.b32.xlu0 %v10554, 112
      %v10770 = vpop.permute.xlu0 %10769
      %v10779 = vsel %vm5521, %v10474, %v10572
      %v10780 = vsel %vm5521, %v10475, %v10574
      %v10781 = vsel %vm5521, %v10476, %v10576
      %v10782 = vsel %vm5521, %v10477, %v10578
      %v10783 = vsel %vm5521, %v10478, %v10580
      %v10784 = vsel %vm5521, %v10479, %v10582
      %v10785 = vsel %vm5521, %v10480, %v10584
      %v10786 = vsel %vm5521, %v10481, %v10586
      %v10787 = vsel %vm5554, %v10779, %v10604
      %v10788 = vsel %vm5554, %v10780, %v10606
      %v10789 = vsel %vm5554, %v10781, %v10608
      %v10790 = vsel %vm5554, %v10782, %v10610
      %v10791 = vsel %vm5554, %v10783, %v10612
      %v10792 = vsel %vm5554, %v10784, %v10614
      %v10793 = vsel %vm5554, %v10785, %v10616
      %v10794 = vsel %vm5554, %v10786, %v10618
      %v10795 = vsel %vm5587, %v10787, %v10636
      %v10796 = vsel %vm5587, %v10788, %v10638
      %v10797 = vsel %vm5587, %v10789, %v10640
      %v10798 = vsel %vm5587, %v10790, %v10642
      %v10799 = vsel %vm5587, %v10791, %v10644
      %v10800 = vsel %vm5587, %v10792, %v10646
      %v10801 = vsel %vm5587, %v10793, %v10648
      %v10802 = vsel %vm5587, %v10794, %v10650
      %v10803 = vsel %vm5620, %v10795, %v10660
      %v10804 = vsel %vm5620, %v10796, %v10662
      %v10805 = vsel %vm5620, %v10797, %v10664
      %v10806 = vsel %vm5620, %v10798, %v10666
      %v10807 = vsel %vm5620, %v10799, %v10668
      %v10808 = vsel %vm5620, %v10800, %v10670
      %v10809 = vsel %vm5620, %v10801, %v10672
      %v10810 = vsel %vm5620, %v10802, %v10674
      %v10811 = vsel %vm5653, %v10803, %v10692
      %v10812 = vsel %vm5653, %v10804, %v10694
      %v10813 = vsel %vm5653, %v10805, %v10696
      %v10814 = vsel %vm5653, %v10806, %v10698
      %v10815 = vsel %vm5653, %v10807, %v10700
      %v10816 = vsel %vm5653, %v10808, %v10702
      %v10817 = vsel %vm5653, %v10809, %v10704
      %v10818 = vsel %vm5653, %v10810, %v10706
      %v10819 = vsel %vm5686, %v10811, %v10724
      %v10820 = vsel %vm5686, %v10812, %v10726
      %v10821 = vsel %vm5686, %v10813, %v10728
      %v10822 = vsel %vm5686, %v10814, %v10730
      %v10823 = vsel %vm5686, %v10815, %v10732
      %v10824 = vsel %vm5686, %v10816, %v10734
      %v10825 = vsel %vm5686, %v10817, %v10736
      %v10826 = vsel %vm5686, %v10818, %v10738
      %v10827 = vsel %vm5719, %v10819, %v10756
      %v10828 = vsel %vm5719, %v10820, %v10758
      %v10829 = vsel %vm5719, %v10821, %v10760
      %v10830 = vsel %vm5719, %v10822, %v10762
      %v10831 = vsel %vm5719, %v10823, %v10764
      %v10832 = vsel %vm5719, %v10824, %v10766
      %v10833 = vsel %vm5719, %v10825, %v10768
      %v10834 = vsel %vm5719, %v10826, %v10770
      %10835 = vrot.lane.b32.xlu0 %v394, 116
      %v10836 = vpop.permute.xlu0 %10835
      %10837 = vrot.lane.b32.xlu0 %v395, 116
      %v10838 = vpop.permute.xlu0 %10837
      %10839 = vrot.lane.b32.xlu0 %v396, 116
      %v10840 = vpop.permute.xlu0 %10839
      %10841 = vrot.lane.b32.xlu0 %v397, 116
      %v10842 = vpop.permute.xlu0 %10841
      %10843 = vrot.lane.b32.xlu0 %v398, 116
      %v10844 = vpop.permute.xlu0 %10843
      %10845 = vrot.lane.b32.xlu0 %v399, 116
      %v10846 = vpop.permute.xlu0 %10845
      %10847 = vrot.lane.b32.xlu0 %v400, 116
      %v10848 = vpop.permute.xlu0 %10847
      %10849 = vrot.lane.b32.xlu0 %v401, 116
      %v10850 = vpop.permute.xlu0 %10849
      %10851 = vrot.lane.b32.xlu0 %v402, 116
      %v10852 = vpop.permute.xlu0 %10851
      %10853 = vrot.lane.b32.xlu0 %v403, 116
      %v10854 = vpop.permute.xlu0 %10853
      %10855 = vrot.lane.b32.xlu0 %v404, 116
      %v10856 = vpop.permute.xlu0 %10855
      %10857 = vrot.lane.b32.xlu0 %v405, 116
      %v10858 = vpop.permute.xlu0 %10857
      %10859 = vrot.lane.b32.xlu0 %v406, 116
      %v10860 = vpop.permute.xlu0 %10859
      %10861 = vrot.lane.b32.xlu0 %v407, 116
      %v10862 = vpop.permute.xlu0 %10861
      %10863 = vrot.lane.b32.xlu0 %v408, 116
      %v10864 = vpop.permute.xlu0 %10863
      %10865 = vrot.lane.b32.xlu0 %v409, 116
      %v10866 = vpop.permute.xlu0 %10865
      %10867 = vrot.lane.b32.xlu0 %v410, 116
      %v10868 = vpop.permute.xlu0 %10867
      %10869 = vrot.lane.b32.xlu0 %v411, 116
      %v10870 = vpop.permute.xlu0 %10869
      %v10890 = vsel %vm5521, %v10555, 0
      %v10893 = vsel %vm5521, %v10556, 0
      %v10896 = vsel %vm5521, %v10557, 0
      %v10899 = vsel %vm5521, %v10558, 0
      %v10902 = vsel %vm5521, %v10559, 0
      %v10905 = vsel %vm5521, %v10560, 0
      %v10908 = vsel %vm5521, %v10561, 0
      %v10911 = vsel %vm5521, %v10562, 0
      %10913 = vmatprep.subr.mxu0 0.0
      %10914 = vmatpush1.msra.mxu0 %v10866
      %10915 = vmatprep.subr.mxu0 0.0
      %10916 = vmatpush1.msra.mxu0 %v10864
      %10917 = vmatprep.subr.mxu0 0.0
      %10918 = vmatpush1.msra.mxu0 %v10862
      %10919 = vmatprep.subr.mxu0 0.0
      %10920 = vmatpush1.msra.mxu0 %v10860
      %10921 = vmatprep.subr.mxu0 0.0
      %10922 = vmatpush1.msra.mxu0 %v10858
      %10923 = vmatprep.subr.mxu0 0.0
      %10924 = vmatpush1.msra.mxu0 %v10856
      %10925 = vmatprep.subr.mxu0 0.0
      %10926 = vmatpush1.msra.mxu0 %v10854
      %10927 = vmatprep.subr.mxu0 0.0
      %10928 = vmatpush1.msra.mxu0 %v10852
      %10929 = vmatprep.subr.mxu0 0.0
      %10930 = vmatpush1.msra.mxu0 %v10850
      %10931 = vmatprep.subr.mxu0 0.0
      %10932 = vmatpush1.msra.mxu0 %v10848
      %10933 = vmatprep.subr.mxu0 0.0
      %10934 = vmatpush1.msra.mxu0 %v10846
      %10935 = vmatprep.subr.mxu0 0.0
      %10936 = vmatpush1.msra.mxu0 %v10844
      %10937 = vmatprep.subr.mxu0 0.0
      %10938 = vmatpush1.msra.mxu0 %v10842
      %10939 = vmatprep.subr.mxu0 0.0
      %10940 = vmatpush1.msra.mxu0 %v10840
      %10941 = vmatprep.subr.mxu0 0.0
      %10942 = vmatpush1.msra.mxu0 %v10838
      %10943 = vmatprep.subr.mxu0 0.0
      %10944 = vmatpush1.msra.mxu0 %v10836
      %10945 = vmatprep.subr.mxu0 0.0
      %10946 = vmatpush2.msra.mxu0 0.0
      %10947 = vmatprep.subr.mxu0 0.0
      %10948 = vmatpush2.msra.mxu0 0.0
      %10949 = vmatprep.subr.mxu0 0.0
      %10950 = vmatpush2.msra.mxu0 0.0
      %10951 = vmatprep.subr.mxu0 0.0
      %10952 = vmatpush2.msra.mxu0 0.0
      %10953 = vmatprep.subr.mxu0 0.0
      %10954 = vmatpush2.msra.mxu0 0.0
      %10955 = vmatprep.subr.mxu0 0.0
      %10956 = vmatpush2.msra.mxu0 0.0
      %10957 = vmatprep.subr.mxu0 0.0
      %10958 = vmatpush2.msra.mxu0 0.0
      %10959 = vmatprep.subr.mxu0 0.0
      %10960 = vmatpush2.msra.mxu0 0.0
      %10961 = vmatprep.subr.mxu0 0.0
      %10962 = vmatpush2.msra.mxu0 0.0
      %10963 = vmatprep.subr.mxu0 0.0
      %10964 = vmatpush2.msra.mxu0 0.0
      %10965 = vmatprep.subr.mxu0 0.0
      %10966 = vmatpush2.msra.mxu0 0.0
      %10967 = vmatprep.subr.mxu0 0.0
      %10968 = vmatpush2.msra.mxu0 0.0
      %10969 = vmatprep.subr.mxu0 0.0
      %10970 = vmatpush2.msra.mxu0 0.0
      %10971 = vmatprep.subr.mxu0 0.0
      %10972 = vmatpush2.msra.mxu0 0.0
      %10973 = vmatprep.subr.mxu0 0.0
      %10974 = vmatpush2.msra.mxu0 %v10870
      %10975 = vmatprep.subr.mxu0 0.0
      %10976 = vmatpush2.msra.mxu0 %v10868
      %10977 = vmatprep.mubr.f32.mxu0 %v10890
      %10978 = vmatmul.mubr.f32.gmra.mxu0 %v10827
      %v10979 = vpop.f32.mrf.mxu0
      %v10980 = vadd.f32 0.0, %v10979
      %v10981 = vpop.f32.mrf.mxu0
      %10982 = vmatprep.mubr.f32.mxu0 %v10893
      %10983 = vmatmul.mubr.f32.gmra.mxu0 %v10828
      %v10984 = vpop.f32.mrf.mxu0
      %v10985 = vadd.f32 0.0, %v10984
      %v10986 = vpop.f32.mrf.mxu0
      %10987 = vmatprep.mubr.f32.mxu0 %v10896
      %10988 = vmatmul.mubr.f32.gmra.mxu0 %v10829
      %v10989 = vpop.f32.mrf.mxu0
      %v10990 = vadd.f32 0.0, %v10989
      %v10991 = vpop.f32.mrf.mxu0
      %10992 = vmatprep.mubr.f32.mxu0 %v10899
      %10993 = vmatmul.mubr.f32.gmra.mxu0 %v10830
      %v10994 = vpop.f32.mrf.mxu0
      %v10995 = vadd.f32 0.0, %v10994
      %v10996 = vpop.f32.mrf.mxu0
      %10997 = vmatprep.mubr.f32.mxu0 %v10902
      %10998 = vmatmul.mubr.f32.gmra.mxu0 %v10831
      %v10999 = vpop.f32.mrf.mxu0
      %v11000 = vadd.f32 0.0, %v10999
      %v11001 = vpop.f32.mrf.mxu0
      %11002 = vmatprep.mubr.f32.mxu0 %v10905
      %11003 = vmatmul.mubr.f32.gmra.mxu0 %v10832
      %v11004 = vpop.f32.mrf.mxu0
      %v11005 = vadd.f32 0.0, %v11004
      %v11006 = vpop.f32.mrf.mxu0
      %11007 = vmatprep.mubr.f32.mxu0 %v10908
      %11008 = vmatmul.mubr.f32.gmra.mxu0 %v10833
      %v11009 = vpop.f32.mrf.mxu0
      %v11010 = vadd.f32 0.0, %v11009
      %v11011 = vpop.f32.mrf.mxu0
      %11012 = vmatprep.mubr.f32.mxu0 %v10911
      %11013 = vmatmul.mubr.f32.gmra.mxu0 %v10834
      %v11014 = vpop.f32.mrf.mxu0
      %v11015 = vadd.f32 0.0, %v11014
      %v11016 = vpop.f32.mrf.mxu0
      %11017 = vdwg.mxu0
      %11026 = vrot.lane.b32.xlu0 %v10980, 12
      %v11027 = vpop.permute.xlu0 %11026
      %11028 = vrot.lane.b32.xlu0 %v10985, 12
      %v11029 = vpop.permute.xlu0 %11028
      %11030 = vrot.lane.b32.xlu0 %v10990, 12
      %v11031 = vpop.permute.xlu0 %11030
      %11032 = vrot.lane.b32.xlu0 %v10995, 12
      %v11033 = vpop.permute.xlu0 %11032
      %11034 = vrot.lane.b32.xlu0 %v11000, 12
      %v11035 = vpop.permute.xlu0 %11034
      %11036 = vrot.lane.b32.xlu0 %v11005, 12
      %v11037 = vpop.permute.xlu0 %11036
      %11038 = vrot.lane.b32.xlu0 %v11010, 12
      %v11039 = vpop.permute.xlu0 %11038
      %11040 = vrot.lane.b32.xlu0 %v11015, 12
      %v11041 = vpop.permute.xlu0 %11040
      %v11050 = vsel %vm3154, %v10237, %v11027
      %v11051 = vsel %vm3154, %v10238, %v11029
      %v11052 = vsel %vm3154, %v10239, %v11031
      %v11053 = vsel %vm3154, %v10240, %v11033
      %v11054 = vsel %vm3154, %v10241, %v11035
      %v11055 = vsel %vm3154, %v10242, %v11037
      %v11056 = vsel %vm3154, %v10243, %v11039
      %v11057 = vsel %vm3154, %v10244, %v11041
      %v11058 = vld [vmem:[%s10] sm:$0xff]
      %v11059 = vld [vmem:[%s10 + $0x8] sm:$0xff]
      %v11060 = vlaneseq
      %v11061 = vshrl.u32 %v11060, 7
      %v11062 = vsub.s32 1, %v11061
      %v11063 = vrot.slane %v413, %v11062
      %v11064 = vmul.f32 %v11050, %v11063
      %v11065 = vmul.f32 %v11051, %v11063
      %v11066 = vmul.f32 %v11052, %v11063
      %v11067 = vmul.f32 %v11053, %v11063
      %v11068 = vmul.f32 %v11054, %v11063
      %v11069 = vmul.f32 %v11055, %v11063
      %v11070 = vmul.f32 %v11056, %v11063
      %v11071 = vmul.f32 %v11057, %v11063
      %v11072 = vlaneseq
      %v11073 = vshrl.u32 %v11072, 7
      %v11074 = vsub.s32 1, %v11073
      %v11075 = vrot.slane %v416, %v11074
      %v11076 = vadd.f32 %v11064, %v11075
      %v11077 = vadd.f32 %v11065, %v11075
      %v11078 = vadd.f32 %v11066, %v11075
      %v11079 = vadd.f32 %v11067, %v11075
      %v11080 = vadd.f32 %v11068, %v11075
      %v11081 = vadd.f32 %v11069, %v11075
      %v11082 = vadd.f32 %v11070, %v11075
      %v11083 = vadd.f32 %v11071, %v11075
      %v11084 = vmax.f32 %v11076, 0.0
      %v11085 = vmax.f32 %v11077, 0.0
      %v11086 = vmax.f32 %v11078, 0.0
      %v11087 = vmax.f32 %v11079, 0.0
      %v11088 = vmax.f32 %v11080, 0.0
      %v11089 = vmax.f32 %v11081, 0.0
      %v11090 = vmax.f32 %v11082, 0.0
      %v11091 = vmax.f32 %v11083, 0.0
      %11094 = vrot.lane.b32.xlu0 %v418, 120
      %v11095 = vpop.permute.xlu0 %11094
      %11096 = vrot.lane.b32.xlu0 %v419, 120
      %v11097 = vpop.permute.xlu0 %11096
      %v11101 = vsel %vm5521, %v11084, 0
      %v11104 = vsel %vm5521, %v11085, 0
      %v11107 = vsel %vm5521, %v11086, 0
      %v11110 = vsel %vm5521, %v11087, 0
      %v11113 = vsel %vm5521, %v11088, 0
      %v11116 = vsel %vm5521, %v11089, 0
      %v11119 = vsel %vm5521, %v11090, 0
      %v11122 = vsel %vm5521, %v11091, 0
      %11124 = vmatprep.subr.mxu0 0.0
      %11125 = vmatpush1.msra.mxu0 0.0
      %11126 = vmatprep.subr.mxu0 0.0
      %11127 = vmatpush1.msra.mxu0 0.0
      %11128 = vmatprep.subr.mxu0 0.0
      %11129 = vmatpush1.msra.mxu0 0.0
      %11130 = vmatprep.subr.mxu0 0.0
      %11131 = vmatpush1.msra.mxu0 0.0
      %11132 = vmatprep.subr.mxu0 0.0
      %11133 = vmatpush1.msra.mxu0 0.0
      %11134 = vmatprep.subr.mxu0 0.0
      %11135 = vmatpush1.msra.mxu0 0.0
      %11136 = vmatprep.subr.mxu0 0.0
      %11137 = vmatpush1.msra.mxu0 0.0
      %11138 = vmatprep.subr.mxu0 0.0
      %11139 = vmatpush1.msra.mxu0 0.0
      %11140 = vmatprep.subr.mxu0 0.0
      %11141 = vmatpush1.msra.mxu0 0.0
      %11142 = vmatprep.subr.mxu0 0.0
      %11143 = vmatpush1.msra.mxu0 0.0
      %11144 = vmatprep.subr.mxu0 0.0
      %11145 = vmatpush1.msra.mxu0 0.0
      %11146 = vmatprep.subr.mxu0 0.0
      %11147 = vmatpush1.msra.mxu0 0.0
      %11148 = vmatprep.subr.mxu0 0.0
      %11149 = vmatpush1.msra.mxu0 0.0
      %11150 = vmatprep.subr.mxu0 0.0
      %11151 = vmatpush1.msra.mxu0 0.0
      %11152 = vmatprep.subr.mxu0 0.0
      %11153 = vmatpush1.msra.mxu0 %v11097
      %11154 = vmatprep.subr.mxu0 0.0
      %11155 = vmatpush1.msra.mxu0 %v11095
      %11156 = vmatprep.subr.mxu0 0.0
      %11157 = vmatpush2.msra.mxu0 0.0
      %11158 = vmatprep.subr.mxu0 0.0
      %11159 = vmatpush2.msra.mxu0 0.0
      %11160 = vmatprep.subr.mxu0 0.0
      %11161 = vmatpush2.msra.mxu0 0.0
      %11162 = vmatprep.subr.mxu0 0.0
      %11163 = vmatpush2.msra.mxu0 0.0
      %11164 = vmatprep.subr.mxu0 0.0
      %11165 = vmatpush2.msra.mxu0 0.0
      %11166 = vmatprep.subr.mxu0 0.0
      %11167 = vmatpush2.msra.mxu0 0.0
      %11168 = vmatprep.subr.mxu0 0.0
      %11169 = vmatpush2.msra.mxu0 0.0
      %11170 = vmatprep.subr.mxu0 0.0
      %11171 = vmatpush2.msra.mxu0 0.0
      %11172 = vmatprep.subr.mxu0 0.0
      %11173 = vmatpush2.msra.mxu0 0.0
      %11174 = vmatprep.subr.mxu0 0.0
      %11175 = vmatpush2.msra.mxu0 0.0
      %11176 = vmatprep.subr.mxu0 0.0
      %11177 = vmatpush2.msra.mxu0 0.0
      %11178 = vmatprep.subr.mxu0 0.0
      %11179 = vmatpush2.msra.mxu0 0.0
      %11180 = vmatprep.subr.mxu0 0.0
      %11181 = vmatpush2.msra.mxu0 0.0
      %11182 = vmatprep.subr.mxu0 0.0
      %11183 = vmatpush2.msra.mxu0 0.0
      %11184 = vmatprep.subr.mxu0 0.0
      %11185 = vmatpush2.msra.mxu0 0.0
      %11186 = vmatprep.subr.mxu0 0.0
      %11187 = vmatpush2.msra.mxu0 0.0
      %11188 = vmatprep.mubr.f32.mxu0 0.0
      %11189 = vmatmul.mubr.f32.gmra.mxu0 %v11101
      %v11190 = vpop.f32.mrf.mxu0
      %v11191 = vadd.f32 0.0, %v11190
      %v11192 = vpop.f32.mrf.mxu0
      %11193 = vmatprep.mubr.f32.mxu0 0.0
      %11194 = vmatmul.mubr.f32.gmra.mxu0 %v11104
      %v11195 = vpop.f32.mrf.mxu0
      %v11196 = vadd.f32 0.0, %v11195
      %v11197 = vpop.f32.mrf.mxu0
      %11198 = vmatprep.mubr.f32.mxu0 0.0
      %11199 = vmatmul.mubr.f32.gmra.mxu0 %v11107
      %v11200 = vpop.f32.mrf.mxu0
      %v11201 = vadd.f32 0.0, %v11200
      %v11202 = vpop.f32.mrf.mxu0
      %11203 = vmatprep.mubr.f32.mxu0 0.0
      %11204 = vmatmul.mubr.f32.gmra.mxu0 %v11110
      %v11205 = vpop.f32.mrf.mxu0
      %v11206 = vadd.f32 0.0, %v11205
      %v11207 = vpop.f32.mrf.mxu0
      %11208 = vmatprep.mubr.f32.mxu0 0.0
      %11209 = vmatmul.mubr.f32.gmra.mxu0 %v11113
      %v11210 = vpop.f32.mrf.mxu0
      %v11211 = vadd.f32 0.0, %v11210
      %v11212 = vpop.f32.mrf.mxu0
      %11213 = vmatprep.mubr.f32.mxu0 0.0
      %11214 = vmatmul.mubr.f32.gmra.mxu0 %v11116
      %v11215 = vpop.f32.mrf.mxu0
      %v11216 = vadd.f32 0.0, %v11215
      %v11217 = vpop.f32.mrf.mxu0
      %11218 = vmatprep.mubr.f32.mxu0 0.0
      %11219 = vmatmul.mubr.f32.gmra.mxu0 %v11119
      %v11220 = vpop.f32.mrf.mxu0
      %v11221 = vadd.f32 0.0, %v11220
      %v11222 = vpop.f32.mrf.mxu0
      %11223 = vmatprep.mubr.f32.mxu0 0.0
      %11224 = vmatmul.mubr.f32.gmra.mxu0 %v11122
      %v11225 = vpop.f32.mrf.mxu0
      %v11226 = vadd.f32 0.0, %v11225
      %v11227 = vpop.f32.mrf.mxu0
      %11228 = vdwg.mxu0
      %v11230 = vsel %vm5620, %v11058, 0
      %v11233 = vsel %vm5620, %v11059, 0
      %11235 = vmatprep.subr.mxu0 0.0
      %11236 = vmatpush1.msra.mxu0 0.0
      %11237 = vmatprep.subr.mxu0 0.0
      %11238 = vmatpush1.msra.mxu0 0.0
      %11239 = vmatprep.subr.mxu0 0.0
      %11240 = vmatpush1.msra.mxu0 0.0
      %11241 = vmatprep.subr.mxu0 0.0
      %11242 = vmatpush1.msra.mxu0 0.0
      %11243 = vmatprep.subr.mxu0 0.0
      %11244 = vmatpush1.msra.mxu0 0.0
      %11245 = vmatprep.subr.mxu0 0.0
      %11246 = vmatpush1.msra.mxu0 0.0
      %11247 = vmatprep.subr.mxu0 0.0
      %11248 = vmatpush1.msra.mxu0 0.0
      %11249 = vmatprep.subr.mxu0 0.0
      %11250 = vmatpush1.msra.mxu0 0.0
      %11251 = vmatprep.subr.mxu0 0.0
      %11252 = vmatpush1.msra.mxu0 %v11226
      %11253 = vmatprep.subr.mxu0 0.0
      %11254 = vmatpush1.msra.mxu0 %v11221
      %11255 = vmatprep.subr.mxu0 0.0
      %11256 = vmatpush1.msra.mxu0 %v11216
      %11257 = vmatprep.subr.mxu0 0.0
      %11258 = vmatpush1.msra.mxu0 %v11211
      %11259 = vmatprep.subr.mxu0 0.0
      %11260 = vmatpush1.msra.mxu0 %v11206
      %11261 = vmatprep.subr.mxu0 0.0
      %11262 = vmatpush1.msra.mxu0 %v11201
      %11263 = vmatprep.subr.mxu0 0.0
      %11264 = vmatpush1.msra.mxu0 %v11196
      %11265 = vmatprep.subr.mxu0 0.0
      %11266 = vmatpush1.msra.mxu0 %v11191
      %11267 = vmatprep.subr.mxu0 0.0
      %11268 = vmatpush2.msra.mxu0 0.0
      %11269 = vmatprep.subr.mxu0 0.0
      %11270 = vmatpush2.msra.mxu0 0.0
      %11271 = vmatprep.subr.mxu0 0.0
      %11272 = vmatpush2.msra.mxu0 0.0
      %11273 = vmatprep.subr.mxu0 0.0
      %11274 = vmatpush2.msra.mxu0 0.0
      %11275 = vmatprep.subr.mxu0 0.0
      %11276 = vmatpush2.msra.mxu0 0.0
      %11277 = vmatprep.subr.mxu0 0.0
      %11278 = vmatpush2.msra.mxu0 0.0
      %11279 = vmatprep.subr.mxu0 0.0
      %11280 = vmatpush2.msra.mxu0 0.0
      %11281 = vmatprep.subr.mxu0 0.0
      %11282 = vmatpush2.msra.mxu0 0.0
      %11283 = vmatprep.subr.mxu0 0.0
      %11284 = vmatpush2.msra.mxu0 0.0
      %11285 = vmatprep.subr.mxu0 0.0
      %11286 = vmatpush2.msra.mxu0 0.0
      %11287 = vmatprep.subr.mxu0 0.0
      %11288 = vmatpush2.msra.mxu0 0.0
      %11289 = vmatprep.subr.mxu0 0.0
      %11290 = vmatpush2.msra.mxu0 0.0
      %11291 = vmatprep.subr.mxu0 0.0
      %11292 = vmatpush2.msra.mxu0 0.0
      %11293 = vmatprep.subr.mxu0 0.0
      %11294 = vmatpush2.msra.mxu0 0.0
      %11295 = vmatprep.subr.mxu0 0.0
      %11296 = vmatpush2.msra.mxu0 0.0
      %11297 = vmatprep.subr.mxu0 0.0
      %11298 = vmatpush2.msra.mxu0 0.0
      %11299 = vmatprep.mubr.f32.mxu0 0.0
      %11300 = vmatmul.mubr.f32.gmra.mxu0 %v11230
      %v11301 = vpop.f32.mrf.mxu0
      %v11302 = vadd.f32 0.0, %v11301
      %v11303 = vpop.f32.mrf.mxu0
      %11304 = vmatprep.mubr.f32.mxu0 0.0
      %11305 = vmatmul.mubr.f32.gmra.mxu0 %v11233
      %v11306 = vpop.f32.mrf.mxu0
      %v11307 = vadd.f32 0.0, %v11306
      %v11308 = vpop.f32.mrf.mxu0
      %11309 = vdwg.mxu0
      %v11310 = vlaneseq
      %v11311 = vshrl.u32 %v11310, 7
      %v11312 = vsub.s32 2, %v11311
      %v11313 = vrot.slane %v413, %v11312
      %v11314 = vmul.f32 %v11302, %v11313
      %v11315 = vmul.f32 %v11307, %v11313
      %v11316 = vlaneseq
      %v11317 = vshrl.u32 %v11316, 7
      %v11318 = vsub.s32 2, %v11317
      %v11319 = vrot.slane %v416, %v11318
      %v11320 = vadd.f32 %v11314, %v11319
      %v11321 = vadd.f32 %v11315, %v11319
      %v11322 = vmax.f32 %v11320, 0.0
      %v11323 = vmax.f32 %v11321, 0.0
      %v11325 = vsel %vm3749, %v11322, 0
      %v11328 = vsel %vm3749, %v11323, 0
      %11330 = vmatprep.subr.mxu0 0.0
      %11331 = vmatpush1.msra.mxu0 0.0
      %11332 = vmatprep.subr.mxu0 0.0
      %11333 = vmatpush1.msra.mxu0 0.0
      %11334 = vmatprep.subr.mxu0 0.0
      %11335 = vmatpush1.msra.mxu0 0.0
      %11336 = vmatprep.subr.mxu0 0.0
      %11337 = vmatpush1.msra.mxu0 0.0
      %11338 = vmatprep.subr.mxu0 0.0
      %11339 = vmatpush1.msra.mxu0 0.0
      %11340 = vmatprep.subr.mxu0 0.0
      %11341 = vmatpush1.msra.mxu0 0.0
      %11342 = vmatprep.subr.mxu0 0.0
      %11343 = vmatpush1.msra.mxu0 0.0
      %11344 = vmatprep.subr.mxu0 0.0
      %11345 = vmatpush1.msra.mxu0 0.0
      %11346 = vmatprep.subr.mxu0 0.0
      %11347 = vmatpush1.msra.mxu0 0.0
      %11348 = vmatprep.subr.mxu0 0.0
      %11349 = vmatpush1.msra.mxu0 0.0
      %11350 = vmatprep.subr.mxu0 0.0
      %11351 = vmatpush1.msra.mxu0 0.0
      %11352 = vmatprep.subr.mxu0 0.0
      %11353 = vmatpush1.msra.mxu0 0.0
      %11354 = vmatprep.subr.mxu0 0.0
      %11355 = vmatpush1.msra.mxu0 0.0
      %11356 = vmatprep.subr.mxu0 0.0
      %11357 = vmatpush1.msra.mxu0 0.0
      %11358 = vmatprep.subr.mxu0 0.0
      %11359 = vmatpush1.msra.mxu0 0.0
      %11360 = vmatprep.subr.mxu0 0.0
      %11361 = vmatpush1.msra.mxu0 %v391
      %11362 = vmatprep.subr.mxu0 0.0
      %11363 = vmatpush2.msra.mxu0 0.0
      %11364 = vmatprep.subr.mxu0 0.0
      %11365 = vmatpush2.msra.mxu0 0.0
      %11366 = vmatprep.subr.mxu0 0.0
      %11367 = vmatpush2.msra.mxu0 0.0
      %11368 = vmatprep.subr.mxu0 0.0
      %11369 = vmatpush2.msra.mxu0 0.0
      %11370 = vmatprep.subr.mxu0 0.0
      %11371 = vmatpush2.msra.mxu0 0.0
      %11372 = vmatprep.subr.mxu0 0.0
      %11373 = vmatpush2.msra.mxu0 0.0
      %11374 = vmatprep.subr.mxu0 0.0
      %11375 = vmatpush2.msra.mxu0 0.0
      %11376 = vmatprep.subr.mxu0 0.0
      %11377 = vmatpush2.msra.mxu0 0.0
      %11378 = vmatprep.subr.mxu0 0.0
      %11379 = vmatpush2.msra.mxu0 0.0
      %11380 = vmatprep.subr.mxu0 0.0
      %11381 = vmatpush2.msra.mxu0 0.0
      %11382 = vmatprep.subr.mxu0 0.0
      %11383 = vmatpush2.msra.mxu0 0.0
      %11384 = vmatprep.subr.mxu0 0.0
      %11385 = vmatpush2.msra.mxu0 0.0
      %11386 = vmatprep.subr.mxu0 0.0
      %11387 = vmatpush2.msra.mxu0 0.0
      %11388 = vmatprep.subr.mxu0 0.0
      %11389 = vmatpush2.msra.mxu0 0.0
      %11390 = vmatprep.subr.mxu0 0.0
      %11391 = vmatpush2.msra.mxu0 0.0
      %11392 = vmatprep.subr.mxu0 0.0
      %11393 = vmatpush2.msra.mxu0 0.0
      %11394 = vmatprep.mubr.f32.mxu0 0.0
      %11395 = vmatmul.mubr.f32.gmra.mxu0 %v11325
      %v11396 = vpop.f32.mrf.mxu0
      %v11397 = vadd.f32 0.0, %v11396
      %v11398 = vpop.f32.mrf.mxu0
      %11399 = vmatprep.mubr.f32.mxu0 0.0
      %11400 = vmatmul.mubr.f32.gmra.mxu0 %v11328
      %v11401 = vpop.f32.mrf.mxu0
      %v11402 = vadd.f32 0.0, %v11401
      %v11403 = vpop.f32.mrf.mxu0
      %11404 = vdwg.mxu0
      %v11405 = vlaneseq
      %v11406 = vshrl.u32 %v11405, 7
      %v11407 = vsub.s32 3, %v11406
      %v11408 = vrot.slane %v413, %v11407
      %v11409 = vmul.f32 %v11397, %v11408
      %v11410 = vmul.f32 %v11402, %v11408
      %v11411 = vlaneseq
      %v11412 = vshrl.u32 %v11411, 7
      %v11413 = vsub.s32 3, %v11412
      %v11414 = vrot.slane %v416, %v11413
      %v11415 = vadd.f32 %v11409, %v11414
      %v11416 = vadd.f32 %v11410, %v11414
      %v11417 = vmax.f32 %v11415, 0.0
      %v11418 = vmax.f32 %v11416, 0.0
      %v11420 = vrot.slane %v11418, 3
      %vm11423 = vcmask 1044480
      %v11424 = vrot.slane %v11417, 3
      %v11425 = vsel %vm11423, %v11424, %v11420
      %v11428 = vsel %vm11423, %v11420, %v11424
      %v11429 = vmul.f32 %v11428, %v1507
      %v11430 = vmul.f32 %v11425, %v1508
      %v11431 = vrot.slane %v11418, 4
      %v11433 = vrot.slane %v11417, 4
      %v11434 = vsel %vm6433, %v11433, %v11431
      %v11437 = vsel %vm6433, %v11431, %v11433
      %v11438 = vmul.f32 %v11437, %v1511
      %v11439 = vmul.f32 %v11434, %v1512
      %v11440 = vrot.slane %v11418, 5
      %v11442 = vrot.slane %v11417, 5
      %v11443 = vsel %vm3416, %v11442, %v11440
      %v11446 = vsel %vm3416, %v11440, %v11442
      %v11447 = vmul.f32 %v11446, %v1517
      %v11448 = vmul.f32 %v11443, %v1518
      %v11449 = vrot.slane %v11418, 7
      %v11451 = vrot.slane %v11417, 7
      %v11452 = vsel %vm1582, %v11451, %v11449
      %v11455 = vsel %vm1582, %v11449, %v11451
      %v11456 = vmul.f32 %v11455, %v1521
      %v11457 = vmul.f32 %v11452, %v1522
      %v11458 = vrot.slane %v11417, 1
      %v11459 = vrot.slane %v11418, 1
      %v11460 = vsel %vm1773, %v11458, %v11459
      %v11464 = vsel %vm1773, %v11459, %v11458
      %v11465 = vmul.f32 %v11460, %v1525
      %v11466 = vmul.f32 %v11464, %v1526
      %v11467 = vmul.f32 %v11425, %v1531
      %v11468 = vmul.f32 %v11428, %v1532
      %v11469 = vmul.f32 %v11434, %v1535
      %v11470 = vmul.f32 %v11437, %v1536
      %v11471 = vmul.f32 %v11443, %v1541
      %v11472 = vmul.f32 %v11446, %v1542
      %11475 = vrot.lane.b32.xlu0 %v11438, 16
      %v11476 = vpop.permute.xlu0 %11475
      %11477 = vrot.lane.b32.xlu0 %v11439, 16
      %v11478 = vpop.permute.xlu0 %11477
      %11483 = vrot.lane.b32.xlu0 %v11447, 32
      %v11484 = vpop.permute.xlu0 %11483
      %11485 = vrot.lane.b32.xlu0 %v11448, 32
      %v11486 = vpop.permute.xlu0 %11485
      %11491 = vrot.lane.b32.xlu0 %v11456, 48
      %v11492 = vpop.permute.xlu0 %11491
      %11493 = vrot.lane.b32.xlu0 %v11457, 48
      %v11494 = vpop.permute.xlu0 %11493
      %11497 = vrot.lane.b32.xlu0 %v11417, 64
      %v11498 = vpop.permute.xlu0 %11497
      %11499 = vrot.lane.b32.xlu0 %v11418, 64
      %v11500 = vpop.permute.xlu0 %11499
      %11505 = vrot.lane.b32.xlu0 %v11465, 80
      %v11506 = vpop.permute.xlu0 %11505
      %11507 = vrot.lane.b32.xlu0 %v11466, 80
      %v11508 = vpop.permute.xlu0 %11507
      %11513 = vrot.lane.b32.xlu0 %v11467, 96
      %v11514 = vpop.permute.xlu0 %11513
      %11515 = vrot.lane.b32.xlu0 %v11468, 96
      %v11516 = vpop.permute.xlu0 %11515
      %11521 = vrot.lane.b32.xlu0 %v11469, 112
      %v11522 = vpop.permute.xlu0 %11521
      %11523 = vrot.lane.b32.xlu0 %v11470, 112
      %v11524 = vpop.permute.xlu0 %11523
      %v11527 = vsel %vm5521, %v11429, %v11476
      %v11528 = vsel %vm5521, %v11430, %v11478
      %v11529 = vsel %vm5554, %v11527, %v11484
      %v11530 = vsel %vm5554, %v11528, %v11486
      %v11531 = vsel %vm5587, %v11529, %v11492
      %v11532 = vsel %vm5587, %v11530, %v11494
      %v11533 = vsel %vm5620, %v11531, %v11498
      %v11534 = vsel %vm5620, %v11532, %v11500
      %v11535 = vsel %vm5653, %v11533, %v11506
      %v11536 = vsel %vm5653, %v11534, %v11508
      %v11537 = vsel %vm5686, %v11535, %v11514
      %v11538 = vsel %vm5686, %v11536, %v11516
      %v11539 = vsel %vm5719, %v11537, %v11522
      %v11540 = vsel %vm5719, %v11538, %v11524
      %11541 = vrot.lane.b32.xlu0 %v394, 112
      %v11542 = vpop.permute.xlu0 %11541
      %11543 = vrot.lane.b32.xlu0 %v395, 112
      %v11544 = vpop.permute.xlu0 %11543
      %11545 = vrot.lane.b32.xlu0 %v396, 112
      %v11546 = vpop.permute.xlu0 %11545
      %11547 = vrot.lane.b32.xlu0 %v397, 112
      %v11548 = vpop.permute.xlu0 %11547
      %11549 = vrot.lane.b32.xlu0 %v398, 112
      %v11550 = vpop.permute.xlu0 %11549
      %11551 = vrot.lane.b32.xlu0 %v399, 112
      %v11552 = vpop.permute.xlu0 %11551
      %11553 = vrot.lane.b32.xlu0 %v400, 112
      %v11554 = vpop.permute.xlu0 %11553
      %11555 = vrot.lane.b32.xlu0 %v401, 112
      %v11556 = vpop.permute.xlu0 %11555
      %11557 = vrot.lane.b32.xlu0 %v402, 112
      %v11558 = vpop.permute.xlu0 %11557
      %11559 = vrot.lane.b32.xlu0 %v403, 112
      %v11560 = vpop.permute.xlu0 %11559
      %11561 = vrot.lane.b32.xlu0 %v404, 112
      %v11562 = vpop.permute.xlu0 %11561
      %11563 = vrot.lane.b32.xlu0 %v405, 112
      %v11564 = vpop.permute.xlu0 %11563
      %11565 = vrot.lane.b32.xlu0 %v406, 112
      %v11566 = vpop.permute.xlu0 %11565
      %11567 = vrot.lane.b32.xlu0 %v407, 112
      %v11568 = vpop.permute.xlu0 %11567
      %11569 = vrot.lane.b32.xlu0 %v408, 112
      %v11570 = vpop.permute.xlu0 %11569
      %11571 = vrot.lane.b32.xlu0 %v409, 112
      %v11572 = vpop.permute.xlu0 %11571
      %11573 = vrot.lane.b32.xlu0 %v410, 112
      %v11574 = vpop.permute.xlu0 %11573
      %11575 = vrot.lane.b32.xlu0 %v411, 112
      %v11576 = vpop.permute.xlu0 %11575
      %v11596 = vsel %vm5521, %v11471, 0
      %v11599 = vsel %vm5521, %v11472, 0
      %11601 = vmatprep.subr.mxu0 0.0
      %11602 = vmatpush1.msra.mxu0 %v11572
      %11603 = vmatprep.subr.mxu0 0.0
      %11604 = vmatpush1.msra.mxu0 %v11570
      %11605 = vmatprep.subr.mxu0 0.0
      %11606 = vmatpush1.msra.mxu0 %v11568
      %11607 = vmatprep.subr.mxu0 0.0
      %11608 = vmatpush1.msra.mxu0 %v11566
      %11609 = vmatprep.subr.mxu0 0.0
      %11610 = vmatpush1.msra.mxu0 %v11564
      %11611 = vmatprep.subr.mxu0 0.0
      %11612 = vmatpush1.msra.mxu0 %v11562
      %11613 = vmatprep.subr.mxu0 0.0
      %11614 = vmatpush1.msra.mxu0 %v11560
      %11615 = vmatprep.subr.mxu0 0.0
      %11616 = vmatpush1.msra.mxu0 %v11558
      %11617 = vmatprep.subr.mxu0 0.0
      %11618 = vmatpush1.msra.mxu0 %v11556
      %11619 = vmatprep.subr.mxu0 0.0
      %11620 = vmatpush1.msra.mxu0 %v11554
      %11621 = vmatprep.subr.mxu0 0.0
      %11622 = vmatpush1.msra.mxu0 %v11552
      %11623 = vmatprep.subr.mxu0 0.0
      %11624 = vmatpush1.msra.mxu0 %v11550
      %11625 = vmatprep.subr.mxu0 0.0
      %11626 = vmatpush1.msra.mxu0 %v11548
      %11627 = vmatprep.subr.mxu0 0.0
      %11628 = vmatpush1.msra.mxu0 %v11546
      %11629 = vmatprep.subr.mxu0 0.0
      %11630 = vmatpush1.msra.mxu0 %v11544
      %11631 = vmatprep.subr.mxu0 0.0
      %11632 = vmatpush1.msra.mxu0 %v11542
      %11633 = vmatprep.subr.mxu0 0.0
      %11634 = vmatpush2.msra.mxu0 0.0
      %11635 = vmatprep.subr.mxu0 0.0
      %11636 = vmatpush2.msra.mxu0 0.0
      %11637 = vmatprep.subr.mxu0 0.0
      %11638 = vmatpush2.msra.mxu0 0.0
      %11639 = vmatprep.subr.mxu0 0.0
      %11640 = vmatpush2.msra.mxu0 0.0
      %11641 = vmatprep.subr.mxu0 0.0
      %11642 = vmatpush2.msra.mxu0 0.0
      %11643 = vmatprep.subr.mxu0 0.0
      %11644 = vmatpush2.msra.mxu0 0.0
      %11645 = vmatprep.subr.mxu0 0.0
      %11646 = vmatpush2.msra.mxu0 0.0
      %11647 = vmatprep.subr.mxu0 0.0
      %11648 = vmatpush2.msra.mxu0 0.0
      %11649 = vmatprep.subr.mxu0 0.0
      %11650 = vmatpush2.msra.mxu0 0.0
      %11651 = vmatprep.subr.mxu0 0.0
      %11652 = vmatpush2.msra.mxu0 0.0
      %11653 = vmatprep.subr.mxu0 0.0
      %11654 = vmatpush2.msra.mxu0 0.0
      %11655 = vmatprep.subr.mxu0 0.0
      %11656 = vmatpush2.msra.mxu0 0.0
      %11657 = vmatprep.subr.mxu0 0.0
      %11658 = vmatpush2.msra.mxu0 0.0
      %11659 = vmatprep.subr.mxu0 0.0
      %11660 = vmatpush2.msra.mxu0 0.0
      %11661 = vmatprep.subr.mxu0 0.0
      %11662 = vmatpush2.msra.mxu0 %v11576
      %11663 = vmatprep.subr.mxu0 0.0
      %11664 = vmatpush2.msra.mxu0 %v11574
      %11665 = vmatprep.mubr.f32.mxu0 %v11596
      %11666 = vmatmul.mubr.f32.gmra.mxu0 %v11539
      %v11667 = vpop.f32.mrf.mxu0
      %v11668 = vadd.f32 0.0, %v11667
      %v11669 = vpop.f32.mrf.mxu0
      %11670 = vmatprep.mubr.f32.mxu0 %v11599
      %11671 = vmatmul.mubr.f32.gmra.mxu0 %v11540
      %v11672 = vpop.f32.mrf.mxu0
      %v11673 = vadd.f32 0.0, %v11672
      %v11674 = vpop.f32.mrf.mxu0
      %11675 = vdwg.mxu0
      %11678 = vrot.lane.b32.xlu0 %v11668, 8
      %v11679 = vpop.permute.xlu0 %11678
      %11680 = vrot.lane.b32.xlu0 %v11673, 8
      %v11681 = vpop.permute.xlu0 %11680
      %v11684 = vsel %vm3749, %v11302, %v11679
      %v11685 = vsel %vm3749, %v11307, %v11681
      %v11686 = vlaneseq
      %v11687 = vshrl.u32 %v11686, 7
      %v11688 = vsub.s32 4, %v11687
      %v11689 = vrot.slane %v413, %v11688
      %v11690 = vmul.f32 %v11684, %v11689
      %v11691 = vmul.f32 %v11685, %v11689
      %v11692 = vlaneseq
      %v11693 = vshrl.u32 %v11692, 7
      %v11694 = vsub.s32 4, %v11693
      %v11695 = vrot.slane %v416, %v11694
      %v11696 = vadd.f32 %v11690, %v11695
      %v11697 = vadd.f32 %v11691, %v11695
      %v11698 = vmax.f32 %v11696, 0.0
      %v11699 = vmax.f32 %v11697, 0.0
      %v11701 = vsel %vm3154, %v11698, 0
      %v11704 = vsel %vm3154, %v11699, 0
      %v11707 = vsel %vm6433, %v393, 0
      %11709 = vmatprep.subr.mxu0 0.0
      %11710 = vmatpush1.msra.mxu0 0.0
      %11711 = vmatprep.subr.mxu0 0.0
      %11712 = vmatpush1.msra.mxu0 0.0
      %11713 = vmatprep.subr.mxu0 0.0
      %11714 = vmatpush1.msra.mxu0 0.0
      %11715 = vmatprep.subr.mxu0 0.0
      %11716 = vmatpush1.msra.mxu0 0.0
      %11717 = vmatprep.subr.mxu0 0.0
      %11718 = vmatpush1.msra.mxu0 0.0
      %11719 = vmatprep.subr.mxu0 0.0
      %11720 = vmatpush1.msra.mxu0 0.0
      %11721 = vmatprep.subr.mxu0 0.0
      %11722 = vmatpush1.msra.mxu0 0.0
      %11723 = vmatprep.subr.mxu0 0.0
      %11724 = vmatpush1.msra.mxu0 0.0
      %11725 = vmatprep.subr.mxu0 0.0
      %11726 = vmatpush1.msra.mxu0 0.0
      %11727 = vmatprep.subr.mxu0 0.0
      %11728 = vmatpush1.msra.mxu0 0.0
      %11729 = vmatprep.subr.mxu0 0.0
      %11730 = vmatpush1.msra.mxu0 0.0
      %11731 = vmatprep.subr.mxu0 0.0
      %11732 = vmatpush1.msra.mxu0 0.0
      %11733 = vmatprep.subr.mxu0 0.0
      %11734 = vmatpush1.msra.mxu0 0.0
      %11735 = vmatprep.subr.mxu0 0.0
      %11736 = vmatpush1.msra.mxu0 0.0
      %11737 = vmatprep.subr.mxu0 0.0
      %11738 = vmatpush1.msra.mxu0 %v11707
      %11739 = vmatprep.subr.mxu0 0.0
      %11740 = vmatpush1.msra.mxu0 %v392
      %11741 = vmatprep.subr.mxu0 0.0
      %11742 = vmatpush2.msra.mxu0 0.0
      %11743 = vmatprep.subr.mxu0 0.0
      %11744 = vmatpush2.msra.mxu0 0.0
      %11745 = vmatprep.subr.mxu0 0.0
      %11746 = vmatpush2.msra.mxu0 0.0
      %11747 = vmatprep.subr.mxu0 0.0
      %11748 = vmatpush2.msra.mxu0 0.0
      %11749 = vmatprep.subr.mxu0 0.0
      %11750 = vmatpush2.msra.mxu0 0.0
      %11751 = vmatprep.subr.mxu0 0.0
      %11752 = vmatpush2.msra.mxu0 0.0
      %11753 = vmatprep.subr.mxu0 0.0
      %11754 = vmatpush2.msra.mxu0 0.0
      %11755 = vmatprep.subr.mxu0 0.0
      %11756 = vmatpush2.msra.mxu0 0.0
      %11757 = vmatprep.subr.mxu0 0.0
      %11758 = vmatpush2.msra.mxu0 0.0
      %11759 = vmatprep.subr.mxu0 0.0
      %11760 = vmatpush2.msra.mxu0 0.0
      %11761 = vmatprep.subr.mxu0 0.0
      %11762 = vmatpush2.msra.mxu0 0.0
      %11763 = vmatprep.subr.mxu0 0.0
      %11764 = vmatpush2.msra.mxu0 0.0
      %11765 = vmatprep.subr.mxu0 0.0
      %11766 = vmatpush2.msra.mxu0 0.0
      %11767 = vmatprep.subr.mxu0 0.0
      %11768 = vmatpush2.msra.mxu0 0.0
      %11769 = vmatprep.subr.mxu0 0.0
      %11770 = vmatpush2.msra.mxu0 0.0
      %11771 = vmatprep.subr.mxu0 0.0
      %11772 = vmatpush2.msra.mxu0 0.0
      %11773 = vmatprep.mubr.f32.mxu0 0.0
      %11774 = vmatmul.mubr.f32.gmra.mxu0 %v11701
      %v11775 = vpop.f32.mrf.mxu0
      %v11776 = vadd.f32 0.0, %v11775
      %v11777 = vpop.f32.mrf.mxu0
      %11778 = vmatprep.mubr.f32.mxu0 0.0
      %11779 = vmatmul.mubr.f32.gmra.mxu0 %v11704
      %v11780 = vpop.f32.mrf.mxu0
      %v11781 = vadd.f32 0.0, %v11780
      %v11782 = vpop.f32.mrf.mxu0
      %11783 = vdwg.mxu0
      %v11784 = vlaneseq
      %v11785 = vshrl.u32 %v11784, 7
      %v11786 = vsub.s32 5, %v11785
      %v11787 = vrot.slane %v413, %v11786
      %v11788 = vmul.f32 %v11776, %v11787
      %v11789 = vmul.f32 %v11781, %v11787
      %v11790 = vlaneseq
      %v11791 = vshrl.u32 %v11790, 7
      %v11792 = vsub.s32 5, %v11791
      %v11793 = vrot.slane %v416, %v11792
      %v11794 = vadd.f32 %v11788, %v11793
      %v11795 = vadd.f32 %v11789, %v11793
      %v11796 = vmax.f32 %v11794, 0.0
      %v11797 = vmax.f32 %v11795, 0.0
      %v11799 = vrot.slane %v11797, 3
      %v11802 = vrot.slane %v11796, 3
      %v11803 = vsel %vm11423, %v11802, %v11799
      %v11806 = vsel %vm11423, %v11799, %v11802
      %v11807 = vmul.f32 %v11806, %v1507
      %v11808 = vmul.f32 %v11803, %v1508
      %v11809 = vrot.slane %v11797, 4
      %v11811 = vrot.slane %v11796, 4
      %v11812 = vsel %vm6433, %v11811, %v11809
      %v11815 = vsel %vm6433, %v11809, %v11811
      %v11816 = vmul.f32 %v11815, %v1511
      %v11817 = vmul.f32 %v11812, %v1512
      %v11818 = vrot.slane %v11797, 5
      %v11820 = vrot.slane %v11796, 5
      %v11821 = vsel %vm3416, %v11820, %v11818
      %v11824 = vsel %vm3416, %v11818, %v11820
      %v11825 = vmul.f32 %v11824, %v1517
      %v11826 = vmul.f32 %v11821, %v1518
      %v11827 = vrot.slane %v11797, 7
      %v11829 = vrot.slane %v11796, 7
      %v11830 = vsel %vm1582, %v11829, %v11827
      %v11833 = vsel %vm1582, %v11827, %v11829
      %v11834 = vmul.f32 %v11833, %v1521
      %v11835 = vmul.f32 %v11830, %v1522
      %v11836 = vrot.slane %v11796, 1
      %v11837 = vrot.slane %v11797, 1
      %v11838 = vsel %vm1773, %v11836, %v11837
      %v11842 = vsel %vm1773, %v11837, %v11836
      %v11843 = vmul.f32 %v11838, %v1525
      %v11844 = vmul.f32 %v11842, %v1526
      %v11845 = vmul.f32 %v11803, %v1531
      %v11846 = vmul.f32 %v11806, %v1532
      %v11847 = vmul.f32 %v11812, %v1535
      %v11848 = vmul.f32 %v11815, %v1536
      %v11849 = vmul.f32 %v11821, %v1541
      %v11850 = vmul.f32 %v11824, %v1542
      %11853 = vrot.lane.b32.xlu0 %v11816, 16
      %v11854 = vpop.permute.xlu0 %11853
      %11855 = vrot.lane.b32.xlu0 %v11817, 16
      %v11856 = vpop.permute.xlu0 %11855
      %11861 = vrot.lane.b32.xlu0 %v11825, 32
      %v11862 = vpop.permute.xlu0 %11861
      %11863 = vrot.lane.b32.xlu0 %v11826, 32
      %v11864 = vpop.permute.xlu0 %11863
      %11869 = vrot.lane.b32.xlu0 %v11834, 48
      %v11870 = vpop.permute.xlu0 %11869
      %11871 = vrot.lane.b32.xlu0 %v11835, 48
      %v11872 = vpop.permute.xlu0 %11871
      %11875 = vrot.lane.b32.xlu0 %v11796, 64
      %v11876 = vpop.permute.xlu0 %11875
      %11877 = vrot.lane.b32.xlu0 %v11797, 64
      %v11878 = vpop.permute.xlu0 %11877
      %11883 = vrot.lane.b32.xlu0 %v11843, 80
      %v11884 = vpop.permute.xlu0 %11883
      %11885 = vrot.lane.b32.xlu0 %v11844, 80
      %v11886 = vpop.permute.xlu0 %11885
      %11891 = vrot.lane.b32.xlu0 %v11845, 96
      %v11892 = vpop.permute.xlu0 %11891
      %11893 = vrot.lane.b32.xlu0 %v11846, 96
      %v11894 = vpop.permute.xlu0 %11893
      %11899 = vrot.lane.b32.xlu0 %v11847, 112
      %v11900 = vpop.permute.xlu0 %11899
      %11901 = vrot.lane.b32.xlu0 %v11848, 112
      %v11902 = vpop.permute.xlu0 %11901
      %v11905 = vsel %vm5521, %v11807, %v11854
      %v11906 = vsel %vm5521, %v11808, %v11856
      %v11907 = vsel %vm5554, %v11905, %v11862
      %v11908 = vsel %vm5554, %v11906, %v11864
      %v11909 = vsel %vm5587, %v11907, %v11870
      %v11910 = vsel %vm5587, %v11908, %v11872
      %v11911 = vsel %vm5620, %v11909, %v11876
      %v11912 = vsel %vm5620, %v11910, %v11878
      %v11913 = vsel %vm5653, %v11911, %v11884
      %v11914 = vsel %vm5653, %v11912, %v11886
      %v11915 = vsel %vm5686, %v11913, %v11892
      %v11916 = vsel %vm5686, %v11914, %v11894
      %v11917 = vsel %vm5719, %v11915, %v11900
      %v11918 = vsel %vm5719, %v11916, %v11902
      %11919 = vrot.lane.b32.xlu0 %v394, 108
      %v11920 = vpop.permute.xlu0 %11919
      %11921 = vrot.lane.b32.xlu0 %v395, 108
      %v11922 = vpop.permute.xlu0 %11921
      %11923 = vrot.lane.b32.xlu0 %v396, 108
      %v11924 = vpop.permute.xlu0 %11923
      %11925 = vrot.lane.b32.xlu0 %v397, 108
      %v11926 = vpop.permute.xlu0 %11925
      %11927 = vrot.lane.b32.xlu0 %v398, 108
      %v11928 = vpop.permute.xlu0 %11927
      %11929 = vrot.lane.b32.xlu0 %v399, 108
      %v11930 = vpop.permute.xlu0 %11929
      %11931 = vrot.lane.b32.xlu0 %v400, 108
      %v11932 = vpop.permute.xlu0 %11931
      %11933 = vrot.lane.b32.xlu0 %v401, 108
      %v11934 = vpop.permute.xlu0 %11933
      %11935 = vrot.lane.b32.xlu0 %v402, 108
      %v11936 = vpop.permute.xlu0 %11935
      %11937 = vrot.lane.b32.xlu0 %v403, 108
      %v11938 = vpop.permute.xlu0 %11937
      %11939 = vrot.lane.b32.xlu0 %v404, 108
      %v11940 = vpop.permute.xlu0 %11939
      %11941 = vrot.lane.b32.xlu0 %v405, 108
      %v11942 = vpop.permute.xlu0 %11941
      %11943 = vrot.lane.b32.xlu0 %v406, 108
      %v11944 = vpop.permute.xlu0 %11943
      %11945 = vrot.lane.b32.xlu0 %v407, 108
      %v11946 = vpop.permute.xlu0 %11945
      %11947 = vrot.lane.b32.xlu0 %v408, 108
      %v11948 = vpop.permute.xlu0 %11947
      %11949 = vrot.lane.b32.xlu0 %v409, 108
      %v11950 = vpop.permute.xlu0 %11949
      %11951 = vrot.lane.b32.xlu0 %v410, 108
      %v11952 = vpop.permute.xlu0 %11951
      %11953 = vrot.lane.b32.xlu0 %v411, 108
      %v11954 = vpop.permute.xlu0 %11953
      %v11974 = vsel %vm5521, %v11849, 0
      %v11977 = vsel %vm5521, %v11850, 0
      %11979 = vmatprep.subr.mxu0 0.0
      %11980 = vmatpush1.msra.mxu0 %v11950
      %11981 = vmatprep.subr.mxu0 0.0
      %11982 = vmatpush1.msra.mxu0 %v11948
      %11983 = vmatprep.subr.mxu0 0.0
      %11984 = vmatpush1.msra.mxu0 %v11946
      %11985 = vmatprep.subr.mxu0 0.0
      %11986 = vmatpush1.msra.mxu0 %v11944
      %11987 = vmatprep.subr.mxu0 0.0
      %11988 = vmatpush1.msra.mxu0 %v11942
      %11989 = vmatprep.subr.mxu0 0.0
      %11990 = vmatpush1.msra.mxu0 %v11940
      %11991 = vmatprep.subr.mxu0 0.0
      %11992 = vmatpush1.msra.mxu0 %v11938
      %11993 = vmatprep.subr.mxu0 0.0
      %11994 = vmatpush1.msra.mxu0 %v11936
      %11995 = vmatprep.subr.mxu0 0.0
      %11996 = vmatpush1.msra.mxu0 %v11934
      %11997 = vmatprep.subr.mxu0 0.0
      %11998 = vmatpush1.msra.mxu0 %v11932
      %11999 = vmatprep.subr.mxu0 0.0
      %12000 = vmatpush1.msra.mxu0 %v11930
      %12001 = vmatprep.subr.mxu0 0.0
      %12002 = vmatpush1.msra.mxu0 %v11928
      %12003 = vmatprep.subr.mxu0 0.0
      %12004 = vmatpush1.msra.mxu0 %v11926
      %12005 = vmatprep.subr.mxu0 0.0
      %12006 = vmatpush1.msra.mxu0 %v11924
      %12007 = vmatprep.subr.mxu0 0.0
      %12008 = vmatpush1.msra.mxu0 %v11922
      %12009 = vmatprep.subr.mxu0 0.0
      %12010 = vmatpush1.msra.mxu0 %v11920
      %12011 = vmatprep.subr.mxu0 0.0
      %12012 = vmatpush2.msra.mxu0 0.0
      %12013 = vmatprep.subr.mxu0 0.0
      %12014 = vmatpush2.msra.mxu0 0.0
      %12015 = vmatprep.subr.mxu0 0.0
      %12016 = vmatpush2.msra.mxu0 0.0
      %12017 = vmatprep.subr.mxu0 0.0
      %12018 = vmatpush2.msra.mxu0 0.0
      %12019 = vmatprep.subr.mxu0 0.0
      %12020 = vmatpush2.msra.mxu0 0.0
      %12021 = vmatprep.subr.mxu0 0.0
      %12022 = vmatpush2.msra.mxu0 0.0
      %12023 = vmatprep.subr.mxu0 0.0
      %12024 = vmatpush2.msra.mxu0 0.0
      %12025 = vmatprep.subr.mxu0 0.0
      %12026 = vmatpush2.msra.mxu0 0.0
      %12027 = vmatprep.subr.mxu0 0.0
      %12028 = vmatpush2.msra.mxu0 0.0
      %12029 = vmatprep.subr.mxu0 0.0
      %12030 = vmatpush2.msra.mxu0 0.0
      %12031 = vmatprep.subr.mxu0 0.0
      %12032 = vmatpush2.msra.mxu0 0.0
      %12033 = vmatprep.subr.mxu0 0.0
      %12034 = vmatpush2.msra.mxu0 0.0
      %12035 = vmatprep.subr.mxu0 0.0
      %12036 = vmatpush2.msra.mxu0 0.0
      %12037 = vmatprep.subr.mxu0 0.0
      %12038 = vmatpush2.msra.mxu0 0.0
      %12039 = vmatprep.subr.mxu0 0.0
      %12040 = vmatpush2.msra.mxu0 %v11954
      %12041 = vmatprep.subr.mxu0 0.0
      %12042 = vmatpush2.msra.mxu0 %v11952
      %12043 = vmatprep.mubr.f32.mxu0 %v11974
      %12044 = vmatmul.mubr.f32.gmra.mxu0 %v11917
      %v12045 = vpop.f32.mrf.mxu0
      %v12046 = vadd.f32 0.0, %v12045
      %v12047 = vpop.f32.mrf.mxu0
      %12048 = vmatprep.mubr.f32.mxu0 %v11977
      %12049 = vmatmul.mubr.f32.gmra.mxu0 %v11918
      %v12050 = vpop.f32.mrf.mxu0
      %v12051 = vadd.f32 0.0, %v12050
      %v12052 = vpop.f32.mrf.mxu0
      %12053 = vdwg.mxu0
      %12056 = vrot.lane.b32.xlu0 %v12046, 12
      %v12057 = vpop.permute.xlu0 %12056
      %12058 = vrot.lane.b32.xlu0 %v12051, 12
      %v12059 = vpop.permute.xlu0 %12058
      %v12062 = vsel %vm3154, %v11684, %v12057
      %v12063 = vsel %vm3154, %v11685, %v12059
      %v12064 = vlaneseq
      %v12065 = vshrl.u32 %v12064, 7
      %v12066 = vsub.s32 6, %v12065
      %v12067 = vrot.slane %v413, %v12066
      %v12068 = vmul.f32 %v12062, %v12067
      %v12069 = vmul.f32 %v12063, %v12067
      %v12070 = vlaneseq
      %v12071 = vshrl.u32 %v12070, 7
      %v12072 = vsub.s32 6, %v12071
      %v12073 = vrot.slane %v416, %v12072
      %v12074 = vadd.f32 %v12068, %v12073
      %v12075 = vadd.f32 %v12069, %v12073
      %v12076 = vmax.f32 %v12074, 0.0
      %v12077 = vmax.f32 %v12075, 0.0
      %v12078 = vsel %vm5521, %v12076, 0.0
      %v12079 = vsel %vm5521, %v12077, 0.0
      %v12080 = vadd.f32 %v12078, %v12079
      %v12081 = vrot.slane %v12080, 4
      %v12082 = vadd.f32 %v12080, %v12081
      %v12083 = vrot.slane %v12082, 2
      %v12084 = vadd.f32 %v12082, %v12083
      %v12085 = vrot.slane %v12084, 1
      %v12086 = vadd.f32 %v12084, %v12085
      %v12087 = vmul.f32 %v12086, 0.0625
      %v12088 = vlaneseq
      %v12089 = vshrl.u32 %v12088, 7
      %v12090 = vsub.s32 7, %v12089
      %v12091 = vrot.slane %v413, %v12090
      %v12092 = vmul.f32 %v12062, %v12091
      %v12093 = vmul.f32 %v12063, %v12091
      %v12094 = vlaneseq
      %v12095 = vshrl.u32 %v12094, 7
      %v12096 = vsub.s32 7, %v12095
      %v12097 = vrot.slane %v416, %v12096
      %v12098 = vadd.f32 %v12092, %v12097
      %v12099 = vadd.f32 %v12093, %v12097
      %v12100 = vmax.f32 %v12098, 0.0
      %v12101 = vmax.f32 %v12099, 0.0
      %v12102 = vsel %vm5521, %v12100, 0.0
      %v12103 = vsel %vm5521, %v12101, 0.0
      %v12104 = vadd.f32 %v12102, %v12103
      %v12105 = vrot.slane %v12104, 4
      %v12106 = vadd.f32 %v12104, %v12105
      %v12107 = vrot.slane %v12106, 2
      %v12108 = vadd.f32 %v12106, %v12107
      %v12109 = vrot.slane %v12108, 1
      %v12110 = vadd.f32 %v12108, %v12109
      %v12111 = vmul.f32 %v12110, 0.0625
      %v12112 = vlaneseq
      %v12113 = vshrl.u32 %v12112, 7
      %v12114 = vsub.s32 0, %v12113
      %v12115 = vrot.slane %v414, %v12114
      %v12116 = vmul.f32 %v12062, %v12115
      %v12117 = vmul.f32 %v12063, %v12115
      %v12118 = vlaneseq
      %v12119 = vshrl.u32 %v12118, 7
      %v12120 = vsub.s32 0, %v12119
      %v12121 = vrot.slane %v417, %v12120
      %v12122 = vadd.f32 %v12116, %v12121
      %v12123 = vadd.f32 %v12117, %v12121
      %v12124 = vmax.f32 %v12122, 0.0
      %v12125 = vmax.f32 %v12123, 0.0
      %v12126 = vsel %vm5521, %v12124, 0.0
      %v12127 = vsel %vm5521, %v12125, 0.0
      %v12128 = vadd.f32 %v12126, %v12127
      %v12129 = vrot.slane %v12128, 4
      %v12130 = vadd.f32 %v12128, %v12129
      %v12131 = vrot.slane %v12130, 2
      %v12132 = vadd.f32 %v12130, %v12131
      %v12133 = vrot.slane %v12132, 1
      %v12134 = vadd.f32 %v12132, %v12133
      %v12135 = vmul.f32 %v12134, 0.0625
      %v12136 = vsel %vm5521, %v12062, 0.0
      %v12137 = vsel %vm5521, %v12063, 0.0
      %v12138 = vadd.f32 %v12136, %v12137
      %v12139 = vrot.slane %v12138, 4
      %v12140 = vadd.f32 %v12138, %v12139
      %v12141 = vrot.slane %v12140, 2
      %v12142 = vadd.f32 %v12140, %v12141
      %v12143 = vrot.slane %v12142, 1
      %v12144 = vadd.f32 %v12142, %v12143
      %v12145 = vmul.f32 %v12144, 0.0625
      %12147 = vrot.lane.b32.xlu0 %v12111, 16
      %v12148 = vpop.permute.xlu0 %12147
      %12151 = vrot.lane.b32.xlu0 %v12135, 32
      %v12152 = vpop.permute.xlu0 %12151
      %12155 = vrot.lane.b32.xlu0 %v12145, 48
      %v12156 = vpop.permute.xlu0 %12155
      %v12158 = vsel %vm5521, %v12087, %v12148
      %v12159 = vsel %vm5554, %v12158, %v12152
      %v12160 = vsel %vm5587, %v12159, %v12156
      %v12161 = vld [vmem:[%s7] sm:$0xff]
      %v12162 = vld [vmem:[%s7 + $0x8] sm:$0xff]
      %v12163 = vld [vmem:[%s7 + $0x10] sm:$0xff]
      %v12164 = vld [vmem:[%s7 + $0x18] sm:$0xff]
      %v12165 = vld [vmem:[%s7 + $0x20] sm:$0xff]
      %v12166 = vld [vmem:[%s7 + $0x28] sm:$0xff]
      %v12167 = vld [vmem:[%s7 + $0x30] sm:$0xff]
      %v12168 = vld [vmem:[%s7 + $0x38] sm:$0xff]
      %v12169 = vld [vmem:[%s8] sm:$0x1]
      %v12171 = vsel %vm5620, %v12160, 0
      %12173 = vmatprep.subr.mxu0 0.0
      %12174 = vmatpush1.msra.mxu0 0.0
      %12175 = vmatprep.subr.mxu0 0.0
      %12176 = vmatpush1.msra.mxu0 0.0
      %12177 = vmatprep.subr.mxu0 0.0
      %12178 = vmatpush1.msra.mxu0 0.0
      %12179 = vmatprep.subr.mxu0 0.0
      %12180 = vmatpush1.msra.mxu0 0.0
      %12181 = vmatprep.subr.mxu0 0.0
      %12182 = vmatpush1.msra.mxu0 0.0
      %12183 = vmatprep.subr.mxu0 0.0
      %12184 = vmatpush1.msra.mxu0 0.0
      %12185 = vmatprep.subr.mxu0 0.0
      %12186 = vmatpush1.msra.mxu0 0.0
      %12187 = vmatprep.subr.mxu0 0.0
      %12188 = vmatpush1.msra.mxu0 0.0
      %12189 = vmatprep.subr.mxu0 0.0
      %12190 = vmatpush1.msra.mxu0 %v12168
      %12191 = vmatprep.subr.mxu0 0.0
      %12192 = vmatpush1.msra.mxu0 %v12167
      %12193 = vmatprep.subr.mxu0 0.0
      %12194 = vmatpush1.msra.mxu0 %v12166
      %12195 = vmatprep.subr.mxu0 0.0
      %12196 = vmatpush1.msra.mxu0 %v12165
      %12197 = vmatprep.subr.mxu0 0.0
      %12198 = vmatpush1.msra.mxu0 %v12164
      %12199 = vmatprep.subr.mxu0 0.0
      %12200 = vmatpush1.msra.mxu0 %v12163
      %12201 = vmatprep.subr.mxu0 0.0
      %12202 = vmatpush1.msra.mxu0 %v12162
      %12203 = vmatprep.subr.mxu0 0.0
      %12204 = vmatpush1.msra.mxu0 %v12161
      %12205 = vmatprep.subr.mxu0 0.0
      %12206 = vmatpush2.msra.mxu0 0.0
      %12207 = vmatprep.subr.mxu0 0.0
      %12208 = vmatpush2.msra.mxu0 0.0
      %12209 = vmatprep.subr.mxu0 0.0
      %12210 = vmatpush2.msra.mxu0 0.0
      %12211 = vmatprep.subr.mxu0 0.0
      %12212 = vmatpush2.msra.mxu0 0.0
      %12213 = vmatprep.subr.mxu0 0.0
      %12214 = vmatpush2.msra.mxu0 0.0
      %12215 = vmatprep.subr.mxu0 0.0
      %12216 = vmatpush2.msra.mxu0 0.0
      %12217 = vmatprep.subr.mxu0 0.0
      %12218 = vmatpush2.msra.mxu0 0.0
      %12219 = vmatprep.subr.mxu0 0.0
      %12220 = vmatpush2.msra.mxu0 0.0
      %12221 = vmatprep.subr.mxu0 0.0
      %12222 = vmatpush2.msra.mxu0 0.0
      %12223 = vmatprep.subr.mxu0 0.0
      %12224 = vmatpush2.msra.mxu0 0.0
      %12225 = vmatprep.subr.mxu0 0.0
      %12226 = vmatpush2.msra.mxu0 0.0
      %12227 = vmatprep.subr.mxu0 0.0
      %12228 = vmatpush2.msra.mxu0 0.0
      %12229 = vmatprep.subr.mxu0 0.0
      %12230 = vmatpush2.msra.mxu0 0.0
      %12231 = vmatprep.subr.mxu0 0.0
      %12232 = vmatpush2.msra.mxu0 0.0
      %12233 = vmatprep.subr.mxu0 0.0
      %12234 = vmatpush2.msra.mxu0 0.0
      %12235 = vmatprep.subr.mxu0 0.0
      %12236 = vmatpush2.msra.mxu0 0.0
      %12237 = vmatprep.mubr.f32.mxu0 0.0
      %12238 = vmatmul.mubr.f32.gmra.mxu0 %v12171
      %v12239 = vpop.f32.mrf.mxu0
      %v12240 = vadd.f32 %v12169, %v12239
      %v12241 = vpop.f32.mrf.mxu0
      %12242 = vdwg.mxu0
      %v12244 = vrot.slane %v12240, 7
      %12245 = vrot.lane.b32.xlu0 %v12244, 114
      %v12246 = vpop.permute.xlu0 %12245
      %v12248 = vrot.slane %v12240, 6
      %12249 = vrot.lane.b32.xlu0 %v12248, 100
      %v12250 = vpop.permute.xlu0 %12249
      %v12252 = vsel %vm1582, %v12240, %v12246
      %vm12253 = vcmask 1041408
      %v12254 = vsel %vm12253, %v12252, %v12250
      %12256 = vrot.lane.b32.xlu0 %v12254, 126
      %v12257 = vpop.permute.xlu0 %12256
      %vm12258 = vcmask 15360
      %v12259 = vsel %vm12258, %v12254, 0
      %v12261 = vsel %vm12258, %v12257, 0
      %12263 = vmatprep.subr.mxu0 0.0
      %12264 = vmatpush1.xpose.msra.mxu0 0.0
      %12265 = vmatprep.subr.mxu0 0.0
      %12266 = vmatpush1.xpose.msra.mxu0 0.0
      %12267 = vmatprep.subr.mxu0 0.0
      %12268 = vmatpush1.xpose.msra.mxu0 0.0
      %12269 = vmatprep.subr.mxu0 0.0
      %12270 = vmatpush1.xpose.msra.mxu0 0.0
      %12271 = vmatprep.subr.mxu0 0.0
      %12272 = vmatpush1.xpose.msra.mxu0 0.0
      %12273 = vmatprep.subr.mxu0 0.0
      %12274 = vmatpush1.xpose.msra.mxu0 0.0
      %12275 = vmatprep.subr.mxu0 0.0
      %12276 = vmatpush1.xpose.msra.mxu0 0.0
      %12277 = vmatprep.subr.mxu0 0.0
      %12278 = vmatpush1.xpose.msra.mxu0 0.0
      %12279 = vmatprep.subr.mxu0 0.0
      %12280 = vmatpush1.xpose.msra.mxu0 0.0
      %12281 = vmatprep.subr.mxu0 0.0
      %12282 = vmatpush1.xpose.msra.mxu0 0.0
      %12283 = vmatprep.subr.mxu0 0.0
      %12284 = vmatpush1.xpose.msra.mxu0 0.0
      %12285 = vmatprep.subr.mxu0 0.0
      %12286 = vmatpush1.xpose.msra.mxu0 0.0
      %12287 = vmatprep.subr.mxu0 0.0
      %12288 = vmatpush1.xpose.msra.mxu0 0.0
      %12289 = vmatprep.subr.mxu0 0.0
      %12290 = vmatpush1.xpose.msra.mxu0 0.0
      %12291 = vmatprep.subr.mxu0 0.0
      %12292 = vmatpush1.xpose.msra.mxu0 0.0
      %12293 = vmatprep.subr.mxu0 0.0
      %12294 = vmatpush1.xpose.msra.mxu0 %v12261
      %12295 = vmatprep.subr.mxu0 0.0
      %12296 = vmatpush2.xpose.msra.mxu0 0.0
      %12297 = vmatprep.subr.mxu0 0.0
      %12298 = vmatpush2.xpose.msra.mxu0 0.0
      %12299 = vmatprep.subr.mxu0 0.0
      %12300 = vmatpush2.xpose.msra.mxu0 0.0
      %12301 = vmatprep.subr.mxu0 0.0
      %12302 = vmatpush2.xpose.msra.mxu0 0.0
      %12303 = vmatprep.subr.mxu0 0.0
      %12304 = vmatpush2.xpose.msra.mxu0 0.0
      %12305 = vmatprep.subr.mxu0 0.0
      %12306 = vmatpush2.xpose.msra.mxu0 0.0
      %12307 = vmatprep.subr.mxu0 0.0
      %12308 = vmatpush2.xpose.msra.mxu0 0.0
      %12309 = vmatprep.subr.mxu0 0.0
      %12310 = vmatpush2.xpose.msra.mxu0 0.0
      %12311 = vmatprep.subr.mxu0 0.0
      %12312 = vmatpush2.xpose.msra.mxu0 0.0
      %12313 = vmatprep.subr.mxu0 0.0
      %12314 = vmatpush2.xpose.msra.mxu0 0.0
      %12315 = vmatprep.subr.mxu0 0.0
      %12316 = vmatpush2.xpose.msra.mxu0 0.0
      %12317 = vmatprep.subr.mxu0 0.0
      %12318 = vmatpush2.xpose.msra.mxu0 0.0
      %12319 = vmatprep.subr.mxu0 0.0
      %12320 = vmatpush2.xpose.msra.mxu0 0.0
      %12321 = vmatprep.subr.mxu0 0.0
      %12322 = vmatpush2.xpose.msra.mxu0 0.0
      %12323 = vmatprep.subr.mxu0 0.0
      %12324 = vmatpush2.xpose.msra.mxu0 0.0
      %12325 = vmatprep.subr.mxu0 0.0
      %12326 = vmatpush2.xpose.msra.mxu0 0.0
      %12327 = vmatprep.mubr.f32.mxu0 0.0
      %12328 = vmatmul.mubr.f32.gmra.mxu0 %v12259
      %v12329 = vpop.f32.mrf.mxu0
      %v12330 = vadd.f32 0.0, %v12329
      %v12331 = vpop.f32.mrf.mxu0
      %12332 = vdwg.mxu0
      %vm12333 = vcmask 18432
      %v12334 = vsel %vm12333, %v12330, -inf
      %12335 = vmax.xlane.f32.xlu0 %v12334
      %v12336 = vpop.xlane.xlu0 %12335
      %v12337 = vsub.f32 %v12330, %v12336
      %v12338 = vmul.f32 %v12337, 1.442695
      %v12339 = vpow.pop %v12338
      %v12340 = vsel %vm12333, %v12339, 0.0
      %12341 = vadd.xlane.f32.xlu0 %v12340
      %v12342 = vpop.xlane.xlu0 %12341
      %v12343 = vrcp.pop %v12342
      %v12344 = vmul.f32 %v12339, %v12343
      %12345 = vrot.lane.b32.xlu0 %v12254, 124
      %v12346 = vpop.permute.xlu0 %12345
      %v12348 = vsel %vm3055, %v12344, 0
      %v12350 = vsel %vm3416, %v12346, 0
      %12352 = vmatprep.subr.mxu0 0.0
      %12353 = vmatpush1.msra.mxu0 0.0
      %12354 = vmatprep.subr.mxu0 0.0
      %12355 = vmatpush1.msra.mxu0 0.0
      %12356 = vmatprep.subr.mxu0 0.0
      %12357 = vmatpush1.msra.mxu0 0.0
      %12358 = vmatprep.subr.mxu0 0.0
      %12359 = vmatpush1.msra.mxu0 0.0
      %12360 = vmatprep.subr.mxu0 0.0
      %12361 = vmatpush1.msra.mxu0 0.0
      %12362 = vmatprep.subr.mxu0 0.0
      %12363 = vmatpush1.msra.mxu0 0.0
      %12364 = vmatprep.subr.mxu0 0.0
      %12365 = vmatpush1.msra.mxu0 0.0
      %12366 = vmatprep.subr.mxu0 0.0
      %12367 = vmatpush1.msra.mxu0 0.0
      %12368 = vmatprep.subr.mxu0 0.0
      %12369 = vmatpush1.msra.mxu0 0.0
      %12370 = vmatprep.subr.mxu0 0.0
      %12371 = vmatpush1.msra.mxu0 0.0
      %12372 = vmatprep.subr.mxu0 0.0
      %12373 = vmatpush1.msra.mxu0 0.0
      %12374 = vmatprep.subr.mxu0 0.0
      %12375 = vmatpush1.msra.mxu0 0.0
      %12376 = vmatprep.subr.mxu0 0.0
      %12377 = vmatpush1.msra.mxu0 0.0
      %12378 = vmatprep.subr.mxu0 0.0
      %12379 = vmatpush1.msra.mxu0 0.0
      %12380 = vmatprep.subr.mxu0 0.0
      %12381 = vmatpush1.msra.mxu0 0.0
      %12382 = vmatprep.subr.mxu0 0.0
      %12383 = vmatpush1.msra.mxu0 %v12350
      %12384 = vmatprep.subr.mxu0 0.0
      %12385 = vmatpush2.msra.mxu0 0.0
      %12386 = vmatprep.subr.mxu0 0.0
      %12387 = vmatpush2.msra.mxu0 0.0
      %12388 = vmatprep.subr.mxu0 0.0
      %12389 = vmatpush2.msra.mxu0 0.0
      %12390 = vmatprep.subr.mxu0 0.0
      %12391 = vmatpush2.msra.mxu0 0.0
      %12392 = vmatprep.subr.mxu0 0.0
      %12393 = vmatpush2.msra.mxu0 0.0
      %12394 = vmatprep.subr.mxu0 0.0
      %12395 = vmatpush2.msra.mxu0 0.0
      %12396 = vmatprep.subr.mxu0 0.0
      %12397 = vmatpush2.msra.mxu0 0.0
      %12398 = vmatprep.subr.mxu0 0.0
      %12399 = vmatpush2.msra.mxu0 0.0
      %12400 = vmatprep.subr.mxu0 0.0
      %12401 = vmatpush2.msra.mxu0 0.0
      %12402 = vmatprep.subr.mxu0 0.0
      %12403 = vmatpush2.msra.mxu0 0.0
      %12404 = vmatprep.subr.mxu0 0.0
      %12405 = vmatpush2.msra.mxu0 0.0
      %12406 = vmatprep.subr.mxu0 0.0
      %12407 = vmatpush2.msra.mxu0 0.0
      %12408 = vmatprep.subr.mxu0 0.0
      %12409 = vmatpush2.msra.mxu0 0.0
      %12410 = vmatprep.subr.mxu0 0.0
      %12411 = vmatpush2.msra.mxu0 0.0
      %12412 = vmatprep.subr.mxu0 0.0
      %12413 = vmatpush2.msra.mxu0 0.0
      %12414 = vmatprep.subr.mxu0 0.0
      %12415 = vmatpush2.msra.mxu0 0.0
      %12416 = vmatprep.mubr.f32.mxu0 0.0
      %12417 = vmatmul.mubr.f32.gmra.mxu0 %v12348
      %v12418 = vpop.f32.mrf.mxu0
      %v12419 = vadd.f32 0.0, %v12418
      %v12420 = vpop.f32.mrf.mxu0
      %12421 = vdwg.mxu0
      %v12423 = vrot.slane %v12419, 5
      %12424 = vrot.lane.b32.xlu0 %v12423, 4
      %v12425 = vpop.permute.xlu0 %12424
      %v12427 = vrot.slane %v12240, 2
      %12428 = vrot.lane.b32.xlu0 %v12427, 90
      %v12429 = vpop.permute.xlu0 %12428
      %v12431 = vsel %vm3416, %v12254, %v12425
      %vm12432 = vcmask 1045504
      %v12433 = vsel %vm12432, %v12431, %v12429
      %v12434 = vsel %vm1773, %v12433, 0.0
      %12436 = vrot.lane.b32.xlu0 %v12434, 124
      %v12437 = vpop.permute.xlu0 %12436
      %vm12439 = vcmask 80896
      %v12440 = vsel %vm12439, %v12437, 0.0
      %12441 = vst [vmem:[%s384] sm:$0xff] %v12440
      %p12442 = scmp.lt.s32.totalorder %s22, 1
      %s12443 = scalar_select %p12442, %s22, 1
      %s12444 = smul.addr %s12443, 8
      %s12445 = scalar_lea.vmem %s11, %s12444
      // Predicated region
      $region65: #{forward.1} parent=63 // pred_check
        %p12446 = pneg %p276
      $region66: #{forward.1} parent=63 // pred_check_branch
        %12448 = sbr.rel (%p12446) target = $region68
      $region67: #{forward.1} parent=63 // pred_region
        _
      $region68: #{forward.1} parent=63 // pred_fallthru
        _
    $region64: #{forward.1} parent=5 // pred_fallthru
      _
    %p12449 = scmp.le.s32.totalorder 2, %s17
    // Predicated region
    $region69: #{forward.1} parent=5 // pred_check
      %p12450 = pneg %p12449
    $region70: #{forward.1} parent=5 // pred_check_branch
      %12452 = sbr.rel (%p12450) target = $region72
    $region71: #{forward.1} parent=5 // pred_region
      %s12453 = ssub.s32 %s17, 2
      // Predicated region
      $region73: #{forward.1} parent=71 // pred_check
        %p12454 = pneg %p282
      $region74: #{forward.1} parent=71 // pred_check_branch
        %12456 = sbr.rel (%p12454) target = $region76
      $region75: #{forward.1} parent=71 // pred_region
        %p12457 = scmp.lt.s32.totalorder %s23, 1
        %s12458 = scalar_select %p12457, %s23, 1
        %s12459 = smul.addr %s12458, 8
        %s12460 = scalar_lea.vmem %s11, %s12459
      $region76: #{forward.1} parent=71 // pred_fallthru
        _
    $region72: #{forward.1} parent=5 // pred_fallthru
      _
  $region6: #{forward.1} parent=0 // loop_footer
    %s21 = sadd.s32 1, %s17
  $region7: #{forward.1} parent=0 // loop_footer_branch
    %16 = sbr.rel target = $region3
  $region8: #{forward.1} parent=0 // loop_exit
    _

</llo_original>
